<compile_context>
chip_gen: v5e
topology: v5e:2x2
jax: 0.10.0
libtpu: 0.0.40
codegen_flags: <defaults>
</compile_context>

<pallas_src>
import functools

import jax
import jax.numpy as jnp
from jax.experimental import pallas as pl
from jax.experimental.pallas import tpu as pltpu


# ------------- in-kernel 3x3 reflect-pad conv via pre-shifted taps -----------

def _conv3x3(v, shift_ref, w_ref, b, H, W, Cin):
    """3x3 stride-1 conv with ReflectionPad2d(1) as 9 accumulated MXU dots.

    v:         (H, W, Cin) float32 value (H, W >= 3).
    shift_ref: VMEM scratch (3, H+2, W, Cin) float32. Slot kw holds the
               kw-column-shifted, row-reflected copy of v, so tap (kh, kw) is
               shift_ref[kw, kh:kh+H] -- outer-dim slices only, no per-tap
               sublane relayout.
    w_ref:     (9*Cin, Cout) bfloat16 ref, rows laid out (kh, kw, cin).
    b:         (1, Cout) float32 value.
    Returns (H*W, Cout) float32.
    """
    # ---- fill the three kw-shifted copies (sublane relayout paid 2x, once) ----
    # kw = 1: no column shift, plain contiguous store.
    shift_ref[1, 1:H + 1, :, :] = v
    # kw = 0: col 0 = reflect(col 1); cols 1..W-1 = orig cols 0..W-2.
    shift_ref[0, 1:H + 1, 1:W, :] = v[:, 0:W - 1, :]
    shift_ref[0, 1:H + 1, 0:1, :] = v[:, 1:2, :]
    # kw = 2: cols 0..W-2 = orig cols 1..W-1; col W-1 = reflect(col W-2).
    shift_ref[2, 1:H + 1, 0:W - 1, :] = v[:, 1:W, :]
    shift_ref[2, 1:H + 1, W - 1:W, :] = v[:, W - 2:W - 1, :]
    # Row reflection (padded row 0 = orig row 1; padded row H+1 = orig row H-2),
    # applied after the column shift so corners come out consistent.
    for kw in range(3):
        shift_ref[kw, 0, :, :] = shift_ref[kw, 2, :, :]
        shift_ref[kw, H + 1, :, :] = shift_ref[kw, H - 1, :, :]
    # ---- 9 taps: outer-dim slices -> contiguous reshape -> bf16 MXU dot ------
    acc = None
    for kh in range(3):
        for kw in range(3):
            patch = shift_ref[kw, kh:kh + H, :, :].reshape(H * W, Cin)
            patch = patch.astype(jnp.bfloat16)
            r0 = (kh * 3 + kw) * Cin
            d = jnp.dot(patch, w_ref[r0:r0 + Cin, :],
                        preferred_element_type=jnp.float32)
            acc = d if acc is None else acc + d
    return acc + b


def _instance_norm(h, gamma, beta, eps):
    """InstanceNorm2d(affine=True) on an (HW, C) float32 tile of one sample."""
    mean = jnp.mean(h, axis=0, keepdims=True)
    var = jnp.mean(jnp.square(h - mean), axis=0, keepdims=True)
    return (h - mean) * jax.lax.rsqrt(var + eps) * gamma + beta


# --------------------------- fused conv3 + relu kernel -----------------------

def _conv3x3_relu_kernel(x_ref, w_ref, b_ref, o_ref, shift_ref):
    _, H, W, Cin = x_ref.shape
    Cout = o_ref.shape[3]
    acc = _conv3x3(x_ref[0], shift_ref, w_ref, b_ref[...], H, W, Cin)
    o_ref[0] = jnp.maximum(acc, 0.0).reshape(H, W, Cout).astype(o_ref.dtype)


def conv3x3_relu(x, w, b):
    """ConvLayer(k=3, s=1) + ReLU, one fused VMEM-resident kernel per sample."""
    N, H, W, Cin = x.shape
    Cout = w.shape[3]
    assert H >= 3 and W >= 3, "reflection padding assumes H, W >= 3"
    return pl.pallas_call(
        _conv3x3_relu_kernel,
        out_shape=jax.ShapeDtypeStruct((N, H, W, Cout), jnp.float32),
        grid=(N,),
        in_specs=[
            pl.BlockSpec((1, H, W, Cin), lambda n: (n, 0, 0, 0)),
            pl.BlockSpec((9 * Cin, Cout), lambda n: (0, 0)),
            pl.BlockSpec((1, Cout), lambda n: (0, 0)),
        ],
        out_specs=pl.BlockSpec((1, H, W, Cout), lambda n: (n, 0, 0, 0)),
        scratch_shapes=[pltpu.VMEM((3, H + 2, W, Cin), jnp.float32)],
        compiler_params=pltpu.CompilerParams(
            dimension_semantics=("parallel",),
            vmem_limit_bytes=32 * 1024 * 1024),
    )(x, w.reshape(9 * Cin, Cout).astype(jnp.bfloat16), b.reshape(1, Cout))


# --------- fused STN-warp + residual block + conv4 + sigmoid (tail) ----------

def _stnres_tail_kernel(f_ref, m_ref, w1_ref, b1_ref, g1_ref, be1_ref,
                        w2_ref, b2_ref, g2_ref, be2_ref, w4_ref, b4_ref,
                        o_ref, shift_ref, *, eps):
    _, H, W, C = f_ref.shape
    HW = H * W
    C4 = o_ref.shape[3]
    f = f_ref[0].reshape(HW, C)                                    # conv3 feats
    # STN bilinear warp as a single MXU dot: (HW, HW) @ (HW, C), VMEM-resident.
    xt = jnp.dot(m_ref[0], f, preferred_element_type=jnp.float32)  # (HW, C) f32
    # Residual block: conv1 -> IN1 -> relu -> conv2 -> IN2 -> + xt (no relu).
    h = _conv3x3(xt.reshape(H, W, C), shift_ref, w1_ref, b1_ref[...], H, W, C)
    h = jnp.maximum(_instance_norm(h, g1_ref[...], be1_ref[...], eps), 0.0)
    h = _conv3x3(h.reshape(H, W, C), shift_ref, w2_ref, b2_ref[...], H, W, C)
    h = _instance_norm(h, g2_ref[...], be2_ref[...], eps) + xt
    # conv4 (out channels lane-padded to 128) + sigmoid (EUP reciprocal).
    y = _conv3x3(h.reshape(H, W, C), shift_ref, w4_ref, b4_ref[...], H, W, C)
    y = pl.reciprocal(1.0 + jnp.exp(-y), approx=True)
    o_ref[0] = y.reshape(H, W, C4).astype(o_ref.dtype)


def stnres_tail(f, m, rp, w4, b4, eps=1e-5):
    """Fused warp + residual block + conv4 + sigmoid; grid=(N,), all in VMEM."""
    N, H, W, C = f.shape
    HW = H * W
    assert H >= 3 and W >= 3, "reflection padding assumes H, W >= 3"
    c4 = w4.shape[3]
    C4 = 128                                    # lane-dense padded out channels
    w4p = jnp.zeros((3, 3, C, C4), w4.dtype).at[:, :, :, :c4].set(w4)
    b4p = jnp.zeros((C4,), b4.dtype).at[:c4].set(b4)

    def wspec(r, c):
        return pl.BlockSpec((r, c), lambda n: (0, 0))

    return pl.pallas_call(
        functools.partial(_stnres_tail_kernel, eps=eps),
        out_shape=jax.ShapeDtypeStruct((N, H, W, C4), jnp.float32),
        grid=(N,),
        in_specs=[
            pl.BlockSpec((1, H, W, C), lambda n: (n, 0, 0, 0)),
            pl.BlockSpec((1, HW, HW), lambda n: (n, 0, 0)),
            wspec(9 * C, C), wspec(1, C), wspec(1, C), wspec(1, C),
            wspec(9 * C, C), wspec(1, C), wspec(1, C), wspec(1, C),
            wspec(9 * C, C4), wspec(1, C4),
        ],
        out_specs=pl.BlockSpec((1, H, W, C4), lambda n: (n, 0, 0, 0)),
        scratch_shapes=[pltpu.VMEM((3, H + 2, W, C), jnp.float32)],
        compiler_params=pltpu.CompilerParams(
            dimension_semantics=("parallel",),
            vmem_limit_bytes=32 * 1024 * 1024),
    )(f, m,
      rp["w1"].reshape(9 * C, C).astype(jnp.bfloat16), rp["b1"].reshape(1, C),
      rp["g1"].reshape(1, C), rp["be1"].reshape(1, C),
      rp["w2"].reshape(9 * C, C).astype(jnp.bfloat16), rp["b2"].reshape(1, C),
      rp["g2"].reshape(1, C), rp["be2"].reshape(1, C),
      w4p.reshape(9 * C, C4).astype(jnp.bfloat16), b4p.reshape(1, C4))


# ------------- tiny strided convs (stem / localization) in plain JAX ---------
# Per perf review: the im2col + pallas-matmul hybrid spent more on launches and
# HBM round trips than on compute for these sub-microsecond convs.

def conv_layer(x, w, b, *, stride, act="relu"):
    """ConvLayer: ReflectionPad2d(k//2) + Conv2d(k, stride), NHWC / HWIO."""
    k = w.shape[0]
    pad = k // 2
    xp = jnp.pad(x, ((0, 0), (pad, pad), (pad, pad), (0, 0)), mode="reflect")
    y = jax.lax.conv_general_dilated(
        xp, w, window_strides=(stride, stride), padding="VALID",
        dimension_numbers=("NHWC", "HWIO", "NHWC"))
    y = y + b
    if act == "relu":
        y = jnp.maximum(y, 0.0)
    return y


# -------------------- STN: theta -> bilinear warp matrix ---------------------

def affine_grid(theta, H, W):
    # matches torch.nn.functional.affine_grid(align_corners=False)
    xs = (2.0 * jnp.arange(W, dtype=jnp.float32) + 1.0) / W - 1.0
    ys = (2.0 * jnp.arange(H, dtype=jnp.float32) + 1.0) / H - 1.0
    gx, gy = jnp.meshgrid(xs, ys)                              # (H, W)
    base = jnp.stack([gx, gy, jnp.ones_like(gx)], axis=-1)     # (H, W, 3)
    return jnp.einsum("nij,hwj->nhwi", theta, base)            # (N, H, W, 2)


def build_warp_matrix(theta, H, W):
    """Per-sample (HW_out, HW_in) bilinear interpolation matrix from theta.

    Equivalent to F.grid_sample(mode='bilinear', padding_mode='zeros',
    align_corners=False); applied later as an MXU dot inside the fused tail
    kernel so no gather is ever emitted.
    """
    grid = affine_grid(theta, H, W)
    gx = ((grid[..., 0] + 1.0) * W - 1.0) / 2.0
    gy = ((grid[..., 1] + 1.0) * H - 1.0) / 2.0
    x0 = jnp.floor(gx)
    y0 = jnp.floor(gy)
    x1 = x0 + 1.0
    y1 = y0 + 1.0
    wx1 = gx - x0
    wx0 = 1.0 - wx1
    wy1 = gy - y0
    wy0 = 1.0 - wy1
    HW = H * W

    def corner(xi, yi, wgt):
        valid = (xi >= 0) & (xi <= W - 1) & (yi >= 0) & (yi <= H - 1)
        xi_c = jnp.clip(xi, 0, W - 1).astype(jnp.int32)
        yi_c = jnp.clip(yi, 0, H - 1).astype(jnp.int32)
        idx = yi_c * W + xi_c                                   # (N, H, W)
        wgt = wgt * valid.astype(wgt.dtype)
        return wgt[..., None] * jax.nn.one_hot(idx, HW, dtype=jnp.float32)

    m = (corner(x0, y0, wx0 * wy0) + corner(x1, y0, wx1 * wy0)
         + corner(x0, y1, wx0 * wy1) + corner(x1, y1, wx1 * wy1))
    return m.reshape(-1, HW, HW)                                # (N, HW, HW)


# ------------------------------- parameter init ------------------------------

def conv_params(key, cin, cout, k):
    kw_, kb_ = jax.random.split(key)
    fan_in = cin * k * k
    w = jax.random.normal(kw_, (k, k, cin, cout), jnp.float32) / jnp.sqrt(float(fan_in))
    b = jax.random.normal(kb_, (cout,), jnp.float32) * 0.01
    return w, b


def res_params(key, c):
    k1, k2 = jax.random.split(key)
    w1, b1 = conv_params(k1, c, c, 3)
    w2, b2 = conv_params(k2, c, c, 3)
    return {"w1": w1, "b1": b1,
            "g1": jnp.ones((c,), jnp.float32), "be1": jnp.zeros((c,), jnp.float32),
            "w2": w2, "b2": b2,
            "g2": jnp.ones((c,), jnp.float32), "be2": jnp.zeros((c,), jnp.float32)}


def stn_params(key, c):
    k1, k2, k3, k4 = jax.random.split(key, 4)
    p = res_params(k1, c)
    wl1, bl1 = conv_params(k2, c, 16, 3)
    wl2, bl2 = conv_params(k3, 16, 16, 3)
    wfc1 = jax.random.normal(k4, (16, 32), jnp.float32) / jnp.sqrt(16.0)
    bfc1 = jnp.zeros((32,), jnp.float32)
    wfc2 = jnp.zeros((32, 6), jnp.float32)                      # identity-init theta
    bfc2 = jnp.array([1.0, 0.0, 0.0, 0.0, 1.0, 0.0], jnp.float32)
    p.update({"wl1": wl1, "bl1": bl1, "wl2": wl2, "bl2": bl2,
              "wfc1": wfc1, "bfc1": bfc1, "wfc2": wfc2, "bfc2": bfc2})
    return p


def init_params(key):
    ks = jax.random.split(key, 5)
    return {
        "conv1": conv_params(ks[0], 3, 32, 5),
        "conv2": conv_params(ks[1], 32, 64, 3),
        "conv3": conv_params(ks[2], 64, 128, 3),
        "stnres1": stn_params(ks[3], 128),
        "conv4": conv_params(ks[4], 128, 64, 3),
    }


# ---------------------------------- forward ----------------------------------

def forward(x_nchw, p):
    x = jnp.transpose(x_nchw, (0, 2, 3, 1))                     # NCHW -> NHWC
    h = conv_layer(x, *p["conv1"], stride=2, act="relu")        # relu(conv1)
    h = conv_layer(h, *p["conv2"], stride=2, act="relu")        # relu(conv2)
    f = conv3x3_relu(h, *p["conv3"])                            # relu(conv3), Pallas
    sp = p["stnres1"]
    # STN localization -> theta (tiny; plain JAX per perf review).
    l = conv_layer(f, sp["wl1"], sp["bl1"], stride=2, act="relu")
    l = conv_layer(l, sp["wl2"], sp["bl2"], stride=2, act="relu")
    pooled = jnp.mean(l, axis=(1, 2))                           # global avg pool
    hf = jnp.maximum(pooled @ sp["wfc1"] + sp["bfc1"], 0.0)
    theta = (hf @ sp["wfc2"] + sp["bfc2"]).reshape(-1, 2, 3)
    N, H, W, C = f.shape
    m = build_warp_matrix(theta, H, W)                          # (N, HW, HW)
    # Fused Pallas tail: warp + residual block + conv4 + sigmoid, VMEM-resident.
    out = stnres_tail(f, m, sp, *p["conv4"])
    out = out[..., :p["conv4"][0].shape[3]]                     # drop lane padding
    return jnp.transpose(out, (0, 3, 1, 2))                     # NHWC -> NCHW


if __name__ == "__main__":
    key = jax.random.PRNGKey(0)
    pkey, xkey = jax.random.split(key)
    params = init_params(pkey)
    x = jax.random.normal(xkey, (2, 3, 32, 32), jnp.float32)    # NCHW like PyTorch
    out = jax.block_until_ready(jax.jit(forward)(x, params))
    assert out.shape == (2, 64, 8, 8), out.shape
    assert bool(jnp.all(jnp.isfinite(out)))
    # sigmoid range (loose tolerance: in-kernel sigmoid uses the approx EUP recip)
    assert bool(jnp.all((out > -1e-3) & (out < 1.0 + 1e-3)))
    print("KERNEL_OK")
</pallas_src>

<mosaic_0001>
module attributes {stable_mosaic.version = 11 : i64} {
  func.func @_conv3x3_relu_kernel(%arg0: i32, %arg1: memref<1x8x8x64xf32, #tpu.memory_space<vmem>>, %arg2: memref<576x128xbf16, #tpu.memory_space<vmem>>, %arg3: memref<1x128xf32, #tpu.memory_space<vmem>>, %arg4: memref<1x8x8x128xf32, #tpu.memory_space<vmem>>, %arg5: memref<3x10x8x64xf32, #tpu.memory_space<vmem>>) attributes {dimension_semantics = [#tpu.dimension_semantics<parallel>], iteration_bounds = array<i64: 2>, scalar_prefetch = 0 : i64, scratch_operands = 1 : i64, tpu.core_type = #tpu.core_type<tc>, window_params = [{transform_indices = @transform_0, window_bounds = array<i64: 1, 8, 8, 64>}, {pipeline_mode = #tpu.pipeline_mode<synchronous>, transform_indices = @transform_1, window_bounds = array<i64: 576, 128>}, {pipeline_mode = #tpu.pipeline_mode<synchronous>, transform_indices = @transform_2, window_bounds = array<i64: 1, 128>}, {transform_indices = @transform_3, window_bounds = array<i64: 1, 8, 8, 128>}]} {
    %c0 = arith.constant 0 : index
    %c0_0 = arith.constant 0 : index
    %c0_1 = arith.constant 0 : index
    %c0_2 = arith.constant 0 : index
    %0 = vector.load %arg1[%c0, %c0_0, %c0_1, %c0_2] : memref<1x8x8x64xf32, #tpu.memory_space<vmem>>, vector<1x8x8x64xf32>
    %1 = vector.shape_cast %0 : vector<1x8x8x64xf32> to vector<8x8x64xf32>
    %c0_3 = arith.constant 0 : index
    %c0_4 = arith.constant 0 : index
    %2 = vector.load %arg3[%c0_3, %c0_4] : memref<1x128xf32, #tpu.memory_space<vmem>>, vector<1x128xf32>
    %c1 = arith.constant 1 : index
    %c1_5 = arith.constant 1 : index
    %c0_6 = arith.constant 0 : index
    %c0_7 = arith.constant 0 : index
    %3 = vector.load %arg5[%c1, %c1_5, %c0_6, %c0_7] : memref<3x10x8x64xf32, #tpu.memory_space<vmem>>, vector<1x8x8x64xf32>
    %4 = vector.shape_cast %3 : vector<1x8x8x64xf32> to vector<8x8x64xf32>
    %5 = vector.shape_cast %1 : vector<8x8x64xf32> to vector<1x8x8x64xf32>
    tpu.vector_store %arg5[%c1, %c1_5, %c0_6, %c0_7], %5 {strides = array<i32>} : memref<3x10x8x64xf32, #tpu.memory_space<vmem>>, vector<1x8x8x64xf32>,
    %6 = vector.extract_strided_slice %1 {offsets = [0, 0, 0], sizes = [8, 7, 64], strides = [1, 1, 1]} : vector<8x8x64xf32> to vector<8x7x64xf32>
    %c0_8 = arith.constant 0 : index
    %c1_9 = arith.constant 1 : index
    %c1_10 = arith.constant 1 : index
    %c0_11 = arith.constant 0 : index
    %7 = vector.load %arg5[%c0_8, %c1_9, %c1_10, %c0_11] : memref<3x10x8x64xf32, #tpu.memory_space<vmem>>, vector<1x8x7x64xf32>
    %8 = vector.shape_cast %7 : vector<1x8x7x64xf32> to vector<8x7x64xf32>
    %9 = vector.shape_cast %6 : vector<8x7x64xf32> to vector<1x8x7x64xf32>
    tpu.vector_store %arg5[%c0_8, %c1_9, %c1_10, %c0_11], %9 {strides = array<i32>} : memref<3x10x8x64xf32, #tpu.memory_space<vmem>>, vector<1x8x7x64xf32>,
    %10 = vector.extract_strided_slice %1 {offsets = [0, 1, 0], sizes = [8, 1, 64], strides = [1, 1, 1]} : vector<8x8x64xf32> to vector<8x1x64xf32>
    %c0_12 = arith.constant 0 : index
    %c1_13 = arith.constant 1 : index
    %c0_14 = arith.constant 0 : index
    %c0_15 = arith.constant 0 : index
    %11 = vector.load %arg5[%c0_12, %c1_13, %c0_14, %c0_15] : memref<3x10x8x64xf32, #tpu.memory_space<vmem>>, vector<1x8x1x64xf32>
    %12 = vector.shape_cast %11 : vector<1x8x1x64xf32> to vector<8x1x64xf32>
    %13 = vector.shape_cast %10 : vector<8x1x64xf32> to vector<1x8x1x64xf32>
    tpu.vector_store %arg5[%c0_12, %c1_13, %c0_14, %c0_15], %13 {strides = array<i32>} : memref<3x10x8x64xf32, #tpu.memory_space<vmem>>, vector<1x8x1x64xf32>,
    %14 = vector.extract_strided_slice %1 {offsets = [0, 1, 0], sizes = [8, 7, 64], strides = [1, 1, 1]} : vector<8x8x64xf32> to vector<8x7x64xf32>
    %c2 = arith.constant 2 : index
    %c1_16 = arith.constant 1 : index
    %c0_17 = arith.constant 0 : index
    %c0_18 = arith.constant 0 : index
    %15 = vector.load %arg5[%c2, %c1_16, %c0_17, %c0_18] : memref<3x10x8x64xf32, #tpu.memory_space<vmem>>, vector<1x8x7x64xf32>
    %16 = vector.shape_cast %15 : vector<1x8x7x64xf32> to vector<8x7x64xf32>
    %17 = vector.shape_cast %14 : vector<8x7x64xf32> to vector<1x8x7x64xf32>
    tpu.vector_store %arg5[%c2, %c1_16, %c0_17, %c0_18], %17 {strides = array<i32>} : memref<3x10x8x64xf32, #tpu.memory_space<vmem>>, vector<1x8x7x64xf32>,
    %18 = vector.extract_strided_slice %1 {offsets = [0, 6, 0], sizes = [8, 1, 64], strides = [1, 1, 1]} : vector<8x8x64xf32> to vector<8x1x64xf32>
    %c2_19 = arith.constant 2 : index
    %c1_20 = arith.constant 1 : index
    %c7 = arith.constant 7 : index
    %c0_21 = arith.constant 0 : index
    %19 = vector.load %arg5[%c2_19, %c1_20, %c7, %c0_21] : memref<3x10x8x64xf32, #tpu.memory_space<vmem>>, vector<1x8x1x64xf32>
    %20 = vector.shape_cast %19 : vector<1x8x1x64xf32> to vector<8x1x64xf32>
    %21 = vector.shape_cast %18 : vector<8x1x64xf32> to vector<1x8x1x64xf32>
    tpu.vector_store %arg5[%c2_19, %c1_20, %c7, %c0_21], %21 {strides = array<i32>} : memref<3x10x8x64xf32, #tpu.memory_space<vmem>>, vector<1x8x1x64xf32>,
    %c0_22 = arith.constant 0 : index
    %c2_23 = arith.constant 2 : index
    %c0_24 = arith.constant 0 : index
    %c0_25 = arith.constant 0 : index
    %22 = vector.load %arg5[%c0_22, %c2_23, %c0_24, %c0_25] : memref<3x10x8x64xf32, #tpu.memory_space<vmem>>, vector<1x1x8x64xf32>
    %23 = vector.shape_cast %22 : vector<1x1x8x64xf32> to vector<8x64xf32>
    %c0_26 = arith.constant 0 : index
    %c0_27 = arith.constant 0 : index
    %c0_28 = arith.constant 0 : index
    %c0_29 = arith.constant 0 : index
    %24 = vector.load %arg5[%c0_26, %c0_27, %c0_28, %c0_29] : memref<3x10x8x64xf32, #tpu.memory_space<vmem>>, vector<1x1x8x64xf32>
    %25 = vector.shape_cast %24 : vector<1x1x8x64xf32> to vector<8x64xf32>
    %26 = vector.shape_cast %23 : vector<8x64xf32> to vector<1x1x8x64xf32>
    tpu.vector_store %arg5[%c0_26, %c0_27, %c0_28, %c0_29], %26 {strides = array<i32>} : memref<3x10x8x64xf32, #tpu.memory_space<vmem>>, vector<1x1x8x64xf32>,
    %c0_30 = arith.constant 0 : index
    %c7_31 = arith.constant 7 : index
    %c0_32 = arith.constant 0 : index
    %c0_33 = arith.constant 0 : index
    %27 = vector.load %arg5[%c0_30, %c7_31, %c0_32, %c0_33] : memref<3x10x8x64xf32, #tpu.memory_space<vmem>>, vector<1x1x8x64xf32>
    %28 = vector.shape_cast %27 : vector<1x1x8x64xf32> to vector<8x64xf32>
    %c0_34 = arith.constant 0 : index
    %c9 = arith.constant 9 : index
    %c0_35 = arith.constant 0 : index
    %c0_36 = arith.constant 0 : index
    %29 = vector.load %arg5[%c0_34, %c9, %c0_35, %c0_36] : memref<3x10x8x64xf32, #tpu.memory_space<vmem>>, vector<1x1x8x64xf32>
    %30 = vector.shape_cast %29 : vector<1x1x8x64xf32> to vector<8x64xf32>
    %31 = vector.shape_cast %28 : vector<8x64xf32> to vector<1x1x8x64xf32>
    tpu.vector_store %arg5[%c0_34, %c9, %c0_35, %c0_36], %31 {strides = array<i32>} : memref<3x10x8x64xf32, #tpu.memory_space<vmem>>, vector<1x1x8x64xf32>,
    %c1_37 = arith.constant 1 : index
    %c2_38 = arith.constant 2 : index
    %c0_39 = arith.constant 0 : index
    %c0_40 = arith.constant 0 : index
    %32 = vector.load %arg5[%c1_37, %c2_38, %c0_39, %c0_40] : memref<3x10x8x64xf32, #tpu.memory_space<vmem>>, vector<1x1x8x64xf32>
    %33 = vector.shape_cast %32 : vector<1x1x8x64xf32> to vector<8x64xf32>
    %c1_41 = arith.constant 1 : index
    %c0_42 = arith.constant 0 : index
    %c0_43 = arith.constant 0 : index
    %c0_44 = arith.constant 0 : index
    %34 = vector.load %arg5[%c1_41, %c0_42, %c0_43, %c0_44] : memref<3x10x8x64xf32, #tpu.memory_space<vmem>>, vector<1x1x8x64xf32>
    %35 = vector.shape_cast %34 : vector<1x1x8x64xf32> to vector<8x64xf32>
    %36 = vector.shape_cast %33 : vector<8x64xf32> to vector<1x1x8x64xf32>
    tpu.vector_store %arg5[%c1_41, %c0_42, %c0_43, %c0_44], %36 {strides = array<i32>} : memref<3x10x8x64xf32, #tpu.memory_space<vmem>>, vector<1x1x8x64xf32>,
    %c1_45 = arith.constant 1 : index
    %c7_46 = arith.constant 7 : index
    %c0_47 = arith.constant 0 : index
    %c0_48 = arith.constant 0 : index
    %37 = vector.load %arg5[%c1_45, %c7_46, %c0_47, %c0_48] : memref<3x10x8x64xf32, #tpu.memory_space<vmem>>, vector<1x1x8x64xf32>
    %38 = vector.shape_cast %37 : vector<1x1x8x64xf32> to vector<8x64xf32>
    %c1_49 = arith.constant 1 : index
    %c9_50 = arith.constant 9 : index
    %c0_51 = arith.constant 0 : index
    %c0_52 = arith.constant 0 : index
    %39 = vector.load %arg5[%c1_49, %c9_50, %c0_51, %c0_52] : memref<3x10x8x64xf32, #tpu.memory_space<vmem>>, vector<1x1x8x64xf32>
    %40 = vector.shape_cast %39 : vector<1x1x8x64xf32> to vector<8x64xf32>
    %41 = vector.shape_cast %38 : vector<8x64xf32> to vector<1x1x8x64xf32>
    tpu.vector_store %arg5[%c1_49, %c9_50, %c0_51, %c0_52], %41 {strides = array<i32>} : memref<3x10x8x64xf32, #tpu.memory_space<vmem>>, vector<1x1x8x64xf32>,
    %c2_53 = arith.constant 2 : index
    %c2_54 = arith.constant 2 : index
    %c0_55 = arith.constant 0 : index
    %c0_56 = arith.constant 0 : index
    %42 = vector.load %arg5[%c2_53, %c2_54, %c0_55, %c0_56] : memref<3x10x8x64xf32, #tpu.memory_space<vmem>>, vector<1x1x8x64xf32>
    %43 = vector.shape_cast %42 : vector<1x1x8x64xf32> to vector<8x64xf32>
    %c2_57 = arith.constant 2 : index
    %c0_58 = arith.constant 0 : index
    %c0_59 = arith.constant 0 : index
    %c0_60 = arith.constant 0 : index
    %44 = vector.load %arg5[%c2_57, %c0_58, %c0_59, %c0_60] : memref<3x10x8x64xf32, #tpu.memory_space<vmem>>, vector<1x1x8x64xf32>
    %45 = vector.shape_cast %44 : vector<1x1x8x64xf32> to vector<8x64xf32>
    %46 = vector.shape_cast %43 : vector<8x64xf32> to vector<1x1x8x64xf32>
    tpu.vector_store %arg5[%c2_57, %c0_58, %c0_59, %c0_60], %46 {strides = array<i32>} : memref<3x10x8x64xf32, #tpu.memory_space<vmem>>, vector<1x1x8x64xf32>,
    %c2_61 = arith.constant 2 : index
    %c7_62 = arith.constant 7 : index
    %c0_63 = arith.constant 0 : index
    %c0_64 = arith.constant 0 : index
    %47 = vector.load %arg5[%c2_61, %c7_62, %c0_63, %c0_64] : memref<3x10x8x64xf32, #tpu.memory_space<vmem>>, vector<1x1x8x64xf32>
    %48 = vector.shape_cast %47 : vector<1x1x8x64xf32> to vector<8x64xf32>
    %c2_65 = arith.constant 2 : index
    %c9_66 = arith.constant 9 : index
    %c0_67 = arith.constant 0 : index
    %c0_68 = arith.constant 0 : index
    %49 = vector.load %arg5[%c2_65, %c9_66, %c0_67, %c0_68] : memref<3x10x8x64xf32, #tpu.memory_space<vmem>>, vector<1x1x8x64xf32>
    %50 = vector.shape_cast %49 : vector<1x1x8x64xf32> to vector<8x64xf32>
    %51 = vector.shape_cast %48 : vector<8x64xf32> to vector<1x1x8x64xf32>
    tpu.vector_store %arg5[%c2_65, %c9_66, %c0_67, %c0_68], %51 {strides = array<i32>} : memref<3x10x8x64xf32, #tpu.memory_space<vmem>>, vector<1x1x8x64xf32>,
    %c0_69 = arith.constant 0 : index
    %c0_70 = arith.constant 0 : index
    %c0_71 = arith.constant 0 : index
    %c0_72 = arith.constant 0 : index
    %52 = vector.load %arg5[%c0_69, %c0_70, %c0_71, %c0_72] : memref<3x10x8x64xf32, #tpu.memory_space<vmem>>, vector<1x8x8x64xf32>
    %53 = vector.shape_cast %52 : vector<1x8x8x64xf32> to vector<8x8x64xf32>
    %54 = vector.shape_cast %53 : vector<8x8x64xf32> to vector<64x64xf32>
    %55 = arith.truncf %54 : vector<64x64xf32> to vector<64x64xbf16>
    %c0_73 = arith.constant 0 : index
    %c0_74 = arith.constant 0 : index
    %56 = vector.load %arg2[%c0_73, %c0_74] : memref<576x128xbf16, #tpu.memory_space<vmem>>, vector<64x128xbf16>
    %cst = arith.constant dense<0.000000e+00> : vector<64x128xf32>
    %57 = tpu.matmul %55, %56, %cst {dimension_numbers = #tpu.dot_dimension_numbers<[1], [0], [0], [1], [0, 0, 1, 1], [], []>} : vector<64x64xbf16>, vector<64x128xbf16>, vector<64x128xf32> -> vector<64x128xf32>
    %c1_75 = arith.constant 1 : index
    %c0_76 = arith.constant 0 : index
    %c0_77 = arith.constant 0 : index
    %c0_78 = arith.constant 0 : index
    %58 = vector.load %arg5[%c1_75, %c0_76, %c0_77, %c0_78] : memref<3x10x8x64xf32, #tpu.memory_space<vmem>>, vector<1x8x8x64xf32>
    %59 = vector.shape_cast %58 : vector<1x8x8x64xf32> to vector<8x8x64xf32>
    %60 = vector.shape_cast %59 : vector<8x8x64xf32> to vector<64x64xf32>
    %61 = arith.truncf %60 : vector<64x64xf32> to vector<64x64xbf16>
    %c64 = arith.constant 64 : index
    %c0_79 = arith.constant 0 : index
    %62 = vector.load %arg2[%c64, %c0_79] : memref<576x128xbf16, #tpu.memory_space<vmem>>, vector<64x128xbf16>
    %cst_80 = arith.constant dense<0.000000e+00> : vector<64x128xf32>
    %63 = tpu.matmul %61, %62, %cst_80 {dimension_numbers = #tpu.dot_dimension_numbers<[1], [0], [0], [1], [0, 0, 1, 1], [], []>} : vector<64x64xbf16>, vector<64x128xbf16>, vector<64x128xf32> -> vector<64x128xf32>
    %64 = arith.addf %57, %63 : vector<64x128xf32>
    %c2_81 = arith.constant 2 : index
    %c0_82 = arith.constant 0 : index
    %c0_83 = arith.constant 0 : index
    %c0_84 = arith.constant 0 : index
    %65 = vector.load %arg5[%c2_81, %c0_82, %c0_83, %c0_84] : memref<3x10x8x64xf32, #tpu.memory_space<vmem>>, vector<1x8x8x64xf32>
    %66 = vector.shape_cast %65 : vector<1x8x8x64xf32> to vector<8x8x64xf32>
    %67 = vector.shape_cast %66 : vector<8x8x64xf32> to vector<64x64xf32>
    %68 = arith.truncf %67 : vector<64x64xf32> to vector<64x64xbf16>
    %c128 = arith.constant 128 : index
    %c0_85 = arith.constant 0 : index
    %69 = vector.load %arg2[%c128, %c0_85] : memref<576x128xbf16, #tpu.memory_space<vmem>>, vector<64x128xbf16>
    %cst_86 = arith.constant dense<0.000000e+00> : vector<64x128xf32>
    %70 = tpu.matmul %68, %69, %cst_86 {dimension_numbers = #tpu.dot_dimension_numbers<[1], [0], [0], [1], [0, 0, 1, 1], [], []>} : vector<64x64xbf16>, vector<64x128xbf16>, vector<64x128xf32> -> vector<64x128xf32>
    %71 = arith.addf %64, %70 : vector<64x128xf32>
    %c0_87 = arith.constant 0 : index
    %c1_88 = arith.constant 1 : index
    %c0_89 = arith.constant 0 : index
    %c0_90 = arith.constant 0 : index
    %72 = vector.load %arg5[%c0_87, %c1_88, %c0_89, %c0_90] : memref<3x10x8x64xf32, #tpu.memory_space<vmem>>, vector<1x8x8x64xf32>
    %73 = vector.shape_cast %72 : vector<1x8x8x64xf32> to vector<8x8x64xf32>
    %74 = vector.shape_cast %73 : vector<8x8x64xf32> to vector<64x64xf32>
    %75 = arith.truncf %74 : vector<64x64xf32> to vector<64x64xbf16>
    %c192 = arith.constant 192 : index
    %c0_91 = arith.constant 0 : index
    %76 = vector.load %arg2[%c192, %c0_91] : memref<576x128xbf16, #tpu.memory_space<vmem>>, vector<64x128xbf16>
    %cst_92 = arith.constant dense<0.000000e+00> : vector<64x128xf32>
    %77 = tpu.matmul %75, %76, %cst_92 {dimension_numbers = #tpu.dot_dimension_numbers<[1], [0], [0], [1], [0, 0, 1, 1], [], []>} : vector<64x64xbf16>, vector<64x128xbf16>, vector<64x128xf32> -> vector<64x128xf32>
    %78 = arith.addf %71, %77 : vector<64x128xf32>
    %c1_93 = arith.constant 1 : index
    %c1_94 = arith.constant 1 : index
    %c0_95 = arith.constant 0 : index
    %c0_96 = arith.constant 0 : index
    %79 = vector.load %arg5[%c1_93, %c1_94, %c0_95, %c0_96] : memref<3x10x8x64xf32, #tpu.memory_space<vmem>>, vector<1x8x8x64xf32>
    %80 = vector.shape_cast %79 : vector<1x8x8x64xf32> to vector<8x8x64xf32>
    %81 = vector.shape_cast %80 : vector<8x8x64xf32> to vector<64x64xf32>
    %82 = arith.truncf %81 : vector<64x64xf32> to vector<64x64xbf16>
    %c256 = arith.constant 256 : index
    %c0_97 = arith.constant 0 : index
    %83 = vector.load %arg2[%c256, %c0_97] : memref<576x128xbf16, #tpu.memory_space<vmem>>, vector<64x128xbf16>
    %cst_98 = arith.constant dense<0.000000e+00> : vector<64x128xf32>
    %84 = tpu.matmul %82, %83, %cst_98 {dimension_numbers = #tpu.dot_dimension_numbers<[1], [0], [0], [1], [0, 0, 1, 1], [], []>} : vector<64x64xbf16>, vector<64x128xbf16>, vector<64x128xf32> -> vector<64x128xf32>
    %85 = arith.addf %78, %84 : vector<64x128xf32>
    %c2_99 = arith.constant 2 : index
    %c1_100 = arith.constant 1 : index
    %c0_101 = arith.constant 0 : index
    %c0_102 = arith.constant 0 : index
    %86 = vector.load %arg5[%c2_99, %c1_100, %c0_101, %c0_102] : memref<3x10x8x64xf32, #tpu.memory_space<vmem>>, vector<1x8x8x64xf32>
    %87 = vector.shape_cast %86 : vector<1x8x8x64xf32> to vector<8x8x64xf32>
    %88 = vector.shape_cast %87 : vector<8x8x64xf32> to vector<64x64xf32>
    %89 = arith.truncf %88 : vector<64x64xf32> to vector<64x64xbf16>
    %c320 = arith.constant 320 : index
    %c0_103 = arith.constant 0 : index
    %90 = vector.load %arg2[%c320, %c0_103] : memref<576x128xbf16, #tpu.memory_space<vmem>>, vector<64x128xbf16>
    %cst_104 = arith.constant dense<0.000000e+00> : vector<64x128xf32>
    %91 = tpu.matmul %89, %90, %cst_104 {dimension_numbers = #tpu.dot_dimension_numbers<[1], [0], [0], [1], [0, 0, 1, 1], [], []>} : vector<64x64xbf16>, vector<64x128xbf16>, vector<64x128xf32> -> vector<64x128xf32>
    %92 = arith.addf %85, %91 : vector<64x128xf32>
    %c0_105 = arith.constant 0 : index
    %c2_106 = arith.constant 2 : index
    %c0_107 = arith.constant 0 : index
    %c0_108 = arith.constant 0 : index
    %93 = vector.load %arg5[%c0_105, %c2_106, %c0_107, %c0_108] : memref<3x10x8x64xf32, #tpu.memory_space<vmem>>, vector<1x8x8x64xf32>
    %94 = vector.shape_cast %93 : vector<1x8x8x64xf32> to vector<8x8x64xf32>
    %95 = vector.shape_cast %94 : vector<8x8x64xf32> to vector<64x64xf32>
    %96 = arith.truncf %95 : vector<64x64xf32> to vector<64x64xbf16>
    %c384 = arith.constant 384 : index
    %c0_109 = arith.constant 0 : index
    %97 = vector.load %arg2[%c384, %c0_109] : memref<576x128xbf16, #tpu.memory_space<vmem>>, vector<64x128xbf16>
    %cst_110 = arith.constant dense<0.000000e+00> : vector<64x128xf32>
    %98 = tpu.matmul %96, %97, %cst_110 {dimension_numbers = #tpu.dot_dimension_numbers<[1], [0], [0], [1], [0, 0, 1, 1], [], []>} : vector<64x64xbf16>, vector<64x128xbf16>, vector<64x128xf32> -> vector<64x128xf32>
    %99 = arith.addf %92, %98 : vector<64x128xf32>
    %c1_111 = arith.constant 1 : index
    %c2_112 = arith.constant 2 : index
    %c0_113 = arith.constant 0 : index
    %c0_114 = arith.constant 0 : index
    %100 = vector.load %arg5[%c1_111, %c2_112, %c0_113, %c0_114] : memref<3x10x8x64xf32, #tpu.memory_space<vmem>>, vector<1x8x8x64xf32>
    %101 = vector.shape_cast %100 : vector<1x8x8x64xf32> to vector<8x8x64xf32>
    %102 = vector.shape_cast %101 : vector<8x8x64xf32> to vector<64x64xf32>
    %103 = arith.truncf %102 : vector<64x64xf32> to vector<64x64xbf16>
    %c448 = arith.constant 448 : index
    %c0_115 = arith.constant 0 : index
    %104 = vector.load %arg2[%c448, %c0_115] : memref<576x128xbf16, #tpu.memory_space<vmem>>, vector<64x128xbf16>
    %cst_116 = arith.constant dense<0.000000e+00> : vector<64x128xf32>
    %105 = tpu.matmul %103, %104, %cst_116 {dimension_numbers = #tpu.dot_dimension_numbers<[1], [0], [0], [1], [0, 0, 1, 1], [], []>} : vector<64x64xbf16>, vector<64x128xbf16>, vector<64x128xf32> -> vector<64x128xf32>
    %106 = arith.addf %99, %105 : vector<64x128xf32>
    %c2_117 = arith.constant 2 : index
    %c2_118 = arith.constant 2 : index
    %c0_119 = arith.constant 0 : index
    %c0_120 = arith.constant 0 : index
    %107 = vector.load %arg5[%c2_117, %c2_118, %c0_119, %c0_120] : memref<3x10x8x64xf32, #tpu.memory_space<vmem>>, vector<1x8x8x64xf32>
    %108 = vector.shape_cast %107 : vector<1x8x8x64xf32> to vector<8x8x64xf32>
    %109 = vector.shape_cast %108 : vector<8x8x64xf32> to vector<64x64xf32>
    %110 = arith.truncf %109 : vector<64x64xf32> to vector<64x64xbf16>
    %c512 = arith.constant 512 : index
    %c0_121 = arith.constant 0 : index
    %111 = vector.load %arg2[%c512, %c0_121] : memref<576x128xbf16, #tpu.memory_space<vmem>>, vector<64x128xbf16>
    %cst_122 = arith.constant dense<0.000000e+00> : vector<64x128xf32>
    %112 = tpu.matmul %110, %111, %cst_122 {dimension_numbers = #tpu.dot_dimension_numbers<[1], [0], [0], [1], [0, 0, 1, 1], [], []>} : vector<64x64xbf16>, vector<64x128xbf16>, vector<64x128xf32> -> vector<64x128xf32>
    %113 = arith.addf %106, %112 : vector<64x128xf32>
    %114 = vector.broadcast %2 : vector<1x128xf32> to vector<64x128xf32>
    %115 = arith.addf %113, %114 : vector<64x128xf32>
    %cst_123 = arith.constant 0.000000e+00 : f32
    %116 = vector.broadcast %cst_123 : f32 to vector<64x128xf32>
    %117 = arith.maximumf %115, %116 : vector<64x128xf32>
    %118 = vector.shape_cast %117 : vector<64x128xf32> to vector<8x8x128xf32>
    %c0_124 = arith.constant 0 : index
    %c0_125 = arith.constant 0 : index
    %c0_126 = arith.constant 0 : index
    %c0_127 = arith.constant 0 : index
    %119 = vector.load %arg4[%c0_124, %c0_125, %c0_126, %c0_127] : memref<1x8x8x128xf32, #tpu.memory_space<vmem>>, vector<1x8x8x128xf32>
    %120 = vector.shape_cast %119 : vector<1x8x8x128xf32> to vector<8x8x128xf32>
    %121 = vector.shape_cast %118 : vector<8x8x128xf32> to vector<1x8x8x128xf32>
    tpu.vector_store %arg4[%c0_124, %c0_125, %c0_126, %c0_127], %121 {strides = array<i32>} : memref<1x8x8x128xf32, #tpu.memory_space<vmem>>, vector<1x8x8x128xf32>,
    return
  }
  func.func @transform_0(%arg0: i32) -> (i32, i32, i32, i32) {
    %c0_i32 = arith.constant 0 : i32
    %c0_i32_0 = arith.constant 0 : i32
    %c0_i32_1 = arith.constant 0 : i32
    %c0_i32_2 = arith.constant 0 : i32
    return %arg0, %c0_i32, %c0_i32_0, %c0_i32_1 : i32, i32, i32, i32
  }
  func.func @transform_1(%arg0: i32) -> (i32, i32) {
    %c0_i32 = arith.constant 0 : i32
    %c0_i32_0 = arith.constant 0 : i32
    %c0_i32_1 = arith.constant 0 : i32
    return %c0_i32, %c0_i32_0 : i32, i32
  }
  func.func @transform_2(%arg0: i32) -> (i32, i32) {
    %c0_i32 = arith.constant 0 : i32
    %c0_i32_0 = arith.constant 0 : i32
    %c0_i32_1 = arith.constant 0 : i32
    return %c0_i32, %c0_i32_0 : i32, i32
  }
  func.func @transform_3(%arg0: i32) -> (i32, i32, i32, i32) {
    %c0_i32 = arith.constant 0 : i32
    %c0_i32_0 = arith.constant 0 : i32
    %c0_i32_1 = arith.constant 0 : i32
    %c0_i32_2 = arith.constant 0 : i32
    return %arg0, %c0_i32, %c0_i32_0, %c0_i32_1 : i32, i32, i32, i32
  }
}

module attributes {stable_mosaic.version = 11 : i64} {
  func.func @_stnres_tail_kernel(%arg0: i32, %arg1: memref<1x8x8x128xf32, #tpu.memory_space<vmem>>, %arg2: memref<1x64x64xf32, #tpu.memory_space<vmem>>, %arg3: memref<1152x128xbf16, #tpu.memory_space<vmem>>, %arg4: memref<1x128xf32, #tpu.memory_space<vmem>>, %arg5: memref<1x128xf32, #tpu.memory_space<vmem>>, %arg6: memref<1x128xf32, #tpu.memory_space<vmem>>, %arg7: memref<1152x128xbf16, #tpu.memory_space<vmem>>, %arg8: memref<1x128xf32, #tpu.memory_space<vmem>>, %arg9: memref<1x128xf32, #tpu.memory_space<vmem>>, %arg10: memref<1x128xf32, #tpu.memory_space<vmem>>, %arg11: memref<1152x128xbf16, #tpu.memory_space<vmem>>, %arg12: memref<1x128xf32, #tpu.memory_space<vmem>>, %arg13: memref<1x8x8x128xf32, #tpu.memory_space<vmem>>, %arg14: memref<3x10x8x128xf32, #tpu.memory_space<vmem>>) attributes {dimension_semantics = [#tpu.dimension_semantics<parallel>], iteration_bounds = array<i64: 2>, scalar_prefetch = 0 : i64, scratch_operands = 1 : i64, tpu.core_type = #tpu.core_type<tc>, window_params = [{transform_indices = @transform_0, window_bounds = array<i64: 1, 8, 8, 128>}, {transform_indices = @transform_1, window_bounds = array<i64: 1, 64, 64>}, {pipeline_mode = #tpu.pipeline_mode<synchronous>, transform_indices = @transform_2, window_bounds = array<i64: 1152, 128>}, {pipeline_mode = #tpu.pipeline_mode<synchronous>, transform_indices = @transform_3, window_bounds = array<i64: 1, 128>}, {pipeline_mode = #tpu.pipeline_mode<synchronous>, transform_indices = @transform_4, window_bounds = array<i64: 1, 128>}, {pipeline_mode = #tpu.pipeline_mode<synchronous>, transform_indices = @transform_5, window_bounds = array<i64: 1, 128>}, {pipeline_mode = #tpu.pipeline_mode<synchronous>, transform_indices = @transform_6, window_bounds = array<i64: 1152, 128>}, {pipeline_mode = #tpu.pipeline_mode<synchronous>, transform_indices = @transform_7, window_bounds = array<i64: 1, 128>}, {pipeline_mode = #tpu.pipeline_mode<synchronous>, transform_indices = @transform_8, window_bounds = array<i64: 1, 128>}, {pipeline_mode = #tpu.pipeline_mode<synchronous>, transform_indices = @transform_9, window_bounds = array<i64: 1, 128>}, {pipeline_mode = #tpu.pipeline_mode<synchronous>, transform_indices = @transform_10, window_bounds = array<i64: 1152, 128>}, {pipeline_mode = #tpu.pipeline_mode<synchronous>, transform_indices = @transform_11, window_bounds = array<i64: 1, 128>}, {transform_indices = @transform_12, window_bounds = array<i64: 1, 8, 8, 128>}]} {
    %c0 = arith.constant 0 : index
    %c0_0 = arith.constant 0 : index
    %c0_1 = arith.constant 0 : index
    %c0_2 = arith.constant 0 : index
    %0 = vector.load %arg1[%c0, %c0_0, %c0_1, %c0_2] : memref<1x8x8x128xf32, #tpu.memory_space<vmem>>, vector<1x8x8x128xf32>
    %1 = vector.shape_cast %0 : vector<1x8x8x128xf32> to vector<8x8x128xf32>
    %2 = vector.shape_cast %1 : vector<8x8x128xf32> to vector<64x128xf32>
    %c0_3 = arith.constant 0 : index
    %c0_4 = arith.constant 0 : index
    %c0_5 = arith.constant 0 : index
    %3 = vector.load %arg2[%c0_3, %c0_4, %c0_5] : memref<1x64x64xf32, #tpu.memory_space<vmem>>, vector<1x64x64xf32>
    %4 = vector.shape_cast %3 : vector<1x64x64xf32> to vector<64x64xf32>
    %cst = arith.constant dense<0.000000e+00> : vector<64x128xf32>
    %5 = tpu.matmul %4, %2, %cst {dimension_numbers = #tpu.dot_dimension_numbers<[1], [0], [0], [1], [0, 0, 1, 1], [], []>} : vector<64x64xf32>, vector<64x128xf32>, vector<64x128xf32> -> vector<64x128xf32>
    %6 = vector.shape_cast %5 : vector<64x128xf32> to vector<8x8x128xf32>
    %c0_6 = arith.constant 0 : index
    %c0_7 = arith.constant 0 : index
    %7 = vector.load %arg4[%c0_6, %c0_7] : memref<1x128xf32, #tpu.memory_space<vmem>>, vector<1x128xf32>
    %c1 = arith.constant 1 : index
    %c1_8 = arith.constant 1 : index
    %c0_9 = arith.constant 0 : index
    %c0_10 = arith.constant 0 : index
    %8 = vector.load %arg14[%c1, %c1_8, %c0_9, %c0_10] : memref<3x10x8x128xf32, #tpu.memory_space<vmem>>, vector<1x8x8x128xf32>
    %9 = vector.shape_cast %8 : vector<1x8x8x128xf32> to vector<8x8x128xf32>
    %10 = vector.shape_cast %6 : vector<8x8x128xf32> to vector<1x8x8x128xf32>
    tpu.vector_store %arg14[%c1, %c1_8, %c0_9, %c0_10], %10 {strides = array<i32>} : memref<3x10x8x128xf32, #tpu.memory_space<vmem>>, vector<1x8x8x128xf32>,
    %11 = vector.extract_strided_slice %6 {offsets = [0, 0, 0], sizes = [8, 7, 128], strides = [1, 1, 1]} : vector<8x8x128xf32> to vector<8x7x128xf32>
    %c0_11 = arith.constant 0 : index
    %c1_12 = arith.constant 1 : index
    %c1_13 = arith.constant 1 : index
    %c0_14 = arith.constant 0 : index
    %12 = vector.load %arg14[%c0_11, %c1_12, %c1_13, %c0_14] : memref<3x10x8x128xf32, #tpu.memory_space<vmem>>, vector<1x8x7x128xf32>
    %13 = vector.shape_cast %12 : vector<1x8x7x128xf32> to vector<8x7x128xf32>
    %14 = vector.shape_cast %11 : vector<8x7x128xf32> to vector<1x8x7x128xf32>
    tpu.vector_store %arg14[%c0_11, %c1_12, %c1_13, %c0_14], %14 {strides = array<i32>} : memref<3x10x8x128xf32, #tpu.memory_space<vmem>>, vector<1x8x7x128xf32>,
    %15 = vector.extract_strided_slice %6 {offsets = [0, 1, 0], sizes = [8, 1, 128], strides = [1, 1, 1]} : vector<8x8x128xf32> to vector<8x1x128xf32>
    %c0_15 = arith.constant 0 : index
    %c1_16 = arith.constant 1 : index
    %c0_17 = arith.constant 0 : index
    %c0_18 = arith.constant 0 : index
    %16 = vector.load %arg14[%c0_15, %c1_16, %c0_17, %c0_18] : memref<3x10x8x128xf32, #tpu.memory_space<vmem>>, vector<1x8x1x128xf32>
    %17 = vector.shape_cast %16 : vector<1x8x1x128xf32> to vector<8x1x128xf32>
    %18 = vector.shape_cast %15 : vector<8x1x128xf32> to vector<1x8x1x128xf32>
    tpu.vector_store %arg14[%c0_15, %c1_16, %c0_17, %c0_18], %18 {strides = array<i32>} : memref<3x10x8x128xf32, #tpu.memory_space<vmem>>, vector<1x8x1x128xf32>,
    %19 = vector.extract_strided_slice %6 {offsets = [0, 1, 0], sizes = [8, 7, 128], strides = [1, 1, 1]} : vector<8x8x128xf32> to vector<8x7x128xf32>
    %c2 = arith.constant 2 : index
    %c1_19 = arith.constant 1 : index
    %c0_20 = arith.constant 0 : index
    %c0_21 = arith.constant 0 : index
    %20 = vector.load %arg14[%c2, %c1_19, %c0_20, %c0_21] : memref<3x10x8x128xf32, #tpu.memory_space<vmem>>, vector<1x8x7x128xf32>
    %21 = vector.shape_cast %20 : vector<1x8x7x128xf32> to vector<8x7x128xf32>
    %22 = vector.shape_cast %19 : vector<8x7x128xf32> to vector<1x8x7x128xf32>
    tpu.vector_store %arg14[%c2, %c1_19, %c0_20, %c0_21], %22 {strides = array<i32>} : memref<3x10x8x128xf32, #tpu.memory_space<vmem>>, vector<1x8x7x128xf32>,
    %23 = vector.extract_strided_slice %6 {offsets = [0, 6, 0], sizes = [8, 1, 128], strides = [1, 1, 1]} : vector<8x8x128xf32> to vector<8x1x128xf32>
    %c2_22 = arith.constant 2 : index
    %c1_23 = arith.constant 1 : index
    %c7 = arith.constant 7 : index
    %c0_24 = arith.constant 0 : index
    %24 = vector.load %arg14[%c2_22, %c1_23, %c7, %c0_24] : memref<3x10x8x128xf32, #tpu.memory_space<vmem>>, vector<1x8x1x128xf32>
    %25 = vector.shape_cast %24 : vector<1x8x1x128xf32> to vector<8x1x128xf32>
    %26 = vector.shape_cast %23 : vector<8x1x128xf32> to vector<1x8x1x128xf32>
    tpu.vector_store %arg14[%c2_22, %c1_23, %c7, %c0_24], %26 {strides = array<i32>} : memref<3x10x8x128xf32, #tpu.memory_space<vmem>>, vector<1x8x1x128xf32>,
    %c0_25 = arith.constant 0 : index
    %c2_26 = arith.constant 2 : index
    %c0_27 = arith.constant 0 : index
    %c0_28 = arith.constant 0 : index
    %27 = vector.load %arg14[%c0_25, %c2_26, %c0_27, %c0_28] : memref<3x10x8x128xf32, #tpu.memory_space<vmem>>, vector<1x1x8x128xf32>
    %28 = vector.shape_cast %27 : vector<1x1x8x128xf32> to vector<8x128xf32>
    %c0_29 = arith.constant 0 : index
    %c0_30 = arith.constant 0 : index
    %c0_31 = arith.constant 0 : index
    %c0_32 = arith.constant 0 : index
    %29 = vector.load %arg14[%c0_29, %c0_30, %c0_31, %c0_32] : memref<3x10x8x128xf32, #tpu.memory_space<vmem>>, vector<1x1x8x128xf32>
    %30 = vector.shape_cast %29 : vector<1x1x8x128xf32> to vector<8x128xf32>
    %31 = vector.shape_cast %28 : vector<8x128xf32> to vector<1x1x8x128xf32>
    tpu.vector_store %arg14[%c0_29, %c0_30, %c0_31, %c0_32], %31 {strides = array<i32>} : memref<3x10x8x128xf32, #tpu.memory_space<vmem>>, vector<1x1x8x128xf32>,
    %c0_33 = arith.constant 0 : index
    %c7_34 = arith.constant 7 : index
    %c0_35 = arith.constant 0 : index
    %c0_36 = arith.constant 0 : index
    %32 = vector.load %arg14[%c0_33, %c7_34, %c0_35, %c0_36] : memref<3x10x8x128xf32, #tpu.memory_space<vmem>>, vector<1x1x8x128xf32>
    %33 = vector.shape_cast %32 : vector<1x1x8x128xf32> to vector<8x128xf32>
    %c0_37 = arith.constant 0 : index
    %c9 = arith.constant 9 : index
    %c0_38 = arith.constant 0 : index
    %c0_39 = arith.constant 0 : index
    %34 = vector.load %arg14[%c0_37, %c9, %c0_38, %c0_39] : memref<3x10x8x128xf32, #tpu.memory_space<vmem>>, vector<1x1x8x128xf32>
    %35 = vector.shape_cast %34 : vector<1x1x8x128xf32> to vector<8x128xf32>
    %36 = vector.shape_cast %33 : vector<8x128xf32> to vector<1x1x8x128xf32>
    tpu.vector_store %arg14[%c0_37, %c9, %c0_38, %c0_39], %36 {strides = array<i32>} : memref<3x10x8x128xf32, #tpu.memory_space<vmem>>, vector<1x1x8x128xf32>,
    %c1_40 = arith.constant 1 : index
    %c2_41 = arith.constant 2 : index
    %c0_42 = arith.constant 0 : index
    %c0_43 = arith.constant 0 : index
    %37 = vector.load %arg14[%c1_40, %c2_41, %c0_42, %c0_43] : memref<3x10x8x128xf32, #tpu.memory_space<vmem>>, vector<1x1x8x128xf32>
    %38 = vector.shape_cast %37 : vector<1x1x8x128xf32> to vector<8x128xf32>
    %c1_44 = arith.constant 1 : index
    %c0_45 = arith.constant 0 : index
    %c0_46 = arith.constant 0 : index
    %c0_47 = arith.constant 0 : index
    %39 = vector.load %arg14[%c1_44, %c0_45, %c0_46, %c0_47] : memref<3x10x8x128xf32, #tpu.memory_space<vmem>>, vector<1x1x8x128xf32>
    %40 = vector.shape_cast %39 : vector<1x1x8x128xf32> to vector<8x128xf32>
    %41 = vector.shape_cast %38 : vector<8x128xf32> to vector<1x1x8x128xf32>
    tpu.vector_store %arg14[%c1_44, %c0_45, %c0_46, %c0_47], %41 {strides = array<i32>} : memref<3x10x8x128xf32, #tpu.memory_space<vmem>>, vector<1x1x8x128xf32>,
    %c1_48 = arith.constant 1 : index
    %c7_49 = arith.constant 7 : index
    %c0_50 = arith.constant 0 : index
    %c0_51 = arith.constant 0 : index
    %42 = vector.load %arg14[%c1_48, %c7_49, %c0_50, %c0_51] : memref<3x10x8x128xf32, #tpu.memory_space<vmem>>, vector<1x1x8x128xf32>
    %43 = vector.shape_cast %42 : vector<1x1x8x128xf32> to vector<8x128xf32>
    %c1_52 = arith.constant 1 : index
    %c9_53 = arith.constant 9 : index
    %c0_54 = arith.constant 0 : index
    %c0_55 = arith.constant 0 : index
    %44 = vector.load %arg14[%c1_52, %c9_53, %c0_54, %c0_55] : memref<3x10x8x128xf32, #tpu.memory_space<vmem>>, vector<1x1x8x128xf32>
    %45 = vector.shape_cast %44 : vector<1x1x8x128xf32> to vector<8x128xf32>
    %46 = vector.shape_cast %43 : vector<8x128xf32> to vector<1x1x8x128xf32>
    tpu.vector_store %arg14[%c1_52, %c9_53, %c0_54, %c0_55], %46 {strides = array<i32>} : memref<3x10x8x128xf32, #tpu.memory_space<vmem>>, vector<1x1x8x128xf32>,
    %c2_56 = arith.constant 2 : index
    %c2_57 = arith.constant 2 : index
    %c0_58 = arith.constant 0 : index
    %c0_59 = arith.constant 0 : index
    %47 = vector.load %arg14[%c2_56, %c2_57, %c0_58, %c0_59] : memref<3x10x8x128xf32, #tpu.memory_space<vmem>>, vector<1x1x8x128xf32>
    %48 = vector.shape_cast %47 : vector<1x1x8x128xf32> to vector<8x128xf32>
    %c2_60 = arith.constant 2 : index
    %c0_61 = arith.constant 0 : index
    %c0_62 = arith.constant 0 : index
    %c0_63 = arith.constant 0 : index
    %49 = vector.load %arg14[%c2_60, %c0_61, %c0_62, %c0_63] : memref<3x10x8x128xf32, #tpu.memory_space<vmem>>, vector<1x1x8x128xf32>
    %50 = vector.shape_cast %49 : vector<1x1x8x128xf32> to vector<8x128xf32>
    %51 = vector.shape_cast %48 : vector<8x128xf32> to vector<1x1x8x128xf32>
    tpu.vector_store %arg14[%c2_60, %c0_61, %c0_62, %c0_63], %51 {strides = array<i32>} : memref<3x10x8x128xf32, #tpu.memory_space<vmem>>, vector<1x1x8x128xf32>,
    %c2_64 = arith.constant 2 : index
    %c7_65 = arith.constant 7 : index
    %c0_66 = arith.constant 0 : index
    %c0_67 = arith.constant 0 : index
    %52 = vector.load %arg14[%c2_64, %c7_65, %c0_66, %c0_67] : memref<3x10x8x128xf32, #tpu.memory_space<vmem>>, vector<1x1x8x128xf32>
    %53 = vector.shape_cast %52 : vector<1x1x8x128xf32> to vector<8x128xf32>
    %c2_68 = arith.constant 2 : index
    %c9_69 = arith.constant 9 : index
    %c0_70 = arith.constant 0 : index
    %c0_71 = arith.constant 0 : index
    %54 = vector.load %arg14[%c2_68, %c9_69, %c0_70, %c0_71] : memref<3x10x8x128xf32, #tpu.memory_space<vmem>>, vector<1x1x8x128xf32>
    %55 = vector.shape_cast %54 : vector<1x1x8x128xf32> to vector<8x128xf32>
    %56 = vector.shape_cast %53 : vector<8x128xf32> to vector<1x1x8x128xf32>
    tpu.vector_store %arg14[%c2_68, %c9_69, %c0_70, %c0_71], %56 {strides = array<i32>} : memref<3x10x8x128xf32, #tpu.memory_space<vmem>>, vector<1x1x8x128xf32>,
    %c0_72 = arith.constant 0 : index
    %c0_73 = arith.constant 0 : index
    %c0_74 = arith.constant 0 : index
    %c0_75 = arith.constant 0 : index
    %57 = vector.load %arg14[%c0_72, %c0_73, %c0_74, %c0_75] : memref<3x10x8x128xf32, #tpu.memory_space<vmem>>, vector<1x8x8x128xf32>
    %58 = vector.shape_cast %57 : vector<1x8x8x128xf32> to vector<8x8x128xf32>
    %59 = vector.shape_cast %58 : vector<8x8x128xf32> to vector<64x128xf32>
    %60 = arith.truncf %59 : vector<64x128xf32> to vector<64x128xbf16>
    %c0_76 = arith.constant 0 : index
    %c0_77 = arith.constant 0 : index
    %61 = vector.load %arg3[%c0_76, %c0_77] : memref<1152x128xbf16, #tpu.memory_space<vmem>>, vector<128x128xbf16>
    %cst_78 = arith.constant dense<0.000000e+00> : vector<64x128xf32>
    %62 = tpu.matmul %60, %61, %cst_78 {dimension_numbers = #tpu.dot_dimension_numbers<[1], [0], [0], [1], [0, 0, 1, 1], [], []>} : vector<64x128xbf16>, vector<128x128xbf16>, vector<64x128xf32> -> vector<64x128xf32>
    %c1_79 = arith.constant 1 : index
    %c0_80 = arith.constant 0 : index
    %c0_81 = arith.constant 0 : index
    %c0_82 = arith.constant 0 : index
    %63 = vector.load %arg14[%c1_79, %c0_80, %c0_81, %c0_82] : memref<3x10x8x128xf32, #tpu.memory_space<vmem>>, vector<1x8x8x128xf32>
    %64 = vector.shape_cast %63 : vector<1x8x8x128xf32> to vector<8x8x128xf32>
    %65 = vector.shape_cast %64 : vector<8x8x128xf32> to vector<64x128xf32>
    %66 = arith.truncf %65 : vector<64x128xf32> to vector<64x128xbf16>
    %c128 = arith.constant 128 : index
    %c0_83 = arith.constant 0 : index
    %67 = vector.load %arg3[%c128, %c0_83] : memref<1152x128xbf16, #tpu.memory_space<vmem>>, vector<128x128xbf16>
    %cst_84 = arith.constant dense<0.000000e+00> : vector<64x128xf32>
    %68 = tpu.matmul %66, %67, %cst_84 {dimension_numbers = #tpu.dot_dimension_numbers<[1], [0], [0], [1], [0, 0, 1, 1], [], []>} : vector<64x128xbf16>, vector<128x128xbf16>, vector<64x128xf32> -> vector<64x128xf32>
    %69 = arith.addf %62, %68 : vector<64x128xf32>
    %c2_85 = arith.constant 2 : index
    %c0_86 = arith.constant 0 : index
    %c0_87 = arith.constant 0 : index
    %c0_88 = arith.constant 0 : index
    %70 = vector.load %arg14[%c2_85, %c0_86, %c0_87, %c0_88] : memref<3x10x8x128xf32, #tpu.memory_space<vmem>>, vector<1x8x8x128xf32>
    %71 = vector.shape_cast %70 : vector<1x8x8x128xf32> to vector<8x8x128xf32>
    %72 = vector.shape_cast %71 : vector<8x8x128xf32> to vector<64x128xf32>
    %73 = arith.truncf %72 : vector<64x128xf32> to vector<64x128xbf16>
    %c256 = arith.constant 256 : index
    %c0_89 = arith.constant 0 : index
    %74 = vector.load %arg3[%c256, %c0_89] : memref<1152x128xbf16, #tpu.memory_space<vmem>>, vector<128x128xbf16>
    %cst_90 = arith.constant dense<0.000000e+00> : vector<64x128xf32>
    %75 = tpu.matmul %73, %74, %cst_90 {dimension_numbers = #tpu.dot_dimension_numbers<[1], [0], [0], [1], [0, 0, 1, 1], [], []>} : vector<64x128xbf16>, vector<128x128xbf16>, vector<64x128xf32> -> vector<64x128xf32>
    %76 = arith.addf %69, %75 : vector<64x128xf32>
    %c0_91 = arith.constant 0 : index
    %c1_92 = arith.constant 1 : index
    %c0_93 = arith.constant 0 : index
    %c0_94 = arith.constant 0 : index
    %77 = vector.load %arg14[%c0_91, %c1_92, %c0_93, %c0_94] : memref<3x10x8x128xf32, #tpu.memory_space<vmem>>, vector<1x8x8x128xf32>
    %78 = vector.shape_cast %77 : vector<1x8x8x128xf32> to vector<8x8x128xf32>
    %79 = vector.shape_cast %78 : vector<8x8x128xf32> to vector<64x128xf32>
    %80 = arith.truncf %79 : vector<64x128xf32> to vector<64x128xbf16>
    %c384 = arith.constant 384 : index
    %c0_95 = arith.constant 0 : index
    %81 = vector.load %arg3[%c384, %c0_95] : memref<1152x128xbf16, #tpu.memory_space<vmem>>, vector<128x128xbf16>
    %cst_96 = arith.constant dense<0.000000e+00> : vector<64x128xf32>
    %82 = tpu.matmul %80, %81, %cst_96 {dimension_numbers = #tpu.dot_dimension_numbers<[1], [0], [0], [1], [0, 0, 1, 1], [], []>} : vector<64x128xbf16>, vector<128x128xbf16>, vector<64x128xf32> -> vector<64x128xf32>
    %83 = arith.addf %76, %82 : vector<64x128xf32>
    %c1_97 = arith.constant 1 : index
    %c1_98 = arith.constant 1 : index
    %c0_99 = arith.constant 0 : index
    %c0_100 = arith.constant 0 : index
    %84 = vector.load %arg14[%c1_97, %c1_98, %c0_99, %c0_100] : memref<3x10x8x128xf32, #tpu.memory_space<vmem>>, vector<1x8x8x128xf32>
    %85 = vector.shape_cast %84 : vector<1x8x8x128xf32> to vector<8x8x128xf32>
    %86 = vector.shape_cast %85 : vector<8x8x128xf32> to vector<64x128xf32>
    %87 = arith.truncf %86 : vector<64x128xf32> to vector<64x128xbf16>
    %c512 = arith.constant 512 : index
    %c0_101 = arith.constant 0 : index
    %88 = vector.load %arg3[%c512, %c0_101] : memref<1152x128xbf16, #tpu.memory_space<vmem>>, vector<128x128xbf16>
    %cst_102 = arith.constant dense<0.000000e+00> : vector<64x128xf32>
    %89 = tpu.matmul %87, %88, %cst_102 {dimension_numbers = #tpu.dot_dimension_numbers<[1], [0], [0], [1], [0, 0, 1, 1], [], []>} : vector<64x128xbf16>, vector<128x128xbf16>, vector<64x128xf32> -> vector<64x128xf32>
    %90 = arith.addf %83, %89 : vector<64x128xf32>
    %c2_103 = arith.constant 2 : index
    %c1_104 = arith.constant 1 : index
    %c0_105 = arith.constant 0 : index
    %c0_106 = arith.constant 0 : index
    %91 = vector.load %arg14[%c2_103, %c1_104, %c0_105, %c0_106] : memref<3x10x8x128xf32, #tpu.memory_space<vmem>>, vector<1x8x8x128xf32>
    %92 = vector.shape_cast %91 : vector<1x8x8x128xf32> to vector<8x8x128xf32>
    %93 = vector.shape_cast %92 : vector<8x8x128xf32> to vector<64x128xf32>
    %94 = arith.truncf %93 : vector<64x128xf32> to vector<64x128xbf16>
    %c640 = arith.constant 640 : index
    %c0_107 = arith.constant 0 : index
    %95 = vector.load %arg3[%c640, %c0_107] : memref<1152x128xbf16, #tpu.memory_space<vmem>>, vector<128x128xbf16>
    %cst_108 = arith.constant dense<0.000000e+00> : vector<64x128xf32>
    %96 = tpu.matmul %94, %95, %cst_108 {dimension_numbers = #tpu.dot_dimension_numbers<[1], [0], [0], [1], [0, 0, 1, 1], [], []>} : vector<64x128xbf16>, vector<128x128xbf16>, vector<64x128xf32> -> vector<64x128xf32>
    %97 = arith.addf %90, %96 : vector<64x128xf32>
    %c0_109 = arith.constant 0 : index
    %c2_110 = arith.constant 2 : index
    %c0_111 = arith.constant 0 : index
    %c0_112 = arith.constant 0 : index
    %98 = vector.load %arg14[%c0_109, %c2_110, %c0_111, %c0_112] : memref<3x10x8x128xf32, #tpu.memory_space<vmem>>, vector<1x8x8x128xf32>
    %99 = vector.shape_cast %98 : vector<1x8x8x128xf32> to vector<8x8x128xf32>
    %100 = vector.shape_cast %99 : vector<8x8x128xf32> to vector<64x128xf32>
    %101 = arith.truncf %100 : vector<64x128xf32> to vector<64x128xbf16>
    %c768 = arith.constant 768 : index
    %c0_113 = arith.constant 0 : index
    %102 = vector.load %arg3[%c768, %c0_113] : memref<1152x128xbf16, #tpu.memory_space<vmem>>, vector<128x128xbf16>
    %cst_114 = arith.constant dense<0.000000e+00> : vector<64x128xf32>
    %103 = tpu.matmul %101, %102, %cst_114 {dimension_numbers = #tpu.dot_dimension_numbers<[1], [0], [0], [1], [0, 0, 1, 1], [], []>} : vector<64x128xbf16>, vector<128x128xbf16>, vector<64x128xf32> -> vector<64x128xf32>
    %104 = arith.addf %97, %103 : vector<64x128xf32>
    %c1_115 = arith.constant 1 : index
    %c2_116 = arith.constant 2 : index
    %c0_117 = arith.constant 0 : index
    %c0_118 = arith.constant 0 : index
    %105 = vector.load %arg14[%c1_115, %c2_116, %c0_117, %c0_118] : memref<3x10x8x128xf32, #tpu.memory_space<vmem>>, vector<1x8x8x128xf32>
    %106 = vector.shape_cast %105 : vector<1x8x8x128xf32> to vector<8x8x128xf32>
    %107 = vector.shape_cast %106 : vector<8x8x128xf32> to vector<64x128xf32>
    %108 = arith.truncf %107 : vector<64x128xf32> to vector<64x128xbf16>
    %c896 = arith.constant 896 : index
    %c0_119 = arith.constant 0 : index
    %109 = vector.load %arg3[%c896, %c0_119] : memref<1152x128xbf16, #tpu.memory_space<vmem>>, vector<128x128xbf16>
    %cst_120 = arith.constant dense<0.000000e+00> : vector<64x128xf32>
    %110 = tpu.matmul %108, %109, %cst_120 {dimension_numbers = #tpu.dot_dimension_numbers<[1], [0], [0], [1], [0, 0, 1, 1], [], []>} : vector<64x128xbf16>, vector<128x128xbf16>, vector<64x128xf32> -> vector<64x128xf32>
    %111 = arith.addf %104, %110 : vector<64x128xf32>
    %c2_121 = arith.constant 2 : index
    %c2_122 = arith.constant 2 : index
    %c0_123 = arith.constant 0 : index
    %c0_124 = arith.constant 0 : index
    %112 = vector.load %arg14[%c2_121, %c2_122, %c0_123, %c0_124] : memref<3x10x8x128xf32, #tpu.memory_space<vmem>>, vector<1x8x8x128xf32>
    %113 = vector.shape_cast %112 : vector<1x8x8x128xf32> to vector<8x8x128xf32>
    %114 = vector.shape_cast %113 : vector<8x8x128xf32> to vector<64x128xf32>
    %115 = arith.truncf %114 : vector<64x128xf32> to vector<64x128xbf16>
    %c1024 = arith.constant 1024 : index
    %c0_125 = arith.constant 0 : index
    %116 = vector.load %arg3[%c1024, %c0_125] : memref<1152x128xbf16, #tpu.memory_space<vmem>>, vector<128x128xbf16>
    %cst_126 = arith.constant dense<0.000000e+00> : vector<64x128xf32>
    %117 = tpu.matmul %115, %116, %cst_126 {dimension_numbers = #tpu.dot_dimension_numbers<[1], [0], [0], [1], [0, 0, 1, 1], [], []>} : vector<64x128xbf16>, vector<128x128xbf16>, vector<64x128xf32> -> vector<64x128xf32>
    %118 = arith.addf %111, %117 : vector<64x128xf32>
    %119 = vector.broadcast %7 : vector<1x128xf32> to vector<64x128xf32>
    %120 = arith.addf %118, %119 : vector<64x128xf32>
    %c0_127 = arith.constant 0 : index
    %c0_128 = arith.constant 0 : index
    %121 = vector.load %arg5[%c0_127, %c0_128] : memref<1x128xf32, #tpu.memory_space<vmem>>, vector<1x128xf32>
    %c0_129 = arith.constant 0 : index
    %c0_130 = arith.constant 0 : index
    %122 = vector.load %arg6[%c0_129, %c0_130] : memref<1x128xf32, #tpu.memory_space<vmem>>, vector<1x128xf32>
    %cst_131 = arith.constant dense<0.000000e+00> : vector<128xf32>
    %123 = vector.multi_reduction <add>, %120, %cst_131 [0] : vector<64x128xf32> to vector<128xf32>
    %124 = vector.shape_cast %123 : vector<128xf32> to vector<1x128xf32>
    %cst_132 = arith.constant 6.400000e+01 : f32
    %125 = vector.broadcast %cst_132 : f32 to vector<1x128xf32>
    %126 = arith.divf %124, %125 : vector<1x128xf32>
    %127 = vector.broadcast %126 : vector<1x128xf32> to vector<64x128xf32>
    %128 = arith.subf %120, %127 : vector<64x128xf32>
    %129 = arith.mulf %128, %128 : vector<64x128xf32>
    %cst_133 = arith.constant dense<0.000000e+00> : vector<128xf32>
    %130 = vector.multi_reduction <add>, %129, %cst_133 [0] : vector<64x128xf32> to vector<128xf32>
    %131 = vector.shape_cast %130 : vector<128xf32> to vector<1x128xf32>
    %cst_134 = arith.constant 6.400000e+01 : f32
    %132 = vector.broadcast %cst_134 : f32 to vector<1x128xf32>
    %133 = arith.divf %131, %132 : vector<1x128xf32>
    %134 = vector.broadcast %126 : vector<1x128xf32> to vector<64x128xf32>
    %135 = arith.subf %120, %134 : vector<64x128xf32>
    %cst_135 = arith.constant 9.99999974E-6 : f32
    %136 = vector.broadcast %cst_135 : f32 to vector<1x128xf32>
    %137 = arith.addf %133, %136 : vector<1x128xf32>
    %138 = math.rsqrt %137 : vector<1x128xf32>
    %139 = vector.broadcast %138 : vector<1x128xf32> to vector<64x128xf32>
    %140 = arith.mulf %135, %139 : vector<64x128xf32>
    %141 = vector.broadcast %121 : vector<1x128xf32> to vector<64x128xf32>
    %142 = arith.mulf %140, %141 : vector<64x128xf32>
    %143 = vector.broadcast %122 : vector<1x128xf32> to vector<64x128xf32>
    %144 = arith.addf %142, %143 : vector<64x128xf32>
    %cst_136 = arith.constant 0.000000e+00 : f32
    %145 = vector.broadcast %cst_136 : f32 to vector<64x128xf32>
    %146 = arith.maximumf %144, %145 : vector<64x128xf32>
    %147 = vector.shape_cast %146 : vector<64x128xf32> to vector<8x8x128xf32>
    %c0_137 = arith.constant 0 : index
    %c0_138 = arith.constant 0 : index
    %148 = vector.load %arg8[%c0_137, %c0_138] : memref<1x128xf32, #tpu.memory_space<vmem>>, vector<1x128xf32>
    %c1_139 = arith.constant 1 : index
    %c1_140 = arith.constant 1 : index
    %c0_141 = arith.constant 0 : index
    %c0_142 = arith.constant 0 : index
    %149 = vector.load %arg14[%c1_139, %c1_140, %c0_141, %c0_142] : memref<3x10x8x128xf32, #tpu.memory_space<vmem>>, vector<1x8x8x128xf32>
    %150 = vector.shape_cast %149 : vector<1x8x8x128xf32> to vector<8x8x128xf32>
    %151 = vector.shape_cast %147 : vector<8x8x128xf32> to vector<1x8x8x128xf32>
    tpu.vector_store %arg14[%c1_139, %c1_140, %c0_141, %c0_142], %151 {strides = array<i32>} : memref<3x10x8x128xf32, #tpu.memory_space<vmem>>, vector<1x8x8x128xf32>,
    %152 = vector.extract_strided_slice %147 {offsets = [0, 0, 0], sizes = [8, 7, 128], strides = [1, 1, 1]} : vector<8x8x128xf32> to vector<8x7x128xf32>
    %c0_143 = arith.constant 0 : index
    %c1_144 = arith.constant 1 : index
    %c1_145 = arith.constant 1 : index
    %c0_146 = arith.constant 0 : index
    %153 = vector.load %arg14[%c0_143, %c1_144, %c1_145, %c0_146] : memref<3x10x8x128xf32, #tpu.memory_space<vmem>>, vector<1x8x7x128xf32>
    %154 = vector.shape_cast %153 : vector<1x8x7x128xf32> to vector<8x7x128xf32>
    %155 = vector.shape_cast %152 : vector<8x7x128xf32> to vector<1x8x7x128xf32>
    tpu.vector_store %arg14[%c0_143, %c1_144, %c1_145, %c0_146], %155 {strides = array<i32>} : memref<3x10x8x128xf32, #tpu.memory_space<vmem>>, vector<1x8x7x128xf32>,
    %156 = vector.extract_strided_slice %147 {offsets = [0, 1, 0], sizes = [8, 1, 128], strides = [1, 1, 1]} : vector<8x8x128xf32> to vector<8x1x128xf32>
    %c0_147 = arith.constant 0 : index
    %c1_148 = arith.constant 1 : index
    %c0_149 = arith.constant 0 : index
    %c0_150 = arith.constant 0 : index
    %157 = vector.load %arg14[%c0_147, %c1_148, %c0_149, %c0_150] : memref<3x10x8x128xf32, #tpu.memory_space<vmem>>, vector<1x8x1x128xf32>
    %158 = vector.shape_cast %157 : vector<1x8x1x128xf32> to vector<8x1x128xf32>
    %159 = vector.shape_cast %156 : vector<8x1x128xf32> to vector<1x8x1x128xf32>
    tpu.vector_store %arg14[%c0_147, %c1_148, %c0_149, %c0_150], %159 {strides = array<i32>} : memref<3x10x8x128xf32, #tpu.memory_space<vmem>>, vector<1x8x1x128xf32>,
    %160 = vector.extract_strided_slice %147 {offsets = [0, 1, 0], sizes = [8, 7, 128], strides = [1, 1, 1]} : vector<8x8x128xf32> to vector<8x7x128xf32>
    %c2_151 = arith.constant 2 : index
    %c1_152 = arith.constant 1 : index
    %c0_153 = arith.constant 0 : index
    %c0_154 = arith.constant 0 : index
    %161 = vector.load %arg14[%c2_151, %c1_152, %c0_153, %c0_154] : memref<3x10x8x128xf32, #tpu.memory_space<vmem>>, vector<1x8x7x128xf32>
    %162 = vector.shape_cast %161 : vector<1x8x7x128xf32> to vector<8x7x128xf32>
    %163 = vector.shape_cast %160 : vector<8x7x128xf32> to vector<1x8x7x128xf32>
    tpu.vector_store %arg14[%c2_151, %c1_152, %c0_153, %c0_154], %163 {strides = array<i32>} : memref<3x10x8x128xf32, #tpu.memory_space<vmem>>, vector<1x8x7x128xf32>,
    %164 = vector.extract_strided_slice %147 {offsets = [0, 6, 0], sizes = [8, 1, 128], strides = [1, 1, 1]} : vector<8x8x128xf32> to vector<8x1x128xf32>
    %c2_155 = arith.constant 2 : index
    %c1_156 = arith.constant 1 : index
    %c7_157 = arith.constant 7 : index
    %c0_158 = arith.constant 0 : index
    %165 = vector.load %arg14[%c2_155, %c1_156, %c7_157, %c0_158] : memref<3x10x8x128xf32, #tpu.memory_space<vmem>>, vector<1x8x1x128xf32>
    %166 = vector.shape_cast %165 : vector<1x8x1x128xf32> to vector<8x1x128xf32>
    %167 = vector.shape_cast %164 : vector<8x1x128xf32> to vector<1x8x1x128xf32>
    tpu.vector_store %arg14[%c2_155, %c1_156, %c7_157, %c0_158], %167 {strides = array<i32>} : memref<3x10x8x128xf32, #tpu.memory_space<vmem>>, vector<1x8x1x128xf32>,
    %c0_159 = arith.constant 0 : index
    %c2_160 = arith.constant 2 : index
    %c0_161 = arith.constant 0 : index
    %c0_162 = arith.constant 0 : index
    %168 = vector.load %arg14[%c0_159, %c2_160, %c0_161, %c0_162] : memref<3x10x8x128xf32, #tpu.memory_space<vmem>>, vector<1x1x8x128xf32>
    %169 = vector.shape_cast %168 : vector<1x1x8x128xf32> to vector<8x128xf32>
    %c0_163 = arith.constant 0 : index
    %c0_164 = arith.constant 0 : index
    %c0_165 = arith.constant 0 : index
    %c0_166 = arith.constant 0 : index
    %170 = vector.load %arg14[%c0_163, %c0_164, %c0_165, %c0_166] : memref<3x10x8x128xf32, #tpu.memory_space<vmem>>, vector<1x1x8x128xf32>
    %171 = vector.shape_cast %170 : vector<1x1x8x128xf32> to vector<8x128xf32>
    %172 = vector.shape_cast %169 : vector<8x128xf32> to vector<1x1x8x128xf32>
    tpu.vector_store %arg14[%c0_163, %c0_164, %c0_165, %c0_166], %172 {strides = array<i32>} : memref<3x10x8x128xf32, #tpu.memory_space<vmem>>, vector<1x1x8x128xf32>,
    %c0_167 = arith.constant 0 : index
    %c7_168 = arith.constant 7 : index
    %c0_169 = arith.constant 0 : index
    %c0_170 = arith.constant 0 : index
    %173 = vector.load %arg14[%c0_167, %c7_168, %c0_169, %c0_170] : memref<3x10x8x128xf32, #tpu.memory_space<vmem>>, vector<1x1x8x128xf32>
    %174 = vector.shape_cast %173 : vector<1x1x8x128xf32> to vector<8x128xf32>
    %c0_171 = arith.constant 0 : index
    %c9_172 = arith.constant 9 : index
    %c0_173 = arith.constant 0 : index
    %c0_174 = arith.constant 0 : index
    %175 = vector.load %arg14[%c0_171, %c9_172, %c0_173, %c0_174] : memref<3x10x8x128xf32, #tpu.memory_space<vmem>>, vector<1x1x8x128xf32>
    %176 = vector.shape_cast %175 : vector<1x1x8x128xf32> to vector<8x128xf32>
    %177 = vector.shape_cast %174 : vector<8x128xf32> to vector<1x1x8x128xf32>
    tpu.vector_store %arg14[%c0_171, %c9_172, %c0_173, %c0_174], %177 {strides = array<i32>} : memref<3x10x8x128xf32, #tpu.memory_space<vmem>>, vector<1x1x8x128xf32>,
    %c1_175 = arith.constant 1 : index
    %c2_176 = arith.constant 2 : index
    %c0_177 = arith.constant 0 : index
    %c0_178 = arith.constant 0 : index
    %178 = vector.load %arg14[%c1_175, %c2_176, %c0_177, %c0_178] : memref<3x10x8x128xf32, #tpu.memory_space<vmem>>, vector<1x1x8x128xf32>
    %179 = vector.shape_cast %178 : vector<1x1x8x128xf32> to vector<8x128xf32>
    %c1_179 = arith.constant 1 : index
    %c0_180 = arith.constant 0 : index
    %c0_181 = arith.constant 0 : index
    %c0_182 = arith.constant 0 : index
    %180 = vector.load %arg14[%c1_179, %c0_180, %c0_181, %c0_182] : memref<3x10x8x128xf32, #tpu.memory_space<vmem>>, vector<1x1x8x128xf32>
    %181 = vector.shape_cast %180 : vector<1x1x8x128xf32> to vector<8x128xf32>
    %182 = vector.shape_cast %179 : vector<8x128xf32> to vector<1x1x8x128xf32>
    tpu.vector_store %arg14[%c1_179, %c0_180, %c0_181, %c0_182], %182 {strides = array<i32>} : memref<3x10x8x128xf32, #tpu.memory_space<vmem>>, vector<1x1x8x128xf32>,
    %c1_183 = arith.constant 1 : index
    %c7_184 = arith.constant 7 : index
    %c0_185 = arith.constant 0 : index
    %c0_186 = arith.constant 0 : index
    %183 = vector.load %arg14[%c1_183, %c7_184, %c0_185, %c0_186] : memref<3x10x8x128xf32, #tpu.memory_space<vmem>>, vector<1x1x8x128xf32>
    %184 = vector.shape_cast %183 : vector<1x1x8x128xf32> to vector<8x128xf32>
    %c1_187 = arith.constant 1 : index
    %c9_188 = arith.constant 9 : index
    %c0_189 = arith.constant 0 : index
    %c0_190 = arith.constant 0 : index
    %185 = vector.load %arg14[%c1_187, %c9_188, %c0_189, %c0_190] : memref<3x10x8x128xf32, #tpu.memory_space<vmem>>, vector<1x1x8x128xf32>
    %186 = vector.shape_cast %185 : vector<1x1x8x128xf32> to vector<8x128xf32>
    %187 = vector.shape_cast %184 : vector<8x128xf32> to vector<1x1x8x128xf32>
    tpu.vector_store %arg14[%c1_187, %c9_188, %c0_189, %c0_190], %187 {strides = array<i32>} : memref<3x10x8x128xf32, #tpu.memory_space<vmem>>, vector<1x1x8x128xf32>,
    %c2_191 = arith.constant 2 : index
    %c2_192 = arith.constant 2 : index
    %c0_193 = arith.constant 0 : index
    %c0_194 = arith.constant 0 : index
    %188 = vector.load %arg14[%c2_191, %c2_192, %c0_193, %c0_194] : memref<3x10x8x128xf32, #tpu.memory_space<vmem>>, vector<1x1x8x128xf32>
    %189 = vector.shape_cast %188 : vector<1x1x8x128xf32> to vector<8x128xf32>
    %c2_195 = arith.constant 2 : index
    %c0_196 = arith.constant 0 : index
    %c0_197 = arith.constant 0 : index
    %c0_198 = arith.constant 0 : index
    %190 = vector.load %arg14[%c2_195, %c0_196, %c0_197, %c0_198] : memref<3x10x8x128xf32, #tpu.memory_space<vmem>>, vector<1x1x8x128xf32>
    %191 = vector.shape_cast %190 : vector<1x1x8x128xf32> to vector<8x128xf32>
    %192 = vector.shape_cast %189 : vector<8x128xf32> to vector<1x1x8x128xf32>
    tpu.vector_store %arg14[%c2_195, %c0_196, %c0_197, %c0_198], %192 {strides = array<i32>} : memref<3x10x8x128xf32, #tpu.memory_space<vmem>>, vector<1x1x8x128xf32>,
    %c2_199 = arith.constant 2 : index
    %c7_200 = arith.constant 7 : index
    %c0_201 = arith.constant 0 : index
    %c0_202 = arith.constant 0 : index
    %193 = vector.load %arg14[%c2_199, %c7_200, %c0_201, %c0_202] : memref<3x10x8x128xf32, #tpu.memory_space<vmem>>, vector<1x1x8x128xf32>
    %194 = vector.shape_cast %193 : vector<1x1x8x128xf32> to vector<8x128xf32>
    %c2_203 = arith.constant 2 : index
    %c9_204 = arith.constant 9 : index
    %c0_205 = arith.constant 0 : index
    %c0_206 = arith.constant 0 : index
    %195 = vector.load %arg14[%c2_203, %c9_204, %c0_205, %c0_206] : memref<3x10x8x128xf32, #tpu.memory_space<vmem>>, vector<1x1x8x128xf32>
    %196 = vector.shape_cast %195 : vector<1x1x8x128xf32> to vector<8x128xf32>
    %197 = vector.shape_cast %194 : vector<8x128xf32> to vector<1x1x8x128xf32>
    tpu.vector_store %arg14[%c2_203, %c9_204, %c0_205, %c0_206], %197 {strides = array<i32>} : memref<3x10x8x128xf32, #tpu.memory_space<vmem>>, vector<1x1x8x128xf32>,
    %c0_207 = arith.constant 0 : index
    %c0_208 = arith.constant 0 : index
    %c0_209 = arith.constant 0 : index
    %c0_210 = arith.constant 0 : index
    %198 = vector.load %arg14[%c0_207, %c0_208, %c0_209, %c0_210] : memref<3x10x8x128xf32, #tpu.memory_space<vmem>>, vector<1x8x8x128xf32>
    %199 = vector.shape_cast %198 : vector<1x8x8x128xf32> to vector<8x8x128xf32>
    %200 = vector.shape_cast %199 : vector<8x8x128xf32> to vector<64x128xf32>
    %201 = arith.truncf %200 : vector<64x128xf32> to vector<64x128xbf16>
    %c0_211 = arith.constant 0 : index
    %c0_212 = arith.constant 0 : index
    %202 = vector.load %arg7[%c0_211, %c0_212] : memref<1152x128xbf16, #tpu.memory_space<vmem>>, vector<128x128xbf16>
    %cst_213 = arith.constant dense<0.000000e+00> : vector<64x128xf32>
    %203 = tpu.matmul %201, %202, %cst_213 {dimension_numbers = #tpu.dot_dimension_numbers<[1], [0], [0], [1], [0, 0, 1, 1], [], []>} : vector<64x128xbf16>, vector<128x128xbf16>, vector<64x128xf32> -> vector<64x128xf32>
    %c1_214 = arith.constant 1 : index
    %c0_215 = arith.constant 0 : index
    %c0_216 = arith.constant 0 : index
    %c0_217 = arith.constant 0 : index
    %204 = vector.load %arg14[%c1_214, %c0_215, %c0_216, %c0_217] : memref<3x10x8x128xf32, #tpu.memory_space<vmem>>, vector<1x8x8x128xf32>
    %205 = vector.shape_cast %204 : vector<1x8x8x128xf32> to vector<8x8x128xf32>
    %206 = vector.shape_cast %205 : vector<8x8x128xf32> to vector<64x128xf32>
    %207 = arith.truncf %206 : vector<64x128xf32> to vector<64x128xbf16>
    %c128_218 = arith.constant 128 : index
    %c0_219 = arith.constant 0 : index
    %208 = vector.load %arg7[%c128_218, %c0_219] : memref<1152x128xbf16, #tpu.memory_space<vmem>>, vector<128x128xbf16>
    %cst_220 = arith.constant dense<0.000000e+00> : vector<64x128xf32>
    %209 = tpu.matmul %207, %208, %cst_220 {dimension_numbers = #tpu.dot_dimension_numbers<[1], [0], [0], [1], [0, 0, 1, 1], [], []>} : vector<64x128xbf16>, vector<128x128xbf16>, vector<64x128xf32> -> vector<64x128xf32>
    %210 = arith.addf %203, %209 : vector<64x128xf32>
    %c2_221 = arith.constant 2 : index
    %c0_222 = arith.constant 0 : index
    %c0_223 = arith.constant 0 : index
    %c0_224 = arith.constant 0 : index
    %211 = vector.load %arg14[%c2_221, %c0_222, %c0_223, %c0_224] : memref<3x10x8x128xf32, #tpu.memory_space<vmem>>, vector<1x8x8x128xf32>
    %212 = vector.shape_cast %211 : vector<1x8x8x128xf32> to vector<8x8x128xf32>
    %213 = vector.shape_cast %212 : vector<8x8x128xf32> to vector<64x128xf32>
    %214 = arith.truncf %213 : vector<64x128xf32> to vector<64x128xbf16>
    %c256_225 = arith.constant 256 : index
    %c0_226 = arith.constant 0 : index
    %215 = vector.load %arg7[%c256_225, %c0_226] : memref<1152x128xbf16, #tpu.memory_space<vmem>>, vector<128x128xbf16>
    %cst_227 = arith.constant dense<0.000000e+00> : vector<64x128xf32>
    %216 = tpu.matmul %214, %215, %cst_227 {dimension_numbers = #tpu.dot_dimension_numbers<[1], [0], [0], [1], [0, 0, 1, 1], [], []>} : vector<64x128xbf16>, vector<128x128xbf16>, vector<64x128xf32> -> vector<64x128xf32>
    %217 = arith.addf %210, %216 : vector<64x128xf32>
    %c0_228 = arith.constant 0 : index
    %c1_229 = arith.constant 1 : index
    %c0_230 = arith.constant 0 : index
    %c0_231 = arith.constant 0 : index
    %218 = vector.load %arg14[%c0_228, %c1_229, %c0_230, %c0_231] : memref<3x10x8x128xf32, #tpu.memory_space<vmem>>, vector<1x8x8x128xf32>
    %219 = vector.shape_cast %218 : vector<1x8x8x128xf32> to vector<8x8x128xf32>
    %220 = vector.shape_cast %219 : vector<8x8x128xf32> to vector<64x128xf32>
    %221 = arith.truncf %220 : vector<64x128xf32> to vector<64x128xbf16>
    %c384_232 = arith.constant 384 : index
    %c0_233 = arith.constant 0 : index
    %222 = vector.load %arg7[%c384_232, %c0_233] : memref<1152x128xbf16, #tpu.memory_space<vmem>>, vector<128x128xbf16>
    %cst_234 = arith.constant dense<0.000000e+00> : vector<64x128xf32>
    %223 = tpu.matmul %221, %222, %cst_234 {dimension_numbers = #tpu.dot_dimension_numbers<[1], [0], [0], [1], [0, 0, 1, 1], [], []>} : vector<64x128xbf16>, vector<128x128xbf16>, vector<64x128xf32> -> vector<64x128xf32>
    %224 = arith.addf %217, %223 : vector<64x128xf32>
    %c1_235 = arith.constant 1 : index
    %c1_236 = arith.constant 1 : index
    %c0_237 = arith.constant 0 : index
    %c0_238 = arith.constant 0 : index
    %225 = vector.load %arg14[%c1_235, %c1_236, %c0_237, %c0_238] : memref<3x10x8x128xf32, #tpu.memory_space<vmem>>, vector<1x8x8x128xf32>
    %226 = vector.shape_cast %225 : vector<1x8x8x128xf32> to vector<8x8x128xf32>
    %227 = vector.shape_cast %226 : vector<8x8x128xf32> to vector<64x128xf32>
    %228 = arith.truncf %227 : vector<64x128xf32> to vector<64x128xbf16>
    %c512_239 = arith.constant 512 : index
    %c0_240 = arith.constant 0 : index
    %229 = vector.load %arg7[%c512_239, %c0_240] : memref<1152x128xbf16, #tpu.memory_space<vmem>>, vector<128x128xbf16>
    %cst_241 = arith.constant dense<0.000000e+00> : vector<64x128xf32>
    %230 = tpu.matmul %228, %229, %cst_241 {dimension_numbers = #tpu.dot_dimension_numbers<[1], [0], [0], [1], [0, 0, 1, 1], [], []>} : vector<64x128xbf16>, vector<128x128xbf16>, vector<64x128xf32> -> vector<64x128xf32>
    %231 = arith.addf %224, %230 : vector<64x128xf32>
    %c2_242 = arith.constant 2 : index
    %c1_243 = arith.constant 1 : index
    %c0_244 = arith.constant 0 : index
    %c0_245 = arith.constant 0 : index
    %232 = vector.load %arg14[%c2_242, %c1_243, %c0_244, %c0_245] : memref<3x10x8x128xf32, #tpu.memory_space<vmem>>, vector<1x8x8x128xf32>
    %233 = vector.shape_cast %232 : vector<1x8x8x128xf32> to vector<8x8x128xf32>
    %234 = vector.shape_cast %233 : vector<8x8x128xf32> to vector<64x128xf32>
    %235 = arith.truncf %234 : vector<64x128xf32> to vector<64x128xbf16>
    %c640_246 = arith.constant 640 : index
    %c0_247 = arith.constant 0 : index
    %236 = vector.load %arg7[%c640_246, %c0_247] : memref<1152x128xbf16, #tpu.memory_space<vmem>>, vector<128x128xbf16>
    %cst_248 = arith.constant dense<0.000000e+00> : vector<64x128xf32>
    %237 = tpu.matmul %235, %236, %cst_248 {dimension_numbers = #tpu.dot_dimension_numbers<[1], [0], [0], [1], [0, 0, 1, 1], [], []>} : vector<64x128xbf16>, vector<128x128xbf16>, vector<64x128xf32> -> vector<64x128xf32>
    %238 = arith.addf %231, %237 : vector<64x128xf32>
    %c0_249 = arith.constant 0 : index
    %c2_250 = arith.constant 2 : index
    %c0_251 = arith.constant 0 : index
    %c0_252 = arith.constant 0 : index
    %239 = vector.load %arg14[%c0_249, %c2_250, %c0_251, %c0_252] : memref<3x10x8x128xf32, #tpu.memory_space<vmem>>, vector<1x8x8x128xf32>
    %240 = vector.shape_cast %239 : vector<1x8x8x128xf32> to vector<8x8x128xf32>
    %241 = vector.shape_cast %240 : vector<8x8x128xf32> to vector<64x128xf32>
    %242 = arith.truncf %241 : vector<64x128xf32> to vector<64x128xbf16>
    %c768_253 = arith.constant 768 : index
    %c0_254 = arith.constant 0 : index
    %243 = vector.load %arg7[%c768_253, %c0_254] : memref<1152x128xbf16, #tpu.memory_space<vmem>>, vector<128x128xbf16>
    %cst_255 = arith.constant dense<0.000000e+00> : vector<64x128xf32>
    %244 = tpu.matmul %242, %243, %cst_255 {dimension_numbers = #tpu.dot_dimension_numbers<[1], [0], [0], [1], [0, 0, 1, 1], [], []>} : vector<64x128xbf16>, vector<128x128xbf16>, vector<64x128xf32> -> vector<64x128xf32>
    %245 = arith.addf %238, %244 : vector<64x128xf32>
    %c1_256 = arith.constant 1 : index
    %c2_257 = arith.constant 2 : index
    %c0_258 = arith.constant 0 : index
    %c0_259 = arith.constant 0 : index
    %246 = vector.load %arg14[%c1_256, %c2_257, %c0_258, %c0_259] : memref<3x10x8x128xf32, #tpu.memory_space<vmem>>, vector<1x8x8x128xf32>
    %247 = vector.shape_cast %246 : vector<1x8x8x128xf32> to vector<8x8x128xf32>
    %248 = vector.shape_cast %247 : vector<8x8x128xf32> to vector<64x128xf32>
    %249 = arith.truncf %248 : vector<64x128xf32> to vector<64x128xbf16>
    %c896_260 = arith.constant 896 : index
    %c0_261 = arith.constant 0 : index
    %250 = vector.load %arg7[%c896_260, %c0_261] : memref<1152x128xbf16, #tpu.memory_space<vmem>>, vector<128x128xbf16>
    %cst_262 = arith.constant dense<0.000000e+00> : vector<64x128xf32>
    %251 = tpu.matmul %249, %250, %cst_262 {dimension_numbers = #tpu.dot_dimension_numbers<[1], [0], [0], [1], [0, 0, 1, 1], [], []>} : vector<64x128xbf16>, vector<128x128xbf16>, vector<64x128xf32> -> vector<64x128xf32>
    %252 = arith.addf %245, %251 : vector<64x128xf32>
    %c2_263 = arith.constant 2 : index
    %c2_264 = arith.constant 2 : index
    %c0_265 = arith.constant 0 : index
    %c0_266 = arith.constant 0 : index
    %253 = vector.load %arg14[%c2_263, %c2_264, %c0_265, %c0_266] : memref<3x10x8x128xf32, #tpu.memory_space<vmem>>, vector<1x8x8x128xf32>
    %254 = vector.shape_cast %253 : vector<1x8x8x128xf32> to vector<8x8x128xf32>
    %255 = vector.shape_cast %254 : vector<8x8x128xf32> to vector<64x128xf32>
    %256 = arith.truncf %255 : vector<64x128xf32> to vector<64x128xbf16>
    %c1024_267 = arith.constant 1024 : index
    %c0_268 = arith.constant 0 : index
    %257 = vector.load %arg7[%c1024_267, %c0_268] : memref<1152x128xbf16, #tpu.memory_space<vmem>>, vector<128x128xbf16>
    %cst_269 = arith.constant dense<0.000000e+00> : vector<64x128xf32>
    %258 = tpu.matmul %256, %257, %cst_269 {dimension_numbers = #tpu.dot_dimension_numbers<[1], [0], [0], [1], [0, 0, 1, 1], [], []>} : vector<64x128xbf16>, vector<128x128xbf16>, vector<64x128xf32> -> vector<64x128xf32>
    %259 = arith.addf %252, %258 : vector<64x128xf32>
    %260 = vector.broadcast %148 : vector<1x128xf32> to vector<64x128xf32>
    %261 = arith.addf %259, %260 : vector<64x128xf32>
    %c0_270 = arith.constant 0 : index
    %c0_271 = arith.constant 0 : index
    %262 = vector.load %arg9[%c0_270, %c0_271] : memref<1x128xf32, #tpu.memory_space<vmem>>, vector<1x128xf32>
    %c0_272 = arith.constant 0 : index
    %c0_273 = arith.constant 0 : index
    %263 = vector.load %arg10[%c0_272, %c0_273] : memref<1x128xf32, #tpu.memory_space<vmem>>, vector<1x128xf32>
    %cst_274 = arith.constant dense<0.000000e+00> : vector<128xf32>
    %264 = vector.multi_reduction <add>, %261, %cst_274 [0] : vector<64x128xf32> to vector<128xf32>
    %265 = vector.shape_cast %264 : vector<128xf32> to vector<1x128xf32>
    %cst_275 = arith.constant 6.400000e+01 : f32
    %266 = vector.broadcast %cst_275 : f32 to vector<1x128xf32>
    %267 = arith.divf %265, %266 : vector<1x128xf32>
    %268 = vector.broadcast %267 : vector<1x128xf32> to vector<64x128xf32>
    %269 = arith.subf %261, %268 : vector<64x128xf32>
    %270 = arith.mulf %269, %269 : vector<64x128xf32>
    %cst_276 = arith.constant dense<0.000000e+00> : vector<128xf32>
    %271 = vector.multi_reduction <add>, %270, %cst_276 [0] : vector<64x128xf32> to vector<128xf32>
    %272 = vector.shape_cast %271 : vector<128xf32> to vector<1x128xf32>
    %cst_277 = arith.constant 6.400000e+01 : f32
    %273 = vector.broadcast %cst_277 : f32 to vector<1x128xf32>
    %274 = arith.divf %272, %273 : vector<1x128xf32>
    %275 = vector.broadcast %267 : vector<1x128xf32> to vector<64x128xf32>
    %276 = arith.subf %261, %275 : vector<64x128xf32>
    %cst_278 = arith.constant 9.99999974E-6 : f32
    %277 = vector.broadcast %cst_278 : f32 to vector<1x128xf32>
    %278 = arith.addf %274, %277 : vector<1x128xf32>
    %279 = math.rsqrt %278 : vector<1x128xf32>
    %280 = vector.broadcast %279 : vector<1x128xf32> to vector<64x128xf32>
    %281 = arith.mulf %276, %280 : vector<64x128xf32>
    %282 = vector.broadcast %262 : vector<1x128xf32> to vector<64x128xf32>
    %283 = arith.mulf %281, %282 : vector<64x128xf32>
    %284 = vector.broadcast %263 : vector<1x128xf32> to vector<64x128xf32>
    %285 = arith.addf %283, %284 : vector<64x128xf32>
    %286 = arith.addf %285, %5 : vector<64x128xf32>
    %287 = vector.shape_cast %286 : vector<64x128xf32> to vector<8x8x128xf32>
    %c0_279 = arith.constant 0 : index
    %c0_280 = arith.constant 0 : index
    %288 = vector.load %arg12[%c0_279, %c0_280] : memref<1x128xf32, #tpu.memory_space<vmem>>, vector<1x128xf32>
    %c1_281 = arith.constant 1 : index
    %c1_282 = arith.constant 1 : index
    %c0_283 = arith.constant 0 : index
    %c0_284 = arith.constant 0 : index
    %289 = vector.load %arg14[%c1_281, %c1_282, %c0_283, %c0_284] : memref<3x10x8x128xf32, #tpu.memory_space<vmem>>, vector<1x8x8x128xf32>
    %290 = vector.shape_cast %289 : vector<1x8x8x128xf32> to vector<8x8x128xf32>
    %291 = vector.shape_cast %287 : vector<8x8x128xf32> to vector<1x8x8x128xf32>
    tpu.vector_store %arg14[%c1_281, %c1_282, %c0_283, %c0_284], %291 {strides = array<i32>} : memref<3x10x8x128xf32, #tpu.memory_space<vmem>>, vector<1x8x8x128xf32>,
    %292 = vector.extract_strided_slice %287 {offsets = [0, 0, 0], sizes = [8, 7, 128], strides = [1, 1, 1]} : vector<8x8x128xf32> to vector<8x7x128xf32>
    %c0_285 = arith.constant 0 : index
    %c1_286 = arith.constant 1 : index
    %c1_287 = arith.constant 1 : index
    %c0_288 = arith.constant 0 : index
    %293 = vector.load %arg14[%c0_285, %c1_286, %c1_287, %c0_288] : memref<3x10x8x128xf32, #tpu.memory_space<vmem>>, vector<1x8x7x128xf32>
    %294 = vector.shape_cast %293 : vector<1x8x7x128xf32> to vector<8x7x128xf32>
    %295 = vector.shape_cast %292 : vector<8x7x128xf32> to vector<1x8x7x128xf32>
    tpu.vector_store %arg14[%c0_285, %c1_286, %c1_287, %c0_288], %295 {strides = array<i32>} : memref<3x10x8x128xf32, #tpu.memory_space<vmem>>, vector<1x8x7x128xf32>,
    %296 = vector.extract_strided_slice %287 {offsets = [0, 1, 0], sizes = [8, 1, 128], strides = [1, 1, 1]} : vector<8x8x128xf32> to vector<8x1x128xf32>
    %c0_289 = arith.constant 0 : index
    %c1_290 = arith.constant 1 : index
    %c0_291 = arith.constant 0 : index
    %c0_292 = arith.constant 0 : index
    %297 = vector.load %arg14[%c0_289, %c1_290, %c0_291, %c0_292] : memref<3x10x8x128xf32, #tpu.memory_space<vmem>>, vector<1x8x1x128xf32>
    %298 = vector.shape_cast %297 : vector<1x8x1x128xf32> to vector<8x1x128xf32>
    %299 = vector.shape_cast %296 : vector<8x1x128xf32> to vector<1x8x1x128xf32>
    tpu.vector_store %arg14[%c0_289, %c1_290, %c0_291, %c0_292], %299 {strides = array<i32>} : memref<3x10x8x128xf32, #tpu.memory_space<vmem>>, vector<1x8x1x128xf32>,
    %300 = vector.extract_strided_slice %287 {offsets = [0, 1, 0], sizes = [8, 7, 128], strides = [1, 1, 1]} : vector<8x8x128xf32> to vector<8x7x128xf32>
    %c2_293 = arith.constant 2 : index
    %c1_294 = arith.constant 1 : index
    %c0_295 = arith.constant 0 : index
    %c0_296 = arith.constant 0 : index
    %301 = vector.load %arg14[%c2_293, %c1_294, %c0_295, %c0_296] : memref<3x10x8x128xf32, #tpu.memory_space<vmem>>, vector<1x8x7x128xf32>
    %302 = vector.shape_cast %301 : vector<1x8x7x128xf32> to vector<8x7x128xf32>
    %303 = vector.shape_cast %300 : vector<8x7x128xf32> to vector<1x8x7x128xf32>
    tpu.vector_store %arg14[%c2_293, %c1_294, %c0_295, %c0_296], %303 {strides = array<i32>} : memref<3x10x8x128xf32, #tpu.memory_space<vmem>>, vector<1x8x7x128xf32>,
    %304 = vector.extract_strided_slice %287 {offsets = [0, 6, 0], sizes = [8, 1, 128], strides = [1, 1, 1]} : vector<8x8x128xf32> to vector<8x1x128xf32>
    %c2_297 = arith.constant 2 : index
    %c1_298 = arith.constant 1 : index
    %c7_299 = arith.constant 7 : index
    %c0_300 = arith.constant 0 : index
    %305 = vector.load %arg14[%c2_297, %c1_298, %c7_299, %c0_300] : memref<3x10x8x128xf32, #tpu.memory_space<vmem>>, vector<1x8x1x128xf32>
    %306 = vector.shape_cast %305 : vector<1x8x1x128xf32> to vector<8x1x128xf32>
    %307 = vector.shape_cast %304 : vector<8x1x128xf32> to vector<1x8x1x128xf32>
    tpu.vector_store %arg14[%c2_297, %c1_298, %c7_299, %c0_300], %307 {strides = array<i32>} : memref<3x10x8x128xf32, #tpu.memory_space<vmem>>, vector<1x8x1x128xf32>,
    %c0_301 = arith.constant 0 : index
    %c2_302 = arith.constant 2 : index
    %c0_303 = arith.constant 0 : index
    %c0_304 = arith.constant 0 : index
    %308 = vector.load %arg14[%c0_301, %c2_302, %c0_303, %c0_304] : memref<3x10x8x128xf32, #tpu.memory_space<vmem>>, vector<1x1x8x128xf32>
    %309 = vector.shape_cast %308 : vector<1x1x8x128xf32> to vector<8x128xf32>
    %c0_305 = arith.constant 0 : index
    %c0_306 = arith.constant 0 : index
    %c0_307 = arith.constant 0 : index
    %c0_308 = arith.constant 0 : index
    %310 = vector.load %arg14[%c0_305, %c0_306, %c0_307, %c0_308] : memref<3x10x8x128xf32, #tpu.memory_space<vmem>>, vector<1x1x8x128xf32>
    %311 = vector.shape_cast %310 : vector<1x1x8x128xf32> to vector<8x128xf32>
    %312 = vector.shape_cast %309 : vector<8x128xf32> to vector<1x1x8x128xf32>
    tpu.vector_store %arg14[%c0_305, %c0_306, %c0_307, %c0_308], %312 {strides = array<i32>} : memref<3x10x8x128xf32, #tpu.memory_space<vmem>>, vector<1x1x8x128xf32>,
    %c0_309 = arith.constant 0 : index
    %c7_310 = arith.constant 7 : index
    %c0_311 = arith.constant 0 : index
    %c0_312 = arith.constant 0 : index
    %313 = vector.load %arg14[%c0_309, %c7_310, %c0_311, %c0_312] : memref<3x10x8x128xf32, #tpu.memory_space<vmem>>, vector<1x1x8x128xf32>
    %314 = vector.shape_cast %313 : vector<1x1x8x128xf32> to vector<8x128xf32>
    %c0_313 = arith.constant 0 : index
    %c9_314 = arith.constant 9 : index
    %c0_315 = arith.constant 0 : index
    %c0_316 = arith.constant 0 : index
    %315 = vector.load %arg14[%c0_313, %c9_314, %c0_315, %c0_316] : memref<3x10x8x128xf32, #tpu.memory_space<vmem>>, vector<1x1x8x128xf32>
    %316 = vector.shape_cast %315 : vector<1x1x8x128xf32> to vector<8x128xf32>
    %317 = vector.shape_cast %314 : vector<8x128xf32> to vector<1x1x8x128xf32>
    tpu.vector_store %arg14[%c0_313, %c9_314, %c0_315, %c0_316], %317 {strides = array<i32>} : memref<3x10x8x128xf32, #tpu.memory_space<vmem>>, vector<1x1x8x128xf32>,
    %c1_317 = arith.constant 1 : index
    %c2_318 = arith.constant 2 : index
    %c0_319 = arith.constant 0 : index
    %c0_320 = arith.constant 0 : index
    %318 = vector.load %arg14[%c1_317, %c2_318, %c0_319, %c0_320] : memref<3x10x8x128xf32, #tpu.memory_space<vmem>>, vector<1x1x8x128xf32>
    %319 = vector.shape_cast %318 : vector<1x1x8x128xf32> to vector<8x128xf32>
    %c1_321 = arith.constant 1 : index
    %c0_322 = arith.constant 0 : index
    %c0_323 = arith.constant 0 : index
    %c0_324 = arith.constant 0 : index
    %320 = vector.load %arg14[%c1_321, %c0_322, %c0_323, %c0_324] : memref<3x10x8x128xf32, #tpu.memory_space<vmem>>, vector<1x1x8x128xf32>
    %321 = vector.shape_cast %320 : vector<1x1x8x128xf32> to vector<8x128xf32>
    %322 = vector.shape_cast %319 : vector<8x128xf32> to vector<1x1x8x128xf32>
    tpu.vector_store %arg14[%c1_321, %c0_322, %c0_323, %c0_324], %322 {strides = array<i32>} : memref<3x10x8x128xf32, #tpu.memory_space<vmem>>, vector<1x1x8x128xf32>,
    %c1_325 = arith.constant 1 : index
    %c7_326 = arith.constant 7 : index
    %c0_327 = arith.constant 0 : index
    %c0_328 = arith.constant 0 : index
    %323 = vector.load %arg14[%c1_325, %c7_326, %c0_327, %c0_328] : memref<3x10x8x128xf32, #tpu.memory_space<vmem>>, vector<1x1x8x128xf32>
    %324 = vector.shape_cast %323 : vector<1x1x8x128xf32> to vector<8x128xf32>
    %c1_329 = arith.constant 1 : index
    %c9_330 = arith.constant 9 : index
    %c0_331 = arith.constant 0 : index
    %c0_332 = arith.constant 0 : index
    %325 = vector.load %arg14[%c1_329, %c9_330, %c0_331, %c0_332] : memref<3x10x8x128xf32, #tpu.memory_space<vmem>>, vector<1x1x8x128xf32>
    %326 = vector.shape_cast %325 : vector<1x1x8x128xf32> to vector<8x128xf32>
    %327 = vector.shape_cast %324 : vector<8x128xf32> to vector<1x1x8x128xf32>
    tpu.vector_store %arg14[%c1_329, %c9_330, %c0_331, %c0_332], %327 {strides = array<i32>} : memref<3x10x8x128xf32, #tpu.memory_space<vmem>>, vector<1x1x8x128xf32>,
    %c2_333 = arith.constant 2 : index
    %c2_334 = arith.constant 2 : index
    %c0_335 = arith.constant 0 : index
    %c0_336 = arith.constant 0 : index
    %328 = vector.load %arg14[%c2_333, %c2_334, %c0_335, %c0_336] : memref<3x10x8x128xf32, #tpu.memory_space<vmem>>, vector<1x1x8x128xf32>
    %329 = vector.shape_cast %328 : vector<1x1x8x128xf32> to vector<8x128xf32>
    %c2_337 = arith.constant 2 : index
    %c0_338 = arith.constant 0 : index
    %c0_339 = arith.constant 0 : index
    %c0_340 = arith.constant 0 : index
    %330 = vector.load %arg14[%c2_337, %c0_338, %c0_339, %c0_340] : memref<3x10x8x128xf32, #tpu.memory_space<vmem>>, vector<1x1x8x128xf32>
    %331 = vector.shape_cast %330 : vector<1x1x8x128xf32> to vector<8x128xf32>
    %332 = vector.shape_cast %329 : vector<8x128xf32> to vector<1x1x8x128xf32>
    tpu.vector_store %arg14[%c2_337, %c0_338, %c0_339, %c0_340], %332 {strides = array<i32>} : memref<3x10x8x128xf32, #tpu.memory_space<vmem>>, vector<1x1x8x128xf32>,
    %c2_341 = arith.constant 2 : index
    %c7_342 = arith.constant 7 : index
    %c0_343 = arith.constant 0 : index
    %c0_344 = arith.constant 0 : index
    %333 = vector.load %arg14[%c2_341, %c7_342, %c0_343, %c0_344] : memref<3x10x8x128xf32, #tpu.memory_space<vmem>>, vector<1x1x8x128xf32>
    %334 = vector.shape_cast %333 : vector<1x1x8x128xf32> to vector<8x128xf32>
    %c2_345 = arith.constant 2 : index
    %c9_346 = arith.constant 9 : index
    %c0_347 = arith.constant 0 : index
    %c0_348 = arith.constant 0 : index
    %335 = vector.load %arg14[%c2_345, %c9_346, %c0_347, %c0_348] : memref<3x10x8x128xf32, #tpu.memory_space<vmem>>, vector<1x1x8x128xf32>
    %336 = vector.shape_cast %335 : vector<1x1x8x128xf32> to vector<8x128xf32>
    %337 = vector.shape_cast %334 : vector<8x128xf32> to vector<1x1x8x128xf32>
    tpu.vector_store %arg14[%c2_345, %c9_346, %c0_347, %c0_348], %337 {strides = array<i32>} : memref<3x10x8x128xf32, #tpu.memory_space<vmem>>, vector<1x1x8x128xf32>,
    %c0_349 = arith.constant 0 : index
    %c0_350 = arith.constant 0 : index
    %c0_351 = arith.constant 0 : index
    %c0_352 = arith.constant 0 : index
    %338 = vector.load %arg14[%c0_349, %c0_350, %c0_351, %c0_352] : memref<3x10x8x128xf32, #tpu.memory_space<vmem>>, vector<1x8x8x128xf32>
    %339 = vector.shape_cast %338 : vector<1x8x8x128xf32> to vector<8x8x128xf32>
    %340 = vector.shape_cast %339 : vector<8x8x128xf32> to vector<64x128xf32>
    %341 = arith.truncf %340 : vector<64x128xf32> to vector<64x128xbf16>
    %c0_353 = arith.constant 0 : index
    %c0_354 = arith.constant 0 : index
    %342 = vector.load %arg11[%c0_353, %c0_354] : memref<1152x128xbf16, #tpu.memory_space<vmem>>, vector<128x128xbf16>
    %cst_355 = arith.constant dense<0.000000e+00> : vector<64x128xf32>
    %343 = tpu.matmul %341, %342, %cst_355 {dimension_numbers = #tpu.dot_dimension_numbers<[1], [0], [0], [1], [0, 0, 1, 1], [], []>} : vector<64x128xbf16>, vector<128x128xbf16>, vector<64x128xf32> -> vector<64x128xf32>
    %c1_356 = arith.constant 1 : index
    %c0_357 = arith.constant 0 : index
    %c0_358 = arith.constant 0 : index
    %c0_359 = arith.constant 0 : index
    %344 = vector.load %arg14[%c1_356, %c0_357, %c0_358, %c0_359] : memref<3x10x8x128xf32, #tpu.memory_space<vmem>>, vector<1x8x8x128xf32>
    %345 = vector.shape_cast %344 : vector<1x8x8x128xf32> to vector<8x8x128xf32>
    %346 = vector.shape_cast %345 : vector<8x8x128xf32> to vector<64x128xf32>
    %347 = arith.truncf %346 : vector<64x128xf32> to vector<64x128xbf16>
    %c128_360 = arith.constant 128 : index
    %c0_361 = arith.constant 0 : index
    %348 = vector.load %arg11[%c128_360, %c0_361] : memref<1152x128xbf16, #tpu.memory_space<vmem>>, vector<128x128xbf16>
    %cst_362 = arith.constant dense<0.000000e+00> : vector<64x128xf32>
    %349 = tpu.matmul %347, %348, %cst_362 {dimension_numbers = #tpu.dot_dimension_numbers<[1], [0], [0], [1], [0, 0, 1, 1], [], []>} : vector<64x128xbf16>, vector<128x128xbf16>, vector<64x128xf32> -> vector<64x128xf32>
    %350 = arith.addf %343, %349 : vector<64x128xf32>
    %c2_363 = arith.constant 2 : index
    %c0_364 = arith.constant 0 : index
    %c0_365 = arith.constant 0 : index
    %c0_366 = arith.constant 0 : index
    %351 = vector.load %arg14[%c2_363, %c0_364, %c0_365, %c0_366] : memref<3x10x8x128xf32, #tpu.memory_space<vmem>>, vector<1x8x8x128xf32>
    %352 = vector.shape_cast %351 : vector<1x8x8x128xf32> to vector<8x8x128xf32>
    %353 = vector.shape_cast %352 : vector<8x8x128xf32> to vector<64x128xf32>
    %354 = arith.truncf %353 : vector<64x128xf32> to vector<64x128xbf16>
    %c256_367 = arith.constant 256 : index
    %c0_368 = arith.constant 0 : index
    %355 = vector.load %arg11[%c256_367, %c0_368] : memref<1152x128xbf16, #tpu.memory_space<vmem>>, vector<128x128xbf16>
    %cst_369 = arith.constant dense<0.000000e+00> : vector<64x128xf32>
    %356 = tpu.matmul %354, %355, %cst_369 {dimension_numbers = #tpu.dot_dimension_numbers<[1], [0], [0], [1], [0, 0, 1, 1], [], []>} : vector<64x128xbf16>, vector<128x128xbf16>, vector<64x128xf32> -> vector<64x128xf32>
    %357 = arith.addf %350, %356 : vector<64x128xf32>
    %c0_370 = arith.constant 0 : index
    %c1_371 = arith.constant 1 : index
    %c0_372 = arith.constant 0 : index
    %c0_373 = arith.constant 0 : index
    %358 = vector.load %arg14[%c0_370, %c1_371, %c0_372, %c0_373] : memref<3x10x8x128xf32, #tpu.memory_space<vmem>>, vector<1x8x8x128xf32>
    %359 = vector.shape_cast %358 : vector<1x8x8x128xf32> to vector<8x8x128xf32>
    %360 = vector.shape_cast %359 : vector<8x8x128xf32> to vector<64x128xf32>
    %361 = arith.truncf %360 : vector<64x128xf32> to vector<64x128xbf16>
    %c384_374 = arith.constant 384 : index
    %c0_375 = arith.constant 0 : index
    %362 = vector.load %arg11[%c384_374, %c0_375] : memref<1152x128xbf16, #tpu.memory_space<vmem>>, vector<128x128xbf16>
    %cst_376 = arith.constant dense<0.000000e+00> : vector<64x128xf32>
    %363 = tpu.matmul %361, %362, %cst_376 {dimension_numbers = #tpu.dot_dimension_numbers<[1], [0], [0], [1], [0, 0, 1, 1], [], []>} : vector<64x128xbf16>, vector<128x128xbf16>, vector<64x128xf32> -> vector<64x128xf32>
    %364 = arith.addf %357, %363 : vector<64x128xf32>
    %c1_377 = arith.constant 1 : index
    %c1_378 = arith.constant 1 : index
    %c0_379 = arith.constant 0 : index
    %c0_380 = arith.constant 0 : index
    %365 = vector.load %arg14[%c1_377, %c1_378, %c0_379, %c0_380] : memref<3x10x8x128xf32, #tpu.memory_space<vmem>>, vector<1x8x8x128xf32>
    %366 = vector.shape_cast %365 : vector<1x8x8x128xf32> to vector<8x8x128xf32>
    %367 = vector.shape_cast %366 : vector<8x8x128xf32> to vector<64x128xf32>
    %368 = arith.truncf %367 : vector<64x128xf32> to vector<64x128xbf16>
    %c512_381 = arith.constant 512 : index
    %c0_382 = arith.constant 0 : index
    %369 = vector.load %arg11[%c512_381, %c0_382] : memref<1152x128xbf16, #tpu.memory_space<vmem>>, vector<128x128xbf16>
    %cst_383 = arith.constant dense<0.000000e+00> : vector<64x128xf32>
    %370 = tpu.matmul %368, %369, %cst_383 {dimension_numbers = #tpu.dot_dimension_numbers<[1], [0], [0], [1], [0, 0, 1, 1], [], []>} : vector<64x128xbf16>, vector<128x128xbf16>, vector<64x128xf32> -> vector<64x128xf32>
    %371 = arith.addf %364, %370 : vector<64x128xf32>
    %c2_384 = arith.constant 2 : index
    %c1_385 = arith.constant 1 : index
    %c0_386 = arith.constant 0 : index
    %c0_387 = arith.constant 0 : index
    %372 = vector.load %arg14[%c2_384, %c1_385, %c0_386, %c0_387] : memref<3x10x8x128xf32, #tpu.memory_space<vmem>>, vector<1x8x8x128xf32>
    %373 = vector.shape_cast %372 : vector<1x8x8x128xf32> to vector<8x8x128xf32>
    %374 = vector.shape_cast %373 : vector<8x8x128xf32> to vector<64x128xf32>
    %375 = arith.truncf %374 : vector<64x128xf32> to vector<64x128xbf16>
    %c640_388 = arith.constant 640 : index
    %c0_389 = arith.constant 0 : index
    %376 = vector.load %arg11[%c640_388, %c0_389] : memref<1152x128xbf16, #tpu.memory_space<vmem>>, vector<128x128xbf16>
    %cst_390 = arith.constant dense<0.000000e+00> : vector<64x128xf32>
    %377 = tpu.matmul %375, %376, %cst_390 {dimension_numbers = #tpu.dot_dimension_numbers<[1], [0], [0], [1], [0, 0, 1, 1], [], []>} : vector<64x128xbf16>, vector<128x128xbf16>, vector<64x128xf32> -> vector<64x128xf32>
    %378 = arith.addf %371, %377 : vector<64x128xf32>
    %c0_391 = arith.constant 0 : index
    %c2_392 = arith.constant 2 : index
    %c0_393 = arith.constant 0 : index
    %c0_394 = arith.constant 0 : index
    %379 = vector.load %arg14[%c0_391, %c2_392, %c0_393, %c0_394] : memref<3x10x8x128xf32, #tpu.memory_space<vmem>>, vector<1x8x8x128xf32>
    %380 = vector.shape_cast %379 : vector<1x8x8x128xf32> to vector<8x8x128xf32>
    %381 = vector.shape_cast %380 : vector<8x8x128xf32> to vector<64x128xf32>
    %382 = arith.truncf %381 : vector<64x128xf32> to vector<64x128xbf16>
    %c768_395 = arith.constant 768 : index
    %c0_396 = arith.constant 0 : index
    %383 = vector.load %arg11[%c768_395, %c0_396] : memref<1152x128xbf16, #tpu.memory_space<vmem>>, vector<128x128xbf16>
    %cst_397 = arith.constant dense<0.000000e+00> : vector<64x128xf32>
    %384 = tpu.matmul %382, %383, %cst_397 {dimension_numbers = #tpu.dot_dimension_numbers<[1], [0], [0], [1], [0, 0, 1, 1], [], []>} : vector<64x128xbf16>, vector<128x128xbf16>, vector<64x128xf32> -> vector<64x128xf32>
    %385 = arith.addf %378, %384 : vector<64x128xf32>
    %c1_398 = arith.constant 1 : index
    %c2_399 = arith.constant 2 : index
    %c0_400 = arith.constant 0 : index
    %c0_401 = arith.constant 0 : index
    %386 = vector.load %arg14[%c1_398, %c2_399, %c0_400, %c0_401] : memref<3x10x8x128xf32, #tpu.memory_space<vmem>>, vector<1x8x8x128xf32>
    %387 = vector.shape_cast %386 : vector<1x8x8x128xf32> to vector<8x8x128xf32>
    %388 = vector.shape_cast %387 : vector<8x8x128xf32> to vector<64x128xf32>
    %389 = arith.truncf %388 : vector<64x128xf32> to vector<64x128xbf16>
    %c896_402 = arith.constant 896 : index
    %c0_403 = arith.constant 0 : index
    %390 = vector.load %arg11[%c896_402, %c0_403] : memref<1152x128xbf16, #tpu.memory_space<vmem>>, vector<128x128xbf16>
    %cst_404 = arith.constant dense<0.000000e+00> : vector<64x128xf32>
    %391 = tpu.matmul %389, %390, %cst_404 {dimension_numbers = #tpu.dot_dimension_numbers<[1], [0], [0], [1], [0, 0, 1, 1], [], []>} : vector<64x128xbf16>, vector<128x128xbf16>, vector<64x128xf32> -> vector<64x128xf32>
    %392 = arith.addf %385, %391 : vector<64x128xf32>
    %c2_405 = arith.constant 2 : index
    %c2_406 = arith.constant 2 : index
    %c0_407 = arith.constant 0 : index
    %c0_408 = arith.constant 0 : index
    %393 = vector.load %arg14[%c2_405, %c2_406, %c0_407, %c0_408] : memref<3x10x8x128xf32, #tpu.memory_space<vmem>>, vector<1x8x8x128xf32>
    %394 = vector.shape_cast %393 : vector<1x8x8x128xf32> to vector<8x8x128xf32>
    %395 = vector.shape_cast %394 : vector<8x8x128xf32> to vector<64x128xf32>
    %396 = arith.truncf %395 : vector<64x128xf32> to vector<64x128xbf16>
    %c1024_409 = arith.constant 1024 : index
    %c0_410 = arith.constant 0 : index
    %397 = vector.load %arg11[%c1024_409, %c0_410] : memref<1152x128xbf16, #tpu.memory_space<vmem>>, vector<128x128xbf16>
    %cst_411 = arith.constant dense<0.000000e+00> : vector<64x128xf32>
    %398 = tpu.matmul %396, %397, %cst_411 {dimension_numbers = #tpu.dot_dimension_numbers<[1], [0], [0], [1], [0, 0, 1, 1], [], []>} : vector<64x128xbf16>, vector<128x128xbf16>, vector<64x128xf32> -> vector<64x128xf32>
    %399 = arith.addf %392, %398 : vector<64x128xf32>
    %400 = vector.broadcast %288 : vector<1x128xf32> to vector<64x128xf32>
    %401 = arith.addf %399, %400 : vector<64x128xf32>
    %cst_412 = arith.constant 0.000000e+00 : f32
    %402 = vector.broadcast %cst_412 : f32 to vector<64x128xf32>
    %403 = arith.subf %402, %401 : vector<64x128xf32>
    %404 = math.exp %403 : vector<64x128xf32>
    %cst_413 = arith.constant 1.000000e+00 : f32
    %405 = vector.broadcast %cst_413 : f32 to vector<64x128xf32>
    %406 = arith.addf %405, %404 : vector<64x128xf32>
    %407 = tpu.reciprocal %406 {approx = true} : vector<64x128xf32> -> vector<64x128xf32>
    %408 = vector.shape_cast %407 : vector<64x128xf32> to vector<8x8x128xf32>
    %c0_414 = arith.constant 0 : index
    %c0_415 = arith.constant 0 : index
    %c0_416 = arith.constant 0 : index
    %c0_417 = arith.constant 0 : index
    %409 = vector.load %arg13[%c0_414, %c0_415, %c0_416, %c0_417] : memref<1x8x8x128xf32, #tpu.memory_space<vmem>>, vector<1x8x8x128xf32>
    %410 = vector.shape_cast %409 : vector<1x8x8x128xf32> to vector<8x8x128xf32>
    %411 = vector.shape_cast %408 : vector<8x8x128xf32> to vector<1x8x8x128xf32>
    tpu.vector_store %arg13[%c0_414, %c0_415, %c0_416, %c0_417], %411 {strides = array<i32>} : memref<1x8x8x128xf32, #tpu.memory_space<vmem>>, vector<1x8x8x128xf32>,
    return
  }
  func.func @transform_0(%arg0: i32) -> (i32, i32, i32, i32) {
    %c0_i32 = arith.constant 0 : i32
    %c0_i32_0 = arith.constant 0 : i32
    %c0_i32_1 = arith.constant 0 : i32
    %c0_i32_2 = arith.constant 0 : i32
    return %arg0, %c0_i32, %c0_i32_0, %c0_i32_1 : i32, i32, i32, i32
  }
  func.func @transform_1(%arg0: i32) -> (i32, i32, i32) {
    %c0_i32 = arith.constant 0 : i32
    %c0_i32_0 = arith.constant 0 : i32
    %c0_i32_1 = arith.constant 0 : i32
    return %arg0, %c0_i32, %c0_i32_0 : i32, i32, i32
  }
  func.func @transform_2(%arg0: i32) -> (i32, i32) {
    %c0_i32 = arith.constant 0 : i32
    %c0_i32_0 = arith.constant 0 : i32
    %c0_i32_1 = arith.constant 0 : i32
    return %c0_i32, %c0_i32_0 : i32, i32
  }
  func.func @transform_3(%arg0: i32) -> (i32, i32) {
    %c0_i32 = arith.constant 0 : i32
    %c0_i32_0 = arith.constant 0 : i32
    %c0_i32_1 = arith.constant 0 : i32
    return %c0_i32, %c0_i32_0 : i32, i32
  }
  func.func @transform_4(%arg0: i32) -> (i32, i32) {
    %c0_i32 = arith.constant 0 : i32
    %c0_i32_0 = arith.constant 0 : i32
    %c0_i32_1 = arith.constant 0 : i32
    return %c0_i32, %c0_i32_0 : i32, i32
  }
  func.func @transform_5(%arg0: i32) -> (i32, i32) {
    %c0_i32 = arith.constant 0 : i32
    %c0_i32_0 = arith.constant 0 : i32
    %c0_i32_1 = arith.constant 0 : i32
    return %c0_i32, %c0_i32_0 : i32, i32
  }
  func.func @transform_6(%arg0: i32) -> (i32, i32) {
    %c0_i32 = arith.constant 0 : i32
    %c0_i32_0 = arith.constant 0 : i32
    %c0_i32_1 = arith.constant 0 : i32
    return %c0_i32, %c0_i32_0 : i32, i32
  }
  func.func @transform_7(%arg0: i32) -> (i32, i32) {
    %c0_i32 = arith.constant 0 : i32
    %c0_i32_0 = arith.constant 0 : i32
    %c0_i32_1 = arith.constant 0 : i32
    return %c0_i32, %c0_i32_0 : i32, i32
  }
  func.func @transform_8(%arg0: i32) -> (i32, i32) {
    %c0_i32 = arith.constant 0 : i32
    %c0_i32_0 = arith.constant 0 : i32
    %c0_i32_1 = arith.constant 0 : i32
    return %c0_i32, %c0_i32_0 : i32, i32
  }
  func.func @transform_9(%arg0: i32) -> (i32, i32) {
    %c0_i32 = arith.constant 0 : i32
    %c0_i32_0 = arith.constant 0 : i32
    %c0_i32_1 = arith.constant 0 : i32
    return %c0_i32, %c0_i32_0 : i32, i32
  }
  func.func @transform_10(%arg0: i32) -> (i32, i32) {
    %c0_i32 = arith.constant 0 : i32
    %c0_i32_0 = arith.constant 0 : i32
    %c0_i32_1 = arith.constant 0 : i32
    return %c0_i32, %c0_i32_0 : i32, i32
  }
  func.func @transform_11(%arg0: i32) -> (i32, i32) {
    %c0_i32 = arith.constant 0 : i32
    %c0_i32_0 = arith.constant 0 : i32
    %c0_i32_1 = arith.constant 0 : i32
    return %c0_i32, %c0_i32_0 : i32, i32
  }
  func.func @transform_12(%arg0: i32) -> (i32, i32, i32, i32) {
    %c0_i32 = arith.constant 0 : i32
    %c0_i32_0 = arith.constant 0 : i32
    %c0_i32_1 = arith.constant 0 : i32
    %c0_i32_2 = arith.constant 0 : i32
    return %arg0, %c0_i32, %c0_i32_0, %c0_i32_1 : i32, i32, i32, i32
  }
}

</mosaic_0001>

<llo_original>
// kernel: forward.2
$region0: #{forward.2}
  #allocation0 [shape = 'u32[]', space=smem, size = 0x4, offset = 0x4, fixed_abs, tag = 'smem constant byte address 0x4 - core index']
  #allocation1 [shape = 'u32[72,128]{1,0:T(1,128)}', space=vmem, size = 0x9000, scoped, tag = 'internal scratch']
  #allocation2 [shape = 'f32[3,10,8,64]{3,2,1,0:T(8,128)}', space=vmem, size = 0x1e000, scoped, tag = 'scratch operand']
  %s0 = inlined_call_operand.vmem [shape: f32[2,8,8,64], index: 0, kind: input, shape index: {}]
  %s1 = inlined_call_operand.vmem [shape: bf16[576,128], index: 1, kind: input, shape index: {}]
  %s2 = inlined_call_operand.vmem [shape: f32[1,128], index: 2, kind: input, shape index: {}]
  %s3 = inlined_call_operand.vmem [shape: f32[2,8,8,128], index: 3, kind: output, shape index: {}]
  %s4 = sld [smem:[#allocation0]]
  $region45: #{forward.2} parent=0
    _
  %s6 = ssub.s32 1, %s4
  %s7 = scalar_select 0, %s6, %s4
  loop: start=0, step=1, limit=4
  $region2: #{forward.2} parent=0 // loop_pre_header
    _
  $region3: #{forward.2} parent=0 // loop_header
    %s9 = sphi 0, %s13
    %p10 = scmp.ge.s32.totalorder %s9, 4
    %s19 = sphi 0, %s21
    %s22 = sphi 0, %s19
    %s23 = sphi 0, %s22
    %s39 = sphi 0, %s23
    %s43 = sphi 0, %s43
    %s45 = sphi 0, %s43
    %s46 = sphi 0, %s45
    %s60 = sphi 0, %s46
    %s64 = sphi 0, %s64
    %s66 = sphi 0, %s64
    %s67 = sphi 0, %s66
    %s81 = sphi 0, %s67
    %s87 = sphi 0, %s89
    %s90 = sphi 0, %s87
    %s91 = sphi 0, %s90
    %s107 = sphi 0, %s91
  $region4: #{forward.2} parent=0 // loop_header_branch
    %12 = sbr.rel (%p10) target = $region8
  $region5: #{forward.2} parent=0 // loop_body
    %s14 = ssub.s32 %s9, 1
    %s15 = ssub.s32 %s9, 2
    %s16 = sadd.s32 %s9, 1
    %s17 = ssub.s32 %s9, %s16
    %p18 = scmp.eq.s32.totalorder %s17, 0
    %s20 = sadd.s32 %s19, 1
    %s21 = scalar_select %p18, %s19, %s20
    %p24 = pneg %p18
    %p25 = scmp.eq.s32.totalorder %s9, 1
    %p26 = por %p24, %p25
    %p27 = scmp.ne.s32.totalorder %s19, %s22
    %p28 = scmp.eq.s32.totalorder %s9, 0
    %p29 = por %p27, %p28
    %p30 = scmp.ne.s32.totalorder %s19, %s22
    %p31 = scmp.eq.s32.totalorder %s14, 1
    %p32 = por %p30, %p31
    %p33 = scmp.ne.s32.totalorder %s22, %s23
    %p34 = scmp.eq.s32.totalorder %s14, 0
    %p35 = por %p33, %p34
    %p36 = scmp.ne.s32.totalorder %s22, %s23
    %p37 = scmp.eq.s32.totalorder %s15, 1
    %p38 = por %p36, %p37
    %p40 = scmp.ne.s32.totalorder %s23, %s39
    %p41 = scmp.eq.s32.totalorder %s15, 0
    %p42 = por %p40, %p41
    %s44 = sadd.s32 %s43, 1
    %p47 = scmp.eq.s32.totalorder %s9, 1
    %p48 = scmp.ne.s32.totalorder %s43, %s45
    %p49 = scmp.eq.s32.totalorder %s9, 0
    %p50 = por %p48, %p49
    %p51 = scmp.ne.s32.totalorder %s43, %s45
    %p52 = scmp.eq.s32.totalorder %s14, 1
    %p53 = por %p51, %p52
    %p54 = scmp.ne.s32.totalorder %s45, %s46
    %p55 = scmp.eq.s32.totalorder %s14, 0
    %p56 = por %p54, %p55
    %p57 = scmp.ne.s32.totalorder %s45, %s46
    %p58 = scmp.eq.s32.totalorder %s15, 1
    %p59 = por %p57, %p58
    %p61 = scmp.ne.s32.totalorder %s46, %s60
    %p62 = scmp.eq.s32.totalorder %s15, 0
    %p63 = por %p61, %p62
    %s65 = sadd.s32 %s64, 1
    %p68 = scmp.eq.s32.totalorder %s9, 1
    %p69 = scmp.ne.s32.totalorder %s64, %s66
    %p70 = scmp.eq.s32.totalorder %s9, 0
    %p71 = por %p69, %p70
    %p72 = scmp.ne.s32.totalorder %s64, %s66
    %p73 = scmp.eq.s32.totalorder %s14, 1
    %p74 = por %p72, %p73
    %p75 = scmp.ne.s32.totalorder %s66, %s67
    %p76 = scmp.eq.s32.totalorder %s14, 0
    %p77 = por %p75, %p76
    %p78 = scmp.ne.s32.totalorder %s66, %s67
    %p79 = scmp.eq.s32.totalorder %s15, 1
    %p80 = por %p78, %p79
    %p82 = scmp.ne.s32.totalorder %s67, %s81
    %p83 = scmp.eq.s32.totalorder %s15, 0
    %p84 = por %p82, %p83
    %s85 = ssub.s32 %s9, %s16
    %p86 = scmp.eq.s32.totalorder %s85, 0
    %s88 = sadd.s32 %s87, 1
    %s89 = scalar_select %p86, %s87, %s88
    %p92 = pneg %p86
    %p93 = scmp.eq.s32.totalorder %s9, 1
    %p94 = por %p92, %p93
    %p95 = scmp.ne.s32.totalorder %s87, %s90
    %p96 = scmp.eq.s32.totalorder %s9, 0
    %p97 = por %p95, %p96
    %p98 = scmp.ne.s32.totalorder %s87, %s90
    %p99 = scmp.eq.s32.totalorder %s14, 1
    %p100 = por %p98, %p99
    %p101 = scmp.ne.s32.totalorder %s90, %s91
    %p102 = scmp.eq.s32.totalorder %s14, 0
    %p103 = por %p101, %p102
    %p104 = scmp.ne.s32.totalorder %s90, %s91
    %p105 = scmp.eq.s32.totalorder %s15, 1
    %p106 = por %p104, %p105
    %p108 = scmp.ne.s32.totalorder %s91, %s107
    %p109 = scmp.eq.s32.totalorder %s15, 0
    %p110 = por %p108, %p109
    %p111 = scmp.le.s32.totalorder 1, %s9
    %p112 = scmp.lt.s32.totalorder %s9, 3
    %p113 = pnand %p111, %p112
    %p114 = pneg %p113
    // Predicated region
    $region9: #{forward.2} parent=5 // pred_check
      _
    $region10: #{forward.2} parent=5 // pred_check_branch
      %116 = sbr.rel (%p113) target = $region12
    $region11: #{forward.2} parent=5 // pred_region
      %s117 = ssub.s32 %s9, 1
      // Predicated region
      $region13: #{forward.2} parent=11 // pred_check
        %p118 = pneg %p56
      $region14: #{forward.2} parent=11 // pred_check_branch
        %120 = sbr.rel (%p118) target = $region16
      $region15: #{forward.2} parent=11 // pred_region
        _
      $region16: #{forward.2} parent=11 // pred_fallthru
        _
      // Predicated region
      $region17: #{forward.2} parent=11 // pred_check
        %p121 = pneg %p77
      $region18: #{forward.2} parent=11 // pred_check_branch
        %123 = sbr.rel (%p121) target = $region20
      $region19: #{forward.2} parent=11 // pred_region
        _
      $region20: #{forward.2} parent=11 // pred_fallthru
        _
    $region12: #{forward.2} parent=5 // pred_fallthru
      _
    %p124 = scmp.lt.s32.totalorder %s9, 2
    // Predicated region
    $region21: #{forward.2} parent=5 // pred_check
      %p125 = pneg %p124
    $region22: #{forward.2} parent=5 // pred_check_branch
      %127 = sbr.rel (%p125) target = $region24
    $region23: #{forward.2} parent=5 // pred_region
      // Predicated region
      $region25: #{forward.2} parent=23 // pred_check
        %p128 = pneg %p29
      $region26: #{forward.2} parent=23 // pred_check_branch
        %130 = sbr.rel (%p128) target = $region28
      $region27: #{forward.2} parent=23 // pred_region
        %p131 = scmp.lt.s32.totalorder %s9, 1
        %s132 = scalar_select %p131, %s9, 1
        %s133 = smul.addr %s132, 8
        %s134 = smul.addr %s133, 8
        %s135 = scalar_lea.vmem %s0, %s134
      $region28: #{forward.2} parent=23 // pred_fallthru
        _
    $region24: #{forward.2} parent=5 // pred_fallthru
      _
    %p136 = scmp.le.s32.totalorder 1, %s9
    %p137 = scmp.lt.s32.totalorder %s9, 3
    %p138 = pnand %p136, %p137
    %p139 = pneg %p138
    // Predicated region
    $region29: #{forward.2} parent=5 // pred_check
      _
    $region30: #{forward.2} parent=5 // pred_check_branch
      %141 = sbr.rel (%p138) target = $region32
    $region31: #{forward.2} parent=5 // pred_region
      %s142 = ssub.s32 %s9, 1
      %p143 = scmp.lt.s32.totalorder %s14, 1
      %s144 = scalar_select %p143, %s14, 1
      %s145 = smul.addr %s144, 8
      %s146 = smul.addr %s145, 8
      %s147 = scalar_lea.vmem %s0, %s146
      %p148 = pneg %p35
      %p149 = pneg %p32
      %p150 = pneg %p56
      %p151 = pneg %p53
      %p152 = pneg %p77
      %p153 = pneg %p74
      %p154 = pneg %p103
      %p155 = pneg %p100
      %p156 = scmp.lt.s32.totalorder %s14, 1
      %s157 = scalar_select %p156, %s14, 1
      %s158 = smul.addr %s157, 8
      %s159 = smul.addr %s158, 8
      %s160 = scalar_lea.vmem %s3, %s159
      %p161 = scmp.lt.s32.totalorder %s14, 1
      %s162 = scalar_select %p161, %s14, 1
      %s163 = smul.addr %s162, 8
      %s164 = smul.addr %s163, 8
      %s165 = scalar_lea.vmem %s0, %s164
      %p166 = scmp.lt.s32.totalorder %s14, 1
      %s167 = scalar_select %p166, %s14, 1
      %s168 = smul.addr %s167, 8
      %s169 = smul.addr %s168, 8
      %s170 = scalar_lea.vmem %s3, %s169
      %v172 = vld [vmem:[%s165] sm:$0xff]
      %v173 = vld [vmem:[%s165 + $0x8] sm:$0xff]
      %v174 = vld [vmem:[%s165 + $0x10] sm:$0xff]
      %v175 = vld [vmem:[%s165 + $0x18] sm:$0xff]
      %v176 = vld [vmem:[%s165 + $0x20] sm:$0xff]
      %v177 = vld [vmem:[%s165 + $0x28] sm:$0xff]
      %v178 = vld [vmem:[%s165 + $0x30] sm:$0xff]
      %v179 = vld [vmem:[%s165 + $0x38] sm:$0xff]
      %v180 = vld [vmem:[%s2] sm:$0x1]
      %s181 = scalar_lea.vmem [#allocation2], 88
      %vm182 = vcmask 523264
      %183 = vst.msk [vmem:[%s181] sm:$0xff] %vm182, %v172
      %184 = vst.msk [vmem:[%s181 + $0x8] sm:$0xff] %vm182, %v173
      %185 = vst.msk [vmem:[%s181 + $0x10] sm:$0xff] %vm182, %v174
      %186 = vst.msk [vmem:[%s181 + $0x18] sm:$0xff] %vm182, %v175
      %187 = vst.msk [vmem:[%s181 + $0x20] sm:$0xff] %vm182, %v176
      %188 = vst.msk [vmem:[%s181 + $0x28] sm:$0xff] %vm182, %v177
      %189 = vst.msk [vmem:[%s181 + $0x30] sm:$0xff] %vm182, %v178
      %190 = vst.msk [vmem:[%s181 + $0x38] sm:$0xff] %vm182, %v179
      %s191 = scalar_lea.vmem [#allocation2], 8
      %vm192 = vcmask 522240
      %193 = vst.msk [vmem:[%s191 + $0x1] sm:$0x7f] %vm192, %v172
      %194 = vst.msk [vmem:[%s191 + $0x9] sm:$0x7f] %vm192, %v173
      %195 = vst.msk [vmem:[%s191 + $0x11] sm:$0x7f] %vm192, %v174
      %196 = vst.msk [vmem:[%s191 + $0x19] sm:$0x7f] %vm192, %v175
      %197 = vst.msk [vmem:[%s191 + $0x21] sm:$0x7f] %vm192, %v176
      %198 = vst.msk [vmem:[%s191 + $0x29] sm:$0x7f] %vm192, %v177
      %199 = vst.msk [vmem:[%s191 + $0x31] sm:$0x7f] %vm192, %v178
      %200 = vst.msk [vmem:[%s191 + $0x39] sm:$0x7f] %vm192, %v179
      %vm201 = vcmask 517121
      %202 = vst.msk [vmem:[%s191 - $0x1] sm:$0x2] %vm201, %v172
      %203 = vst.msk [vmem:[%s191 + $0x7] sm:$0x2] %vm201, %v173
      %204 = vst.msk [vmem:[%s191 + $0xf] sm:$0x2] %vm201, %v174
      %205 = vst.msk [vmem:[%s191 + $0x17] sm:$0x2] %vm201, %v175
      %206 = vst.msk [vmem:[%s191 + $0x1f] sm:$0x2] %vm201, %v176
      %207 = vst.msk [vmem:[%s191 + $0x27] sm:$0x2] %vm201, %v177
      %208 = vst.msk [vmem:[%s191 + $0x2f] sm:$0x2] %vm201, %v178
      %209 = vst.msk [vmem:[%s191 + $0x37] sm:$0x2] %vm201, %v179
      %s210 = scalar_lea.vmem [#allocation2], 168
      %vm211 = vcmask 523265
      %212 = vst.msk [vmem:[%s210 - $0x1] sm:$0xfe] %vm211, %v172
      %213 = vst.msk [vmem:[%s210 + $0x7] sm:$0xfe] %vm211, %v173
      %214 = vst.msk [vmem:[%s210 + $0xf] sm:$0xfe] %vm211, %v174
      %215 = vst.msk [vmem:[%s210 + $0x17] sm:$0xfe] %vm211, %v175
      %216 = vst.msk [vmem:[%s210 + $0x1f] sm:$0xfe] %vm211, %v176
      %217 = vst.msk [vmem:[%s210 + $0x27] sm:$0xfe] %vm211, %v177
      %218 = vst.msk [vmem:[%s210 + $0x2f] sm:$0xfe] %vm211, %v178
      %219 = vst.msk [vmem:[%s210 + $0x37] sm:$0xfe] %vm211, %v179
      %vm220 = vcmask 522246
      %221 = vst.msk [vmem:[%s210 + $0x1] sm:$0x40] %vm220, %v172
      %222 = vst.msk [vmem:[%s210 + $0x9] sm:$0x40] %vm220, %v173
      %223 = vst.msk [vmem:[%s210 + $0x11] sm:$0x40] %vm220, %v174
      %224 = vst.msk [vmem:[%s210 + $0x19] sm:$0x40] %vm220, %v175
      %225 = vst.msk [vmem:[%s210 + $0x21] sm:$0x40] %vm220, %v176
      %226 = vst.msk [vmem:[%s210 + $0x29] sm:$0x40] %vm220, %v177
      %227 = vst.msk [vmem:[%s210 + $0x31] sm:$0x40] %vm220, %v178
      %228 = vst.msk [vmem:[%s210 + $0x39] sm:$0x40] %vm220, %v179
      %s229 = scalar_lea.vmem [#allocation2], 16
      %v230 = vld [vmem:[%s229] sm:$0xff]
      %231 = vst.msk [vmem:[#allocation2] sm:$0xff] %vm182, %v230
      %s232 = scalar_lea.vmem [#allocation2], 56
      %v233 = vld [vmem:[%s232] sm:$0xff]
      %s234 = scalar_lea.vmem [#allocation2], 72
      %235 = vst.msk [vmem:[%s234] sm:$0xff] %vm182, %v233
      %s236 = scalar_lea.vmem [#allocation2], 96
      %v237 = vld [vmem:[%s236] sm:$0xff]
      %s238 = scalar_lea.vmem [#allocation2], 80
      %239 = vst.msk [vmem:[%s238] sm:$0xff] %vm182, %v237
      %s240 = scalar_lea.vmem [#allocation2], 136
      %v241 = vld [vmem:[%s240] sm:$0xff]
      %s242 = scalar_lea.vmem [#allocation2], 152
      %243 = vst.msk [vmem:[%s242] sm:$0xff] %vm182, %v241
      %s244 = scalar_lea.vmem [#allocation2], 176
      %v245 = vld [vmem:[%s244] sm:$0xff]
      %s246 = scalar_lea.vmem [#allocation2], 160
      %247 = vst.msk [vmem:[%s246] sm:$0xff] %vm182, %v245
      %s248 = scalar_lea.vmem [#allocation2], 216
      %v249 = vld [vmem:[%s248] sm:$0xff]
      %s250 = scalar_lea.vmem [#allocation2], 232
      %251 = vst.msk [vmem:[%s250] sm:$0xff] %vm182, %v249
      %v252 = vld [vmem:[#allocation2] sm:$0xff]
      %v253 = vld [vmem:[#allocation2 + $0x8] sm:$0xff]
      %v254 = vld [vmem:[#allocation2 + $0x10] sm:$0xff]
      %v255 = vld [vmem:[#allocation2 + $0x18] sm:$0xff]
      %v256 = vld [vmem:[#allocation2 + $0x20] sm:$0xff]
      %v257 = vld [vmem:[#allocation2 + $0x28] sm:$0xff]
      %v258 = vld [vmem:[#allocation2 + $0x30] sm:$0xff]
      %v259 = vld [vmem:[#allocation2 + $0x38] sm:$0xff]
      %v260 = vpack.c.bf16 %v253, %v252
      %v261 = vpack.c.bf16 %v255, %v254
      %v262 = vpack.c.bf16 %v257, %v256
      %v263 = vpack.c.bf16 %v259, %v258
      %v264 = vld [vmem:[%s1] sm:$0xf]
      %v265 = vld [vmem:[%s1 + $0x4] sm:$0xf]
      %v266 = vld [vmem:[%s1 + $0x8] sm:$0xf]
      %v267 = vld [vmem:[%s1 + $0xc] sm:$0xf]
      %v268 = vld [vmem:[%s1 + $0x10] sm:$0xf]
      %v269 = vld [vmem:[%s1 + $0x14] sm:$0xf]
      %v270 = vld [vmem:[%s1 + $0x18] sm:$0xf]
      %v271 = vld [vmem:[%s1 + $0x1c] sm:$0xf]
      %v272 = vld [vmem:[%s238] sm:$0xff]
      %v273 = vld [vmem:[%s238 + $0x8] sm:$0xff]
      %v274 = vld [vmem:[%s238 + $0x10] sm:$0xff]
      %v275 = vld [vmem:[%s238 + $0x18] sm:$0xff]
      %v276 = vld [vmem:[%s238 + $0x20] sm:$0xff]
      %v277 = vld [vmem:[%s238 + $0x28] sm:$0xff]
      %v278 = vld [vmem:[%s238 + $0x30] sm:$0xff]
      %v279 = vld [vmem:[%s238 + $0x38] sm:$0xff]
      %v280 = vpack.c.bf16 %v273, %v272
      %v281 = vpack.c.bf16 %v275, %v274
      %v282 = vpack.c.bf16 %v277, %v276
      %v283 = vpack.c.bf16 %v279, %v278
      %v284 = vld [vmem:[%s1 + $0x20] sm:$0xf]
      %v285 = vld [vmem:[%s1 + $0x24] sm:$0xf]
      %v286 = vld [vmem:[%s1 + $0x28] sm:$0xf]
      %v287 = vld [vmem:[%s1 + $0x2c] sm:$0xf]
      %v288 = vld [vmem:[%s1 + $0x30] sm:$0xf]
      %v289 = vld [vmem:[%s1 + $0x34] sm:$0xf]
      %v290 = vld [vmem:[%s1 + $0x38] sm:$0xf]
      %v291 = vld [vmem:[%s1 + $0x3c] sm:$0xf]
      %v300 = vunpack.c.l.b16 %v284
      %v301 = vunpack.c.l.b16 %v285
      %v302 = vunpack.c.l.b16 %v286
      %v303 = vunpack.c.l.b16 %v287
      %v304 = vunpack.c.l.b16 %v288
      %v305 = vunpack.c.l.b16 %v289
      %v306 = vunpack.c.l.b16 %v290
      %v307 = vunpack.c.l.b16 %v291
      %v308 = vpack.c.b16 %v301, %v300
      %v309 = vpack.c.b16 %v303, %v302
      %v310 = vpack.c.b16 %v305, %v304
      %v311 = vpack.c.b16 %v307, %v306
      %v317 = vsel %vm182, %v280, 0
      %v320 = vsel %vm182, %v281, 0
      %v323 = vsel %vm182, %v282, 0
      %v326 = vsel %vm182, %v283, 0
      %328 = vmatpush.bf16.msra.mxu0 0
      %329 = vmatpush.bf16.msra.mxu0 0
      %330 = vmatpush.bf16.msra.mxu0 0
      %331 = vmatpush.bf16.msra.mxu0 0
      %332 = vmatpush.bf16.msra.mxu0 %v311
      %333 = vmatpush.bf16.msra.mxu0 %v310
      %334 = vmatpush.bf16.msra.mxu0 %v309
      %335 = vmatpush.bf16.msra.mxu0 %v308
      %336 = vmatmul.bf16.gmra.mxu0 %v317
      %v337 = vpop.f32.mrf.mxu0
      %v338 = vadd.f32 0.0, %v337
      %v339 = vpop.f32.mrf.mxu0
      %v340 = vadd.f32 0.0, %v339
      %341 = vmatmul.bf16.gmra.mxu0 %v320
      %v342 = vpop.f32.mrf.mxu0
      %v343 = vadd.f32 0.0, %v342
      %v344 = vpop.f32.mrf.mxu0
      %v345 = vadd.f32 0.0, %v344
      %346 = vmatmul.bf16.gmra.mxu0 %v323
      %v347 = vpop.f32.mrf.mxu0
      %v348 = vadd.f32 0.0, %v347
      %v349 = vpop.f32.mrf.mxu0
      %v350 = vadd.f32 0.0, %v349
      %351 = vmatmul.bf16.gmra.mxu0 %v326
      %v352 = vpop.f32.mrf.mxu0
      %v353 = vadd.f32 0.0, %v352
      %v354 = vpop.f32.mrf.mxu0
      %v355 = vadd.f32 0.0, %v354
      %356 = vdwg.mxu0
      %v365 = vunpack.c.l.b16 %v264
      %v366 = vunpack.c.l.b16 %v265
      %v367 = vunpack.c.l.b16 %v266
      %v368 = vunpack.c.l.b16 %v267
      %v369 = vunpack.c.l.b16 %v268
      %v370 = vunpack.c.l.b16 %v269
      %v371 = vunpack.c.l.b16 %v270
      %v372 = vunpack.c.l.b16 %v271
      %v373 = vpack.c.b16 %v366, %v365
      %v374 = vpack.c.b16 %v368, %v367
      %v375 = vpack.c.b16 %v370, %v369
      %v376 = vpack.c.b16 %v372, %v371
      %v382 = vsel %vm182, %v260, 0
      %v385 = vsel %vm182, %v261, 0
      %v388 = vsel %vm182, %v262, 0
      %v391 = vsel %vm182, %v263, 0
      %393 = vmatpush.bf16.msra.mxu0 0
      %394 = vmatpush.bf16.msra.mxu0 0
      %395 = vmatpush.bf16.msra.mxu0 0
      %396 = vmatpush.bf16.msra.mxu0 0
      %397 = vmatpush.bf16.msra.mxu0 %v376
      %398 = vmatpush.bf16.msra.mxu0 %v375
      %399 = vmatpush.bf16.msra.mxu0 %v374
      %400 = vmatpush.bf16.msra.mxu0 %v373
      %401 = vmatmul.bf16.gmra.mxu0 %v382
      %v402 = vpop.f32.mrf.mxu0
      %v403 = vadd.f32 %v338, %v402
      %v404 = vpop.f32.mrf.mxu0
      %v405 = vadd.f32 %v340, %v404
      %406 = vmatmul.bf16.gmra.mxu0 %v385
      %v407 = vpop.f32.mrf.mxu0
      %v408 = vadd.f32 %v343, %v407
      %v409 = vpop.f32.mrf.mxu0
      %v410 = vadd.f32 %v345, %v409
      %411 = vmatmul.bf16.gmra.mxu0 %v388
      %v412 = vpop.f32.mrf.mxu0
      %v413 = vadd.f32 %v348, %v412
      %v414 = vpop.f32.mrf.mxu0
      %v415 = vadd.f32 %v350, %v414
      %416 = vmatmul.bf16.gmra.mxu0 %v391
      %v417 = vpop.f32.mrf.mxu0
      %v418 = vadd.f32 %v353, %v417
      %v419 = vpop.f32.mrf.mxu0
      %v420 = vadd.f32 %v355, %v419
      %421 = vdwg.mxu0
      %v422 = vld [vmem:[%s246] sm:$0xff]
      %v423 = vld [vmem:[%s246 + $0x8] sm:$0xff]
      %v424 = vld [vmem:[%s246 + $0x10] sm:$0xff]
      %v425 = vld [vmem:[%s246 + $0x18] sm:$0xff]
      %v426 = vld [vmem:[%s246 + $0x20] sm:$0xff]
      %v427 = vld [vmem:[%s246 + $0x28] sm:$0xff]
      %v428 = vld [vmem:[%s246 + $0x30] sm:$0xff]
      %v429 = vld [vmem:[%s246 + $0x38] sm:$0xff]
      %v430 = vpack.c.bf16 %v423, %v422
      %v431 = vpack.c.bf16 %v425, %v424
      %v432 = vpack.c.bf16 %v427, %v426
      %v433 = vpack.c.bf16 %v429, %v428
      %v434 = vld [vmem:[%s1 + $0x40] sm:$0xf]
      %v435 = vld [vmem:[%s1 + $0x44] sm:$0xf]
      %v436 = vld [vmem:[%s1 + $0x48] sm:$0xf]
      %v437 = vld [vmem:[%s1 + $0x4c] sm:$0xf]
      %v438 = vld [vmem:[%s1 + $0x50] sm:$0xf]
      %v439 = vld [vmem:[%s1 + $0x54] sm:$0xf]
      %v440 = vld [vmem:[%s1 + $0x58] sm:$0xf]
      %v441 = vld [vmem:[%s1 + $0x5c] sm:$0xf]
      %v450 = vunpack.c.l.b16 %v434
      %v451 = vunpack.c.l.b16 %v435
      %v452 = vunpack.c.l.b16 %v436
      %v453 = vunpack.c.l.b16 %v437
      %v454 = vunpack.c.l.b16 %v438
      %v455 = vunpack.c.l.b16 %v439
      %v456 = vunpack.c.l.b16 %v440
      %v457 = vunpack.c.l.b16 %v441
      %v458 = vpack.c.b16 %v451, %v450
      %v459 = vpack.c.b16 %v453, %v452
      %v460 = vpack.c.b16 %v455, %v454
      %v461 = vpack.c.b16 %v457, %v456
      %v467 = vsel %vm182, %v430, 0
      %v470 = vsel %vm182, %v431, 0
      %v473 = vsel %vm182, %v432, 0
      %v476 = vsel %vm182, %v433, 0
      %478 = vmatpush.bf16.msra.mxu0 0
      %479 = vmatpush.bf16.msra.mxu0 0
      %480 = vmatpush.bf16.msra.mxu0 0
      %481 = vmatpush.bf16.msra.mxu0 0
      %482 = vmatpush.bf16.msra.mxu0 %v461
      %483 = vmatpush.bf16.msra.mxu0 %v460
      %484 = vmatpush.bf16.msra.mxu0 %v459
      %485 = vmatpush.bf16.msra.mxu0 %v458
      %486 = vmatmul.bf16.gmra.mxu0 %v467
      %v487 = vpop.f32.mrf.mxu0
      %v488 = vadd.f32 0.0, %v487
      %v489 = vpop.f32.mrf.mxu0
      %v490 = vadd.f32 0.0, %v489
      %491 = vmatmul.bf16.gmra.mxu0 %v470
      %v492 = vpop.f32.mrf.mxu0
      %v493 = vadd.f32 0.0, %v492
      %v494 = vpop.f32.mrf.mxu0
      %v495 = vadd.f32 0.0, %v494
      %496 = vmatmul.bf16.gmra.mxu0 %v473
      %v497 = vpop.f32.mrf.mxu0
      %v498 = vadd.f32 0.0, %v497
      %v499 = vpop.f32.mrf.mxu0
      %v500 = vadd.f32 0.0, %v499
      %501 = vmatmul.bf16.gmra.mxu0 %v476
      %v502 = vpop.f32.mrf.mxu0
      %v503 = vadd.f32 0.0, %v502
      %v504 = vpop.f32.mrf.mxu0
      %v505 = vadd.f32 0.0, %v504
      %506 = vdwg.mxu0
      %v507 = vadd.f32 %v403, %v488
      %v508 = vadd.f32 %v405, %v490
      %v509 = vadd.f32 %v408, %v493
      %v510 = vadd.f32 %v410, %v495
      %v511 = vadd.f32 %v413, %v498
      %v512 = vadd.f32 %v415, %v500
      %v513 = vadd.f32 %v418, %v503
      %v514 = vadd.f32 %v420, %v505
      %v515 = vld [vmem:[%s191] sm:$0xff]
      %v516 = vld [vmem:[%s191 + $0x8] sm:$0xff]
      %v517 = vld [vmem:[%s191 + $0x10] sm:$0xff]
      %v518 = vld [vmem:[%s191 + $0x18] sm:$0xff]
      %v519 = vld [vmem:[%s191 + $0x20] sm:$0xff]
      %v520 = vld [vmem:[%s191 + $0x28] sm:$0xff]
      %v521 = vld [vmem:[%s191 + $0x30] sm:$0xff]
      %v522 = vld [vmem:[%s191 + $0x38] sm:$0xff]
      %v523 = vpack.c.bf16 %v516, %v515
      %v524 = vpack.c.bf16 %v518, %v517
      %v525 = vpack.c.bf16 %v520, %v519
      %v526 = vpack.c.bf16 %v522, %v521
      %v527 = vld [vmem:[%s1 + $0x60] sm:$0xf]
      %v528 = vld [vmem:[%s1 + $0x64] sm:$0xf]
      %v529 = vld [vmem:[%s1 + $0x68] sm:$0xf]
      %v530 = vld [vmem:[%s1 + $0x6c] sm:$0xf]
      %v531 = vld [vmem:[%s1 + $0x70] sm:$0xf]
      %v532 = vld [vmem:[%s1 + $0x74] sm:$0xf]
      %v533 = vld [vmem:[%s1 + $0x78] sm:$0xf]
      %v534 = vld [vmem:[%s1 + $0x7c] sm:$0xf]
      %v543 = vunpack.c.l.b16 %v527
      %v544 = vunpack.c.l.b16 %v528
      %v545 = vunpack.c.l.b16 %v529
      %v546 = vunpack.c.l.b16 %v530
      %v547 = vunpack.c.l.b16 %v531
      %v548 = vunpack.c.l.b16 %v532
      %v549 = vunpack.c.l.b16 %v533
      %v550 = vunpack.c.l.b16 %v534
      %v551 = vpack.c.b16 %v544, %v543
      %v552 = vpack.c.b16 %v546, %v545
      %v553 = vpack.c.b16 %v548, %v547
      %v554 = vpack.c.b16 %v550, %v549
      %v560 = vsel %vm182, %v523, 0
      %v563 = vsel %vm182, %v524, 0
      %v566 = vsel %vm182, %v525, 0
      %v569 = vsel %vm182, %v526, 0
      %571 = vmatpush.bf16.msra.mxu0 0
      %572 = vmatpush.bf16.msra.mxu0 0
      %573 = vmatpush.bf16.msra.mxu0 0
      %574 = vmatpush.bf16.msra.mxu0 0
      %575 = vmatpush.bf16.msra.mxu0 %v554
      %576 = vmatpush.bf16.msra.mxu0 %v553
      %577 = vmatpush.bf16.msra.mxu0 %v552
      %578 = vmatpush.bf16.msra.mxu0 %v551
      %579 = vmatmul.bf16.gmra.mxu0 %v560
      %v580 = vpop.f32.mrf.mxu0
      %v581 = vadd.f32 0.0, %v580
      %v582 = vpop.f32.mrf.mxu0
      %v583 = vadd.f32 0.0, %v582
      %584 = vmatmul.bf16.gmra.mxu0 %v563
      %v585 = vpop.f32.mrf.mxu0
      %v586 = vadd.f32 0.0, %v585
      %v587 = vpop.f32.mrf.mxu0
      %v588 = vadd.f32 0.0, %v587
      %589 = vmatmul.bf16.gmra.mxu0 %v566
      %v590 = vpop.f32.mrf.mxu0
      %v591 = vadd.f32 0.0, %v590
      %v592 = vpop.f32.mrf.mxu0
      %v593 = vadd.f32 0.0, %v592
      %594 = vmatmul.bf16.gmra.mxu0 %v569
      %v595 = vpop.f32.mrf.mxu0
      %v596 = vadd.f32 0.0, %v595
      %v597 = vpop.f32.mrf.mxu0
      %v598 = vadd.f32 0.0, %v597
      %599 = vdwg.mxu0
      %v600 = vadd.f32 %v507, %v581
      %v601 = vadd.f32 %v508, %v583
      %v602 = vadd.f32 %v509, %v586
      %v603 = vadd.f32 %v510, %v588
      %v604 = vadd.f32 %v511, %v591
      %v605 = vadd.f32 %v512, %v593
      %v606 = vadd.f32 %v513, %v596
      %v607 = vadd.f32 %v514, %v598
      %v608 = vld [vmem:[%s181] sm:$0xff]
      %v609 = vld [vmem:[%s181 + $0x8] sm:$0xff]
      %v610 = vld [vmem:[%s181 + $0x10] sm:$0xff]
      %v611 = vld [vmem:[%s181 + $0x18] sm:$0xff]
      %v612 = vld [vmem:[%s181 + $0x20] sm:$0xff]
      %v613 = vld [vmem:[%s181 + $0x28] sm:$0xff]
      %v614 = vld [vmem:[%s181 + $0x30] sm:$0xff]
      %v615 = vld [vmem:[%s181 + $0x38] sm:$0xff]
      %v616 = vpack.c.bf16 %v609, %v608
      %v617 = vpack.c.bf16 %v611, %v610
      %v618 = vpack.c.bf16 %v613, %v612
      %v619 = vpack.c.bf16 %v615, %v614
      %v620 = vld [vmem:[%s1 + $0x80] sm:$0xf]
      %v621 = vld [vmem:[%s1 + $0x84] sm:$0xf]
      %v622 = vld [vmem:[%s1 + $0x88] sm:$0xf]
      %v623 = vld [vmem:[%s1 + $0x8c] sm:$0xf]
      %v624 = vld [vmem:[%s1 + $0x90] sm:$0xf]
      %v625 = vld [vmem:[%s1 + $0x94] sm:$0xf]
      %v626 = vld [vmem:[%s1 + $0x98] sm:$0xf]
      %v627 = vld [vmem:[%s1 + $0x9c] sm:$0xf]
      %v636 = vunpack.c.l.b16 %v620
      %v637 = vunpack.c.l.b16 %v621
      %v638 = vunpack.c.l.b16 %v622
      %v639 = vunpack.c.l.b16 %v623
      %v640 = vunpack.c.l.b16 %v624
      %v641 = vunpack.c.l.b16 %v625
      %v642 = vunpack.c.l.b16 %v626
      %v643 = vunpack.c.l.b16 %v627
      %v644 = vpack.c.b16 %v637, %v636
      %v645 = vpack.c.b16 %v639, %v638
      %v646 = vpack.c.b16 %v641, %v640
      %v647 = vpack.c.b16 %v643, %v642
      %v653 = vsel %vm182, %v616, 0
      %v656 = vsel %vm182, %v617, 0
      %v659 = vsel %vm182, %v618, 0
      %v662 = vsel %vm182, %v619, 0
      %664 = vmatpush.bf16.msra.mxu0 0
      %665 = vmatpush.bf16.msra.mxu0 0
      %666 = vmatpush.bf16.msra.mxu0 0
      %667 = vmatpush.bf16.msra.mxu0 0
      %668 = vmatpush.bf16.msra.mxu0 %v647
      %669 = vmatpush.bf16.msra.mxu0 %v646
      %670 = vmatpush.bf16.msra.mxu0 %v645
      %671 = vmatpush.bf16.msra.mxu0 %v644
      %672 = vmatmul.bf16.gmra.mxu0 %v653
      %v673 = vpop.f32.mrf.mxu0
      %v674 = vadd.f32 0.0, %v673
      %v675 = vpop.f32.mrf.mxu0
      %v676 = vadd.f32 0.0, %v675
      %677 = vmatmul.bf16.gmra.mxu0 %v656
      %v678 = vpop.f32.mrf.mxu0
      %v679 = vadd.f32 0.0, %v678
      %v680 = vpop.f32.mrf.mxu0
      %v681 = vadd.f32 0.0, %v680
      %682 = vmatmul.bf16.gmra.mxu0 %v659
      %v683 = vpop.f32.mrf.mxu0
      %v684 = vadd.f32 0.0, %v683
      %v685 = vpop.f32.mrf.mxu0
      %v686 = vadd.f32 0.0, %v685
      %687 = vmatmul.bf16.gmra.mxu0 %v662
      %v688 = vpop.f32.mrf.mxu0
      %v689 = vadd.f32 0.0, %v688
      %v690 = vpop.f32.mrf.mxu0
      %v691 = vadd.f32 0.0, %v690
      %692 = vdwg.mxu0
      %v693 = vadd.f32 %v600, %v674
      %v694 = vadd.f32 %v601, %v676
      %v695 = vadd.f32 %v602, %v679
      %v696 = vadd.f32 %v603, %v681
      %v697 = vadd.f32 %v604, %v684
      %v698 = vadd.f32 %v605, %v686
      %v699 = vadd.f32 %v606, %v689
      %v700 = vadd.f32 %v607, %v691
      %v701 = vld [vmem:[%s210] sm:$0xff]
      %v702 = vld [vmem:[%s210 + $0x8] sm:$0xff]
      %v703 = vld [vmem:[%s210 + $0x10] sm:$0xff]
      %v704 = vld [vmem:[%s210 + $0x18] sm:$0xff]
      %v705 = vld [vmem:[%s210 + $0x20] sm:$0xff]
      %v706 = vld [vmem:[%s210 + $0x28] sm:$0xff]
      %v707 = vld [vmem:[%s210 + $0x30] sm:$0xff]
      %v708 = vld [vmem:[%s210 + $0x38] sm:$0xff]
      %v709 = vpack.c.bf16 %v702, %v701
      %v710 = vpack.c.bf16 %v704, %v703
      %v711 = vpack.c.bf16 %v706, %v705
      %v712 = vpack.c.bf16 %v708, %v707
      %v713 = vld [vmem:[%s1 + $0xa0] sm:$0xf]
      %v714 = vld [vmem:[%s1 + $0xa4] sm:$0xf]
      %v715 = vld [vmem:[%s1 + $0xa8] sm:$0xf]
      %v716 = vld [vmem:[%s1 + $0xac] sm:$0xf]
      %v717 = vld [vmem:[%s1 + $0xb0] sm:$0xf]
      %v718 = vld [vmem:[%s1 + $0xb4] sm:$0xf]
      %v719 = vld [vmem:[%s1 + $0xb8] sm:$0xf]
      %v720 = vld [vmem:[%s1 + $0xbc] sm:$0xf]
      %v729 = vunpack.c.l.b16 %v713
      %v730 = vunpack.c.l.b16 %v714
      %v731 = vunpack.c.l.b16 %v715
      %v732 = vunpack.c.l.b16 %v716
      %v733 = vunpack.c.l.b16 %v717
      %v734 = vunpack.c.l.b16 %v718
      %v735 = vunpack.c.l.b16 %v719
      %v736 = vunpack.c.l.b16 %v720
      %v737 = vpack.c.b16 %v730, %v729
      %v738 = vpack.c.b16 %v732, %v731
      %v739 = vpack.c.b16 %v734, %v733
      %v740 = vpack.c.b16 %v736, %v735
      %v746 = vsel %vm182, %v709, 0
      %v749 = vsel %vm182, %v710, 0
      %v752 = vsel %vm182, %v711, 0
      %v755 = vsel %vm182, %v712, 0
      %757 = vmatpush.bf16.msra.mxu0 0
      %758 = vmatpush.bf16.msra.mxu0 0
      %759 = vmatpush.bf16.msra.mxu0 0
      %760 = vmatpush.bf16.msra.mxu0 0
      %761 = vmatpush.bf16.msra.mxu0 %v740
      %762 = vmatpush.bf16.msra.mxu0 %v739
      %763 = vmatpush.bf16.msra.mxu0 %v738
      %764 = vmatpush.bf16.msra.mxu0 %v737
      %765 = vmatmul.bf16.gmra.mxu0 %v746
      %v766 = vpop.f32.mrf.mxu0
      %v767 = vadd.f32 0.0, %v766
      %v768 = vpop.f32.mrf.mxu0
      %v769 = vadd.f32 0.0, %v768
      %770 = vmatmul.bf16.gmra.mxu0 %v749
      %v771 = vpop.f32.mrf.mxu0
      %v772 = vadd.f32 0.0, %v771
      %v773 = vpop.f32.mrf.mxu0
      %v774 = vadd.f32 0.0, %v773
      %775 = vmatmul.bf16.gmra.mxu0 %v752
      %v776 = vpop.f32.mrf.mxu0
      %v777 = vadd.f32 0.0, %v776
      %v778 = vpop.f32.mrf.mxu0
      %v779 = vadd.f32 0.0, %v778
      %780 = vmatmul.bf16.gmra.mxu0 %v755
      %v781 = vpop.f32.mrf.mxu0
      %v782 = vadd.f32 0.0, %v781
      %v783 = vpop.f32.mrf.mxu0
      %v784 = vadd.f32 0.0, %v783
      %785 = vdwg.mxu0
      %v786 = vadd.f32 %v693, %v767
      %v787 = vadd.f32 %v694, %v769
      %v788 = vadd.f32 %v695, %v772
      %v789 = vadd.f32 %v696, %v774
      %v790 = vadd.f32 %v697, %v777
      %v791 = vadd.f32 %v698, %v779
      %v792 = vadd.f32 %v699, %v782
      %v793 = vadd.f32 %v700, %v784
      %v794 = vld [vmem:[%s229] sm:$0xff]
      %v795 = vld [vmem:[%s229 + $0x8] sm:$0xff]
      %v796 = vld [vmem:[%s229 + $0x10] sm:$0xff]
      %v797 = vld [vmem:[%s229 + $0x18] sm:$0xff]
      %v798 = vld [vmem:[%s229 + $0x20] sm:$0xff]
      %v799 = vld [vmem:[%s229 + $0x28] sm:$0xff]
      %v800 = vld [vmem:[%s229 + $0x30] sm:$0xff]
      %v801 = vld [vmem:[%s229 + $0x38] sm:$0xff]
      %v802 = vpack.c.bf16 %v795, %v794
      %v803 = vpack.c.bf16 %v797, %v796
      %v804 = vpack.c.bf16 %v799, %v798
      %v805 = vpack.c.bf16 %v801, %v800
      %v806 = vld [vmem:[%s1 + $0xc0] sm:$0xf]
      %v807 = vld [vmem:[%s1 + $0xc4] sm:$0xf]
      %v808 = vld [vmem:[%s1 + $0xc8] sm:$0xf]
      %v809 = vld [vmem:[%s1 + $0xcc] sm:$0xf]
      %v810 = vld [vmem:[%s1 + $0xd0] sm:$0xf]
      %v811 = vld [vmem:[%s1 + $0xd4] sm:$0xf]
      %v812 = vld [vmem:[%s1 + $0xd8] sm:$0xf]
      %v813 = vld [vmem:[%s1 + $0xdc] sm:$0xf]
      %v822 = vunpack.c.l.b16 %v806
      %v823 = vunpack.c.l.b16 %v807
      %v824 = vunpack.c.l.b16 %v808
      %v825 = vunpack.c.l.b16 %v809
      %v826 = vunpack.c.l.b16 %v810
      %v827 = vunpack.c.l.b16 %v811
      %v828 = vunpack.c.l.b16 %v812
      %v829 = vunpack.c.l.b16 %v813
      %v830 = vpack.c.b16 %v823, %v822
      %v831 = vpack.c.b16 %v825, %v824
      %v832 = vpack.c.b16 %v827, %v826
      %v833 = vpack.c.b16 %v829, %v828
      %v839 = vsel %vm182, %v802, 0
      %v842 = vsel %vm182, %v803, 0
      %v845 = vsel %vm182, %v804, 0
      %v848 = vsel %vm182, %v805, 0
      %850 = vmatpush.bf16.msra.mxu0 0
      %851 = vmatpush.bf16.msra.mxu0 0
      %852 = vmatpush.bf16.msra.mxu0 0
      %853 = vmatpush.bf16.msra.mxu0 0
      %854 = vmatpush.bf16.msra.mxu0 %v833
      %855 = vmatpush.bf16.msra.mxu0 %v832
      %856 = vmatpush.bf16.msra.mxu0 %v831
      %857 = vmatpush.bf16.msra.mxu0 %v830
      %858 = vmatmul.bf16.gmra.mxu0 %v839
      %v859 = vpop.f32.mrf.mxu0
      %v860 = vadd.f32 0.0, %v859
      %v861 = vpop.f32.mrf.mxu0
      %v862 = vadd.f32 0.0, %v861
      %863 = vmatmul.bf16.gmra.mxu0 %v842
      %v864 = vpop.f32.mrf.mxu0
      %v865 = vadd.f32 0.0, %v864
      %v866 = vpop.f32.mrf.mxu0
      %v867 = vadd.f32 0.0, %v866
      %868 = vmatmul.bf16.gmra.mxu0 %v845
      %v869 = vpop.f32.mrf.mxu0
      %v870 = vadd.f32 0.0, %v869
      %v871 = vpop.f32.mrf.mxu0
      %v872 = vadd.f32 0.0, %v871
      %873 = vmatmul.bf16.gmra.mxu0 %v848
      %v874 = vpop.f32.mrf.mxu0
      %v875 = vadd.f32 0.0, %v874
      %v876 = vpop.f32.mrf.mxu0
      %v877 = vadd.f32 0.0, %v876
      %878 = vdwg.mxu0
      %v879 = vadd.f32 %v786, %v860
      %v880 = vadd.f32 %v787, %v862
      %v881 = vadd.f32 %v788, %v865
      %v882 = vadd.f32 %v789, %v867
      %v883 = vadd.f32 %v790, %v870
      %v884 = vadd.f32 %v791, %v872
      %v885 = vadd.f32 %v792, %v875
      %v886 = vadd.f32 %v793, %v877
      %v887 = vld [vmem:[%s236] sm:$0xff]
      %v888 = vld [vmem:[%s236 + $0x8] sm:$0xff]
      %v889 = vld [vmem:[%s236 + $0x10] sm:$0xff]
      %v890 = vld [vmem:[%s236 + $0x18] sm:$0xff]
      %v891 = vld [vmem:[%s236 + $0x20] sm:$0xff]
      %v892 = vld [vmem:[%s236 + $0x28] sm:$0xff]
      %v893 = vld [vmem:[%s236 + $0x30] sm:$0xff]
      %v894 = vld [vmem:[%s236 + $0x38] sm:$0xff]
      %v895 = vpack.c.bf16 %v888, %v887
      %v896 = vpack.c.bf16 %v890, %v889
      %v897 = vpack.c.bf16 %v892, %v891
      %v898 = vpack.c.bf16 %v894, %v893
      %v899 = vld [vmem:[%s1 + $0xe0] sm:$0xf]
      %v900 = vld [vmem:[%s1 + $0xe4] sm:$0xf]
      %v901 = vld [vmem:[%s1 + $0xe8] sm:$0xf]
      %v902 = vld [vmem:[%s1 + $0xec] sm:$0xf]
      %v903 = vld [vmem:[%s1 + $0xf0] sm:$0xf]
      %v904 = vld [vmem:[%s1 + $0xf4] sm:$0xf]
      %v905 = vld [vmem:[%s1 + $0xf8] sm:$0xf]
      %v906 = vld [vmem:[%s1 + $0xfc] sm:$0xf]
      %v915 = vunpack.c.l.b16 %v899
      %v916 = vunpack.c.l.b16 %v900
      %v917 = vunpack.c.l.b16 %v901
      %v918 = vunpack.c.l.b16 %v902
      %v919 = vunpack.c.l.b16 %v903
      %v920 = vunpack.c.l.b16 %v904
      %v921 = vunpack.c.l.b16 %v905
      %v922 = vunpack.c.l.b16 %v906
      %v923 = vpack.c.b16 %v916, %v915
      %v924 = vpack.c.b16 %v918, %v917
      %v925 = vpack.c.b16 %v920, %v919
      %v926 = vpack.c.b16 %v922, %v921
      %v932 = vsel %vm182, %v895, 0
      %v935 = vsel %vm182, %v896, 0
      %v938 = vsel %vm182, %v897, 0
      %v941 = vsel %vm182, %v898, 0
      %943 = vmatpush.bf16.msra.mxu0 0
      %944 = vmatpush.bf16.msra.mxu0 0
      %945 = vmatpush.bf16.msra.mxu0 0
      %946 = vmatpush.bf16.msra.mxu0 0
      %947 = vmatpush.bf16.msra.mxu0 %v926
      %948 = vmatpush.bf16.msra.mxu0 %v925
      %949 = vmatpush.bf16.msra.mxu0 %v924
      %950 = vmatpush.bf16.msra.mxu0 %v923
      %951 = vmatmul.bf16.gmra.mxu0 %v932
      %v952 = vpop.f32.mrf.mxu0
      %v953 = vadd.f32 0.0, %v952
      %v954 = vpop.f32.mrf.mxu0
      %v955 = vadd.f32 0.0, %v954
      %956 = vmatmul.bf16.gmra.mxu0 %v935
      %v957 = vpop.f32.mrf.mxu0
      %v958 = vadd.f32 0.0, %v957
      %v959 = vpop.f32.mrf.mxu0
      %v960 = vadd.f32 0.0, %v959
      %961 = vmatmul.bf16.gmra.mxu0 %v938
      %v962 = vpop.f32.mrf.mxu0
      %v963 = vadd.f32 0.0, %v962
      %v964 = vpop.f32.mrf.mxu0
      %v965 = vadd.f32 0.0, %v964
      %966 = vmatmul.bf16.gmra.mxu0 %v941
      %v967 = vpop.f32.mrf.mxu0
      %v968 = vadd.f32 0.0, %v967
      %v969 = vpop.f32.mrf.mxu0
      %v970 = vadd.f32 0.0, %v969
      %971 = vdwg.mxu0
      %v972 = vadd.f32 %v879, %v953
      %v973 = vadd.f32 %v880, %v955
      %v974 = vadd.f32 %v881, %v958
      %v975 = vadd.f32 %v882, %v960
      %v976 = vadd.f32 %v883, %v963
      %v977 = vadd.f32 %v884, %v965
      %v978 = vadd.f32 %v885, %v968
      %v979 = vadd.f32 %v886, %v970
      %v980 = vld [vmem:[%s244] sm:$0xff]
      %v981 = vld [vmem:[%s244 + $0x8] sm:$0xff]
      %v982 = vld [vmem:[%s244 + $0x10] sm:$0xff]
      %v983 = vld [vmem:[%s244 + $0x18] sm:$0xff]
      %v984 = vld [vmem:[%s244 + $0x20] sm:$0xff]
      %v985 = vld [vmem:[%s244 + $0x28] sm:$0xff]
      %v986 = vld [vmem:[%s244 + $0x30] sm:$0xff]
      %v987 = vld [vmem:[%s244 + $0x38] sm:$0xff]
      %v988 = vpack.c.bf16 %v981, %v980
      %v989 = vpack.c.bf16 %v983, %v982
      %v990 = vpack.c.bf16 %v985, %v984
      %v991 = vpack.c.bf16 %v987, %v986
      %v992 = vld [vmem:[%s1 + $0x100] sm:$0xf]
      %v993 = vld [vmem:[%s1 + $0x104] sm:$0xf]
      %v994 = vld [vmem:[%s1 + $0x108] sm:$0xf]
      %v995 = vld [vmem:[%s1 + $0x10c] sm:$0xf]
      %v996 = vld [vmem:[%s1 + $0x110] sm:$0xf]
      %v997 = vld [vmem:[%s1 + $0x114] sm:$0xf]
      %v998 = vld [vmem:[%s1 + $0x118] sm:$0xf]
      %v999 = vld [vmem:[%s1 + $0x11c] sm:$0xf]
      %v1008 = vunpack.c.l.b16 %v992
      %v1009 = vunpack.c.l.b16 %v993
      %v1010 = vunpack.c.l.b16 %v994
      %v1011 = vunpack.c.l.b16 %v995
      %v1012 = vunpack.c.l.b16 %v996
      %v1013 = vunpack.c.l.b16 %v997
      %v1014 = vunpack.c.l.b16 %v998
      %v1015 = vunpack.c.l.b16 %v999
      %v1016 = vpack.c.b16 %v1009, %v1008
      %v1017 = vpack.c.b16 %v1011, %v1010
      %v1018 = vpack.c.b16 %v1013, %v1012
      %v1019 = vpack.c.b16 %v1015, %v1014
      %v1025 = vsel %vm182, %v988, 0
      %v1028 = vsel %vm182, %v989, 0
      %v1031 = vsel %vm182, %v990, 0
      %v1034 = vsel %vm182, %v991, 0
      %1036 = vmatpush.bf16.msra.mxu0 0
      %1037 = vmatpush.bf16.msra.mxu0 0
      %1038 = vmatpush.bf16.msra.mxu0 0
      %1039 = vmatpush.bf16.msra.mxu0 0
      %1040 = vmatpush.bf16.msra.mxu0 %v1019
      %1041 = vmatpush.bf16.msra.mxu0 %v1018
      %1042 = vmatpush.bf16.msra.mxu0 %v1017
      %1043 = vmatpush.bf16.msra.mxu0 %v1016
      %1044 = vmatmul.bf16.gmra.mxu0 %v1025
      %v1045 = vpop.f32.mrf.mxu0
      %v1046 = vadd.f32 0.0, %v1045
      %v1047 = vpop.f32.mrf.mxu0
      %v1048 = vadd.f32 0.0, %v1047
      %1049 = vmatmul.bf16.gmra.mxu0 %v1028
      %v1050 = vpop.f32.mrf.mxu0
      %v1051 = vadd.f32 0.0, %v1050
      %v1052 = vpop.f32.mrf.mxu0
      %v1053 = vadd.f32 0.0, %v1052
      %1054 = vmatmul.bf16.gmra.mxu0 %v1031
      %v1055 = vpop.f32.mrf.mxu0
      %v1056 = vadd.f32 0.0, %v1055
      %v1057 = vpop.f32.mrf.mxu0
      %v1058 = vadd.f32 0.0, %v1057
      %1059 = vmatmul.bf16.gmra.mxu0 %v1034
      %v1060 = vpop.f32.mrf.mxu0
      %v1061 = vadd.f32 0.0, %v1060
      %v1062 = vpop.f32.mrf.mxu0
      %v1063 = vadd.f32 0.0, %v1062
      %1064 = vdwg.mxu0
      %v1065 = vadd.f32 %v972, %v1046
      %v1066 = vadd.f32 %v973, %v1048
      %v1067 = vadd.f32 %v974, %v1051
      %v1068 = vadd.f32 %v975, %v1053
      %v1069 = vadd.f32 %v976, %v1056
      %v1070 = vadd.f32 %v977, %v1058
      %v1071 = vadd.f32 %v978, %v1061
      %v1072 = vadd.f32 %v979, %v1063
      %v1074 = vperm.slane %v180, 0
      %v1076 = vadd.f32 %v1065, %v1074
      %v1077 = vadd.f32 %v1066, %v1074
      %v1078 = vadd.f32 %v1067, %v1074
      %v1079 = vadd.f32 %v1068, %v1074
      %v1080 = vadd.f32 %v1069, %v1074
      %v1081 = vadd.f32 %v1070, %v1074
      %v1082 = vadd.f32 %v1071, %v1074
      %v1083 = vadd.f32 %v1072, %v1074
      %v1084 = vmax.f32 %v1076, 0.0
      %v1085 = vmax.f32 %v1077, 0.0
      %v1086 = vmax.f32 %v1078, 0.0
      %v1087 = vmax.f32 %v1079, 0.0
      %v1088 = vmax.f32 %v1080, 0.0
      %v1089 = vmax.f32 %v1081, 0.0
      %v1090 = vmax.f32 %v1082, 0.0
      %v1091 = vmax.f32 %v1083, 0.0
      %1092 = vst [vmem:[%s170] sm:$0xff] %v1084
      %1093 = vst [vmem:[%s170 + $0x8] sm:$0xff] %v1085
      %1094 = vst [vmem:[%s170 + $0x10] sm:$0xff] %v1086
      %1095 = vst [vmem:[%s170 + $0x18] sm:$0xff] %v1087
      %1096 = vst [vmem:[%s170 + $0x20] sm:$0xff] %v1088
      %1097 = vst [vmem:[%s170 + $0x28] sm:$0xff] %v1089
      %1098 = vst [vmem:[%s170 + $0x30] sm:$0xff] %v1090
      %1099 = vst [vmem:[%s170 + $0x38] sm:$0xff] %v1091
      %p1100 = scmp.lt.s32.totalorder %s14, 1
      %s1101 = scalar_select %p1100, %s14, 1
      %s1102 = smul.addr %s1101, 8
      %s1103 = smul.addr %s1102, 8
      %s1104 = scalar_lea.vmem %s3, %s1103
      // Predicated region
      $region33: #{forward.2} parent=31 // pred_check
        %p1105 = pneg %p100
      $region34: #{forward.2} parent=31 // pred_check_branch
        %1107 = sbr.rel (%p1105) target = $region36
      $region35: #{forward.2} parent=31 // pred_region
        _
      $region36: #{forward.2} parent=31 // pred_fallthru
        _
    $region32: #{forward.2} parent=5 // pred_fallthru
      _
    %p1108 = scmp.le.s32.totalorder 2, %s9
    // Predicated region
    $region37: #{forward.2} parent=5 // pred_check
      %p1109 = pneg %p1108
    $region38: #{forward.2} parent=5 // pred_check_branch
      %1111 = sbr.rel (%p1109) target = $region40
    $region39: #{forward.2} parent=5 // pred_region
      %s1112 = ssub.s32 %s9, 2
      // Predicated region
      $region41: #{forward.2} parent=39 // pred_check
        %p1113 = pneg %p106
      $region42: #{forward.2} parent=39 // pred_check_branch
        %1115 = sbr.rel (%p1113) target = $region44
      $region43: #{forward.2} parent=39 // pred_region
        %p1116 = scmp.lt.s32.totalorder %s15, 1
        %s1117 = scalar_select %p1116, %s15, 1
        %s1118 = smul.addr %s1117, 8
        %s1119 = smul.addr %s1118, 8
        %s1120 = scalar_lea.vmem %s3, %s1119
      $region44: #{forward.2} parent=39 // pred_fallthru
        _
    $region40: #{forward.2} parent=5 // pred_fallthru
      _
  $region6: #{forward.2} parent=0 // loop_footer
    %s13 = sadd.s32 1, %s9
  $region7: #{forward.2} parent=0 // loop_footer_branch
    %8 = sbr.rel target = $region3
  $region8: #{forward.2} parent=0 // loop_exit
    _

// kernel: forward.3
$region0: #{forward.3}
  #allocation0 [shape = 'u32[]', space=smem, size = 0x4, offset = 0x4, fixed_abs, tag = 'smem constant byte address 0x4 - core index']
  #allocation1 [shape = 'u32[72,128]{1,0:T(1,128)}', space=vmem, size = 0x9000, scoped, tag = 'internal scratch']
  #allocation2 [shape = 'f32[3,10,8,128]{3,2,1,0:T(8,128)}', space=vmem, size = 0x1e000, scoped, tag = 'scratch operand']
  %s0 = inlined_call_operand.vmem [shape: f32[2,8,8,128], index: 0, kind: input, shape index: {}]
  %s1 = inlined_call_operand.vmem [shape: f32[2,64,64], index: 1, kind: input, shape index: {}]
  %s2 = inlined_call_operand.vmem [shape: bf16[1152,128], index: 2, kind: input, shape index: {}]
  %s3 = inlined_call_operand.vmem [shape: f32[1,128], index: 3, kind: input, shape index: {}]
  %s4 = inlined_call_operand.vmem [shape: f32[1,128], index: 4, kind: input, shape index: {}]
  %s5 = inlined_call_operand.vmem [shape: f32[1,128], index: 5, kind: input, shape index: {}]
  %s6 = inlined_call_operand.vmem [shape: bf16[1152,128], index: 6, kind: input, shape index: {}]
  %s7 = inlined_call_operand.vmem [shape: f32[1,128], index: 7, kind: input, shape index: {}]
  %s8 = inlined_call_operand.vmem [shape: f32[1,128], index: 8, kind: input, shape index: {}]
  %s9 = inlined_call_operand.vmem [shape: f32[1,128], index: 9, kind: input, shape index: {}]
  %s10 = inlined_call_operand.vmem [shape: bf16[1152,128], index: 10, kind: input, shape index: {}]
  %s11 = inlined_call_operand.vmem [shape: f32[1,128], index: 11, kind: input, shape index: {}]
  %s12 = inlined_call_operand.vmem [shape: f32[2,8,8,128], index: 12, kind: output, shape index: {}]
  %s13 = sld [smem:[#allocation0]]
  $region81: #{forward.3} parent=0
    _
  %s15 = ssub.s32 1, %s13
  %s16 = scalar_select 0, %s15, %s13
  loop: start=0, step=1, limit=4
  $region2: #{forward.3} parent=0 // loop_pre_header
    _
  $region3: #{forward.3} parent=0 // loop_header
    %s18 = sphi 0, %s22
    %p19 = scmp.ge.s32.totalorder %s18, 4
    %s28 = sphi 0, %s30
    %s31 = sphi 0, %s28
    %s32 = sphi 0, %s31
    %s48 = sphi 0, %s32
    %s54 = sphi 0, %s56
    %s57 = sphi 0, %s54
    %s58 = sphi 0, %s57
    %s74 = sphi 0, %s58
    %s78 = sphi 0, %s78
    %s80 = sphi 0, %s78
    %s81 = sphi 0, %s80
    %s95 = sphi 0, %s81
    %s99 = sphi 0, %s99
    %s101 = sphi 0, %s99
    %s102 = sphi 0, %s101
    %s116 = sphi 0, %s102
    %s120 = sphi 0, %s120
    %s122 = sphi 0, %s120
    %s123 = sphi 0, %s122
    %s137 = sphi 0, %s123
    %s141 = sphi 0, %s141
    %s143 = sphi 0, %s141
    %s144 = sphi 0, %s143
    %s158 = sphi 0, %s144
    %s162 = sphi 0, %s162
    %s164 = sphi 0, %s162
    %s165 = sphi 0, %s164
    %s179 = sphi 0, %s165
    %s183 = sphi 0, %s183
    %s185 = sphi 0, %s183
    %s186 = sphi 0, %s185
    %s200 = sphi 0, %s186
    %s204 = sphi 0, %s204
    %s206 = sphi 0, %s204
    %s207 = sphi 0, %s206
    %s221 = sphi 0, %s207
    %s225 = sphi 0, %s225
    %s227 = sphi 0, %s225
    %s228 = sphi 0, %s227
    %s242 = sphi 0, %s228
    %s246 = sphi 0, %s246
    %s248 = sphi 0, %s246
    %s249 = sphi 0, %s248
    %s263 = sphi 0, %s249
    %s267 = sphi 0, %s267
    %s269 = sphi 0, %s267
    %s270 = sphi 0, %s269
    %s284 = sphi 0, %s270
    %s290 = sphi 0, %s292
    %s293 = sphi 0, %s290
    %s294 = sphi 0, %s293
    %s310 = sphi 0, %s294
  $region4: #{forward.3} parent=0 // loop_header_branch
    %21 = sbr.rel (%p19) target = $region8
  $region5: #{forward.3} parent=0 // loop_body
    %s23 = ssub.s32 %s18, 1
    %s24 = ssub.s32 %s18, 2
    %s25 = sadd.s32 %s18, 1
    %s26 = ssub.s32 %s18, %s25
    %p27 = scmp.eq.s32.totalorder %s26, 0
    %s29 = sadd.s32 %s28, 1
    %s30 = scalar_select %p27, %s28, %s29
    %p33 = pneg %p27
    %p34 = scmp.eq.s32.totalorder %s18, 1
    %p35 = por %p33, %p34
    %p36 = scmp.ne.s32.totalorder %s28, %s31
    %p37 = scmp.eq.s32.totalorder %s18, 0
    %p38 = por %p36, %p37
    %p39 = scmp.ne.s32.totalorder %s28, %s31
    %p40 = scmp.eq.s32.totalorder %s23, 1
    %p41 = por %p39, %p40
    %p42 = scmp.ne.s32.totalorder %s31, %s32
    %p43 = scmp.eq.s32.totalorder %s23, 0
    %p44 = por %p42, %p43
    %p45 = scmp.ne.s32.totalorder %s31, %s32
    %p46 = scmp.eq.s32.totalorder %s24, 1
    %p47 = por %p45, %p46
    %p49 = scmp.ne.s32.totalorder %s32, %s48
    %p50 = scmp.eq.s32.totalorder %s24, 0
    %p51 = por %p49, %p50
    %s52 = ssub.s32 %s18, %s25
    %p53 = scmp.eq.s32.totalorder %s52, 0
    %s55 = sadd.s32 %s54, 1
    %s56 = scalar_select %p53, %s54, %s55
    %p59 = pneg %p53
    %p60 = scmp.eq.s32.totalorder %s18, 1
    %p61 = por %p59, %p60
    %p62 = scmp.ne.s32.totalorder %s54, %s57
    %p63 = scmp.eq.s32.totalorder %s18, 0
    %p64 = por %p62, %p63
    %p65 = scmp.ne.s32.totalorder %s54, %s57
    %p66 = scmp.eq.s32.totalorder %s23, 1
    %p67 = por %p65, %p66
    %p68 = scmp.ne.s32.totalorder %s57, %s58
    %p69 = scmp.eq.s32.totalorder %s23, 0
    %p70 = por %p68, %p69
    %p71 = scmp.ne.s32.totalorder %s57, %s58
    %p72 = scmp.eq.s32.totalorder %s24, 1
    %p73 = por %p71, %p72
    %p75 = scmp.ne.s32.totalorder %s58, %s74
    %p76 = scmp.eq.s32.totalorder %s24, 0
    %p77 = por %p75, %p76
    %s79 = sadd.s32 %s78, 1
    %p82 = scmp.eq.s32.totalorder %s18, 1
    %p83 = scmp.ne.s32.totalorder %s78, %s80
    %p84 = scmp.eq.s32.totalorder %s18, 0
    %p85 = por %p83, %p84
    %p86 = scmp.ne.s32.totalorder %s78, %s80
    %p87 = scmp.eq.s32.totalorder %s23, 1
    %p88 = por %p86, %p87
    %p89 = scmp.ne.s32.totalorder %s80, %s81
    %p90 = scmp.eq.s32.totalorder %s23, 0
    %p91 = por %p89, %p90
    %p92 = scmp.ne.s32.totalorder %s80, %s81
    %p93 = scmp.eq.s32.totalorder %s24, 1
    %p94 = por %p92, %p93
    %p96 = scmp.ne.s32.totalorder %s81, %s95
    %p97 = scmp.eq.s32.totalorder %s24, 0
    %p98 = por %p96, %p97
    %s100 = sadd.s32 %s99, 1
    %p103 = scmp.eq.s32.totalorder %s18, 1
    %p104 = scmp.ne.s32.totalorder %s99, %s101
    %p105 = scmp.eq.s32.totalorder %s18, 0
    %p106 = por %p104, %p105
    %p107 = scmp.ne.s32.totalorder %s99, %s101
    %p108 = scmp.eq.s32.totalorder %s23, 1
    %p109 = por %p107, %p108
    %p110 = scmp.ne.s32.totalorder %s101, %s102
    %p111 = scmp.eq.s32.totalorder %s23, 0
    %p112 = por %p110, %p111
    %p113 = scmp.ne.s32.totalorder %s101, %s102
    %p114 = scmp.eq.s32.totalorder %s24, 1
    %p115 = por %p113, %p114
    %p117 = scmp.ne.s32.totalorder %s102, %s116
    %p118 = scmp.eq.s32.totalorder %s24, 0
    %p119 = por %p117, %p118
    %s121 = sadd.s32 %s120, 1
    %p124 = scmp.eq.s32.totalorder %s18, 1
    %p125 = scmp.ne.s32.totalorder %s120, %s122
    %p126 = scmp.eq.s32.totalorder %s18, 0
    %p127 = por %p125, %p126
    %p128 = scmp.ne.s32.totalorder %s120, %s122
    %p129 = scmp.eq.s32.totalorder %s23, 1
    %p130 = por %p128, %p129
    %p131 = scmp.ne.s32.totalorder %s122, %s123
    %p132 = scmp.eq.s32.totalorder %s23, 0
    %p133 = por %p131, %p132
    %p134 = scmp.ne.s32.totalorder %s122, %s123
    %p135 = scmp.eq.s32.totalorder %s24, 1
    %p136 = por %p134, %p135
    %p138 = scmp.ne.s32.totalorder %s123, %s137
    %p139 = scmp.eq.s32.totalorder %s24, 0
    %p140 = por %p138, %p139
    %s142 = sadd.s32 %s141, 1
    %p145 = scmp.eq.s32.totalorder %s18, 1
    %p146 = scmp.ne.s32.totalorder %s141, %s143
    %p147 = scmp.eq.s32.totalorder %s18, 0
    %p148 = por %p146, %p147
    %p149 = scmp.ne.s32.totalorder %s141, %s143
    %p150 = scmp.eq.s32.totalorder %s23, 1
    %p151 = por %p149, %p150
    %p152 = scmp.ne.s32.totalorder %s143, %s144
    %p153 = scmp.eq.s32.totalorder %s23, 0
    %p154 = por %p152, %p153
    %p155 = scmp.ne.s32.totalorder %s143, %s144
    %p156 = scmp.eq.s32.totalorder %s24, 1
    %p157 = por %p155, %p156
    %p159 = scmp.ne.s32.totalorder %s144, %s158
    %p160 = scmp.eq.s32.totalorder %s24, 0
    %p161 = por %p159, %p160
    %s163 = sadd.s32 %s162, 1
    %p166 = scmp.eq.s32.totalorder %s18, 1
    %p167 = scmp.ne.s32.totalorder %s162, %s164
    %p168 = scmp.eq.s32.totalorder %s18, 0
    %p169 = por %p167, %p168
    %p170 = scmp.ne.s32.totalorder %s162, %s164
    %p171 = scmp.eq.s32.totalorder %s23, 1
    %p172 = por %p170, %p171
    %p173 = scmp.ne.s32.totalorder %s164, %s165
    %p174 = scmp.eq.s32.totalorder %s23, 0
    %p175 = por %p173, %p174
    %p176 = scmp.ne.s32.totalorder %s164, %s165
    %p177 = scmp.eq.s32.totalorder %s24, 1
    %p178 = por %p176, %p177
    %p180 = scmp.ne.s32.totalorder %s165, %s179
    %p181 = scmp.eq.s32.totalorder %s24, 0
    %p182 = por %p180, %p181
    %s184 = sadd.s32 %s183, 1
    %p187 = scmp.eq.s32.totalorder %s18, 1
    %p188 = scmp.ne.s32.totalorder %s183, %s185
    %p189 = scmp.eq.s32.totalorder %s18, 0
    %p190 = por %p188, %p189
    %p191 = scmp.ne.s32.totalorder %s183, %s185
    %p192 = scmp.eq.s32.totalorder %s23, 1
    %p193 = por %p191, %p192
    %p194 = scmp.ne.s32.totalorder %s185, %s186
    %p195 = scmp.eq.s32.totalorder %s23, 0
    %p196 = por %p194, %p195
    %p197 = scmp.ne.s32.totalorder %s185, %s186
    %p198 = scmp.eq.s32.totalorder %s24, 1
    %p199 = por %p197, %p198
    %p201 = scmp.ne.s32.totalorder %s186, %s200
    %p202 = scmp.eq.s32.totalorder %s24, 0
    %p203 = por %p201, %p202
    %s205 = sadd.s32 %s204, 1
    %p208 = scmp.eq.s32.totalorder %s18, 1
    %p209 = scmp.ne.s32.totalorder %s204, %s206
    %p210 = scmp.eq.s32.totalorder %s18, 0
    %p211 = por %p209, %p210
    %p212 = scmp.ne.s32.totalorder %s204, %s206
    %p213 = scmp.eq.s32.totalorder %s23, 1
    %p214 = por %p212, %p213
    %p215 = scmp.ne.s32.totalorder %s206, %s207
    %p216 = scmp.eq.s32.totalorder %s23, 0
    %p217 = por %p215, %p216
    %p218 = scmp.ne.s32.totalorder %s206, %s207
    %p219 = scmp.eq.s32.totalorder %s24, 1
    %p220 = por %p218, %p219
    %p222 = scmp.ne.s32.totalorder %s207, %s221
    %p223 = scmp.eq.s32.totalorder %s24, 0
    %p224 = por %p222, %p223
    %s226 = sadd.s32 %s225, 1
    %p229 = scmp.eq.s32.totalorder %s18, 1
    %p230 = scmp.ne.s32.totalorder %s225, %s227
    %p231 = scmp.eq.s32.totalorder %s18, 0
    %p232 = por %p230, %p231
    %p233 = scmp.ne.s32.totalorder %s225, %s227
    %p234 = scmp.eq.s32.totalorder %s23, 1
    %p235 = por %p233, %p234
    %p236 = scmp.ne.s32.totalorder %s227, %s228
    %p237 = scmp.eq.s32.totalorder %s23, 0
    %p238 = por %p236, %p237
    %p239 = scmp.ne.s32.totalorder %s227, %s228
    %p240 = scmp.eq.s32.totalorder %s24, 1
    %p241 = por %p239, %p240
    %p243 = scmp.ne.s32.totalorder %s228, %s242
    %p244 = scmp.eq.s32.totalorder %s24, 0
    %p245 = por %p243, %p244
    %s247 = sadd.s32 %s246, 1
    %p250 = scmp.eq.s32.totalorder %s18, 1
    %p251 = scmp.ne.s32.totalorder %s246, %s248
    %p252 = scmp.eq.s32.totalorder %s18, 0
    %p253 = por %p251, %p252
    %p254 = scmp.ne.s32.totalorder %s246, %s248
    %p255 = scmp.eq.s32.totalorder %s23, 1
    %p256 = por %p254, %p255
    %p257 = scmp.ne.s32.totalorder %s248, %s249
    %p258 = scmp.eq.s32.totalorder %s23, 0
    %p259 = por %p257, %p258
    %p260 = scmp.ne.s32.totalorder %s248, %s249
    %p261 = scmp.eq.s32.totalorder %s24, 1
    %p262 = por %p260, %p261
    %p264 = scmp.ne.s32.totalorder %s249, %s263
    %p265 = scmp.eq.s32.totalorder %s24, 0
    %p266 = por %p264, %p265
    %s268 = sadd.s32 %s267, 1
    %p271 = scmp.eq.s32.totalorder %s18, 1
    %p272 = scmp.ne.s32.totalorder %s267, %s269
    %p273 = scmp.eq.s32.totalorder %s18, 0
    %p274 = por %p272, %p273
    %p275 = scmp.ne.s32.totalorder %s267, %s269
    %p276 = scmp.eq.s32.totalorder %s23, 1
    %p277 = por %p275, %p276
    %p278 = scmp.ne.s32.totalorder %s269, %s270
    %p279 = scmp.eq.s32.totalorder %s23, 0
    %p280 = por %p278, %p279
    %p281 = scmp.ne.s32.totalorder %s269, %s270
    %p282 = scmp.eq.s32.totalorder %s24, 1
    %p283 = por %p281, %p282
    %p285 = scmp.ne.s32.totalorder %s270, %s284
    %p286 = scmp.eq.s32.totalorder %s24, 0
    %p287 = por %p285, %p286
    %s288 = ssub.s32 %s18, %s25
    %p289 = scmp.eq.s32.totalorder %s288, 0
    %s291 = sadd.s32 %s290, 1
    %s292 = scalar_select %p289, %s290, %s291
    %p295 = pneg %p289
    %p296 = scmp.eq.s32.totalorder %s18, 1
    %p297 = por %p295, %p296
    %p298 = scmp.ne.s32.totalorder %s290, %s293
    %p299 = scmp.eq.s32.totalorder %s18, 0
    %p300 = por %p298, %p299
    %p301 = scmp.ne.s32.totalorder %s290, %s293
    %p302 = scmp.eq.s32.totalorder %s23, 1
    %p303 = por %p301, %p302
    %p304 = scmp.ne.s32.totalorder %s293, %s294
    %p305 = scmp.eq.s32.totalorder %s23, 0
    %p306 = por %p304, %p305
    %p307 = scmp.ne.s32.totalorder %s293, %s294
    %p308 = scmp.eq.s32.totalorder %s24, 1
    %p309 = por %p307, %p308
    %p311 = scmp.ne.s32.totalorder %s294, %s310
    %p312 = scmp.eq.s32.totalorder %s24, 0
    %p313 = por %p311, %p312
    %p314 = scmp.le.s32.totalorder 1, %s18
    %p315 = scmp.lt.s32.totalorder %s18, 3
    %p316 = pnand %p314, %p315
    %p317 = pneg %p316
    // Predicated region
    $region9: #{forward.3} parent=5 // pred_check
      _
    $region10: #{forward.3} parent=5 // pred_check_branch
      %319 = sbr.rel (%p316) target = $region12
    $region11: #{forward.3} parent=5 // pred_region
      %s320 = ssub.s32 %s18, 1
      // Predicated region
      $region13: #{forward.3} parent=11 // pred_check
        %p321 = pneg %p91
      $region14: #{forward.3} parent=11 // pred_check_branch
        %323 = sbr.rel (%p321) target = $region16
      $region15: #{forward.3} parent=11 // pred_region
        _
      $region16: #{forward.3} parent=11 // pred_fallthru
        _
      // Predicated region
      $region17: #{forward.3} parent=11 // pred_check
        %p324 = pneg %p112
      $region18: #{forward.3} parent=11 // pred_check_branch
        %326 = sbr.rel (%p324) target = $region20
      $region19: #{forward.3} parent=11 // pred_region
        _
      $region20: #{forward.3} parent=11 // pred_fallthru
        _
      // Predicated region
      $region21: #{forward.3} parent=11 // pred_check
        %p327 = pneg %p133
      $region22: #{forward.3} parent=11 // pred_check_branch
        %329 = sbr.rel (%p327) target = $region24
      $region23: #{forward.3} parent=11 // pred_region
        _
      $region24: #{forward.3} parent=11 // pred_fallthru
        _
      // Predicated region
      $region25: #{forward.3} parent=11 // pred_check
        %p330 = pneg %p154
      $region26: #{forward.3} parent=11 // pred_check_branch
        %332 = sbr.rel (%p330) target = $region28
      $region27: #{forward.3} parent=11 // pred_region
        _
      $region28: #{forward.3} parent=11 // pred_fallthru
        _
      // Predicated region
      $region29: #{forward.3} parent=11 // pred_check
        %p333 = pneg %p175
      $region30: #{forward.3} parent=11 // pred_check_branch
        %335 = sbr.rel (%p333) target = $region32
      $region31: #{forward.3} parent=11 // pred_region
        _
      $region32: #{forward.3} parent=11 // pred_fallthru
        _
      // Predicated region
      $region33: #{forward.3} parent=11 // pred_check
        %p336 = pneg %p196
      $region34: #{forward.3} parent=11 // pred_check_branch
        %338 = sbr.rel (%p336) target = $region36
      $region35: #{forward.3} parent=11 // pred_region
        _
      $region36: #{forward.3} parent=11 // pred_fallthru
        _
      // Predicated region
      $region37: #{forward.3} parent=11 // pred_check
        %p339 = pneg %p217
      $region38: #{forward.3} parent=11 // pred_check_branch
        %341 = sbr.rel (%p339) target = $region40
      $region39: #{forward.3} parent=11 // pred_region
        _
      $region40: #{forward.3} parent=11 // pred_fallthru
        _
      // Predicated region
      $region41: #{forward.3} parent=11 // pred_check
        %p342 = pneg %p238
      $region42: #{forward.3} parent=11 // pred_check_branch
        %344 = sbr.rel (%p342) target = $region44
      $region43: #{forward.3} parent=11 // pred_region
        _
      $region44: #{forward.3} parent=11 // pred_fallthru
        _
      // Predicated region
      $region45: #{forward.3} parent=11 // pred_check
        %p345 = pneg %p259
      $region46: #{forward.3} parent=11 // pred_check_branch
        %347 = sbr.rel (%p345) target = $region48
      $region47: #{forward.3} parent=11 // pred_region
        _
      $region48: #{forward.3} parent=11 // pred_fallthru
        _
      // Predicated region
      $region49: #{forward.3} parent=11 // pred_check
        %p348 = pneg %p280
      $region50: #{forward.3} parent=11 // pred_check_branch
        %350 = sbr.rel (%p348) target = $region52
      $region51: #{forward.3} parent=11 // pred_region
        _
      $region52: #{forward.3} parent=11 // pred_fallthru
        _
    $region12: #{forward.3} parent=5 // pred_fallthru
      _
    %p351 = scmp.lt.s32.totalorder %s18, 2
    // Predicated region
    $region53: #{forward.3} parent=5 // pred_check
      %p352 = pneg %p351
    $region54: #{forward.3} parent=5 // pred_check_branch
      %354 = sbr.rel (%p352) target = $region56
    $region55: #{forward.3} parent=5 // pred_region
      // Predicated region
      $region57: #{forward.3} parent=55 // pred_check
        %p355 = pneg %p38
      $region58: #{forward.3} parent=55 // pred_check_branch
        %357 = sbr.rel (%p355) target = $region60
      $region59: #{forward.3} parent=55 // pred_region
        %p358 = scmp.lt.s32.totalorder %s18, 1
        %s359 = scalar_select %p358, %s18, 1
        %s360 = smul.addr %s359, 8
        %s361 = smul.addr %s360, 8
        %s362 = scalar_lea.vmem %s0, %s361
      $region60: #{forward.3} parent=55 // pred_fallthru
        _
      // Predicated region
      $region61: #{forward.3} parent=55 // pred_check
        %p363 = pneg %p64
      $region62: #{forward.3} parent=55 // pred_check_branch
        %365 = sbr.rel (%p363) target = $region64
      $region63: #{forward.3} parent=55 // pred_region
        %p366 = scmp.lt.s32.totalorder %s18, 1
        %s367 = scalar_select %p366, %s18, 1
        %s368 = smul.addr %s367, 8
        %s369 = smul.addr %s368, 8
        %s370 = scalar_lea.vmem %s1, %s369
      $region64: #{forward.3} parent=55 // pred_fallthru
        _
    $region56: #{forward.3} parent=5 // pred_fallthru
      _
    %p371 = scmp.le.s32.totalorder 1, %s18
    %p372 = scmp.lt.s32.totalorder %s18, 3
    %p373 = pnand %p371, %p372
    %p374 = pneg %p373
    // Predicated region
    $region65: #{forward.3} parent=5 // pred_check
      _
    $region66: #{forward.3} parent=5 // pred_check_branch
      %376 = sbr.rel (%p373) target = $region68
    $region67: #{forward.3} parent=5 // pred_region
      %s377 = ssub.s32 %s18, 1
      %p378 = scmp.lt.s32.totalorder %s23, 1
      %s379 = scalar_select %p378, %s23, 1
      %s380 = smul.addr %s379, 8
      %s381 = smul.addr %s380, 8
      %s382 = scalar_lea.vmem %s0, %s381
      %p383 = pneg %p44
      %p384 = pneg %p41
      %p385 = scmp.lt.s32.totalorder %s23, 1
      %s386 = scalar_select %p385, %s23, 1
      %s387 = smul.addr %s386, 8
      %s388 = smul.addr %s387, 8
      %s389 = scalar_lea.vmem %s1, %s388
      %p390 = pneg %p70
      %p391 = pneg %p67
      %p392 = pneg %p91
      %p393 = pneg %p88
      %p394 = pneg %p112
      %p395 = pneg %p109
      %p396 = pneg %p133
      %p397 = pneg %p130
      %p398 = pneg %p154
      %p399 = pneg %p151
      %p400 = pneg %p175
      %p401 = pneg %p172
      %p402 = pneg %p196
      %p403 = pneg %p193
      %p404 = pneg %p217
      %p405 = pneg %p214
      %p406 = pneg %p238
      %p407 = pneg %p235
      %p408 = pneg %p259
      %p409 = pneg %p256
      %p410 = pneg %p280
      %p411 = pneg %p277
      %p412 = pneg %p306
      %p413 = pneg %p303
      %p414 = scmp.lt.s32.totalorder %s23, 1
      %s415 = scalar_select %p414, %s23, 1
      %s416 = smul.addr %s415, 8
      %s417 = smul.addr %s416, 8
      %s418 = scalar_lea.vmem %s12, %s417
      %p419 = scmp.lt.s32.totalorder %s23, 1
      %s420 = scalar_select %p419, %s23, 1
      %s421 = smul.addr %s420, 8
      %s422 = smul.addr %s421, 8
      %s423 = scalar_lea.vmem %s0, %s422
      %p424 = scmp.lt.s32.totalorder %s23, 1
      %s425 = scalar_select %p424, %s23, 1
      %s426 = smul.addr %s425, 8
      %s427 = smul.addr %s426, 8
      %s428 = scalar_lea.vmem %s1, %s427
      %p429 = scmp.lt.s32.totalorder %s23, 1
      %s430 = scalar_select %p429, %s23, 1
      %s431 = smul.addr %s430, 8
      %s432 = smul.addr %s431, 8
      %s433 = scalar_lea.vmem %s12, %s432
      %v434 = vld [vmem:[%s423] sm:$0xff]
      %v435 = vld [vmem:[%s423 + $0x8] sm:$0xff]
      %v436 = vld [vmem:[%s423 + $0x10] sm:$0xff]
      %v437 = vld [vmem:[%s423 + $0x18] sm:$0xff]
      %v438 = vld [vmem:[%s423 + $0x20] sm:$0xff]
      %v439 = vld [vmem:[%s423 + $0x28] sm:$0xff]
      %v440 = vld [vmem:[%s423 + $0x30] sm:$0xff]
      %v441 = vld [vmem:[%s423 + $0x38] sm:$0xff]
      %v442 = vld [vmem:[%s428] sm:$0xff]
      %v443 = vld [vmem:[%s428 + $0x8] sm:$0xff]
      %v444 = vld [vmem:[%s428 + $0x10] sm:$0xff]
      %v445 = vld [vmem:[%s428 + $0x18] sm:$0xff]
      %v446 = vld [vmem:[%s428 + $0x20] sm:$0xff]
      %v447 = vld [vmem:[%s428 + $0x28] sm:$0xff]
      %v448 = vld [vmem:[%s428 + $0x30] sm:$0xff]
      %v449 = vld [vmem:[%s428 + $0x38] sm:$0xff]
      %vm450 = vcmask 523264
      %v452 = vsel %vm450, %v442, 0
      %v455 = vsel %vm450, %v443, 0
      %v458 = vsel %vm450, %v444, 0
      %v461 = vsel %vm450, %v445, 0
      %v464 = vsel %vm450, %v446, 0
      %v467 = vsel %vm450, %v447, 0
      %v470 = vsel %vm450, %v448, 0
      %v473 = vsel %vm450, %v449, 0
      %475 = vmatpush.msra.mxu0 0.0
      %476 = vmatpush.msra.mxu0 0.0
      %477 = vmatpush.msra.mxu0 0.0
      %478 = vmatpush.msra.mxu0 0.0
      %479 = vmatpush.msra.mxu0 0.0
      %480 = vmatpush.msra.mxu0 0.0
      %481 = vmatpush.msra.mxu0 0.0
      %482 = vmatpush.msra.mxu0 0.0
      %483 = vmatpush.msra.mxu0 %v441
      %484 = vmatpush.msra.mxu0 %v440
      %485 = vmatpush.msra.mxu0 %v439
      %486 = vmatpush.msra.mxu0 %v438
      %487 = vmatpush.msra.mxu0 %v437
      %488 = vmatpush.msra.mxu0 %v436
      %489 = vmatpush.msra.mxu0 %v435
      %490 = vmatpush.msra.mxu0 %v434
      %491 = vmatmul.f32.gmra.mxu0 %v452
      %v492 = vpop.f32.mrf.mxu0
      %v493 = vadd.f32 0.0, %v492
      %494 = vmatmul.f32.gmra.mxu0 %v455
      %v495 = vpop.f32.mrf.mxu0
      %v496 = vadd.f32 0.0, %v495
      %497 = vmatmul.f32.gmra.mxu0 %v458
      %v498 = vpop.f32.mrf.mxu0
      %v499 = vadd.f32 0.0, %v498
      %500 = vmatmul.f32.gmra.mxu0 %v461
      %v501 = vpop.f32.mrf.mxu0
      %v502 = vadd.f32 0.0, %v501
      %503 = vmatmul.f32.gmra.mxu0 %v464
      %v504 = vpop.f32.mrf.mxu0
      %v505 = vadd.f32 0.0, %v504
      %506 = vmatmul.f32.gmra.mxu0 %v467
      %v507 = vpop.f32.mrf.mxu0
      %v508 = vadd.f32 0.0, %v507
      %509 = vmatmul.f32.gmra.mxu0 %v470
      %v510 = vpop.f32.mrf.mxu0
      %v511 = vadd.f32 0.0, %v510
      %512 = vmatmul.f32.gmra.mxu0 %v473
      %v513 = vpop.f32.mrf.mxu0
      %v514 = vadd.f32 0.0, %v513
      %515 = vdwg.mxu0
      %v516 = vld [vmem:[%s3] sm:$0x1]
      %s517 = scalar_lea.vmem [#allocation2], 88
      %518 = vst [vmem:[%s517] sm:$0xff] %v493
      %519 = vst [vmem:[%s517 + $0x8] sm:$0xff] %v496
      %520 = vst [vmem:[%s517 + $0x10] sm:$0xff] %v499
      %521 = vst [vmem:[%s517 + $0x18] sm:$0xff] %v502
      %522 = vst [vmem:[%s517 + $0x20] sm:$0xff] %v505
      %523 = vst [vmem:[%s517 + $0x28] sm:$0xff] %v508
      %524 = vst [vmem:[%s517 + $0x30] sm:$0xff] %v511
      %525 = vst [vmem:[%s517 + $0x38] sm:$0xff] %v514
      %s526 = scalar_lea.vmem [#allocation2], 8
      %527 = vst [vmem:[%s526 + $0x1] sm:$0x7f] %v493
      %528 = vst [vmem:[%s526 + $0x9] sm:$0x7f] %v496
      %529 = vst [vmem:[%s526 + $0x11] sm:$0x7f] %v499
      %530 = vst [vmem:[%s526 + $0x19] sm:$0x7f] %v502
      %531 = vst [vmem:[%s526 + $0x21] sm:$0x7f] %v505
      %532 = vst [vmem:[%s526 + $0x29] sm:$0x7f] %v508
      %533 = vst [vmem:[%s526 + $0x31] sm:$0x7f] %v511
      %534 = vst [vmem:[%s526 + $0x39] sm:$0x7f] %v514
      %535 = vst [vmem:[%s526 - $0x1] sm:$0x2] %v493
      %536 = vst [vmem:[%s526 + $0x7] sm:$0x2] %v496
      %537 = vst [vmem:[%s526 + $0xf] sm:$0x2] %v499
      %538 = vst [vmem:[%s526 + $0x17] sm:$0x2] %v502
      %539 = vst [vmem:[%s526 + $0x1f] sm:$0x2] %v505
      %540 = vst [vmem:[%s526 + $0x27] sm:$0x2] %v508
      %541 = vst [vmem:[%s526 + $0x2f] sm:$0x2] %v511
      %542 = vst [vmem:[%s526 + $0x37] sm:$0x2] %v514
      %s543 = scalar_lea.vmem [#allocation2], 168
      %544 = vst [vmem:[%s543 - $0x1] sm:$0xfe] %v493
      %545 = vst [vmem:[%s543 + $0x7] sm:$0xfe] %v496
      %546 = vst [vmem:[%s543 + $0xf] sm:$0xfe] %v499
      %547 = vst [vmem:[%s543 + $0x17] sm:$0xfe] %v502
      %548 = vst [vmem:[%s543 + $0x1f] sm:$0xfe] %v505
      %549 = vst [vmem:[%s543 + $0x27] sm:$0xfe] %v508
      %550 = vst [vmem:[%s543 + $0x2f] sm:$0xfe] %v511
      %551 = vst [vmem:[%s543 + $0x37] sm:$0xfe] %v514
      %552 = vst [vmem:[%s543 + $0x1] sm:$0x40] %v493
      %553 = vst [vmem:[%s543 + $0x9] sm:$0x40] %v496
      %554 = vst [vmem:[%s543 + $0x11] sm:$0x40] %v499
      %555 = vst [vmem:[%s543 + $0x19] sm:$0x40] %v502
      %556 = vst [vmem:[%s543 + $0x21] sm:$0x40] %v505
      %557 = vst [vmem:[%s543 + $0x29] sm:$0x40] %v508
      %558 = vst [vmem:[%s543 + $0x31] sm:$0x40] %v511
      %559 = vst [vmem:[%s543 + $0x39] sm:$0x40] %v514
      %s560 = scalar_lea.vmem [#allocation2], 16
      %v561 = vld [vmem:[%s560] sm:$0xff]
      %562 = vst [vmem:[#allocation2] sm:$0xff] %v561
      %s563 = scalar_lea.vmem [#allocation2], 56
      %v564 = vld [vmem:[%s563] sm:$0xff]
      %s565 = scalar_lea.vmem [#allocation2], 72
      %566 = vst [vmem:[%s565] sm:$0xff] %v564
      %s567 = scalar_lea.vmem [#allocation2], 96
      %v568 = vld [vmem:[%s567] sm:$0xff]
      %s569 = scalar_lea.vmem [#allocation2], 80
      %570 = vst [vmem:[%s569] sm:$0xff] %v568
      %s571 = scalar_lea.vmem [#allocation2], 136
      %v572 = vld [vmem:[%s571] sm:$0xff]
      %s573 = scalar_lea.vmem [#allocation2], 152
      %574 = vst [vmem:[%s573] sm:$0xff] %v572
      %s575 = scalar_lea.vmem [#allocation2], 176
      %v576 = vld [vmem:[%s575] sm:$0xff]
      %s577 = scalar_lea.vmem [#allocation2], 160
      %578 = vst [vmem:[%s577] sm:$0xff] %v576
      %s579 = scalar_lea.vmem [#allocation2], 216
      %v580 = vld [vmem:[%s579] sm:$0xff]
      %s581 = scalar_lea.vmem [#allocation2], 232
      %582 = vst [vmem:[%s581] sm:$0xff] %v580
      %v583 = vld [vmem:[#allocation2] sm:$0xff]
      %v584 = vld [vmem:[#allocation2 + $0x8] sm:$0xff]
      %v585 = vld [vmem:[#allocation2 + $0x10] sm:$0xff]
      %v586 = vld [vmem:[#allocation2 + $0x18] sm:$0xff]
      %v587 = vld [vmem:[#allocation2 + $0x20] sm:$0xff]
      %v588 = vld [vmem:[#allocation2 + $0x28] sm:$0xff]
      %v589 = vld [vmem:[#allocation2 + $0x30] sm:$0xff]
      %v590 = vld [vmem:[#allocation2 + $0x38] sm:$0xff]
      %v591 = vpack.c.bf16 %v584, %v583
      %v592 = vpack.c.bf16 %v586, %v585
      %v593 = vpack.c.bf16 %v588, %v587
      %v594 = vpack.c.bf16 %v590, %v589
      %v595 = vld [vmem:[%s2] sm:$0xf]
      %v596 = vld [vmem:[%s2 + $0x4] sm:$0xf]
      %v597 = vld [vmem:[%s2 + $0x8] sm:$0xf]
      %v598 = vld [vmem:[%s2 + $0xc] sm:$0xf]
      %v599 = vld [vmem:[%s2 + $0x10] sm:$0xf]
      %v600 = vld [vmem:[%s2 + $0x14] sm:$0xf]
      %v601 = vld [vmem:[%s2 + $0x18] sm:$0xf]
      %v602 = vld [vmem:[%s2 + $0x1c] sm:$0xf]
      %v603 = vld [vmem:[%s2 + $0x20] sm:$0xf]
      %v604 = vld [vmem:[%s2 + $0x24] sm:$0xf]
      %v605 = vld [vmem:[%s2 + $0x28] sm:$0xf]
      %v606 = vld [vmem:[%s2 + $0x2c] sm:$0xf]
      %v607 = vld [vmem:[%s2 + $0x30] sm:$0xf]
      %v608 = vld [vmem:[%s2 + $0x34] sm:$0xf]
      %v609 = vld [vmem:[%s2 + $0x38] sm:$0xf]
      %v610 = vld [vmem:[%s2 + $0x3c] sm:$0xf]
      %v611 = vld [vmem:[%s569] sm:$0xff]
      %v612 = vld [vmem:[%s569 + $0x8] sm:$0xff]
      %v613 = vld [vmem:[%s569 + $0x10] sm:$0xff]
      %v614 = vld [vmem:[%s569 + $0x18] sm:$0xff]
      %v615 = vld [vmem:[%s569 + $0x20] sm:$0xff]
      %v616 = vld [vmem:[%s569 + $0x28] sm:$0xff]
      %v617 = vld [vmem:[%s569 + $0x30] sm:$0xff]
      %v618 = vld [vmem:[%s569 + $0x38] sm:$0xff]
      %v619 = vpack.c.bf16 %v612, %v611
      %v620 = vpack.c.bf16 %v614, %v613
      %v621 = vpack.c.bf16 %v616, %v615
      %v622 = vpack.c.bf16 %v618, %v617
      %v623 = vld [vmem:[%s2 + $0x40] sm:$0xf]
      %v624 = vld [vmem:[%s2 + $0x44] sm:$0xf]
      %v625 = vld [vmem:[%s2 + $0x48] sm:$0xf]
      %v626 = vld [vmem:[%s2 + $0x4c] sm:$0xf]
      %v627 = vld [vmem:[%s2 + $0x50] sm:$0xf]
      %v628 = vld [vmem:[%s2 + $0x54] sm:$0xf]
      %v629 = vld [vmem:[%s2 + $0x58] sm:$0xf]
      %v630 = vld [vmem:[%s2 + $0x5c] sm:$0xf]
      %v631 = vld [vmem:[%s2 + $0x60] sm:$0xf]
      %v632 = vld [vmem:[%s2 + $0x64] sm:$0xf]
      %v633 = vld [vmem:[%s2 + $0x68] sm:$0xf]
      %v634 = vld [vmem:[%s2 + $0x6c] sm:$0xf]
      %v635 = vld [vmem:[%s2 + $0x70] sm:$0xf]
      %v636 = vld [vmem:[%s2 + $0x74] sm:$0xf]
      %v637 = vld [vmem:[%s2 + $0x78] sm:$0xf]
      %v638 = vld [vmem:[%s2 + $0x7c] sm:$0xf]
      %v655 = vunpack.c.l.b16 %v623
      %v656 = vunpack.c.l.b16 %v624
      %v657 = vunpack.c.l.b16 %v625
      %v658 = vunpack.c.l.b16 %v626
      %v659 = vunpack.c.l.b16 %v627
      %v660 = vunpack.c.l.b16 %v628
      %v661 = vunpack.c.l.b16 %v629
      %v662 = vunpack.c.l.b16 %v630
      %v663 = vunpack.c.l.b16 %v631
      %v664 = vunpack.c.l.b16 %v632
      %v665 = vunpack.c.l.b16 %v633
      %v666 = vunpack.c.l.b16 %v634
      %v667 = vunpack.c.l.b16 %v635
      %v668 = vunpack.c.l.b16 %v636
      %v669 = vunpack.c.l.b16 %v637
      %v670 = vunpack.c.l.b16 %v638
      %v671 = vpack.c.b16 %v656, %v655
      %v672 = vpack.c.b16 %v658, %v657
      %v673 = vpack.c.b16 %v660, %v659
      %v674 = vpack.c.b16 %v662, %v661
      %v675 = vpack.c.b16 %v664, %v663
      %v676 = vpack.c.b16 %v666, %v665
      %v677 = vpack.c.b16 %v668, %v667
      %v678 = vpack.c.b16 %v670, %v669
      %687 = vmatpush.bf16.msra.mxu0 %v678
      %688 = vmatpush.bf16.msra.mxu0 %v677
      %689 = vmatpush.bf16.msra.mxu0 %v676
      %690 = vmatpush.bf16.msra.mxu0 %v675
      %691 = vmatpush.bf16.msra.mxu0 %v674
      %692 = vmatpush.bf16.msra.mxu0 %v673
      %693 = vmatpush.bf16.msra.mxu0 %v672
      %694 = vmatpush.bf16.msra.mxu0 %v671
      %695 = vmatmul.bf16.gmra.mxu0 %v619
      %v696 = vpop.f32.mrf.mxu0
      %v697 = vadd.f32 0.0, %v696
      %v698 = vpop.f32.mrf.mxu0
      %v699 = vadd.f32 0.0, %v698
      %700 = vmatmul.bf16.gmra.mxu0 %v620
      %v701 = vpop.f32.mrf.mxu0
      %v702 = vadd.f32 0.0, %v701
      %v703 = vpop.f32.mrf.mxu0
      %v704 = vadd.f32 0.0, %v703
      %705 = vmatmul.bf16.gmra.mxu0 %v621
      %v706 = vpop.f32.mrf.mxu0
      %v707 = vadd.f32 0.0, %v706
      %v708 = vpop.f32.mrf.mxu0
      %v709 = vadd.f32 0.0, %v708
      %710 = vmatmul.bf16.gmra.mxu0 %v622
      %v711 = vpop.f32.mrf.mxu0
      %v712 = vadd.f32 0.0, %v711
      %v713 = vpop.f32.mrf.mxu0
      %v714 = vadd.f32 0.0, %v713
      %715 = vdwg.mxu0
      %v732 = vunpack.c.l.b16 %v595
      %v733 = vunpack.c.l.b16 %v596
      %v734 = vunpack.c.l.b16 %v597
      %v735 = vunpack.c.l.b16 %v598
      %v736 = vunpack.c.l.b16 %v599
      %v737 = vunpack.c.l.b16 %v600
      %v738 = vunpack.c.l.b16 %v601
      %v739 = vunpack.c.l.b16 %v602
      %v740 = vunpack.c.l.b16 %v603
      %v741 = vunpack.c.l.b16 %v604
      %v742 = vunpack.c.l.b16 %v605
      %v743 = vunpack.c.l.b16 %v606
      %v744 = vunpack.c.l.b16 %v607
      %v745 = vunpack.c.l.b16 %v608
      %v746 = vunpack.c.l.b16 %v609
      %v747 = vunpack.c.l.b16 %v610
      %v748 = vpack.c.b16 %v733, %v732
      %v749 = vpack.c.b16 %v735, %v734
      %v750 = vpack.c.b16 %v737, %v736
      %v751 = vpack.c.b16 %v739, %v738
      %v752 = vpack.c.b16 %v741, %v740
      %v753 = vpack.c.b16 %v743, %v742
      %v754 = vpack.c.b16 %v745, %v744
      %v755 = vpack.c.b16 %v747, %v746
      %764 = vmatpush.bf16.msra.mxu0 %v755
      %765 = vmatpush.bf16.msra.mxu0 %v754
      %766 = vmatpush.bf16.msra.mxu0 %v753
      %767 = vmatpush.bf16.msra.mxu0 %v752
      %768 = vmatpush.bf16.msra.mxu0 %v751
      %769 = vmatpush.bf16.msra.mxu0 %v750
      %770 = vmatpush.bf16.msra.mxu0 %v749
      %771 = vmatpush.bf16.msra.mxu0 %v748
      %772 = vmatmul.bf16.gmra.mxu0 %v591
      %v773 = vpop.f32.mrf.mxu0
      %v774 = vadd.f32 %v697, %v773
      %v775 = vpop.f32.mrf.mxu0
      %v776 = vadd.f32 %v699, %v775
      %777 = vmatmul.bf16.gmra.mxu0 %v592
      %v778 = vpop.f32.mrf.mxu0
      %v779 = vadd.f32 %v702, %v778
      %v780 = vpop.f32.mrf.mxu0
      %v781 = vadd.f32 %v704, %v780
      %782 = vmatmul.bf16.gmra.mxu0 %v593
      %v783 = vpop.f32.mrf.mxu0
      %v784 = vadd.f32 %v707, %v783
      %v785 = vpop.f32.mrf.mxu0
      %v786 = vadd.f32 %v709, %v785
      %787 = vmatmul.bf16.gmra.mxu0 %v594
      %v788 = vpop.f32.mrf.mxu0
      %v789 = vadd.f32 %v712, %v788
      %v790 = vpop.f32.mrf.mxu0
      %v791 = vadd.f32 %v714, %v790
      %792 = vdwg.mxu0
      %v793 = vld [vmem:[%s577] sm:$0xff]
      %v794 = vld [vmem:[%s577 + $0x8] sm:$0xff]
      %v795 = vld [vmem:[%s577 + $0x10] sm:$0xff]
      %v796 = vld [vmem:[%s577 + $0x18] sm:$0xff]
      %v797 = vld [vmem:[%s577 + $0x20] sm:$0xff]
      %v798 = vld [vmem:[%s577 + $0x28] sm:$0xff]
      %v799 = vld [vmem:[%s577 + $0x30] sm:$0xff]
      %v800 = vld [vmem:[%s577 + $0x38] sm:$0xff]
      %v801 = vpack.c.bf16 %v794, %v793
      %v802 = vpack.c.bf16 %v796, %v795
      %v803 = vpack.c.bf16 %v798, %v797
      %v804 = vpack.c.bf16 %v800, %v799
      %v805 = vld [vmem:[%s2 + $0x80] sm:$0xf]
      %v806 = vld [vmem:[%s2 + $0x84] sm:$0xf]
      %v807 = vld [vmem:[%s2 + $0x88] sm:$0xf]
      %v808 = vld [vmem:[%s2 + $0x8c] sm:$0xf]
      %v809 = vld [vmem:[%s2 + $0x90] sm:$0xf]
      %v810 = vld [vmem:[%s2 + $0x94] sm:$0xf]
      %v811 = vld [vmem:[%s2 + $0x98] sm:$0xf]
      %v812 = vld [vmem:[%s2 + $0x9c] sm:$0xf]
      %v813 = vld [vmem:[%s2 + $0xa0] sm:$0xf]
      %v814 = vld [vmem:[%s2 + $0xa4] sm:$0xf]
      %v815 = vld [vmem:[%s2 + $0xa8] sm:$0xf]
      %v816 = vld [vmem:[%s2 + $0xac] sm:$0xf]
      %v817 = vld [vmem:[%s2 + $0xb0] sm:$0xf]
      %v818 = vld [vmem:[%s2 + $0xb4] sm:$0xf]
      %v819 = vld [vmem:[%s2 + $0xb8] sm:$0xf]
      %v820 = vld [vmem:[%s2 + $0xbc] sm:$0xf]
      %v837 = vunpack.c.l.b16 %v805
      %v838 = vunpack.c.l.b16 %v806
      %v839 = vunpack.c.l.b16 %v807
      %v840 = vunpack.c.l.b16 %v808
      %v841 = vunpack.c.l.b16 %v809
      %v842 = vunpack.c.l.b16 %v810
      %v843 = vunpack.c.l.b16 %v811
      %v844 = vunpack.c.l.b16 %v812
      %v845 = vunpack.c.l.b16 %v813
      %v846 = vunpack.c.l.b16 %v814
      %v847 = vunpack.c.l.b16 %v815
      %v848 = vunpack.c.l.b16 %v816
      %v849 = vunpack.c.l.b16 %v817
      %v850 = vunpack.c.l.b16 %v818
      %v851 = vunpack.c.l.b16 %v819
      %v852 = vunpack.c.l.b16 %v820
      %v853 = vpack.c.b16 %v838, %v837
      %v854 = vpack.c.b16 %v840, %v839
      %v855 = vpack.c.b16 %v842, %v841
      %v856 = vpack.c.b16 %v844, %v843
      %v857 = vpack.c.b16 %v846, %v845
      %v858 = vpack.c.b16 %v848, %v847
      %v859 = vpack.c.b16 %v850, %v849
      %v860 = vpack.c.b16 %v852, %v851
      %869 = vmatpush.bf16.msra.mxu0 %v860
      %870 = vmatpush.bf16.msra.mxu0 %v859
      %871 = vmatpush.bf16.msra.mxu0 %v858
      %872 = vmatpush.bf16.msra.mxu0 %v857
      %873 = vmatpush.bf16.msra.mxu0 %v856
      %874 = vmatpush.bf16.msra.mxu0 %v855
      %875 = vmatpush.bf16.msra.mxu0 %v854
      %876 = vmatpush.bf16.msra.mxu0 %v853
      %877 = vmatmul.bf16.gmra.mxu0 %v801
      %v878 = vpop.f32.mrf.mxu0
      %v879 = vadd.f32 0.0, %v878
      %v880 = vpop.f32.mrf.mxu0
      %v881 = vadd.f32 0.0, %v880
      %882 = vmatmul.bf16.gmra.mxu0 %v802
      %v883 = vpop.f32.mrf.mxu0
      %v884 = vadd.f32 0.0, %v883
      %v885 = vpop.f32.mrf.mxu0
      %v886 = vadd.f32 0.0, %v885
      %887 = vmatmul.bf16.gmra.mxu0 %v803
      %v888 = vpop.f32.mrf.mxu0
      %v889 = vadd.f32 0.0, %v888
      %v890 = vpop.f32.mrf.mxu0
      %v891 = vadd.f32 0.0, %v890
      %892 = vmatmul.bf16.gmra.mxu0 %v804
      %v893 = vpop.f32.mrf.mxu0
      %v894 = vadd.f32 0.0, %v893
      %v895 = vpop.f32.mrf.mxu0
      %v896 = vadd.f32 0.0, %v895
      %897 = vdwg.mxu0
      %v898 = vadd.f32 %v774, %v879
      %v899 = vadd.f32 %v776, %v881
      %v900 = vadd.f32 %v779, %v884
      %v901 = vadd.f32 %v781, %v886
      %v902 = vadd.f32 %v784, %v889
      %v903 = vadd.f32 %v786, %v891
      %v904 = vadd.f32 %v789, %v894
      %v905 = vadd.f32 %v791, %v896
      %v906 = vld [vmem:[%s526] sm:$0xff]
      %v907 = vld [vmem:[%s526 + $0x8] sm:$0xff]
      %v908 = vld [vmem:[%s526 + $0x10] sm:$0xff]
      %v909 = vld [vmem:[%s526 + $0x18] sm:$0xff]
      %v910 = vld [vmem:[%s526 + $0x20] sm:$0xff]
      %v911 = vld [vmem:[%s526 + $0x28] sm:$0xff]
      %v912 = vld [vmem:[%s526 + $0x30] sm:$0xff]
      %v913 = vld [vmem:[%s526 + $0x38] sm:$0xff]
      %v914 = vpack.c.bf16 %v907, %v906
      %v915 = vpack.c.bf16 %v909, %v908
      %v916 = vpack.c.bf16 %v911, %v910
      %v917 = vpack.c.bf16 %v913, %v912
      %v918 = vld [vmem:[%s2 + $0xc0] sm:$0xf]
      %v919 = vld [vmem:[%s2 + $0xc4] sm:$0xf]
      %v920 = vld [vmem:[%s2 + $0xc8] sm:$0xf]
      %v921 = vld [vmem:[%s2 + $0xcc] sm:$0xf]
      %v922 = vld [vmem:[%s2 + $0xd0] sm:$0xf]
      %v923 = vld [vmem:[%s2 + $0xd4] sm:$0xf]
      %v924 = vld [vmem:[%s2 + $0xd8] sm:$0xf]
      %v925 = vld [vmem:[%s2 + $0xdc] sm:$0xf]
      %v926 = vld [vmem:[%s2 + $0xe0] sm:$0xf]
      %v927 = vld [vmem:[%s2 + $0xe4] sm:$0xf]
      %v928 = vld [vmem:[%s2 + $0xe8] sm:$0xf]
      %v929 = vld [vmem:[%s2 + $0xec] sm:$0xf]
      %v930 = vld [vmem:[%s2 + $0xf0] sm:$0xf]
      %v931 = vld [vmem:[%s2 + $0xf4] sm:$0xf]
      %v932 = vld [vmem:[%s2 + $0xf8] sm:$0xf]
      %v933 = vld [vmem:[%s2 + $0xfc] sm:$0xf]
      %v950 = vunpack.c.l.b16 %v918
      %v951 = vunpack.c.l.b16 %v919
      %v952 = vunpack.c.l.b16 %v920
      %v953 = vunpack.c.l.b16 %v921
      %v954 = vunpack.c.l.b16 %v922
      %v955 = vunpack.c.l.b16 %v923
      %v956 = vunpack.c.l.b16 %v924
      %v957 = vunpack.c.l.b16 %v925
      %v958 = vunpack.c.l.b16 %v926
      %v959 = vunpack.c.l.b16 %v927
      %v960 = vunpack.c.l.b16 %v928
      %v961 = vunpack.c.l.b16 %v929
      %v962 = vunpack.c.l.b16 %v930
      %v963 = vunpack.c.l.b16 %v931
      %v964 = vunpack.c.l.b16 %v932
      %v965 = vunpack.c.l.b16 %v933
      %v966 = vpack.c.b16 %v951, %v950
      %v967 = vpack.c.b16 %v953, %v952
      %v968 = vpack.c.b16 %v955, %v954
      %v969 = vpack.c.b16 %v957, %v956
      %v970 = vpack.c.b16 %v959, %v958
      %v971 = vpack.c.b16 %v961, %v960
      %v972 = vpack.c.b16 %v963, %v962
      %v973 = vpack.c.b16 %v965, %v964
      %982 = vmatpush.bf16.msra.mxu0 %v973
      %983 = vmatpush.bf16.msra.mxu0 %v972
      %984 = vmatpush.bf16.msra.mxu0 %v971
      %985 = vmatpush.bf16.msra.mxu0 %v970
      %986 = vmatpush.bf16.msra.mxu0 %v969
      %987 = vmatpush.bf16.msra.mxu0 %v968
      %988 = vmatpush.bf16.msra.mxu0 %v967
      %989 = vmatpush.bf16.msra.mxu0 %v966
      %990 = vmatmul.bf16.gmra.mxu0 %v914
      %v991 = vpop.f32.mrf.mxu0
      %v992 = vadd.f32 0.0, %v991
      %v993 = vpop.f32.mrf.mxu0
      %v994 = vadd.f32 0.0, %v993
      %995 = vmatmul.bf16.gmra.mxu0 %v915
      %v996 = vpop.f32.mrf.mxu0
      %v997 = vadd.f32 0.0, %v996
      %v998 = vpop.f32.mrf.mxu0
      %v999 = vadd.f32 0.0, %v998
      %1000 = vmatmul.bf16.gmra.mxu0 %v916
      %v1001 = vpop.f32.mrf.mxu0
      %v1002 = vadd.f32 0.0, %v1001
      %v1003 = vpop.f32.mrf.mxu0
      %v1004 = vadd.f32 0.0, %v1003
      %1005 = vmatmul.bf16.gmra.mxu0 %v917
      %v1006 = vpop.f32.mrf.mxu0
      %v1007 = vadd.f32 0.0, %v1006
      %v1008 = vpop.f32.mrf.mxu0
      %v1009 = vadd.f32 0.0, %v1008
      %1010 = vdwg.mxu0
      %v1011 = vadd.f32 %v898, %v992
      %v1012 = vadd.f32 %v899, %v994
      %v1013 = vadd.f32 %v900, %v997
      %v1014 = vadd.f32 %v901, %v999
      %v1015 = vadd.f32 %v902, %v1002
      %v1016 = vadd.f32 %v903, %v1004
      %v1017 = vadd.f32 %v904, %v1007
      %v1018 = vadd.f32 %v905, %v1009
      %v1019 = vld [vmem:[%s517] sm:$0xff]
      %v1020 = vld [vmem:[%s517 + $0x8] sm:$0xff]
      %v1021 = vld [vmem:[%s517 + $0x10] sm:$0xff]
      %v1022 = vld [vmem:[%s517 + $0x18] sm:$0xff]
      %v1023 = vld [vmem:[%s517 + $0x20] sm:$0xff]
      %v1024 = vld [vmem:[%s517 + $0x28] sm:$0xff]
      %v1025 = vld [vmem:[%s517 + $0x30] sm:$0xff]
      %v1026 = vld [vmem:[%s517 + $0x38] sm:$0xff]
      %v1027 = vpack.c.bf16 %v1020, %v1019
      %v1028 = vpack.c.bf16 %v1022, %v1021
      %v1029 = vpack.c.bf16 %v1024, %v1023
      %v1030 = vpack.c.bf16 %v1026, %v1025
      %v1031 = vld [vmem:[%s2 + $0x100] sm:$0xf]
      %v1032 = vld [vmem:[%s2 + $0x104] sm:$0xf]
      %v1033 = vld [vmem:[%s2 + $0x108] sm:$0xf]
      %v1034 = vld [vmem:[%s2 + $0x10c] sm:$0xf]
      %v1035 = vld [vmem:[%s2 + $0x110] sm:$0xf]
      %v1036 = vld [vmem:[%s2 + $0x114] sm:$0xf]
      %v1037 = vld [vmem:[%s2 + $0x118] sm:$0xf]
      %v1038 = vld [vmem:[%s2 + $0x11c] sm:$0xf]
      %v1039 = vld [vmem:[%s2 + $0x120] sm:$0xf]
      %v1040 = vld [vmem:[%s2 + $0x124] sm:$0xf]
      %v1041 = vld [vmem:[%s2 + $0x128] sm:$0xf]
      %v1042 = vld [vmem:[%s2 + $0x12c] sm:$0xf]
      %v1043 = vld [vmem:[%s2 + $0x130] sm:$0xf]
      %v1044 = vld [vmem:[%s2 + $0x134] sm:$0xf]
      %v1045 = vld [vmem:[%s2 + $0x138] sm:$0xf]
      %v1046 = vld [vmem:[%s2 + $0x13c] sm:$0xf]
      %v1063 = vunpack.c.l.b16 %v1031
      %v1064 = vunpack.c.l.b16 %v1032
      %v1065 = vunpack.c.l.b16 %v1033
      %v1066 = vunpack.c.l.b16 %v1034
      %v1067 = vunpack.c.l.b16 %v1035
      %v1068 = vunpack.c.l.b16 %v1036
      %v1069 = vunpack.c.l.b16 %v1037
      %v1070 = vunpack.c.l.b16 %v1038
      %v1071 = vunpack.c.l.b16 %v1039
      %v1072 = vunpack.c.l.b16 %v1040
      %v1073 = vunpack.c.l.b16 %v1041
      %v1074 = vunpack.c.l.b16 %v1042
      %v1075 = vunpack.c.l.b16 %v1043
      %v1076 = vunpack.c.l.b16 %v1044
      %v1077 = vunpack.c.l.b16 %v1045
      %v1078 = vunpack.c.l.b16 %v1046
      %v1079 = vpack.c.b16 %v1064, %v1063
      %v1080 = vpack.c.b16 %v1066, %v1065
      %v1081 = vpack.c.b16 %v1068, %v1067
      %v1082 = vpack.c.b16 %v1070, %v1069
      %v1083 = vpack.c.b16 %v1072, %v1071
      %v1084 = vpack.c.b16 %v1074, %v1073
      %v1085 = vpack.c.b16 %v1076, %v1075
      %v1086 = vpack.c.b16 %v1078, %v1077
      %1095 = vmatpush.bf16.msra.mxu0 %v1086
      %1096 = vmatpush.bf16.msra.mxu0 %v1085
      %1097 = vmatpush.bf16.msra.mxu0 %v1084
      %1098 = vmatpush.bf16.msra.mxu0 %v1083
      %1099 = vmatpush.bf16.msra.mxu0 %v1082
      %1100 = vmatpush.bf16.msra.mxu0 %v1081
      %1101 = vmatpush.bf16.msra.mxu0 %v1080
      %1102 = vmatpush.bf16.msra.mxu0 %v1079
      %1103 = vmatmul.bf16.gmra.mxu0 %v1027
      %v1104 = vpop.f32.mrf.mxu0
      %v1105 = vadd.f32 0.0, %v1104
      %v1106 = vpop.f32.mrf.mxu0
      %v1107 = vadd.f32 0.0, %v1106
      %1108 = vmatmul.bf16.gmra.mxu0 %v1028
      %v1109 = vpop.f32.mrf.mxu0
      %v1110 = vadd.f32 0.0, %v1109
      %v1111 = vpop.f32.mrf.mxu0
      %v1112 = vadd.f32 0.0, %v1111
      %1113 = vmatmul.bf16.gmra.mxu0 %v1029
      %v1114 = vpop.f32.mrf.mxu0
      %v1115 = vadd.f32 0.0, %v1114
      %v1116 = vpop.f32.mrf.mxu0
      %v1117 = vadd.f32 0.0, %v1116
      %1118 = vmatmul.bf16.gmra.mxu0 %v1030
      %v1119 = vpop.f32.mrf.mxu0
      %v1120 = vadd.f32 0.0, %v1119
      %v1121 = vpop.f32.mrf.mxu0
      %v1122 = vadd.f32 0.0, %v1121
      %1123 = vdwg.mxu0
      %v1124 = vadd.f32 %v1011, %v1105
      %v1125 = vadd.f32 %v1012, %v1107
      %v1126 = vadd.f32 %v1013, %v1110
      %v1127 = vadd.f32 %v1014, %v1112
      %v1128 = vadd.f32 %v1015, %v1115
      %v1129 = vadd.f32 %v1016, %v1117
      %v1130 = vadd.f32 %v1017, %v1120
      %v1131 = vadd.f32 %v1018, %v1122
      %v1132 = vld [vmem:[%s543] sm:$0xff]
      %v1133 = vld [vmem:[%s543 + $0x8] sm:$0xff]
      %v1134 = vld [vmem:[%s543 + $0x10] sm:$0xff]
      %v1135 = vld [vmem:[%s543 + $0x18] sm:$0xff]
      %v1136 = vld [vmem:[%s543 + $0x20] sm:$0xff]
      %v1137 = vld [vmem:[%s543 + $0x28] sm:$0xff]
      %v1138 = vld [vmem:[%s543 + $0x30] sm:$0xff]
      %v1139 = vld [vmem:[%s543 + $0x38] sm:$0xff]
      %v1140 = vpack.c.bf16 %v1133, %v1132
      %v1141 = vpack.c.bf16 %v1135, %v1134
      %v1142 = vpack.c.bf16 %v1137, %v1136
      %v1143 = vpack.c.bf16 %v1139, %v1138
      %v1144 = vld [vmem:[%s2 + $0x140] sm:$0xf]
      %v1145 = vld [vmem:[%s2 + $0x144] sm:$0xf]
      %v1146 = vld [vmem:[%s2 + $0x148] sm:$0xf]
      %v1147 = vld [vmem:[%s2 + $0x14c] sm:$0xf]
      %v1148 = vld [vmem:[%s2 + $0x150] sm:$0xf]
      %v1149 = vld [vmem:[%s2 + $0x154] sm:$0xf]
      %v1150 = vld [vmem:[%s2 + $0x158] sm:$0xf]
      %v1151 = vld [vmem:[%s2 + $0x15c] sm:$0xf]
      %v1152 = vld [vmem:[%s2 + $0x160] sm:$0xf]
      %v1153 = vld [vmem:[%s2 + $0x164] sm:$0xf]
      %v1154 = vld [vmem:[%s2 + $0x168] sm:$0xf]
      %v1155 = vld [vmem:[%s2 + $0x16c] sm:$0xf]
      %v1156 = vld [vmem:[%s2 + $0x170] sm:$0xf]
      %v1157 = vld [vmem:[%s2 + $0x174] sm:$0xf]
      %v1158 = vld [vmem:[%s2 + $0x178] sm:$0xf]
      %v1159 = vld [vmem:[%s2 + $0x17c] sm:$0xf]
      %v1176 = vunpack.c.l.b16 %v1144
      %v1177 = vunpack.c.l.b16 %v1145
      %v1178 = vunpack.c.l.b16 %v1146
      %v1179 = vunpack.c.l.b16 %v1147
      %v1180 = vunpack.c.l.b16 %v1148
      %v1181 = vunpack.c.l.b16 %v1149
      %v1182 = vunpack.c.l.b16 %v1150
      %v1183 = vunpack.c.l.b16 %v1151
      %v1184 = vunpack.c.l.b16 %v1152
      %v1185 = vunpack.c.l.b16 %v1153
      %v1186 = vunpack.c.l.b16 %v1154
      %v1187 = vunpack.c.l.b16 %v1155
      %v1188 = vunpack.c.l.b16 %v1156
      %v1189 = vunpack.c.l.b16 %v1157
      %v1190 = vunpack.c.l.b16 %v1158
      %v1191 = vunpack.c.l.b16 %v1159
      %v1192 = vpack.c.b16 %v1177, %v1176
      %v1193 = vpack.c.b16 %v1179, %v1178
      %v1194 = vpack.c.b16 %v1181, %v1180
      %v1195 = vpack.c.b16 %v1183, %v1182
      %v1196 = vpack.c.b16 %v1185, %v1184
      %v1197 = vpack.c.b16 %v1187, %v1186
      %v1198 = vpack.c.b16 %v1189, %v1188
      %v1199 = vpack.c.b16 %v1191, %v1190
      %1208 = vmatpush.bf16.msra.mxu0 %v1199
      %1209 = vmatpush.bf16.msra.mxu0 %v1198
      %1210 = vmatpush.bf16.msra.mxu0 %v1197
      %1211 = vmatpush.bf16.msra.mxu0 %v1196
      %1212 = vmatpush.bf16.msra.mxu0 %v1195
      %1213 = vmatpush.bf16.msra.mxu0 %v1194
      %1214 = vmatpush.bf16.msra.mxu0 %v1193
      %1215 = vmatpush.bf16.msra.mxu0 %v1192
      %1216 = vmatmul.bf16.gmra.mxu0 %v1140
      %v1217 = vpop.f32.mrf.mxu0
      %v1218 = vadd.f32 0.0, %v1217
      %v1219 = vpop.f32.mrf.mxu0
      %v1220 = vadd.f32 0.0, %v1219
      %1221 = vmatmul.bf16.gmra.mxu0 %v1141
      %v1222 = vpop.f32.mrf.mxu0
      %v1223 = vadd.f32 0.0, %v1222
      %v1224 = vpop.f32.mrf.mxu0
      %v1225 = vadd.f32 0.0, %v1224
      %1226 = vmatmul.bf16.gmra.mxu0 %v1142
      %v1227 = vpop.f32.mrf.mxu0
      %v1228 = vadd.f32 0.0, %v1227
      %v1229 = vpop.f32.mrf.mxu0
      %v1230 = vadd.f32 0.0, %v1229
      %1231 = vmatmul.bf16.gmra.mxu0 %v1143
      %v1232 = vpop.f32.mrf.mxu0
      %v1233 = vadd.f32 0.0, %v1232
      %v1234 = vpop.f32.mrf.mxu0
      %v1235 = vadd.f32 0.0, %v1234
      %1236 = vdwg.mxu0
      %v1237 = vadd.f32 %v1124, %v1218
      %v1238 = vadd.f32 %v1125, %v1220
      %v1239 = vadd.f32 %v1126, %v1223
      %v1240 = vadd.f32 %v1127, %v1225
      %v1241 = vadd.f32 %v1128, %v1228
      %v1242 = vadd.f32 %v1129, %v1230
      %v1243 = vadd.f32 %v1130, %v1233
      %v1244 = vadd.f32 %v1131, %v1235
      %v1245 = vld [vmem:[%s560] sm:$0xff]
      %v1246 = vld [vmem:[%s560 + $0x8] sm:$0xff]
      %v1247 = vld [vmem:[%s560 + $0x10] sm:$0xff]
      %v1248 = vld [vmem:[%s560 + $0x18] sm:$0xff]
      %v1249 = vld [vmem:[%s560 + $0x20] sm:$0xff]
      %v1250 = vld [vmem:[%s560 + $0x28] sm:$0xff]
      %v1251 = vld [vmem:[%s560 + $0x30] sm:$0xff]
      %v1252 = vld [vmem:[%s560 + $0x38] sm:$0xff]
      %v1253 = vpack.c.bf16 %v1246, %v1245
      %v1254 = vpack.c.bf16 %v1248, %v1247
      %v1255 = vpack.c.bf16 %v1250, %v1249
      %v1256 = vpack.c.bf16 %v1252, %v1251
      %v1257 = vld [vmem:[%s2 + $0x180] sm:$0xf]
      %v1258 = vld [vmem:[%s2 + $0x184] sm:$0xf]
      %v1259 = vld [vmem:[%s2 + $0x188] sm:$0xf]
      %v1260 = vld [vmem:[%s2 + $0x18c] sm:$0xf]
      %v1261 = vld [vmem:[%s2 + $0x190] sm:$0xf]
      %v1262 = vld [vmem:[%s2 + $0x194] sm:$0xf]
      %v1263 = vld [vmem:[%s2 + $0x198] sm:$0xf]
      %v1264 = vld [vmem:[%s2 + $0x19c] sm:$0xf]
      %v1265 = vld [vmem:[%s2 + $0x1a0] sm:$0xf]
      %v1266 = vld [vmem:[%s2 + $0x1a4] sm:$0xf]
      %v1267 = vld [vmem:[%s2 + $0x1a8] sm:$0xf]
      %v1268 = vld [vmem:[%s2 + $0x1ac] sm:$0xf]
      %v1269 = vld [vmem:[%s2 + $0x1b0] sm:$0xf]
      %v1270 = vld [vmem:[%s2 + $0x1b4] sm:$0xf]
      %v1271 = vld [vmem:[%s2 + $0x1b8] sm:$0xf]
      %v1272 = vld [vmem:[%s2 + $0x1bc] sm:$0xf]
      %v1289 = vunpack.c.l.b16 %v1257
      %v1290 = vunpack.c.l.b16 %v1258
      %v1291 = vunpack.c.l.b16 %v1259
      %v1292 = vunpack.c.l.b16 %v1260
      %v1293 = vunpack.c.l.b16 %v1261
      %v1294 = vunpack.c.l.b16 %v1262
      %v1295 = vunpack.c.l.b16 %v1263
      %v1296 = vunpack.c.l.b16 %v1264
      %v1297 = vunpack.c.l.b16 %v1265
      %v1298 = vunpack.c.l.b16 %v1266
      %v1299 = vunpack.c.l.b16 %v1267
      %v1300 = vunpack.c.l.b16 %v1268
      %v1301 = vunpack.c.l.b16 %v1269
      %v1302 = vunpack.c.l.b16 %v1270
      %v1303 = vunpack.c.l.b16 %v1271
      %v1304 = vunpack.c.l.b16 %v1272
      %v1305 = vpack.c.b16 %v1290, %v1289
      %v1306 = vpack.c.b16 %v1292, %v1291
      %v1307 = vpack.c.b16 %v1294, %v1293
      %v1308 = vpack.c.b16 %v1296, %v1295
      %v1309 = vpack.c.b16 %v1298, %v1297
      %v1310 = vpack.c.b16 %v1300, %v1299
      %v1311 = vpack.c.b16 %v1302, %v1301
      %v1312 = vpack.c.b16 %v1304, %v1303
      %1321 = vmatpush.bf16.msra.mxu0 %v1312
      %1322 = vmatpush.bf16.msra.mxu0 %v1311
      %1323 = vmatpush.bf16.msra.mxu0 %v1310
      %1324 = vmatpush.bf16.msra.mxu0 %v1309
      %1325 = vmatpush.bf16.msra.mxu0 %v1308
      %1326 = vmatpush.bf16.msra.mxu0 %v1307
      %1327 = vmatpush.bf16.msra.mxu0 %v1306
      %1328 = vmatpush.bf16.msra.mxu0 %v1305
      %1329 = vmatmul.bf16.gmra.mxu0 %v1253
      %v1330 = vpop.f32.mrf.mxu0
      %v1331 = vadd.f32 0.0, %v1330
      %v1332 = vpop.f32.mrf.mxu0
      %v1333 = vadd.f32 0.0, %v1332
      %1334 = vmatmul.bf16.gmra.mxu0 %v1254
      %v1335 = vpop.f32.mrf.mxu0
      %v1336 = vadd.f32 0.0, %v1335
      %v1337 = vpop.f32.mrf.mxu0
      %v1338 = vadd.f32 0.0, %v1337
      %1339 = vmatmul.bf16.gmra.mxu0 %v1255
      %v1340 = vpop.f32.mrf.mxu0
      %v1341 = vadd.f32 0.0, %v1340
      %v1342 = vpop.f32.mrf.mxu0
      %v1343 = vadd.f32 0.0, %v1342
      %1344 = vmatmul.bf16.gmra.mxu0 %v1256
      %v1345 = vpop.f32.mrf.mxu0
      %v1346 = vadd.f32 0.0, %v1345
      %v1347 = vpop.f32.mrf.mxu0
      %v1348 = vadd.f32 0.0, %v1347
      %1349 = vdwg.mxu0
      %v1350 = vadd.f32 %v1237, %v1331
      %v1351 = vadd.f32 %v1238, %v1333
      %v1352 = vadd.f32 %v1239, %v1336
      %v1353 = vadd.f32 %v1240, %v1338
      %v1354 = vadd.f32 %v1241, %v1341
      %v1355 = vadd.f32 %v1242, %v1343
      %v1356 = vadd.f32 %v1243, %v1346
      %v1357 = vadd.f32 %v1244, %v1348
      %v1358 = vld [vmem:[%s567] sm:$0xff]
      %v1359 = vld [vmem:[%s567 + $0x8] sm:$0xff]
      %v1360 = vld [vmem:[%s567 + $0x10] sm:$0xff]
      %v1361 = vld [vmem:[%s567 + $0x18] sm:$0xff]
      %v1362 = vld [vmem:[%s567 + $0x20] sm:$0xff]
      %v1363 = vld [vmem:[%s567 + $0x28] sm:$0xff]
      %v1364 = vld [vmem:[%s567 + $0x30] sm:$0xff]
      %v1365 = vld [vmem:[%s567 + $0x38] sm:$0xff]
      %v1366 = vpack.c.bf16 %v1359, %v1358
      %v1367 = vpack.c.bf16 %v1361, %v1360
      %v1368 = vpack.c.bf16 %v1363, %v1362
      %v1369 = vpack.c.bf16 %v1365, %v1364
      %v1370 = vld [vmem:[%s2 + $0x1c0] sm:$0xf]
      %v1371 = vld [vmem:[%s2 + $0x1c4] sm:$0xf]
      %v1372 = vld [vmem:[%s2 + $0x1c8] sm:$0xf]
      %v1373 = vld [vmem:[%s2 + $0x1cc] sm:$0xf]
      %v1374 = vld [vmem:[%s2 + $0x1d0] sm:$0xf]
      %v1375 = vld [vmem:[%s2 + $0x1d4] sm:$0xf]
      %v1376 = vld [vmem:[%s2 + $0x1d8] sm:$0xf]
      %v1377 = vld [vmem:[%s2 + $0x1dc] sm:$0xf]
      %v1378 = vld [vmem:[%s2 + $0x1e0] sm:$0xf]
      %v1379 = vld [vmem:[%s2 + $0x1e4] sm:$0xf]
      %v1380 = vld [vmem:[%s2 + $0x1e8] sm:$0xf]
      %v1381 = vld [vmem:[%s2 + $0x1ec] sm:$0xf]
      %v1382 = vld [vmem:[%s2 + $0x1f0] sm:$0xf]
      %v1383 = vld [vmem:[%s2 + $0x1f4] sm:$0xf]
      %v1384 = vld [vmem:[%s2 + $0x1f8] sm:$0xf]
      %v1385 = vld [vmem:[%s2 + $0x1fc] sm:$0xf]
      %v1402 = vunpack.c.l.b16 %v1370
      %v1403 = vunpack.c.l.b16 %v1371
      %v1404 = vunpack.c.l.b16 %v1372
      %v1405 = vunpack.c.l.b16 %v1373
      %v1406 = vunpack.c.l.b16 %v1374
      %v1407 = vunpack.c.l.b16 %v1375
      %v1408 = vunpack.c.l.b16 %v1376
      %v1409 = vunpack.c.l.b16 %v1377
      %v1410 = vunpack.c.l.b16 %v1378
      %v1411 = vunpack.c.l.b16 %v1379
      %v1412 = vunpack.c.l.b16 %v1380
      %v1413 = vunpack.c.l.b16 %v1381
      %v1414 = vunpack.c.l.b16 %v1382
      %v1415 = vunpack.c.l.b16 %v1383
      %v1416 = vunpack.c.l.b16 %v1384
      %v1417 = vunpack.c.l.b16 %v1385
      %v1418 = vpack.c.b16 %v1403, %v1402
      %v1419 = vpack.c.b16 %v1405, %v1404
      %v1420 = vpack.c.b16 %v1407, %v1406
      %v1421 = vpack.c.b16 %v1409, %v1408
      %v1422 = vpack.c.b16 %v1411, %v1410
      %v1423 = vpack.c.b16 %v1413, %v1412
      %v1424 = vpack.c.b16 %v1415, %v1414
      %v1425 = vpack.c.b16 %v1417, %v1416
      %1434 = vmatpush.bf16.msra.mxu0 %v1425
      %1435 = vmatpush.bf16.msra.mxu0 %v1424
      %1436 = vmatpush.bf16.msra.mxu0 %v1423
      %1437 = vmatpush.bf16.msra.mxu0 %v1422
      %1438 = vmatpush.bf16.msra.mxu0 %v1421
      %1439 = vmatpush.bf16.msra.mxu0 %v1420
      %1440 = vmatpush.bf16.msra.mxu0 %v1419
      %1441 = vmatpush.bf16.msra.mxu0 %v1418
      %1442 = vmatmul.bf16.gmra.mxu0 %v1366
      %v1443 = vpop.f32.mrf.mxu0
      %v1444 = vadd.f32 0.0, %v1443
      %v1445 = vpop.f32.mrf.mxu0
      %v1446 = vadd.f32 0.0, %v1445
      %1447 = vmatmul.bf16.gmra.mxu0 %v1367
      %v1448 = vpop.f32.mrf.mxu0
      %v1449 = vadd.f32 0.0, %v1448
      %v1450 = vpop.f32.mrf.mxu0
      %v1451 = vadd.f32 0.0, %v1450
      %1452 = vmatmul.bf16.gmra.mxu0 %v1368
      %v1453 = vpop.f32.mrf.mxu0
      %v1454 = vadd.f32 0.0, %v1453
      %v1455 = vpop.f32.mrf.mxu0
      %v1456 = vadd.f32 0.0, %v1455
      %1457 = vmatmul.bf16.gmra.mxu0 %v1369
      %v1458 = vpop.f32.mrf.mxu0
      %v1459 = vadd.f32 0.0, %v1458
      %v1460 = vpop.f32.mrf.mxu0
      %v1461 = vadd.f32 0.0, %v1460
      %1462 = vdwg.mxu0
      %v1463 = vadd.f32 %v1350, %v1444
      %v1464 = vadd.f32 %v1351, %v1446
      %v1465 = vadd.f32 %v1352, %v1449
      %v1466 = vadd.f32 %v1353, %v1451
      %v1467 = vadd.f32 %v1354, %v1454
      %v1468 = vadd.f32 %v1355, %v1456
      %v1469 = vadd.f32 %v1356, %v1459
      %v1470 = vadd.f32 %v1357, %v1461
      %v1471 = vld [vmem:[%s575] sm:$0xff]
      %v1472 = vld [vmem:[%s575 + $0x8] sm:$0xff]
      %v1473 = vld [vmem:[%s575 + $0x10] sm:$0xff]
      %v1474 = vld [vmem:[%s575 + $0x18] sm:$0xff]
      %v1475 = vld [vmem:[%s575 + $0x20] sm:$0xff]
      %v1476 = vld [vmem:[%s575 + $0x28] sm:$0xff]
      %v1477 = vld [vmem:[%s575 + $0x30] sm:$0xff]
      %v1478 = vld [vmem:[%s575 + $0x38] sm:$0xff]
      %v1479 = vpack.c.bf16 %v1472, %v1471
      %v1480 = vpack.c.bf16 %v1474, %v1473
      %v1481 = vpack.c.bf16 %v1476, %v1475
      %v1482 = vpack.c.bf16 %v1478, %v1477
      %v1483 = vld [vmem:[%s2 + $0x200] sm:$0xf]
      %v1484 = vld [vmem:[%s2 + $0x204] sm:$0xf]
      %v1485 = vld [vmem:[%s2 + $0x208] sm:$0xf]
      %v1486 = vld [vmem:[%s2 + $0x20c] sm:$0xf]
      %v1487 = vld [vmem:[%s2 + $0x210] sm:$0xf]
      %v1488 = vld [vmem:[%s2 + $0x214] sm:$0xf]
      %v1489 = vld [vmem:[%s2 + $0x218] sm:$0xf]
      %v1490 = vld [vmem:[%s2 + $0x21c] sm:$0xf]
      %v1491 = vld [vmem:[%s2 + $0x220] sm:$0xf]
      %v1492 = vld [vmem:[%s2 + $0x224] sm:$0xf]
      %v1493 = vld [vmem:[%s2 + $0x228] sm:$0xf]
      %v1494 = vld [vmem:[%s2 + $0x22c] sm:$0xf]
      %v1495 = vld [vmem:[%s2 + $0x230] sm:$0xf]
      %v1496 = vld [vmem:[%s2 + $0x234] sm:$0xf]
      %v1497 = vld [vmem:[%s2 + $0x238] sm:$0xf]
      %v1498 = vld [vmem:[%s2 + $0x23c] sm:$0xf]
      %v1515 = vunpack.c.l.b16 %v1483
      %v1516 = vunpack.c.l.b16 %v1484
      %v1517 = vunpack.c.l.b16 %v1485
      %v1518 = vunpack.c.l.b16 %v1486
      %v1519 = vunpack.c.l.b16 %v1487
      %v1520 = vunpack.c.l.b16 %v1488
      %v1521 = vunpack.c.l.b16 %v1489
      %v1522 = vunpack.c.l.b16 %v1490
      %v1523 = vunpack.c.l.b16 %v1491
      %v1524 = vunpack.c.l.b16 %v1492
      %v1525 = vunpack.c.l.b16 %v1493
      %v1526 = vunpack.c.l.b16 %v1494
      %v1527 = vunpack.c.l.b16 %v1495
      %v1528 = vunpack.c.l.b16 %v1496
      %v1529 = vunpack.c.l.b16 %v1497
      %v1530 = vunpack.c.l.b16 %v1498
      %v1531 = vpack.c.b16 %v1516, %v1515
      %v1532 = vpack.c.b16 %v1518, %v1517
      %v1533 = vpack.c.b16 %v1520, %v1519
      %v1534 = vpack.c.b16 %v1522, %v1521
      %v1535 = vpack.c.b16 %v1524, %v1523
      %v1536 = vpack.c.b16 %v1526, %v1525
      %v1537 = vpack.c.b16 %v1528, %v1527
      %v1538 = vpack.c.b16 %v1530, %v1529
      %1547 = vmatpush.bf16.msra.mxu0 %v1538
      %1548 = vmatpush.bf16.msra.mxu0 %v1537
      %1549 = vmatpush.bf16.msra.mxu0 %v1536
      %1550 = vmatpush.bf16.msra.mxu0 %v1535
      %1551 = vmatpush.bf16.msra.mxu0 %v1534
      %1552 = vmatpush.bf16.msra.mxu0 %v1533
      %1553 = vmatpush.bf16.msra.mxu0 %v1532
      %1554 = vmatpush.bf16.msra.mxu0 %v1531
      %1555 = vmatmul.bf16.gmra.mxu0 %v1479
      %v1556 = vpop.f32.mrf.mxu0
      %v1557 = vadd.f32 0.0, %v1556
      %v1558 = vpop.f32.mrf.mxu0
      %v1559 = vadd.f32 0.0, %v1558
      %1560 = vmatmul.bf16.gmra.mxu0 %v1480
      %v1561 = vpop.f32.mrf.mxu0
      %v1562 = vadd.f32 0.0, %v1561
      %v1563 = vpop.f32.mrf.mxu0
      %v1564 = vadd.f32 0.0, %v1563
      %1565 = vmatmul.bf16.gmra.mxu0 %v1481
      %v1566 = vpop.f32.mrf.mxu0
      %v1567 = vadd.f32 0.0, %v1566
      %v1568 = vpop.f32.mrf.mxu0
      %v1569 = vadd.f32 0.0, %v1568
      %1570 = vmatmul.bf16.gmra.mxu0 %v1482
      %v1571 = vpop.f32.mrf.mxu0
      %v1572 = vadd.f32 0.0, %v1571
      %v1573 = vpop.f32.mrf.mxu0
      %v1574 = vadd.f32 0.0, %v1573
      %1575 = vdwg.mxu0
      %v1576 = vadd.f32 %v1463, %v1557
      %v1577 = vadd.f32 %v1464, %v1559
      %v1578 = vadd.f32 %v1465, %v1562
      %v1579 = vadd.f32 %v1466, %v1564
      %v1580 = vadd.f32 %v1467, %v1567
      %v1581 = vadd.f32 %v1468, %v1569
      %v1582 = vadd.f32 %v1469, %v1572
      %v1583 = vadd.f32 %v1470, %v1574
      %v1585 = vperm.slane %v516, 0
      %v1587 = vadd.f32 %v1576, %v1585
      %v1588 = vadd.f32 %v1577, %v1585
      %v1589 = vadd.f32 %v1578, %v1585
      %v1590 = vadd.f32 %v1579, %v1585
      %v1591 = vadd.f32 %v1580, %v1585
      %v1592 = vadd.f32 %v1581, %v1585
      %v1593 = vadd.f32 %v1582, %v1585
      %v1594 = vadd.f32 %v1583, %v1585
      %v1595 = vld [vmem:[%s4] sm:$0x1]
      %v1596 = vld [vmem:[%s5] sm:$0x1]
      %v1597 = vadd.f32 %v1587, %v1588
      %v1598 = vadd.f32 %v1597, %v1589
      %v1599 = vadd.f32 %v1598, %v1590
      %v1600 = vadd.f32 %v1599, %v1591
      %v1601 = vadd.f32 %v1600, %v1592
      %v1602 = vadd.f32 %v1601, %v1593
      %v1603 = vadd.f32 %v1602, %v1594
      %v1604 = vrot.slane %v1603, 4
      %v1605 = vadd.f32 %v1603, %v1604
      %v1606 = vrot.slane %v1605, 2
      %v1607 = vadd.f32 %v1605, %v1606
      %v1608 = vrot.slane %v1607, 1
      %v1609 = vadd.f32 %v1607, %v1608
      %v1610 = vrcp.pop 64.0
      %v1611 = vmul.f32 64.0, %v1610
      %v1612 = vsub.f32 1.0, %v1611
      %v1613 = vmul.f32 %v1610, %v1612
      %v1614 = vadd.f32 %v1610, %v1613
      %vm1615 = vweird.f32 %v1610
      %v1616 = vsel %vm1615, %v1610, %v1614
      %v1617 = vmul.f32 %v1609, %v1616
      %v1618 = vsub.f32 %v1587, %v1617
      %v1619 = vsub.f32 %v1588, %v1617
      %v1620 = vsub.f32 %v1589, %v1617
      %v1621 = vsub.f32 %v1590, %v1617
      %v1622 = vsub.f32 %v1591, %v1617
      %v1623 = vsub.f32 %v1592, %v1617
      %v1624 = vsub.f32 %v1593, %v1617
      %v1625 = vsub.f32 %v1594, %v1617
      %v1626 = vmul.f32 %v1618, %v1618
      %v1627 = vmul.f32 %v1619, %v1619
      %v1628 = vmul.f32 %v1620, %v1620
      %v1629 = vmul.f32 %v1621, %v1621
      %v1630 = vmul.f32 %v1622, %v1622
      %v1631 = vmul.f32 %v1623, %v1623
      %v1632 = vmul.f32 %v1624, %v1624
      %v1633 = vmul.f32 %v1625, %v1625
      %v1634 = vadd.f32 %v1626, %v1627
      %v1635 = vadd.f32 %v1634, %v1628
      %v1636 = vadd.f32 %v1635, %v1629
      %v1637 = vadd.f32 %v1636, %v1630
      %v1638 = vadd.f32 %v1637, %v1631
      %v1639 = vadd.f32 %v1638, %v1632
      %v1640 = vadd.f32 %v1639, %v1633
      %v1641 = vrot.slane %v1640, 4
      %v1642 = vadd.f32 %v1640, %v1641
      %v1643 = vrot.slane %v1642, 2
      %v1644 = vadd.f32 %v1642, %v1643
      %v1645 = vrot.slane %v1644, 1
      %v1646 = vadd.f32 %v1644, %v1645
      %v1647 = vmul.f32 %v1646, %v1616
      %v1648 = vadd.f32 %v1647, 1e-05
      %v1649 = vrsqrt.pop %v1648
      %v1650 = vmul.f32 %v1649, %v1648
      %v1651 = vmul.f32 %v1650, %v1649
      %v1652 = vmul.f32 0.5, %v1651
      %v1653 = vsub.f32 1.5, %v1652
      %v1654 = vmul.f32 %v1649, %v1653
      %vm1655 = vweird.f32 %v1648
      %vm1656 = vweird.f32 %v1649
      %vm1657 = vmor %vm1655, %vm1656
      %v1658 = vsel %vm1657, %v1649, %v1654
      %v1659 = vmul.f32 %v1618, %v1658
      %v1660 = vmul.f32 %v1619, %v1658
      %v1661 = vmul.f32 %v1620, %v1658
      %v1662 = vmul.f32 %v1621, %v1658
      %v1663 = vmul.f32 %v1622, %v1658
      %v1664 = vmul.f32 %v1623, %v1658
      %v1665 = vmul.f32 %v1624, %v1658
      %v1666 = vmul.f32 %v1625, %v1658
      %v1668 = vperm.slane %v1595, 0
      %v1670 = vmul.f32 %v1659, %v1668
      %v1671 = vmul.f32 %v1660, %v1668
      %v1672 = vmul.f32 %v1661, %v1668
      %v1673 = vmul.f32 %v1662, %v1668
      %v1674 = vmul.f32 %v1663, %v1668
      %v1675 = vmul.f32 %v1664, %v1668
      %v1676 = vmul.f32 %v1665, %v1668
      %v1677 = vmul.f32 %v1666, %v1668
      %v1679 = vperm.slane %v1596, 0
      %v1681 = vadd.f32 %v1670, %v1679
      %v1682 = vadd.f32 %v1671, %v1679
      %v1683 = vadd.f32 %v1672, %v1679
      %v1684 = vadd.f32 %v1673, %v1679
      %v1685 = vadd.f32 %v1674, %v1679
      %v1686 = vadd.f32 %v1675, %v1679
      %v1687 = vadd.f32 %v1676, %v1679
      %v1688 = vadd.f32 %v1677, %v1679
      %v1689 = vmax.f32 %v1681, 0.0
      %v1690 = vmax.f32 %v1682, 0.0
      %v1691 = vmax.f32 %v1683, 0.0
      %v1692 = vmax.f32 %v1684, 0.0
      %v1693 = vmax.f32 %v1685, 0.0
      %v1694 = vmax.f32 %v1686, 0.0
      %v1695 = vmax.f32 %v1687, 0.0
      %v1696 = vmax.f32 %v1688, 0.0
      %v1697 = vld [vmem:[%s7] sm:$0x1]
      %1698 = vst [vmem:[%s517] sm:$0xff] %v1689
      %1699 = vst [vmem:[%s517 + $0x8] sm:$0xff] %v1690
      %1700 = vst [vmem:[%s517 + $0x10] sm:$0xff] %v1691
      %1701 = vst [vmem:[%s517 + $0x18] sm:$0xff] %v1692
      %1702 = vst [vmem:[%s517 + $0x20] sm:$0xff] %v1693
      %1703 = vst [vmem:[%s517 + $0x28] sm:$0xff] %v1694
      %1704 = vst [vmem:[%s517 + $0x30] sm:$0xff] %v1695
      %1705 = vst [vmem:[%s517 + $0x38] sm:$0xff] %v1696
      %1706 = vst [vmem:[%s526 + $0x1] sm:$0x7f] %v1689
      %1707 = vst [vmem:[%s526 + $0x9] sm:$0x7f] %v1690
      %1708 = vst [vmem:[%s526 + $0x11] sm:$0x7f] %v1691
      %1709 = vst [vmem:[%s526 + $0x19] sm:$0x7f] %v1692
      %1710 = vst [vmem:[%s526 + $0x21] sm:$0x7f] %v1693
      %1711 = vst [vmem:[%s526 + $0x29] sm:$0x7f] %v1694
      %1712 = vst [vmem:[%s526 + $0x31] sm:$0x7f] %v1695
      %1713 = vst [vmem:[%s526 + $0x39] sm:$0x7f] %v1696
      %1714 = vst [vmem:[%s526 - $0x1] sm:$0x2] %v1689
      %1715 = vst [vmem:[%s526 + $0x7] sm:$0x2] %v1690
      %1716 = vst [vmem:[%s526 + $0xf] sm:$0x2] %v1691
      %1717 = vst [vmem:[%s526 + $0x17] sm:$0x2] %v1692
      %1718 = vst [vmem:[%s526 + $0x1f] sm:$0x2] %v1693
      %1719 = vst [vmem:[%s526 + $0x27] sm:$0x2] %v1694
      %1720 = vst [vmem:[%s526 + $0x2f] sm:$0x2] %v1695
      %1721 = vst [vmem:[%s526 + $0x37] sm:$0x2] %v1696
      %1722 = vst [vmem:[%s543 - $0x1] sm:$0xfe] %v1689
      %1723 = vst [vmem:[%s543 + $0x7] sm:$0xfe] %v1690
      %1724 = vst [vmem:[%s543 + $0xf] sm:$0xfe] %v1691
      %1725 = vst [vmem:[%s543 + $0x17] sm:$0xfe] %v1692
      %1726 = vst [vmem:[%s543 + $0x1f] sm:$0xfe] %v1693
      %1727 = vst [vmem:[%s543 + $0x27] sm:$0xfe] %v1694
      %1728 = vst [vmem:[%s543 + $0x2f] sm:$0xfe] %v1695
      %1729 = vst [vmem:[%s543 + $0x37] sm:$0xfe] %v1696
      %1730 = vst [vmem:[%s543 + $0x1] sm:$0x40] %v1689
      %1731 = vst [vmem:[%s543 + $0x9] sm:$0x40] %v1690
      %1732 = vst [vmem:[%s543 + $0x11] sm:$0x40] %v1691
      %1733 = vst [vmem:[%s543 + $0x19] sm:$0x40] %v1692
      %1734 = vst [vmem:[%s543 + $0x21] sm:$0x40] %v1693
      %1735 = vst [vmem:[%s543 + $0x29] sm:$0x40] %v1694
      %1736 = vst [vmem:[%s543 + $0x31] sm:$0x40] %v1695
      %1737 = vst [vmem:[%s543 + $0x39] sm:$0x40] %v1696
      %v1738 = vld [vmem:[%s560] sm:$0xff]
      %1739 = vst [vmem:[#allocation2] sm:$0xff] %v1738
      %v1740 = vld [vmem:[%s563] sm:$0xff]
      %1741 = vst [vmem:[%s565] sm:$0xff] %v1740
      %v1742 = vld [vmem:[%s567] sm:$0xff]
      %1743 = vst [vmem:[%s569] sm:$0xff] %v1742
      %v1744 = vld [vmem:[%s571] sm:$0xff]
      %1745 = vst [vmem:[%s573] sm:$0xff] %v1744
      %v1746 = vld [vmem:[%s575] sm:$0xff]
      %1747 = vst [vmem:[%s577] sm:$0xff] %v1746
      %v1748 = vld [vmem:[%s579] sm:$0xff]
      %1749 = vst [vmem:[%s581] sm:$0xff] %v1748
      %v1750 = vld [vmem:[#allocation2] sm:$0xff]
      %v1751 = vld [vmem:[#allocation2 + $0x8] sm:$0xff]
      %v1752 = vld [vmem:[#allocation2 + $0x10] sm:$0xff]
      %v1753 = vld [vmem:[#allocation2 + $0x18] sm:$0xff]
      %v1754 = vld [vmem:[#allocation2 + $0x20] sm:$0xff]
      %v1755 = vld [vmem:[#allocation2 + $0x28] sm:$0xff]
      %v1756 = vld [vmem:[#allocation2 + $0x30] sm:$0xff]
      %v1757 = vld [vmem:[#allocation2 + $0x38] sm:$0xff]
      %v1758 = vpack.c.bf16 %v1751, %v1750
      %v1759 = vpack.c.bf16 %v1753, %v1752
      %v1760 = vpack.c.bf16 %v1755, %v1754
      %v1761 = vpack.c.bf16 %v1757, %v1756
      %v1762 = vld [vmem:[%s6] sm:$0xf]
      %v1763 = vld [vmem:[%s6 + $0x4] sm:$0xf]
      %v1764 = vld [vmem:[%s6 + $0x8] sm:$0xf]
      %v1765 = vld [vmem:[%s6 + $0xc] sm:$0xf]
      %v1766 = vld [vmem:[%s6 + $0x10] sm:$0xf]
      %v1767 = vld [vmem:[%s6 + $0x14] sm:$0xf]
      %v1768 = vld [vmem:[%s6 + $0x18] sm:$0xf]
      %v1769 = vld [vmem:[%s6 + $0x1c] sm:$0xf]
      %v1770 = vld [vmem:[%s6 + $0x20] sm:$0xf]
      %v1771 = vld [vmem:[%s6 + $0x24] sm:$0xf]
      %v1772 = vld [vmem:[%s6 + $0x28] sm:$0xf]
      %v1773 = vld [vmem:[%s6 + $0x2c] sm:$0xf]
      %v1774 = vld [vmem:[%s6 + $0x30] sm:$0xf]
      %v1775 = vld [vmem:[%s6 + $0x34] sm:$0xf]
      %v1776 = vld [vmem:[%s6 + $0x38] sm:$0xf]
      %v1777 = vld [vmem:[%s6 + $0x3c] sm:$0xf]
      %v1778 = vld [vmem:[%s569] sm:$0xff]
      %v1779 = vld [vmem:[%s569 + $0x8] sm:$0xff]
      %v1780 = vld [vmem:[%s569 + $0x10] sm:$0xff]
      %v1781 = vld [vmem:[%s569 + $0x18] sm:$0xff]
      %v1782 = vld [vmem:[%s569 + $0x20] sm:$0xff]
      %v1783 = vld [vmem:[%s569 + $0x28] sm:$0xff]
      %v1784 = vld [vmem:[%s569 + $0x30] sm:$0xff]
      %v1785 = vld [vmem:[%s569 + $0x38] sm:$0xff]
      %v1786 = vpack.c.bf16 %v1779, %v1778
      %v1787 = vpack.c.bf16 %v1781, %v1780
      %v1788 = vpack.c.bf16 %v1783, %v1782
      %v1789 = vpack.c.bf16 %v1785, %v1784
      %v1790 = vld [vmem:[%s6 + $0x40] sm:$0xf]
      %v1791 = vld [vmem:[%s6 + $0x44] sm:$0xf]
      %v1792 = vld [vmem:[%s6 + $0x48] sm:$0xf]
      %v1793 = vld [vmem:[%s6 + $0x4c] sm:$0xf]
      %v1794 = vld [vmem:[%s6 + $0x50] sm:$0xf]
      %v1795 = vld [vmem:[%s6 + $0x54] sm:$0xf]
      %v1796 = vld [vmem:[%s6 + $0x58] sm:$0xf]
      %v1797 = vld [vmem:[%s6 + $0x5c] sm:$0xf]
      %v1798 = vld [vmem:[%s6 + $0x60] sm:$0xf]
      %v1799 = vld [vmem:[%s6 + $0x64] sm:$0xf]
      %v1800 = vld [vmem:[%s6 + $0x68] sm:$0xf]
      %v1801 = vld [vmem:[%s6 + $0x6c] sm:$0xf]
      %v1802 = vld [vmem:[%s6 + $0x70] sm:$0xf]
      %v1803 = vld [vmem:[%s6 + $0x74] sm:$0xf]
      %v1804 = vld [vmem:[%s6 + $0x78] sm:$0xf]
      %v1805 = vld [vmem:[%s6 + $0x7c] sm:$0xf]
      %v1822 = vunpack.c.l.b16 %v1790
      %v1823 = vunpack.c.l.b16 %v1791
      %v1824 = vunpack.c.l.b16 %v1792
      %v1825 = vunpack.c.l.b16 %v1793
      %v1826 = vunpack.c.l.b16 %v1794
      %v1827 = vunpack.c.l.b16 %v1795
      %v1828 = vunpack.c.l.b16 %v1796
      %v1829 = vunpack.c.l.b16 %v1797
      %v1830 = vunpack.c.l.b16 %v1798
      %v1831 = vunpack.c.l.b16 %v1799
      %v1832 = vunpack.c.l.b16 %v1800
      %v1833 = vunpack.c.l.b16 %v1801
      %v1834 = vunpack.c.l.b16 %v1802
      %v1835 = vunpack.c.l.b16 %v1803
      %v1836 = vunpack.c.l.b16 %v1804
      %v1837 = vunpack.c.l.b16 %v1805
      %v1838 = vpack.c.b16 %v1823, %v1822
      %v1839 = vpack.c.b16 %v1825, %v1824
      %v1840 = vpack.c.b16 %v1827, %v1826
      %v1841 = vpack.c.b16 %v1829, %v1828
      %v1842 = vpack.c.b16 %v1831, %v1830
      %v1843 = vpack.c.b16 %v1833, %v1832
      %v1844 = vpack.c.b16 %v1835, %v1834
      %v1845 = vpack.c.b16 %v1837, %v1836
      %1854 = vmatpush.bf16.msra.mxu0 %v1845
      %1855 = vmatpush.bf16.msra.mxu0 %v1844
      %1856 = vmatpush.bf16.msra.mxu0 %v1843
      %1857 = vmatpush.bf16.msra.mxu0 %v1842
      %1858 = vmatpush.bf16.msra.mxu0 %v1841
      %1859 = vmatpush.bf16.msra.mxu0 %v1840
      %1860 = vmatpush.bf16.msra.mxu0 %v1839
      %1861 = vmatpush.bf16.msra.mxu0 %v1838
      %1862 = vmatmul.bf16.gmra.mxu0 %v1786
      %v1863 = vpop.f32.mrf.mxu0
      %v1864 = vadd.f32 0.0, %v1863
      %v1865 = vpop.f32.mrf.mxu0
      %v1866 = vadd.f32 0.0, %v1865
      %1867 = vmatmul.bf16.gmra.mxu0 %v1787
      %v1868 = vpop.f32.mrf.mxu0
      %v1869 = vadd.f32 0.0, %v1868
      %v1870 = vpop.f32.mrf.mxu0
      %v1871 = vadd.f32 0.0, %v1870
      %1872 = vmatmul.bf16.gmra.mxu0 %v1788
      %v1873 = vpop.f32.mrf.mxu0
      %v1874 = vadd.f32 0.0, %v1873
      %v1875 = vpop.f32.mrf.mxu0
      %v1876 = vadd.f32 0.0, %v1875
      %1877 = vmatmul.bf16.gmra.mxu0 %v1789
      %v1878 = vpop.f32.mrf.mxu0
      %v1879 = vadd.f32 0.0, %v1878
      %v1880 = vpop.f32.mrf.mxu0
      %v1881 = vadd.f32 0.0, %v1880
      %1882 = vdwg.mxu0
      %v1899 = vunpack.c.l.b16 %v1762
      %v1900 = vunpack.c.l.b16 %v1763
      %v1901 = vunpack.c.l.b16 %v1764
      %v1902 = vunpack.c.l.b16 %v1765
      %v1903 = vunpack.c.l.b16 %v1766
      %v1904 = vunpack.c.l.b16 %v1767
      %v1905 = vunpack.c.l.b16 %v1768
      %v1906 = vunpack.c.l.b16 %v1769
      %v1907 = vunpack.c.l.b16 %v1770
      %v1908 = vunpack.c.l.b16 %v1771
      %v1909 = vunpack.c.l.b16 %v1772
      %v1910 = vunpack.c.l.b16 %v1773
      %v1911 = vunpack.c.l.b16 %v1774
      %v1912 = vunpack.c.l.b16 %v1775
      %v1913 = vunpack.c.l.b16 %v1776
      %v1914 = vunpack.c.l.b16 %v1777
      %v1915 = vpack.c.b16 %v1900, %v1899
      %v1916 = vpack.c.b16 %v1902, %v1901
      %v1917 = vpack.c.b16 %v1904, %v1903
      %v1918 = vpack.c.b16 %v1906, %v1905
      %v1919 = vpack.c.b16 %v1908, %v1907
      %v1920 = vpack.c.b16 %v1910, %v1909
      %v1921 = vpack.c.b16 %v1912, %v1911
      %v1922 = vpack.c.b16 %v1914, %v1913
      %1931 = vmatpush.bf16.msra.mxu0 %v1922
      %1932 = vmatpush.bf16.msra.mxu0 %v1921
      %1933 = vmatpush.bf16.msra.mxu0 %v1920
      %1934 = vmatpush.bf16.msra.mxu0 %v1919
      %1935 = vmatpush.bf16.msra.mxu0 %v1918
      %1936 = vmatpush.bf16.msra.mxu0 %v1917
      %1937 = vmatpush.bf16.msra.mxu0 %v1916
      %1938 = vmatpush.bf16.msra.mxu0 %v1915
      %1939 = vmatmul.bf16.gmra.mxu0 %v1758
      %v1940 = vpop.f32.mrf.mxu0
      %v1941 = vadd.f32 %v1864, %v1940
      %v1942 = vpop.f32.mrf.mxu0
      %v1943 = vadd.f32 %v1866, %v1942
      %1944 = vmatmul.bf16.gmra.mxu0 %v1759
      %v1945 = vpop.f32.mrf.mxu0
      %v1946 = vadd.f32 %v1869, %v1945
      %v1947 = vpop.f32.mrf.mxu0
      %v1948 = vadd.f32 %v1871, %v1947
      %1949 = vmatmul.bf16.gmra.mxu0 %v1760
      %v1950 = vpop.f32.mrf.mxu0
      %v1951 = vadd.f32 %v1874, %v1950
      %v1952 = vpop.f32.mrf.mxu0
      %v1953 = vadd.f32 %v1876, %v1952
      %1954 = vmatmul.bf16.gmra.mxu0 %v1761
      %v1955 = vpop.f32.mrf.mxu0
      %v1956 = vadd.f32 %v1879, %v1955
      %v1957 = vpop.f32.mrf.mxu0
      %v1958 = vadd.f32 %v1881, %v1957
      %1959 = vdwg.mxu0
      %v1960 = vld [vmem:[%s577] sm:$0xff]
      %v1961 = vld [vmem:[%s577 + $0x8] sm:$0xff]
      %v1962 = vld [vmem:[%s577 + $0x10] sm:$0xff]
      %v1963 = vld [vmem:[%s577 + $0x18] sm:$0xff]
      %v1964 = vld [vmem:[%s577 + $0x20] sm:$0xff]
      %v1965 = vld [vmem:[%s577 + $0x28] sm:$0xff]
      %v1966 = vld [vmem:[%s577 + $0x30] sm:$0xff]
      %v1967 = vld [vmem:[%s577 + $0x38] sm:$0xff]
      %v1968 = vpack.c.bf16 %v1961, %v1960
      %v1969 = vpack.c.bf16 %v1963, %v1962
      %v1970 = vpack.c.bf16 %v1965, %v1964
      %v1971 = vpack.c.bf16 %v1967, %v1966
      %v1972 = vld [vmem:[%s6 + $0x80] sm:$0xf]
      %v1973 = vld [vmem:[%s6 + $0x84] sm:$0xf]
      %v1974 = vld [vmem:[%s6 + $0x88] sm:$0xf]
      %v1975 = vld [vmem:[%s6 + $0x8c] sm:$0xf]
      %v1976 = vld [vmem:[%s6 + $0x90] sm:$0xf]
      %v1977 = vld [vmem:[%s6 + $0x94] sm:$0xf]
      %v1978 = vld [vmem:[%s6 + $0x98] sm:$0xf]
      %v1979 = vld [vmem:[%s6 + $0x9c] sm:$0xf]
      %v1980 = vld [vmem:[%s6 + $0xa0] sm:$0xf]
      %v1981 = vld [vmem:[%s6 + $0xa4] sm:$0xf]
      %v1982 = vld [vmem:[%s6 + $0xa8] sm:$0xf]
      %v1983 = vld [vmem:[%s6 + $0xac] sm:$0xf]
      %v1984 = vld [vmem:[%s6 + $0xb0] sm:$0xf]
      %v1985 = vld [vmem:[%s6 + $0xb4] sm:$0xf]
      %v1986 = vld [vmem:[%s6 + $0xb8] sm:$0xf]
      %v1987 = vld [vmem:[%s6 + $0xbc] sm:$0xf]
      %v2004 = vunpack.c.l.b16 %v1972
      %v2005 = vunpack.c.l.b16 %v1973
      %v2006 = vunpack.c.l.b16 %v1974
      %v2007 = vunpack.c.l.b16 %v1975
      %v2008 = vunpack.c.l.b16 %v1976
      %v2009 = vunpack.c.l.b16 %v1977
      %v2010 = vunpack.c.l.b16 %v1978
      %v2011 = vunpack.c.l.b16 %v1979
      %v2012 = vunpack.c.l.b16 %v1980
      %v2013 = vunpack.c.l.b16 %v1981
      %v2014 = vunpack.c.l.b16 %v1982
      %v2015 = vunpack.c.l.b16 %v1983
      %v2016 = vunpack.c.l.b16 %v1984
      %v2017 = vunpack.c.l.b16 %v1985
      %v2018 = vunpack.c.l.b16 %v1986
      %v2019 = vunpack.c.l.b16 %v1987
      %v2020 = vpack.c.b16 %v2005, %v2004
      %v2021 = vpack.c.b16 %v2007, %v2006
      %v2022 = vpack.c.b16 %v2009, %v2008
      %v2023 = vpack.c.b16 %v2011, %v2010
      %v2024 = vpack.c.b16 %v2013, %v2012
      %v2025 = vpack.c.b16 %v2015, %v2014
      %v2026 = vpack.c.b16 %v2017, %v2016
      %v2027 = vpack.c.b16 %v2019, %v2018
      %2036 = vmatpush.bf16.msra.mxu0 %v2027
      %2037 = vmatpush.bf16.msra.mxu0 %v2026
      %2038 = vmatpush.bf16.msra.mxu0 %v2025
      %2039 = vmatpush.bf16.msra.mxu0 %v2024
      %2040 = vmatpush.bf16.msra.mxu0 %v2023
      %2041 = vmatpush.bf16.msra.mxu0 %v2022
      %2042 = vmatpush.bf16.msra.mxu0 %v2021
      %2043 = vmatpush.bf16.msra.mxu0 %v2020
      %2044 = vmatmul.bf16.gmra.mxu0 %v1968
      %v2045 = vpop.f32.mrf.mxu0
      %v2046 = vadd.f32 0.0, %v2045
      %v2047 = vpop.f32.mrf.mxu0
      %v2048 = vadd.f32 0.0, %v2047
      %2049 = vmatmul.bf16.gmra.mxu0 %v1969
      %v2050 = vpop.f32.mrf.mxu0
      %v2051 = vadd.f32 0.0, %v2050
      %v2052 = vpop.f32.mrf.mxu0
      %v2053 = vadd.f32 0.0, %v2052
      %2054 = vmatmul.bf16.gmra.mxu0 %v1970
      %v2055 = vpop.f32.mrf.mxu0
      %v2056 = vadd.f32 0.0, %v2055
      %v2057 = vpop.f32.mrf.mxu0
      %v2058 = vadd.f32 0.0, %v2057
      %2059 = vmatmul.bf16.gmra.mxu0 %v1971
      %v2060 = vpop.f32.mrf.mxu0
      %v2061 = vadd.f32 0.0, %v2060
      %v2062 = vpop.f32.mrf.mxu0
      %v2063 = vadd.f32 0.0, %v2062
      %2064 = vdwg.mxu0
      %v2065 = vadd.f32 %v1941, %v2046
      %v2066 = vadd.f32 %v1943, %v2048
      %v2067 = vadd.f32 %v1946, %v2051
      %v2068 = vadd.f32 %v1948, %v2053
      %v2069 = vadd.f32 %v1951, %v2056
      %v2070 = vadd.f32 %v1953, %v2058
      %v2071 = vadd.f32 %v1956, %v2061
      %v2072 = vadd.f32 %v1958, %v2063
      %v2073 = vld [vmem:[%s526] sm:$0xff]
      %v2074 = vld [vmem:[%s526 + $0x8] sm:$0xff]
      %v2075 = vld [vmem:[%s526 + $0x10] sm:$0xff]
      %v2076 = vld [vmem:[%s526 + $0x18] sm:$0xff]
      %v2077 = vld [vmem:[%s526 + $0x20] sm:$0xff]
      %v2078 = vld [vmem:[%s526 + $0x28] sm:$0xff]
      %v2079 = vld [vmem:[%s526 + $0x30] sm:$0xff]
      %v2080 = vld [vmem:[%s526 + $0x38] sm:$0xff]
      %v2081 = vpack.c.bf16 %v2074, %v2073
      %v2082 = vpack.c.bf16 %v2076, %v2075
      %v2083 = vpack.c.bf16 %v2078, %v2077
      %v2084 = vpack.c.bf16 %v2080, %v2079
      %v2085 = vld [vmem:[%s6 + $0xc0] sm:$0xf]
      %v2086 = vld [vmem:[%s6 + $0xc4] sm:$0xf]
      %v2087 = vld [vmem:[%s6 + $0xc8] sm:$0xf]
      %v2088 = vld [vmem:[%s6 + $0xcc] sm:$0xf]
      %v2089 = vld [vmem:[%s6 + $0xd0] sm:$0xf]
      %v2090 = vld [vmem:[%s6 + $0xd4] sm:$0xf]
      %v2091 = vld [vmem:[%s6 + $0xd8] sm:$0xf]
      %v2092 = vld [vmem:[%s6 + $0xdc] sm:$0xf]
      %v2093 = vld [vmem:[%s6 + $0xe0] sm:$0xf]
      %v2094 = vld [vmem:[%s6 + $0xe4] sm:$0xf]
      %v2095 = vld [vmem:[%s6 + $0xe8] sm:$0xf]
      %v2096 = vld [vmem:[%s6 + $0xec] sm:$0xf]
      %v2097 = vld [vmem:[%s6 + $0xf0] sm:$0xf]
      %v2098 = vld [vmem:[%s6 + $0xf4] sm:$0xf]
      %v2099 = vld [vmem:[%s6 + $0xf8] sm:$0xf]
      %v2100 = vld [vmem:[%s6 + $0xfc] sm:$0xf]
      %v2117 = vunpack.c.l.b16 %v2085
      %v2118 = vunpack.c.l.b16 %v2086
      %v2119 = vunpack.c.l.b16 %v2087
      %v2120 = vunpack.c.l.b16 %v2088
      %v2121 = vunpack.c.l.b16 %v2089
      %v2122 = vunpack.c.l.b16 %v2090
      %v2123 = vunpack.c.l.b16 %v2091
      %v2124 = vunpack.c.l.b16 %v2092
      %v2125 = vunpack.c.l.b16 %v2093
      %v2126 = vunpack.c.l.b16 %v2094
      %v2127 = vunpack.c.l.b16 %v2095
      %v2128 = vunpack.c.l.b16 %v2096
      %v2129 = vunpack.c.l.b16 %v2097
      %v2130 = vunpack.c.l.b16 %v2098
      %v2131 = vunpack.c.l.b16 %v2099
      %v2132 = vunpack.c.l.b16 %v2100
      %v2133 = vpack.c.b16 %v2118, %v2117
      %v2134 = vpack.c.b16 %v2120, %v2119
      %v2135 = vpack.c.b16 %v2122, %v2121
      %v2136 = vpack.c.b16 %v2124, %v2123
      %v2137 = vpack.c.b16 %v2126, %v2125
      %v2138 = vpack.c.b16 %v2128, %v2127
      %v2139 = vpack.c.b16 %v2130, %v2129
      %v2140 = vpack.c.b16 %v2132, %v2131
      %2149 = vmatpush.bf16.msra.mxu0 %v2140
      %2150 = vmatpush.bf16.msra.mxu0 %v2139
      %2151 = vmatpush.bf16.msra.mxu0 %v2138
      %2152 = vmatpush.bf16.msra.mxu0 %v2137
      %2153 = vmatpush.bf16.msra.mxu0 %v2136
      %2154 = vmatpush.bf16.msra.mxu0 %v2135
      %2155 = vmatpush.bf16.msra.mxu0 %v2134
      %2156 = vmatpush.bf16.msra.mxu0 %v2133
      %2157 = vmatmul.bf16.gmra.mxu0 %v2081
      %v2158 = vpop.f32.mrf.mxu0
      %v2159 = vadd.f32 0.0, %v2158
      %v2160 = vpop.f32.mrf.mxu0
      %v2161 = vadd.f32 0.0, %v2160
      %2162 = vmatmul.bf16.gmra.mxu0 %v2082
      %v2163 = vpop.f32.mrf.mxu0
      %v2164 = vadd.f32 0.0, %v2163
      %v2165 = vpop.f32.mrf.mxu0
      %v2166 = vadd.f32 0.0, %v2165
      %2167 = vmatmul.bf16.gmra.mxu0 %v2083
      %v2168 = vpop.f32.mrf.mxu0
      %v2169 = vadd.f32 0.0, %v2168
      %v2170 = vpop.f32.mrf.mxu0
      %v2171 = vadd.f32 0.0, %v2170
      %2172 = vmatmul.bf16.gmra.mxu0 %v2084
      %v2173 = vpop.f32.mrf.mxu0
      %v2174 = vadd.f32 0.0, %v2173
      %v2175 = vpop.f32.mrf.mxu0
      %v2176 = vadd.f32 0.0, %v2175
      %2177 = vdwg.mxu0
      %v2178 = vadd.f32 %v2065, %v2159
      %v2179 = vadd.f32 %v2066, %v2161
      %v2180 = vadd.f32 %v2067, %v2164
      %v2181 = vadd.f32 %v2068, %v2166
      %v2182 = vadd.f32 %v2069, %v2169
      %v2183 = vadd.f32 %v2070, %v2171
      %v2184 = vadd.f32 %v2071, %v2174
      %v2185 = vadd.f32 %v2072, %v2176
      %v2186 = vld [vmem:[%s517] sm:$0xff]
      %v2187 = vld [vmem:[%s517 + $0x8] sm:$0xff]
      %v2188 = vld [vmem:[%s517 + $0x10] sm:$0xff]
      %v2189 = vld [vmem:[%s517 + $0x18] sm:$0xff]
      %v2190 = vld [vmem:[%s517 + $0x20] sm:$0xff]
      %v2191 = vld [vmem:[%s517 + $0x28] sm:$0xff]
      %v2192 = vld [vmem:[%s517 + $0x30] sm:$0xff]
      %v2193 = vld [vmem:[%s517 + $0x38] sm:$0xff]
      %v2194 = vpack.c.bf16 %v2187, %v2186
      %v2195 = vpack.c.bf16 %v2189, %v2188
      %v2196 = vpack.c.bf16 %v2191, %v2190
      %v2197 = vpack.c.bf16 %v2193, %v2192
      %v2198 = vld [vmem:[%s6 + $0x100] sm:$0xf]
      %v2199 = vld [vmem:[%s6 + $0x104] sm:$0xf]
      %v2200 = vld [vmem:[%s6 + $0x108] sm:$0xf]
      %v2201 = vld [vmem:[%s6 + $0x10c] sm:$0xf]
      %v2202 = vld [vmem:[%s6 + $0x110] sm:$0xf]
      %v2203 = vld [vmem:[%s6 + $0x114] sm:$0xf]
      %v2204 = vld [vmem:[%s6 + $0x118] sm:$0xf]
      %v2205 = vld [vmem:[%s6 + $0x11c] sm:$0xf]
      %v2206 = vld [vmem:[%s6 + $0x120] sm:$0xf]
      %v2207 = vld [vmem:[%s6 + $0x124] sm:$0xf]
      %v2208 = vld [vmem:[%s6 + $0x128] sm:$0xf]
      %v2209 = vld [vmem:[%s6 + $0x12c] sm:$0xf]
      %v2210 = vld [vmem:[%s6 + $0x130] sm:$0xf]
      %v2211 = vld [vmem:[%s6 + $0x134] sm:$0xf]
      %v2212 = vld [vmem:[%s6 + $0x138] sm:$0xf]
      %v2213 = vld [vmem:[%s6 + $0x13c] sm:$0xf]
      %v2230 = vunpack.c.l.b16 %v2198
      %v2231 = vunpack.c.l.b16 %v2199
      %v2232 = vunpack.c.l.b16 %v2200
      %v2233 = vunpack.c.l.b16 %v2201
      %v2234 = vunpack.c.l.b16 %v2202
      %v2235 = vunpack.c.l.b16 %v2203
      %v2236 = vunpack.c.l.b16 %v2204
      %v2237 = vunpack.c.l.b16 %v2205
      %v2238 = vunpack.c.l.b16 %v2206
      %v2239 = vunpack.c.l.b16 %v2207
      %v2240 = vunpack.c.l.b16 %v2208
      %v2241 = vunpack.c.l.b16 %v2209
      %v2242 = vunpack.c.l.b16 %v2210
      %v2243 = vunpack.c.l.b16 %v2211
      %v2244 = vunpack.c.l.b16 %v2212
      %v2245 = vunpack.c.l.b16 %v2213
      %v2246 = vpack.c.b16 %v2231, %v2230
      %v2247 = vpack.c.b16 %v2233, %v2232
      %v2248 = vpack.c.b16 %v2235, %v2234
      %v2249 = vpack.c.b16 %v2237, %v2236
      %v2250 = vpack.c.b16 %v2239, %v2238
      %v2251 = vpack.c.b16 %v2241, %v2240
      %v2252 = vpack.c.b16 %v2243, %v2242
      %v2253 = vpack.c.b16 %v2245, %v2244
      %2262 = vmatpush.bf16.msra.mxu0 %v2253
      %2263 = vmatpush.bf16.msra.mxu0 %v2252
      %2264 = vmatpush.bf16.msra.mxu0 %v2251
      %2265 = vmatpush.bf16.msra.mxu0 %v2250
      %2266 = vmatpush.bf16.msra.mxu0 %v2249
      %2267 = vmatpush.bf16.msra.mxu0 %v2248
      %2268 = vmatpush.bf16.msra.mxu0 %v2247
      %2269 = vmatpush.bf16.msra.mxu0 %v2246
      %2270 = vmatmul.bf16.gmra.mxu0 %v2194
      %v2271 = vpop.f32.mrf.mxu0
      %v2272 = vadd.f32 0.0, %v2271
      %v2273 = vpop.f32.mrf.mxu0
      %v2274 = vadd.f32 0.0, %v2273
      %2275 = vmatmul.bf16.gmra.mxu0 %v2195
      %v2276 = vpop.f32.mrf.mxu0
      %v2277 = vadd.f32 0.0, %v2276
      %v2278 = vpop.f32.mrf.mxu0
      %v2279 = vadd.f32 0.0, %v2278
      %2280 = vmatmul.bf16.gmra.mxu0 %v2196
      %v2281 = vpop.f32.mrf.mxu0
      %v2282 = vadd.f32 0.0, %v2281
      %v2283 = vpop.f32.mrf.mxu0
      %v2284 = vadd.f32 0.0, %v2283
      %2285 = vmatmul.bf16.gmra.mxu0 %v2197
      %v2286 = vpop.f32.mrf.mxu0
      %v2287 = vadd.f32 0.0, %v2286
      %v2288 = vpop.f32.mrf.mxu0
      %v2289 = vadd.f32 0.0, %v2288
      %2290 = vdwg.mxu0
      %v2291 = vadd.f32 %v2178, %v2272
      %v2292 = vadd.f32 %v2179, %v2274
      %v2293 = vadd.f32 %v2180, %v2277
      %v2294 = vadd.f32 %v2181, %v2279
      %v2295 = vadd.f32 %v2182, %v2282
      %v2296 = vadd.f32 %v2183, %v2284
      %v2297 = vadd.f32 %v2184, %v2287
      %v2298 = vadd.f32 %v2185, %v2289
      %v2299 = vld [vmem:[%s543] sm:$0xff]
      %v2300 = vld [vmem:[%s543 + $0x8] sm:$0xff]
      %v2301 = vld [vmem:[%s543 + $0x10] sm:$0xff]
      %v2302 = vld [vmem:[%s543 + $0x18] sm:$0xff]
      %v2303 = vld [vmem:[%s543 + $0x20] sm:$0xff]
      %v2304 = vld [vmem:[%s543 + $0x28] sm:$0xff]
      %v2305 = vld [vmem:[%s543 + $0x30] sm:$0xff]
      %v2306 = vld [vmem:[%s543 + $0x38] sm:$0xff]
      %v2307 = vpack.c.bf16 %v2300, %v2299
      %v2308 = vpack.c.bf16 %v2302, %v2301
      %v2309 = vpack.c.bf16 %v2304, %v2303
      %v2310 = vpack.c.bf16 %v2306, %v2305
      %v2311 = vld [vmem:[%s6 + $0x140] sm:$0xf]
      %v2312 = vld [vmem:[%s6 + $0x144] sm:$0xf]
      %v2313 = vld [vmem:[%s6 + $0x148] sm:$0xf]
      %v2314 = vld [vmem:[%s6 + $0x14c] sm:$0xf]
      %v2315 = vld [vmem:[%s6 + $0x150] sm:$0xf]
      %v2316 = vld [vmem:[%s6 + $0x154] sm:$0xf]
      %v2317 = vld [vmem:[%s6 + $0x158] sm:$0xf]
      %v2318 = vld [vmem:[%s6 + $0x15c] sm:$0xf]
      %v2319 = vld [vmem:[%s6 + $0x160] sm:$0xf]
      %v2320 = vld [vmem:[%s6 + $0x164] sm:$0xf]
      %v2321 = vld [vmem:[%s6 + $0x168] sm:$0xf]
      %v2322 = vld [vmem:[%s6 + $0x16c] sm:$0xf]
      %v2323 = vld [vmem:[%s6 + $0x170] sm:$0xf]
      %v2324 = vld [vmem:[%s6 + $0x174] sm:$0xf]
      %v2325 = vld [vmem:[%s6 + $0x178] sm:$0xf]
      %v2326 = vld [vmem:[%s6 + $0x17c] sm:$0xf]
      %v2343 = vunpack.c.l.b16 %v2311
      %v2344 = vunpack.c.l.b16 %v2312
      %v2345 = vunpack.c.l.b16 %v2313
      %v2346 = vunpack.c.l.b16 %v2314
      %v2347 = vunpack.c.l.b16 %v2315
      %v2348 = vunpack.c.l.b16 %v2316
      %v2349 = vunpack.c.l.b16 %v2317
      %v2350 = vunpack.c.l.b16 %v2318
      %v2351 = vunpack.c.l.b16 %v2319
      %v2352 = vunpack.c.l.b16 %v2320
      %v2353 = vunpack.c.l.b16 %v2321
      %v2354 = vunpack.c.l.b16 %v2322
      %v2355 = vunpack.c.l.b16 %v2323
      %v2356 = vunpack.c.l.b16 %v2324
      %v2357 = vunpack.c.l.b16 %v2325
      %v2358 = vunpack.c.l.b16 %v2326
      %v2359 = vpack.c.b16 %v2344, %v2343
      %v2360 = vpack.c.b16 %v2346, %v2345
      %v2361 = vpack.c.b16 %v2348, %v2347
      %v2362 = vpack.c.b16 %v2350, %v2349
      %v2363 = vpack.c.b16 %v2352, %v2351
      %v2364 = vpack.c.b16 %v2354, %v2353
      %v2365 = vpack.c.b16 %v2356, %v2355
      %v2366 = vpack.c.b16 %v2358, %v2357
      %2375 = vmatpush.bf16.msra.mxu0 %v2366
      %2376 = vmatpush.bf16.msra.mxu0 %v2365
      %2377 = vmatpush.bf16.msra.mxu0 %v2364
      %2378 = vmatpush.bf16.msra.mxu0 %v2363
      %2379 = vmatpush.bf16.msra.mxu0 %v2362
      %2380 = vmatpush.bf16.msra.mxu0 %v2361
      %2381 = vmatpush.bf16.msra.mxu0 %v2360
      %2382 = vmatpush.bf16.msra.mxu0 %v2359
      %2383 = vmatmul.bf16.gmra.mxu0 %v2307
      %v2384 = vpop.f32.mrf.mxu0
      %v2385 = vadd.f32 0.0, %v2384
      %v2386 = vpop.f32.mrf.mxu0
      %v2387 = vadd.f32 0.0, %v2386
      %2388 = vmatmul.bf16.gmra.mxu0 %v2308
      %v2389 = vpop.f32.mrf.mxu0
      %v2390 = vadd.f32 0.0, %v2389
      %v2391 = vpop.f32.mrf.mxu0
      %v2392 = vadd.f32 0.0, %v2391
      %2393 = vmatmul.bf16.gmra.mxu0 %v2309
      %v2394 = vpop.f32.mrf.mxu0
      %v2395 = vadd.f32 0.0, %v2394
      %v2396 = vpop.f32.mrf.mxu0
      %v2397 = vadd.f32 0.0, %v2396
      %2398 = vmatmul.bf16.gmra.mxu0 %v2310
      %v2399 = vpop.f32.mrf.mxu0
      %v2400 = vadd.f32 0.0, %v2399
      %v2401 = vpop.f32.mrf.mxu0
      %v2402 = vadd.f32 0.0, %v2401
      %2403 = vdwg.mxu0
      %v2404 = vadd.f32 %v2291, %v2385
      %v2405 = vadd.f32 %v2292, %v2387
      %v2406 = vadd.f32 %v2293, %v2390
      %v2407 = vadd.f32 %v2294, %v2392
      %v2408 = vadd.f32 %v2295, %v2395
      %v2409 = vadd.f32 %v2296, %v2397
      %v2410 = vadd.f32 %v2297, %v2400
      %v2411 = vadd.f32 %v2298, %v2402
      %v2412 = vld [vmem:[%s560] sm:$0xff]
      %v2413 = vld [vmem:[%s560 + $0x8] sm:$0xff]
      %v2414 = vld [vmem:[%s560 + $0x10] sm:$0xff]
      %v2415 = vld [vmem:[%s560 + $0x18] sm:$0xff]
      %v2416 = vld [vmem:[%s560 + $0x20] sm:$0xff]
      %v2417 = vld [vmem:[%s560 + $0x28] sm:$0xff]
      %v2418 = vld [vmem:[%s560 + $0x30] sm:$0xff]
      %v2419 = vld [vmem:[%s560 + $0x38] sm:$0xff]
      %v2420 = vpack.c.bf16 %v2413, %v2412
      %v2421 = vpack.c.bf16 %v2415, %v2414
      %v2422 = vpack.c.bf16 %v2417, %v2416
      %v2423 = vpack.c.bf16 %v2419, %v2418
      %v2424 = vld [vmem:[%s6 + $0x180] sm:$0xf]
      %v2425 = vld [vmem:[%s6 + $0x184] sm:$0xf]
      %v2426 = vld [vmem:[%s6 + $0x188] sm:$0xf]
      %v2427 = vld [vmem:[%s6 + $0x18c] sm:$0xf]
      %v2428 = vld [vmem:[%s6 + $0x190] sm:$0xf]
      %v2429 = vld [vmem:[%s6 + $0x194] sm:$0xf]
      %v2430 = vld [vmem:[%s6 + $0x198] sm:$0xf]
      %v2431 = vld [vmem:[%s6 + $0x19c] sm:$0xf]
      %v2432 = vld [vmem:[%s6 + $0x1a0] sm:$0xf]
      %v2433 = vld [vmem:[%s6 + $0x1a4] sm:$0xf]
      %v2434 = vld [vmem:[%s6 + $0x1a8] sm:$0xf]
      %v2435 = vld [vmem:[%s6 + $0x1ac] sm:$0xf]
      %v2436 = vld [vmem:[%s6 + $0x1b0] sm:$0xf]
      %v2437 = vld [vmem:[%s6 + $0x1b4] sm:$0xf]
      %v2438 = vld [vmem:[%s6 + $0x1b8] sm:$0xf]
      %v2439 = vld [vmem:[%s6 + $0x1bc] sm:$0xf]
      %v2456 = vunpack.c.l.b16 %v2424
      %v2457 = vunpack.c.l.b16 %v2425
      %v2458 = vunpack.c.l.b16 %v2426
      %v2459 = vunpack.c.l.b16 %v2427
      %v2460 = vunpack.c.l.b16 %v2428
      %v2461 = vunpack.c.l.b16 %v2429
      %v2462 = vunpack.c.l.b16 %v2430
      %v2463 = vunpack.c.l.b16 %v2431
      %v2464 = vunpack.c.l.b16 %v2432
      %v2465 = vunpack.c.l.b16 %v2433
      %v2466 = vunpack.c.l.b16 %v2434
      %v2467 = vunpack.c.l.b16 %v2435
      %v2468 = vunpack.c.l.b16 %v2436
      %v2469 = vunpack.c.l.b16 %v2437
      %v2470 = vunpack.c.l.b16 %v2438
      %v2471 = vunpack.c.l.b16 %v2439
      %v2472 = vpack.c.b16 %v2457, %v2456
      %v2473 = vpack.c.b16 %v2459, %v2458
      %v2474 = vpack.c.b16 %v2461, %v2460
      %v2475 = vpack.c.b16 %v2463, %v2462
      %v2476 = vpack.c.b16 %v2465, %v2464
      %v2477 = vpack.c.b16 %v2467, %v2466
      %v2478 = vpack.c.b16 %v2469, %v2468
      %v2479 = vpack.c.b16 %v2471, %v2470
      %2488 = vmatpush.bf16.msra.mxu0 %v2479
      %2489 = vmatpush.bf16.msra.mxu0 %v2478
      %2490 = vmatpush.bf16.msra.mxu0 %v2477
      %2491 = vmatpush.bf16.msra.mxu0 %v2476
      %2492 = vmatpush.bf16.msra.mxu0 %v2475
      %2493 = vmatpush.bf16.msra.mxu0 %v2474
      %2494 = vmatpush.bf16.msra.mxu0 %v2473
      %2495 = vmatpush.bf16.msra.mxu0 %v2472
      %2496 = vmatmul.bf16.gmra.mxu0 %v2420
      %v2497 = vpop.f32.mrf.mxu0
      %v2498 = vadd.f32 0.0, %v2497
      %v2499 = vpop.f32.mrf.mxu0
      %v2500 = vadd.f32 0.0, %v2499
      %2501 = vmatmul.bf16.gmra.mxu0 %v2421
      %v2502 = vpop.f32.mrf.mxu0
      %v2503 = vadd.f32 0.0, %v2502
      %v2504 = vpop.f32.mrf.mxu0
      %v2505 = vadd.f32 0.0, %v2504
      %2506 = vmatmul.bf16.gmra.mxu0 %v2422
      %v2507 = vpop.f32.mrf.mxu0
      %v2508 = vadd.f32 0.0, %v2507
      %v2509 = vpop.f32.mrf.mxu0
      %v2510 = vadd.f32 0.0, %v2509
      %2511 = vmatmul.bf16.gmra.mxu0 %v2423
      %v2512 = vpop.f32.mrf.mxu0
      %v2513 = vadd.f32 0.0, %v2512
      %v2514 = vpop.f32.mrf.mxu0
      %v2515 = vadd.f32 0.0, %v2514
      %2516 = vdwg.mxu0
      %v2517 = vadd.f32 %v2404, %v2498
      %v2518 = vadd.f32 %v2405, %v2500
      %v2519 = vadd.f32 %v2406, %v2503
      %v2520 = vadd.f32 %v2407, %v2505
      %v2521 = vadd.f32 %v2408, %v2508
      %v2522 = vadd.f32 %v2409, %v2510
      %v2523 = vadd.f32 %v2410, %v2513
      %v2524 = vadd.f32 %v2411, %v2515
      %v2525 = vld [vmem:[%s567] sm:$0xff]
      %v2526 = vld [vmem:[%s567 + $0x8] sm:$0xff]
      %v2527 = vld [vmem:[%s567 + $0x10] sm:$0xff]
      %v2528 = vld [vmem:[%s567 + $0x18] sm:$0xff]
      %v2529 = vld [vmem:[%s567 + $0x20] sm:$0xff]
      %v2530 = vld [vmem:[%s567 + $0x28] sm:$0xff]
      %v2531 = vld [vmem:[%s567 + $0x30] sm:$0xff]
      %v2532 = vld [vmem:[%s567 + $0x38] sm:$0xff]
      %v2533 = vpack.c.bf16 %v2526, %v2525
      %v2534 = vpack.c.bf16 %v2528, %v2527
      %v2535 = vpack.c.bf16 %v2530, %v2529
      %v2536 = vpack.c.bf16 %v2532, %v2531
      %v2537 = vld [vmem:[%s6 + $0x1c0] sm:$0xf]
      %v2538 = vld [vmem:[%s6 + $0x1c4] sm:$0xf]
      %v2539 = vld [vmem:[%s6 + $0x1c8] sm:$0xf]
      %v2540 = vld [vmem:[%s6 + $0x1cc] sm:$0xf]
      %v2541 = vld [vmem:[%s6 + $0x1d0] sm:$0xf]
      %v2542 = vld [vmem:[%s6 + $0x1d4] sm:$0xf]
      %v2543 = vld [vmem:[%s6 + $0x1d8] sm:$0xf]
      %v2544 = vld [vmem:[%s6 + $0x1dc] sm:$0xf]
      %v2545 = vld [vmem:[%s6 + $0x1e0] sm:$0xf]
      %v2546 = vld [vmem:[%s6 + $0x1e4] sm:$0xf]
      %v2547 = vld [vmem:[%s6 + $0x1e8] sm:$0xf]
      %v2548 = vld [vmem:[%s6 + $0x1ec] sm:$0xf]
      %v2549 = vld [vmem:[%s6 + $0x1f0] sm:$0xf]
      %v2550 = vld [vmem:[%s6 + $0x1f4] sm:$0xf]
      %v2551 = vld [vmem:[%s6 + $0x1f8] sm:$0xf]
      %v2552 = vld [vmem:[%s6 + $0x1fc] sm:$0xf]
      %v2569 = vunpack.c.l.b16 %v2537
      %v2570 = vunpack.c.l.b16 %v2538
      %v2571 = vunpack.c.l.b16 %v2539
      %v2572 = vunpack.c.l.b16 %v2540
      %v2573 = vunpack.c.l.b16 %v2541
      %v2574 = vunpack.c.l.b16 %v2542
      %v2575 = vunpack.c.l.b16 %v2543
      %v2576 = vunpack.c.l.b16 %v2544
      %v2577 = vunpack.c.l.b16 %v2545
      %v2578 = vunpack.c.l.b16 %v2546
      %v2579 = vunpack.c.l.b16 %v2547
      %v2580 = vunpack.c.l.b16 %v2548
      %v2581 = vunpack.c.l.b16 %v2549
      %v2582 = vunpack.c.l.b16 %v2550
      %v2583 = vunpack.c.l.b16 %v2551
      %v2584 = vunpack.c.l.b16 %v2552
      %v2585 = vpack.c.b16 %v2570, %v2569
      %v2586 = vpack.c.b16 %v2572, %v2571
      %v2587 = vpack.c.b16 %v2574, %v2573
      %v2588 = vpack.c.b16 %v2576, %v2575
      %v2589 = vpack.c.b16 %v2578, %v2577
      %v2590 = vpack.c.b16 %v2580, %v2579
      %v2591 = vpack.c.b16 %v2582, %v2581
      %v2592 = vpack.c.b16 %v2584, %v2583
      %2601 = vmatpush.bf16.msra.mxu0 %v2592
      %2602 = vmatpush.bf16.msra.mxu0 %v2591
      %2603 = vmatpush.bf16.msra.mxu0 %v2590
      %2604 = vmatpush.bf16.msra.mxu0 %v2589
      %2605 = vmatpush.bf16.msra.mxu0 %v2588
      %2606 = vmatpush.bf16.msra.mxu0 %v2587
      %2607 = vmatpush.bf16.msra.mxu0 %v2586
      %2608 = vmatpush.bf16.msra.mxu0 %v2585
      %2609 = vmatmul.bf16.gmra.mxu0 %v2533
      %v2610 = vpop.f32.mrf.mxu0
      %v2611 = vadd.f32 0.0, %v2610
      %v2612 = vpop.f32.mrf.mxu0
      %v2613 = vadd.f32 0.0, %v2612
      %2614 = vmatmul.bf16.gmra.mxu0 %v2534
      %v2615 = vpop.f32.mrf.mxu0
      %v2616 = vadd.f32 0.0, %v2615
      %v2617 = vpop.f32.mrf.mxu0
      %v2618 = vadd.f32 0.0, %v2617
      %2619 = vmatmul.bf16.gmra.mxu0 %v2535
      %v2620 = vpop.f32.mrf.mxu0
      %v2621 = vadd.f32 0.0, %v2620
      %v2622 = vpop.f32.mrf.mxu0
      %v2623 = vadd.f32 0.0, %v2622
      %2624 = vmatmul.bf16.gmra.mxu0 %v2536
      %v2625 = vpop.f32.mrf.mxu0
      %v2626 = vadd.f32 0.0, %v2625
      %v2627 = vpop.f32.mrf.mxu0
      %v2628 = vadd.f32 0.0, %v2627
      %2629 = vdwg.mxu0
      %v2630 = vadd.f32 %v2517, %v2611
      %v2631 = vadd.f32 %v2518, %v2613
      %v2632 = vadd.f32 %v2519, %v2616
      %v2633 = vadd.f32 %v2520, %v2618
      %v2634 = vadd.f32 %v2521, %v2621
      %v2635 = vadd.f32 %v2522, %v2623
      %v2636 = vadd.f32 %v2523, %v2626
      %v2637 = vadd.f32 %v2524, %v2628
      %v2638 = vld [vmem:[%s575] sm:$0xff]
      %v2639 = vld [vmem:[%s575 + $0x8] sm:$0xff]
      %v2640 = vld [vmem:[%s575 + $0x10] sm:$0xff]
      %v2641 = vld [vmem:[%s575 + $0x18] sm:$0xff]
      %v2642 = vld [vmem:[%s575 + $0x20] sm:$0xff]
      %v2643 = vld [vmem:[%s575 + $0x28] sm:$0xff]
      %v2644 = vld [vmem:[%s575 + $0x30] sm:$0xff]
      %v2645 = vld [vmem:[%s575 + $0x38] sm:$0xff]
      %v2646 = vpack.c.bf16 %v2639, %v2638
      %v2647 = vpack.c.bf16 %v2641, %v2640
      %v2648 = vpack.c.bf16 %v2643, %v2642
      %v2649 = vpack.c.bf16 %v2645, %v2644
      %v2650 = vld [vmem:[%s6 + $0x200] sm:$0xf]
      %v2651 = vld [vmem:[%s6 + $0x204] sm:$0xf]
      %v2652 = vld [vmem:[%s6 + $0x208] sm:$0xf]
      %v2653 = vld [vmem:[%s6 + $0x20c] sm:$0xf]
      %v2654 = vld [vmem:[%s6 + $0x210] sm:$0xf]
      %v2655 = vld [vmem:[%s6 + $0x214] sm:$0xf]
      %v2656 = vld [vmem:[%s6 + $0x218] sm:$0xf]
      %v2657 = vld [vmem:[%s6 + $0x21c] sm:$0xf]
      %v2658 = vld [vmem:[%s6 + $0x220] sm:$0xf]
      %v2659 = vld [vmem:[%s6 + $0x224] sm:$0xf]
      %v2660 = vld [vmem:[%s6 + $0x228] sm:$0xf]
      %v2661 = vld [vmem:[%s6 + $0x22c] sm:$0xf]
      %v2662 = vld [vmem:[%s6 + $0x230] sm:$0xf]
      %v2663 = vld [vmem:[%s6 + $0x234] sm:$0xf]
      %v2664 = vld [vmem:[%s6 + $0x238] sm:$0xf]
      %v2665 = vld [vmem:[%s6 + $0x23c] sm:$0xf]
      %v2682 = vunpack.c.l.b16 %v2650
      %v2683 = vunpack.c.l.b16 %v2651
      %v2684 = vunpack.c.l.b16 %v2652
      %v2685 = vunpack.c.l.b16 %v2653
      %v2686 = vunpack.c.l.b16 %v2654
      %v2687 = vunpack.c.l.b16 %v2655
      %v2688 = vunpack.c.l.b16 %v2656
      %v2689 = vunpack.c.l.b16 %v2657
      %v2690 = vunpack.c.l.b16 %v2658
      %v2691 = vunpack.c.l.b16 %v2659
      %v2692 = vunpack.c.l.b16 %v2660
      %v2693 = vunpack.c.l.b16 %v2661
      %v2694 = vunpack.c.l.b16 %v2662
      %v2695 = vunpack.c.l.b16 %v2663
      %v2696 = vunpack.c.l.b16 %v2664
      %v2697 = vunpack.c.l.b16 %v2665
      %v2698 = vpack.c.b16 %v2683, %v2682
      %v2699 = vpack.c.b16 %v2685, %v2684
      %v2700 = vpack.c.b16 %v2687, %v2686
      %v2701 = vpack.c.b16 %v2689, %v2688
      %v2702 = vpack.c.b16 %v2691, %v2690
      %v2703 = vpack.c.b16 %v2693, %v2692
      %v2704 = vpack.c.b16 %v2695, %v2694
      %v2705 = vpack.c.b16 %v2697, %v2696
      %2714 = vmatpush.bf16.msra.mxu0 %v2705
      %2715 = vmatpush.bf16.msra.mxu0 %v2704
      %2716 = vmatpush.bf16.msra.mxu0 %v2703
      %2717 = vmatpush.bf16.msra.mxu0 %v2702
      %2718 = vmatpush.bf16.msra.mxu0 %v2701
      %2719 = vmatpush.bf16.msra.mxu0 %v2700
      %2720 = vmatpush.bf16.msra.mxu0 %v2699
      %2721 = vmatpush.bf16.msra.mxu0 %v2698
      %2722 = vmatmul.bf16.gmra.mxu0 %v2646
      %v2723 = vpop.f32.mrf.mxu0
      %v2724 = vadd.f32 0.0, %v2723
      %v2725 = vpop.f32.mrf.mxu0
      %v2726 = vadd.f32 0.0, %v2725
      %2727 = vmatmul.bf16.gmra.mxu0 %v2647
      %v2728 = vpop.f32.mrf.mxu0
      %v2729 = vadd.f32 0.0, %v2728
      %v2730 = vpop.f32.mrf.mxu0
      %v2731 = vadd.f32 0.0, %v2730
      %2732 = vmatmul.bf16.gmra.mxu0 %v2648
      %v2733 = vpop.f32.mrf.mxu0
      %v2734 = vadd.f32 0.0, %v2733
      %v2735 = vpop.f32.mrf.mxu0
      %v2736 = vadd.f32 0.0, %v2735
      %2737 = vmatmul.bf16.gmra.mxu0 %v2649
      %v2738 = vpop.f32.mrf.mxu0
      %v2739 = vadd.f32 0.0, %v2738
      %v2740 = vpop.f32.mrf.mxu0
      %v2741 = vadd.f32 0.0, %v2740
      %2742 = vdwg.mxu0
      %v2743 = vadd.f32 %v2630, %v2724
      %v2744 = vadd.f32 %v2631, %v2726
      %v2745 = vadd.f32 %v2632, %v2729
      %v2746 = vadd.f32 %v2633, %v2731
      %v2747 = vadd.f32 %v2634, %v2734
      %v2748 = vadd.f32 %v2635, %v2736
      %v2749 = vadd.f32 %v2636, %v2739
      %v2750 = vadd.f32 %v2637, %v2741
      %v2752 = vperm.slane %v1697, 0
      %v2754 = vadd.f32 %v2743, %v2752
      %v2755 = vadd.f32 %v2744, %v2752
      %v2756 = vadd.f32 %v2745, %v2752
      %v2757 = vadd.f32 %v2746, %v2752
      %v2758 = vadd.f32 %v2747, %v2752
      %v2759 = vadd.f32 %v2748, %v2752
      %v2760 = vadd.f32 %v2749, %v2752
      %v2761 = vadd.f32 %v2750, %v2752
      %v2762 = vld [vmem:[%s8] sm:$0x1]
      %v2763 = vld [vmem:[%s9] sm:$0x1]
      %v2764 = vadd.f32 %v2754, %v2755
      %v2765 = vadd.f32 %v2764, %v2756
      %v2766 = vadd.f32 %v2765, %v2757
      %v2767 = vadd.f32 %v2766, %v2758
      %v2768 = vadd.f32 %v2767, %v2759
      %v2769 = vadd.f32 %v2768, %v2760
      %v2770 = vadd.f32 %v2769, %v2761
      %v2771 = vrot.slane %v2770, 4
      %v2772 = vadd.f32 %v2770, %v2771
      %v2773 = vrot.slane %v2772, 2
      %v2774 = vadd.f32 %v2772, %v2773
      %v2775 = vrot.slane %v2774, 1
      %v2776 = vadd.f32 %v2774, %v2775
      %v2777 = vmul.f32 %v2776, %v1616
      %v2778 = vsub.f32 %v2754, %v2777
      %v2779 = vsub.f32 %v2755, %v2777
      %v2780 = vsub.f32 %v2756, %v2777
      %v2781 = vsub.f32 %v2757, %v2777
      %v2782 = vsub.f32 %v2758, %v2777
      %v2783 = vsub.f32 %v2759, %v2777
      %v2784 = vsub.f32 %v2760, %v2777
      %v2785 = vsub.f32 %v2761, %v2777
      %v2786 = vmul.f32 %v2778, %v2778
      %v2787 = vmul.f32 %v2779, %v2779
      %v2788 = vmul.f32 %v2780, %v2780
      %v2789 = vmul.f32 %v2781, %v2781
      %v2790 = vmul.f32 %v2782, %v2782
      %v2791 = vmul.f32 %v2783, %v2783
      %v2792 = vmul.f32 %v2784, %v2784
      %v2793 = vmul.f32 %v2785, %v2785
      %v2794 = vadd.f32 %v2786, %v2787
      %v2795 = vadd.f32 %v2794, %v2788
      %v2796 = vadd.f32 %v2795, %v2789
      %v2797 = vadd.f32 %v2796, %v2790
      %v2798 = vadd.f32 %v2797, %v2791
      %v2799 = vadd.f32 %v2798, %v2792
      %v2800 = vadd.f32 %v2799, %v2793
      %v2801 = vrot.slane %v2800, 4
      %v2802 = vadd.f32 %v2800, %v2801
      %v2803 = vrot.slane %v2802, 2
      %v2804 = vadd.f32 %v2802, %v2803
      %v2805 = vrot.slane %v2804, 1
      %v2806 = vadd.f32 %v2804, %v2805
      %v2807 = vmul.f32 %v2806, %v1616
      %v2808 = vadd.f32 %v2807, 1e-05
      %v2809 = vrsqrt.pop %v2808
      %v2810 = vmul.f32 %v2809, %v2808
      %v2811 = vmul.f32 %v2810, %v2809
      %v2812 = vmul.f32 0.5, %v2811
      %v2813 = vsub.f32 1.5, %v2812
      %v2814 = vmul.f32 %v2809, %v2813
      %vm2815 = vweird.f32 %v2808
      %vm2816 = vweird.f32 %v2809
      %vm2817 = vmor %vm2815, %vm2816
      %v2818 = vsel %vm2817, %v2809, %v2814
      %v2819 = vmul.f32 %v2778, %v2818
      %v2820 = vmul.f32 %v2779, %v2818
      %v2821 = vmul.f32 %v2780, %v2818
      %v2822 = vmul.f32 %v2781, %v2818
      %v2823 = vmul.f32 %v2782, %v2818
      %v2824 = vmul.f32 %v2783, %v2818
      %v2825 = vmul.f32 %v2784, %v2818
      %v2826 = vmul.f32 %v2785, %v2818
      %v2828 = vperm.slane %v2762, 0
      %v2830 = vmul.f32 %v2819, %v2828
      %v2831 = vmul.f32 %v2820, %v2828
      %v2832 = vmul.f32 %v2821, %v2828
      %v2833 = vmul.f32 %v2822, %v2828
      %v2834 = vmul.f32 %v2823, %v2828
      %v2835 = vmul.f32 %v2824, %v2828
      %v2836 = vmul.f32 %v2825, %v2828
      %v2837 = vmul.f32 %v2826, %v2828
      %v2839 = vperm.slane %v2763, 0
      %v2841 = vadd.f32 %v2830, %v2839
      %v2842 = vadd.f32 %v2831, %v2839
      %v2843 = vadd.f32 %v2832, %v2839
      %v2844 = vadd.f32 %v2833, %v2839
      %v2845 = vadd.f32 %v2834, %v2839
      %v2846 = vadd.f32 %v2835, %v2839
      %v2847 = vadd.f32 %v2836, %v2839
      %v2848 = vadd.f32 %v2837, %v2839
      %v2849 = vadd.f32 %v2841, %v493
      %v2850 = vadd.f32 %v2842, %v496
      %v2851 = vadd.f32 %v2843, %v499
      %v2852 = vadd.f32 %v2844, %v502
      %v2853 = vadd.f32 %v2845, %v505
      %v2854 = vadd.f32 %v2846, %v508
      %v2855 = vadd.f32 %v2847, %v511
      %v2856 = vadd.f32 %v2848, %v514
      %v2857 = vld [vmem:[%s11] sm:$0x1]
      %2858 = vst [vmem:[%s517] sm:$0xff] %v2849
      %2859 = vst [vmem:[%s517 + $0x8] sm:$0xff] %v2850
      %2860 = vst [vmem:[%s517 + $0x10] sm:$0xff] %v2851
      %2861 = vst [vmem:[%s517 + $0x18] sm:$0xff] %v2852
      %2862 = vst [vmem:[%s517 + $0x20] sm:$0xff] %v2853
      %2863 = vst [vmem:[%s517 + $0x28] sm:$0xff] %v2854
      %2864 = vst [vmem:[%s517 + $0x30] sm:$0xff] %v2855
      %2865 = vst [vmem:[%s517 + $0x38] sm:$0xff] %v2856
      %2866 = vst [vmem:[%s526 + $0x1] sm:$0x7f] %v2849
      %2867 = vst [vmem:[%s526 + $0x9] sm:$0x7f] %v2850
      %2868 = vst [vmem:[%s526 + $0x11] sm:$0x7f] %v2851
      %2869 = vst [vmem:[%s526 + $0x19] sm:$0x7f] %v2852
      %2870 = vst [vmem:[%s526 + $0x21] sm:$0x7f] %v2853
      %2871 = vst [vmem:[%s526 + $0x29] sm:$0x7f] %v2854
      %2872 = vst [vmem:[%s526 + $0x31] sm:$0x7f] %v2855
      %2873 = vst [vmem:[%s526 + $0x39] sm:$0x7f] %v2856
      %2874 = vst [vmem:[%s526 - $0x1] sm:$0x2] %v2849
      %2875 = vst [vmem:[%s526 + $0x7] sm:$0x2] %v2850
      %2876 = vst [vmem:[%s526 + $0xf] sm:$0x2] %v2851
      %2877 = vst [vmem:[%s526 + $0x17] sm:$0x2] %v2852
      %2878 = vst [vmem:[%s526 + $0x1f] sm:$0x2] %v2853
      %2879 = vst [vmem:[%s526 + $0x27] sm:$0x2] %v2854
      %2880 = vst [vmem:[%s526 + $0x2f] sm:$0x2] %v2855
      %2881 = vst [vmem:[%s526 + $0x37] sm:$0x2] %v2856
      %2882 = vst [vmem:[%s543 - $0x1] sm:$0xfe] %v2849
      %2883 = vst [vmem:[%s543 + $0x7] sm:$0xfe] %v2850
      %2884 = vst [vmem:[%s543 + $0xf] sm:$0xfe] %v2851
      %2885 = vst [vmem:[%s543 + $0x17] sm:$0xfe] %v2852
      %2886 = vst [vmem:[%s543 + $0x1f] sm:$0xfe] %v2853
      %2887 = vst [vmem:[%s543 + $0x27] sm:$0xfe] %v2854
      %2888 = vst [vmem:[%s543 + $0x2f] sm:$0xfe] %v2855
      %2889 = vst [vmem:[%s543 + $0x37] sm:$0xfe] %v2856
      %2890 = vst [vmem:[%s543 + $0x1] sm:$0x40] %v2849
      %2891 = vst [vmem:[%s543 + $0x9] sm:$0x40] %v2850
      %2892 = vst [vmem:[%s543 + $0x11] sm:$0x40] %v2851
      %2893 = vst [vmem:[%s543 + $0x19] sm:$0x40] %v2852
      %2894 = vst [vmem:[%s543 + $0x21] sm:$0x40] %v2853
      %2895 = vst [vmem:[%s543 + $0x29] sm:$0x40] %v2854
      %2896 = vst [vmem:[%s543 + $0x31] sm:$0x40] %v2855
      %2897 = vst [vmem:[%s543 + $0x39] sm:$0x40] %v2856
      %v2898 = vld [vmem:[%s560] sm:$0xff]
      %2899 = vst [vmem:[#allocation2] sm:$0xff] %v2898
      %v2900 = vld [vmem:[%s563] sm:$0xff]
      %2901 = vst [vmem:[%s565] sm:$0xff] %v2900
      %v2902 = vld [vmem:[%s567] sm:$0xff]
      %2903 = vst [vmem:[%s569] sm:$0xff] %v2902
      %v2904 = vld [vmem:[%s571] sm:$0xff]
      %2905 = vst [vmem:[%s573] sm:$0xff] %v2904
      %v2906 = vld [vmem:[%s575] sm:$0xff]
      %2907 = vst [vmem:[%s577] sm:$0xff] %v2906
      %v2908 = vld [vmem:[%s579] sm:$0xff]
      %2909 = vst [vmem:[%s581] sm:$0xff] %v2908
      %v2910 = vld [vmem:[#allocation2] sm:$0xff]
      %v2911 = vld [vmem:[#allocation2 + $0x8] sm:$0xff]
      %v2912 = vld [vmem:[#allocation2 + $0x10] sm:$0xff]
      %v2913 = vld [vmem:[#allocation2 + $0x18] sm:$0xff]
      %v2914 = vld [vmem:[#allocation2 + $0x20] sm:$0xff]
      %v2915 = vld [vmem:[#allocation2 + $0x28] sm:$0xff]
      %v2916 = vld [vmem:[#allocation2 + $0x30] sm:$0xff]
      %v2917 = vld [vmem:[#allocation2 + $0x38] sm:$0xff]
      %v2918 = vpack.c.bf16 %v2911, %v2910
      %v2919 = vpack.c.bf16 %v2913, %v2912
      %v2920 = vpack.c.bf16 %v2915, %v2914
      %v2921 = vpack.c.bf16 %v2917, %v2916
      %v2922 = vld [vmem:[%s10] sm:$0xf]
      %v2923 = vld [vmem:[%s10 + $0x4] sm:$0xf]
      %v2924 = vld [vmem:[%s10 + $0x8] sm:$0xf]
      %v2925 = vld [vmem:[%s10 + $0xc] sm:$0xf]
      %v2926 = vld [vmem:[%s10 + $0x10] sm:$0xf]
      %v2927 = vld [vmem:[%s10 + $0x14] sm:$0xf]
      %v2928 = vld [vmem:[%s10 + $0x18] sm:$0xf]
      %v2929 = vld [vmem:[%s10 + $0x1c] sm:$0xf]
      %v2930 = vld [vmem:[%s10 + $0x20] sm:$0xf]
      %v2931 = vld [vmem:[%s10 + $0x24] sm:$0xf]
      %v2932 = vld [vmem:[%s10 + $0x28] sm:$0xf]
      %v2933 = vld [vmem:[%s10 + $0x2c] sm:$0xf]
      %v2934 = vld [vmem:[%s10 + $0x30] sm:$0xf]
      %v2935 = vld [vmem:[%s10 + $0x34] sm:$0xf]
      %v2936 = vld [vmem:[%s10 + $0x38] sm:$0xf]
      %v2937 = vld [vmem:[%s10 + $0x3c] sm:$0xf]
      %v2938 = vld [vmem:[%s569] sm:$0xff]
      %v2939 = vld [vmem:[%s569 + $0x8] sm:$0xff]
      %v2940 = vld [vmem:[%s569 + $0x10] sm:$0xff]
      %v2941 = vld [vmem:[%s569 + $0x18] sm:$0xff]
      %v2942 = vld [vmem:[%s569 + $0x20] sm:$0xff]
      %v2943 = vld [vmem:[%s569 + $0x28] sm:$0xff]
      %v2944 = vld [vmem:[%s569 + $0x30] sm:$0xff]
      %v2945 = vld [vmem:[%s569 + $0x38] sm:$0xff]
      %v2946 = vpack.c.bf16 %v2939, %v2938
      %v2947 = vpack.c.bf16 %v2941, %v2940
      %v2948 = vpack.c.bf16 %v2943, %v2942
      %v2949 = vpack.c.bf16 %v2945, %v2944
      %v2950 = vld [vmem:[%s10 + $0x40] sm:$0xf]
      %v2951 = vld [vmem:[%s10 + $0x44] sm:$0xf]
      %v2952 = vld [vmem:[%s10 + $0x48] sm:$0xf]
      %v2953 = vld [vmem:[%s10 + $0x4c] sm:$0xf]
      %v2954 = vld [vmem:[%s10 + $0x50] sm:$0xf]
      %v2955 = vld [vmem:[%s10 + $0x54] sm:$0xf]
      %v2956 = vld [vmem:[%s10 + $0x58] sm:$0xf]
      %v2957 = vld [vmem:[%s10 + $0x5c] sm:$0xf]
      %v2958 = vld [vmem:[%s10 + $0x60] sm:$0xf]
      %v2959 = vld [vmem:[%s10 + $0x64] sm:$0xf]
      %v2960 = vld [vmem:[%s10 + $0x68] sm:$0xf]
      %v2961 = vld [vmem:[%s10 + $0x6c] sm:$0xf]
      %v2962 = vld [vmem:[%s10 + $0x70] sm:$0xf]
      %v2963 = vld [vmem:[%s10 + $0x74] sm:$0xf]
      %v2964 = vld [vmem:[%s10 + $0x78] sm:$0xf]
      %v2965 = vld [vmem:[%s10 + $0x7c] sm:$0xf]
      %v2982 = vunpack.c.l.b16 %v2950
      %v2983 = vunpack.c.l.b16 %v2951
      %v2984 = vunpack.c.l.b16 %v2952
      %v2985 = vunpack.c.l.b16 %v2953
      %v2986 = vunpack.c.l.b16 %v2954
      %v2987 = vunpack.c.l.b16 %v2955
      %v2988 = vunpack.c.l.b16 %v2956
      %v2989 = vunpack.c.l.b16 %v2957
      %v2990 = vunpack.c.l.b16 %v2958
      %v2991 = vunpack.c.l.b16 %v2959
      %v2992 = vunpack.c.l.b16 %v2960
      %v2993 = vunpack.c.l.b16 %v2961
      %v2994 = vunpack.c.l.b16 %v2962
      %v2995 = vunpack.c.l.b16 %v2963
      %v2996 = vunpack.c.l.b16 %v2964
      %v2997 = vunpack.c.l.b16 %v2965
      %v2998 = vpack.c.b16 %v2983, %v2982
      %v2999 = vpack.c.b16 %v2985, %v2984
      %v3000 = vpack.c.b16 %v2987, %v2986
      %v3001 = vpack.c.b16 %v2989, %v2988
      %v3002 = vpack.c.b16 %v2991, %v2990
      %v3003 = vpack.c.b16 %v2993, %v2992
      %v3004 = vpack.c.b16 %v2995, %v2994
      %v3005 = vpack.c.b16 %v2997, %v2996
      %3014 = vmatpush.bf16.msra.mxu0 %v3005
      %3015 = vmatpush.bf16.msra.mxu0 %v3004
      %3016 = vmatpush.bf16.msra.mxu0 %v3003
      %3017 = vmatpush.bf16.msra.mxu0 %v3002
      %3018 = vmatpush.bf16.msra.mxu0 %v3001
      %3019 = vmatpush.bf16.msra.mxu0 %v3000
      %3020 = vmatpush.bf16.msra.mxu0 %v2999
      %3021 = vmatpush.bf16.msra.mxu0 %v2998
      %3022 = vmatmul.bf16.gmra.mxu0 %v2946
      %v3023 = vpop.f32.mrf.mxu0
      %v3024 = vadd.f32 0.0, %v3023
      %v3025 = vpop.f32.mrf.mxu0
      %v3026 = vadd.f32 0.0, %v3025
      %3027 = vmatmul.bf16.gmra.mxu0 %v2947
      %v3028 = vpop.f32.mrf.mxu0
      %v3029 = vadd.f32 0.0, %v3028
      %v3030 = vpop.f32.mrf.mxu0
      %v3031 = vadd.f32 0.0, %v3030
      %3032 = vmatmul.bf16.gmra.mxu0 %v2948
      %v3033 = vpop.f32.mrf.mxu0
      %v3034 = vadd.f32 0.0, %v3033
      %v3035 = vpop.f32.mrf.mxu0
      %v3036 = vadd.f32 0.0, %v3035
      %3037 = vmatmul.bf16.gmra.mxu0 %v2949
      %v3038 = vpop.f32.mrf.mxu0
      %v3039 = vadd.f32 0.0, %v3038
      %v3040 = vpop.f32.mrf.mxu0
      %v3041 = vadd.f32 0.0, %v3040
      %3042 = vdwg.mxu0
      %v3059 = vunpack.c.l.b16 %v2922
      %v3060 = vunpack.c.l.b16 %v2923
      %v3061 = vunpack.c.l.b16 %v2924
      %v3062 = vunpack.c.l.b16 %v2925
      %v3063 = vunpack.c.l.b16 %v2926
      %v3064 = vunpack.c.l.b16 %v2927
      %v3065 = vunpack.c.l.b16 %v2928
      %v3066 = vunpack.c.l.b16 %v2929
      %v3067 = vunpack.c.l.b16 %v2930
      %v3068 = vunpack.c.l.b16 %v2931
      %v3069 = vunpack.c.l.b16 %v2932
      %v3070 = vunpack.c.l.b16 %v2933
      %v3071 = vunpack.c.l.b16 %v2934
      %v3072 = vunpack.c.l.b16 %v2935
      %v3073 = vunpack.c.l.b16 %v2936
      %v3074 = vunpack.c.l.b16 %v2937
      %v3075 = vpack.c.b16 %v3060, %v3059
      %v3076 = vpack.c.b16 %v3062, %v3061
      %v3077 = vpack.c.b16 %v3064, %v3063
      %v3078 = vpack.c.b16 %v3066, %v3065
      %v3079 = vpack.c.b16 %v3068, %v3067
      %v3080 = vpack.c.b16 %v3070, %v3069
      %v3081 = vpack.c.b16 %v3072, %v3071
      %v3082 = vpack.c.b16 %v3074, %v3073
      %3091 = vmatpush.bf16.msra.mxu0 %v3082
      %3092 = vmatpush.bf16.msra.mxu0 %v3081
      %3093 = vmatpush.bf16.msra.mxu0 %v3080
      %3094 = vmatpush.bf16.msra.mxu0 %v3079
      %3095 = vmatpush.bf16.msra.mxu0 %v3078
      %3096 = vmatpush.bf16.msra.mxu0 %v3077
      %3097 = vmatpush.bf16.msra.mxu0 %v3076
      %3098 = vmatpush.bf16.msra.mxu0 %v3075
      %3099 = vmatmul.bf16.gmra.mxu0 %v2918
      %v3100 = vpop.f32.mrf.mxu0
      %v3101 = vadd.f32 %v3024, %v3100
      %v3102 = vpop.f32.mrf.mxu0
      %v3103 = vadd.f32 %v3026, %v3102
      %3104 = vmatmul.bf16.gmra.mxu0 %v2919
      %v3105 = vpop.f32.mrf.mxu0
      %v3106 = vadd.f32 %v3029, %v3105
      %v3107 = vpop.f32.mrf.mxu0
      %v3108 = vadd.f32 %v3031, %v3107
      %3109 = vmatmul.bf16.gmra.mxu0 %v2920
      %v3110 = vpop.f32.mrf.mxu0
      %v3111 = vadd.f32 %v3034, %v3110
      %v3112 = vpop.f32.mrf.mxu0
      %v3113 = vadd.f32 %v3036, %v3112
      %3114 = vmatmul.bf16.gmra.mxu0 %v2921
      %v3115 = vpop.f32.mrf.mxu0
      %v3116 = vadd.f32 %v3039, %v3115
      %v3117 = vpop.f32.mrf.mxu0
      %v3118 = vadd.f32 %v3041, %v3117
      %3119 = vdwg.mxu0
      %v3120 = vld [vmem:[%s577] sm:$0xff]
      %v3121 = vld [vmem:[%s577 + $0x8] sm:$0xff]
      %v3122 = vld [vmem:[%s577 + $0x10] sm:$0xff]
      %v3123 = vld [vmem:[%s577 + $0x18] sm:$0xff]
      %v3124 = vld [vmem:[%s577 + $0x20] sm:$0xff]
      %v3125 = vld [vmem:[%s577 + $0x28] sm:$0xff]
      %v3126 = vld [vmem:[%s577 + $0x30] sm:$0xff]
      %v3127 = vld [vmem:[%s577 + $0x38] sm:$0xff]
      %v3128 = vpack.c.bf16 %v3121, %v3120
      %v3129 = vpack.c.bf16 %v3123, %v3122
      %v3130 = vpack.c.bf16 %v3125, %v3124
      %v3131 = vpack.c.bf16 %v3127, %v3126
      %v3132 = vld [vmem:[%s10 + $0x80] sm:$0xf]
      %v3133 = vld [vmem:[%s10 + $0x84] sm:$0xf]
      %v3134 = vld [vmem:[%s10 + $0x88] sm:$0xf]
      %v3135 = vld [vmem:[%s10 + $0x8c] sm:$0xf]
      %v3136 = vld [vmem:[%s10 + $0x90] sm:$0xf]
      %v3137 = vld [vmem:[%s10 + $0x94] sm:$0xf]
      %v3138 = vld [vmem:[%s10 + $0x98] sm:$0xf]
      %v3139 = vld [vmem:[%s10 + $0x9c] sm:$0xf]
      %v3140 = vld [vmem:[%s10 + $0xa0] sm:$0xf]
      %v3141 = vld [vmem:[%s10 + $0xa4] sm:$0xf]
      %v3142 = vld [vmem:[%s10 + $0xa8] sm:$0xf]
      %v3143 = vld [vmem:[%s10 + $0xac] sm:$0xf]
      %v3144 = vld [vmem:[%s10 + $0xb0] sm:$0xf]
      %v3145 = vld [vmem:[%s10 + $0xb4] sm:$0xf]
      %v3146 = vld [vmem:[%s10 + $0xb8] sm:$0xf]
      %v3147 = vld [vmem:[%s10 + $0xbc] sm:$0xf]
      %v3164 = vunpack.c.l.b16 %v3132
      %v3165 = vunpack.c.l.b16 %v3133
      %v3166 = vunpack.c.l.b16 %v3134
      %v3167 = vunpack.c.l.b16 %v3135
      %v3168 = vunpack.c.l.b16 %v3136
      %v3169 = vunpack.c.l.b16 %v3137
      %v3170 = vunpack.c.l.b16 %v3138
      %v3171 = vunpack.c.l.b16 %v3139
      %v3172 = vunpack.c.l.b16 %v3140
      %v3173 = vunpack.c.l.b16 %v3141
      %v3174 = vunpack.c.l.b16 %v3142
      %v3175 = vunpack.c.l.b16 %v3143
      %v3176 = vunpack.c.l.b16 %v3144
      %v3177 = vunpack.c.l.b16 %v3145
      %v3178 = vunpack.c.l.b16 %v3146
      %v3179 = vunpack.c.l.b16 %v3147
      %v3180 = vpack.c.b16 %v3165, %v3164
      %v3181 = vpack.c.b16 %v3167, %v3166
      %v3182 = vpack.c.b16 %v3169, %v3168
      %v3183 = vpack.c.b16 %v3171, %v3170
      %v3184 = vpack.c.b16 %v3173, %v3172
      %v3185 = vpack.c.b16 %v3175, %v3174
      %v3186 = vpack.c.b16 %v3177, %v3176
      %v3187 = vpack.c.b16 %v3179, %v3178
      %3196 = vmatpush.bf16.msra.mxu0 %v3187
      %3197 = vmatpush.bf16.msra.mxu0 %v3186
      %3198 = vmatpush.bf16.msra.mxu0 %v3185
      %3199 = vmatpush.bf16.msra.mxu0 %v3184
      %3200 = vmatpush.bf16.msra.mxu0 %v3183
      %3201 = vmatpush.bf16.msra.mxu0 %v3182
      %3202 = vmatpush.bf16.msra.mxu0 %v3181
      %3203 = vmatpush.bf16.msra.mxu0 %v3180
      %3204 = vmatmul.bf16.gmra.mxu0 %v3128
      %v3205 = vpop.f32.mrf.mxu0
      %v3206 = vadd.f32 0.0, %v3205
      %v3207 = vpop.f32.mrf.mxu0
      %v3208 = vadd.f32 0.0, %v3207
      %3209 = vmatmul.bf16.gmra.mxu0 %v3129
      %v3210 = vpop.f32.mrf.mxu0
      %v3211 = vadd.f32 0.0, %v3210
      %v3212 = vpop.f32.mrf.mxu0
      %v3213 = vadd.f32 0.0, %v3212
      %3214 = vmatmul.bf16.gmra.mxu0 %v3130
      %v3215 = vpop.f32.mrf.mxu0
      %v3216 = vadd.f32 0.0, %v3215
      %v3217 = vpop.f32.mrf.mxu0
      %v3218 = vadd.f32 0.0, %v3217
      %3219 = vmatmul.bf16.gmra.mxu0 %v3131
      %v3220 = vpop.f32.mrf.mxu0
      %v3221 = vadd.f32 0.0, %v3220
      %v3222 = vpop.f32.mrf.mxu0
      %v3223 = vadd.f32 0.0, %v3222
      %3224 = vdwg.mxu0
      %v3225 = vadd.f32 %v3101, %v3206
      %v3226 = vadd.f32 %v3103, %v3208
      %v3227 = vadd.f32 %v3106, %v3211
      %v3228 = vadd.f32 %v3108, %v3213
      %v3229 = vadd.f32 %v3111, %v3216
      %v3230 = vadd.f32 %v3113, %v3218
      %v3231 = vadd.f32 %v3116, %v3221
      %v3232 = vadd.f32 %v3118, %v3223
      %v3233 = vld [vmem:[%s526] sm:$0xff]
      %v3234 = vld [vmem:[%s526 + $0x8] sm:$0xff]
      %v3235 = vld [vmem:[%s526 + $0x10] sm:$0xff]
      %v3236 = vld [vmem:[%s526 + $0x18] sm:$0xff]
      %v3237 = vld [vmem:[%s526 + $0x20] sm:$0xff]
      %v3238 = vld [vmem:[%s526 + $0x28] sm:$0xff]
      %v3239 = vld [vmem:[%s526 + $0x30] sm:$0xff]
      %v3240 = vld [vmem:[%s526 + $0x38] sm:$0xff]
      %v3241 = vpack.c.bf16 %v3234, %v3233
      %v3242 = vpack.c.bf16 %v3236, %v3235
      %v3243 = vpack.c.bf16 %v3238, %v3237
      %v3244 = vpack.c.bf16 %v3240, %v3239
      %v3245 = vld [vmem:[%s10 + $0xc0] sm:$0xf]
      %v3246 = vld [vmem:[%s10 + $0xc4] sm:$0xf]
      %v3247 = vld [vmem:[%s10 + $0xc8] sm:$0xf]
      %v3248 = vld [vmem:[%s10 + $0xcc] sm:$0xf]
      %v3249 = vld [vmem:[%s10 + $0xd0] sm:$0xf]
      %v3250 = vld [vmem:[%s10 + $0xd4] sm:$0xf]
      %v3251 = vld [vmem:[%s10 + $0xd8] sm:$0xf]
      %v3252 = vld [vmem:[%s10 + $0xdc] sm:$0xf]
      %v3253 = vld [vmem:[%s10 + $0xe0] sm:$0xf]
      %v3254 = vld [vmem:[%s10 + $0xe4] sm:$0xf]
      %v3255 = vld [vmem:[%s10 + $0xe8] sm:$0xf]
      %v3256 = vld [vmem:[%s10 + $0xec] sm:$0xf]
      %v3257 = vld [vmem:[%s10 + $0xf0] sm:$0xf]
      %v3258 = vld [vmem:[%s10 + $0xf4] sm:$0xf]
      %v3259 = vld [vmem:[%s10 + $0xf8] sm:$0xf]
      %v3260 = vld [vmem:[%s10 + $0xfc] sm:$0xf]
      %v3277 = vunpack.c.l.b16 %v3245
      %v3278 = vunpack.c.l.b16 %v3246
      %v3279 = vunpack.c.l.b16 %v3247
      %v3280 = vunpack.c.l.b16 %v3248
      %v3281 = vunpack.c.l.b16 %v3249
      %v3282 = vunpack.c.l.b16 %v3250
      %v3283 = vunpack.c.l.b16 %v3251
      %v3284 = vunpack.c.l.b16 %v3252
      %v3285 = vunpack.c.l.b16 %v3253
      %v3286 = vunpack.c.l.b16 %v3254
      %v3287 = vunpack.c.l.b16 %v3255
      %v3288 = vunpack.c.l.b16 %v3256
      %v3289 = vunpack.c.l.b16 %v3257
      %v3290 = vunpack.c.l.b16 %v3258
      %v3291 = vunpack.c.l.b16 %v3259
      %v3292 = vunpack.c.l.b16 %v3260
      %v3293 = vpack.c.b16 %v3278, %v3277
      %v3294 = vpack.c.b16 %v3280, %v3279
      %v3295 = vpack.c.b16 %v3282, %v3281
      %v3296 = vpack.c.b16 %v3284, %v3283
      %v3297 = vpack.c.b16 %v3286, %v3285
      %v3298 = vpack.c.b16 %v3288, %v3287
      %v3299 = vpack.c.b16 %v3290, %v3289
      %v3300 = vpack.c.b16 %v3292, %v3291
      %3309 = vmatpush.bf16.msra.mxu0 %v3300
      %3310 = vmatpush.bf16.msra.mxu0 %v3299
      %3311 = vmatpush.bf16.msra.mxu0 %v3298
      %3312 = vmatpush.bf16.msra.mxu0 %v3297
      %3313 = vmatpush.bf16.msra.mxu0 %v3296
      %3314 = vmatpush.bf16.msra.mxu0 %v3295
      %3315 = vmatpush.bf16.msra.mxu0 %v3294
      %3316 = vmatpush.bf16.msra.mxu0 %v3293
      %3317 = vmatmul.bf16.gmra.mxu0 %v3241
      %v3318 = vpop.f32.mrf.mxu0
      %v3319 = vadd.f32 0.0, %v3318
      %v3320 = vpop.f32.mrf.mxu0
      %v3321 = vadd.f32 0.0, %v3320
      %3322 = vmatmul.bf16.gmra.mxu0 %v3242
      %v3323 = vpop.f32.mrf.mxu0
      %v3324 = vadd.f32 0.0, %v3323
      %v3325 = vpop.f32.mrf.mxu0
      %v3326 = vadd.f32 0.0, %v3325
      %3327 = vmatmul.bf16.gmra.mxu0 %v3243
      %v3328 = vpop.f32.mrf.mxu0
      %v3329 = vadd.f32 0.0, %v3328
      %v3330 = vpop.f32.mrf.mxu0
      %v3331 = vadd.f32 0.0, %v3330
      %3332 = vmatmul.bf16.gmra.mxu0 %v3244
      %v3333 = vpop.f32.mrf.mxu0
      %v3334 = vadd.f32 0.0, %v3333
      %v3335 = vpop.f32.mrf.mxu0
      %v3336 = vadd.f32 0.0, %v3335
      %3337 = vdwg.mxu0
      %v3338 = vadd.f32 %v3225, %v3319
      %v3339 = vadd.f32 %v3226, %v3321
      %v3340 = vadd.f32 %v3227, %v3324
      %v3341 = vadd.f32 %v3228, %v3326
      %v3342 = vadd.f32 %v3229, %v3329
      %v3343 = vadd.f32 %v3230, %v3331
      %v3344 = vadd.f32 %v3231, %v3334
      %v3345 = vadd.f32 %v3232, %v3336
      %v3346 = vld [vmem:[%s517] sm:$0xff]
      %v3347 = vld [vmem:[%s517 + $0x8] sm:$0xff]
      %v3348 = vld [vmem:[%s517 + $0x10] sm:$0xff]
      %v3349 = vld [vmem:[%s517 + $0x18] sm:$0xff]
      %v3350 = vld [vmem:[%s517 + $0x20] sm:$0xff]
      %v3351 = vld [vmem:[%s517 + $0x28] sm:$0xff]
      %v3352 = vld [vmem:[%s517 + $0x30] sm:$0xff]
      %v3353 = vld [vmem:[%s517 + $0x38] sm:$0xff]
      %v3354 = vpack.c.bf16 %v3347, %v3346
      %v3355 = vpack.c.bf16 %v3349, %v3348
      %v3356 = vpack.c.bf16 %v3351, %v3350
      %v3357 = vpack.c.bf16 %v3353, %v3352
      %v3358 = vld [vmem:[%s10 + $0x100] sm:$0xf]
      %v3359 = vld [vmem:[%s10 + $0x104] sm:$0xf]
      %v3360 = vld [vmem:[%s10 + $0x108] sm:$0xf]
      %v3361 = vld [vmem:[%s10 + $0x10c] sm:$0xf]
      %v3362 = vld [vmem:[%s10 + $0x110] sm:$0xf]
      %v3363 = vld [vmem:[%s10 + $0x114] sm:$0xf]
      %v3364 = vld [vmem:[%s10 + $0x118] sm:$0xf]
      %v3365 = vld [vmem:[%s10 + $0x11c] sm:$0xf]
      %v3366 = vld [vmem:[%s10 + $0x120] sm:$0xf]
      %v3367 = vld [vmem:[%s10 + $0x124] sm:$0xf]
      %v3368 = vld [vmem:[%s10 + $0x128] sm:$0xf]
      %v3369 = vld [vmem:[%s10 + $0x12c] sm:$0xf]
      %v3370 = vld [vmem:[%s10 + $0x130] sm:$0xf]
      %v3371 = vld [vmem:[%s10 + $0x134] sm:$0xf]
      %v3372 = vld [vmem:[%s10 + $0x138] sm:$0xf]
      %v3373 = vld [vmem:[%s10 + $0x13c] sm:$0xf]
      %v3390 = vunpack.c.l.b16 %v3358
      %v3391 = vunpack.c.l.b16 %v3359
      %v3392 = vunpack.c.l.b16 %v3360
      %v3393 = vunpack.c.l.b16 %v3361
      %v3394 = vunpack.c.l.b16 %v3362
      %v3395 = vunpack.c.l.b16 %v3363
      %v3396 = vunpack.c.l.b16 %v3364
      %v3397 = vunpack.c.l.b16 %v3365
      %v3398 = vunpack.c.l.b16 %v3366
      %v3399 = vunpack.c.l.b16 %v3367
      %v3400 = vunpack.c.l.b16 %v3368
      %v3401 = vunpack.c.l.b16 %v3369
      %v3402 = vunpack.c.l.b16 %v3370
      %v3403 = vunpack.c.l.b16 %v3371
      %v3404 = vunpack.c.l.b16 %v3372
      %v3405 = vunpack.c.l.b16 %v3373
      %v3406 = vpack.c.b16 %v3391, %v3390
      %v3407 = vpack.c.b16 %v3393, %v3392
      %v3408 = vpack.c.b16 %v3395, %v3394
      %v3409 = vpack.c.b16 %v3397, %v3396
      %v3410 = vpack.c.b16 %v3399, %v3398
      %v3411 = vpack.c.b16 %v3401, %v3400
      %v3412 = vpack.c.b16 %v3403, %v3402
      %v3413 = vpack.c.b16 %v3405, %v3404
      %3422 = vmatpush.bf16.msra.mxu0 %v3413
      %3423 = vmatpush.bf16.msra.mxu0 %v3412
      %3424 = vmatpush.bf16.msra.mxu0 %v3411
      %3425 = vmatpush.bf16.msra.mxu0 %v3410
      %3426 = vmatpush.bf16.msra.mxu0 %v3409
      %3427 = vmatpush.bf16.msra.mxu0 %v3408
      %3428 = vmatpush.bf16.msra.mxu0 %v3407
      %3429 = vmatpush.bf16.msra.mxu0 %v3406
      %3430 = vmatmul.bf16.gmra.mxu0 %v3354
      %v3431 = vpop.f32.mrf.mxu0
      %v3432 = vadd.f32 0.0, %v3431
      %v3433 = vpop.f32.mrf.mxu0
      %v3434 = vadd.f32 0.0, %v3433
      %3435 = vmatmul.bf16.gmra.mxu0 %v3355
      %v3436 = vpop.f32.mrf.mxu0
      %v3437 = vadd.f32 0.0, %v3436
      %v3438 = vpop.f32.mrf.mxu0
      %v3439 = vadd.f32 0.0, %v3438
      %3440 = vmatmul.bf16.gmra.mxu0 %v3356
      %v3441 = vpop.f32.mrf.mxu0
      %v3442 = vadd.f32 0.0, %v3441
      %v3443 = vpop.f32.mrf.mxu0
      %v3444 = vadd.f32 0.0, %v3443
      %3445 = vmatmul.bf16.gmra.mxu0 %v3357
      %v3446 = vpop.f32.mrf.mxu0
      %v3447 = vadd.f32 0.0, %v3446
      %v3448 = vpop.f32.mrf.mxu0
      %v3449 = vadd.f32 0.0, %v3448
      %3450 = vdwg.mxu0
      %v3451 = vadd.f32 %v3338, %v3432
      %v3452 = vadd.f32 %v3339, %v3434
      %v3453 = vadd.f32 %v3340, %v3437
      %v3454 = vadd.f32 %v3341, %v3439
      %v3455 = vadd.f32 %v3342, %v3442
      %v3456 = vadd.f32 %v3343, %v3444
      %v3457 = vadd.f32 %v3344, %v3447
      %v3458 = vadd.f32 %v3345, %v3449
      %v3459 = vld [vmem:[%s543] sm:$0xff]
      %v3460 = vld [vmem:[%s543 + $0x8] sm:$0xff]
      %v3461 = vld [vmem:[%s543 + $0x10] sm:$0xff]
      %v3462 = vld [vmem:[%s543 + $0x18] sm:$0xff]
      %v3463 = vld [vmem:[%s543 + $0x20] sm:$0xff]
      %v3464 = vld [vmem:[%s543 + $0x28] sm:$0xff]
      %v3465 = vld [vmem:[%s543 + $0x30] sm:$0xff]
      %v3466 = vld [vmem:[%s543 + $0x38] sm:$0xff]
      %v3467 = vpack.c.bf16 %v3460, %v3459
      %v3468 = vpack.c.bf16 %v3462, %v3461
      %v3469 = vpack.c.bf16 %v3464, %v3463
      %v3470 = vpack.c.bf16 %v3466, %v3465
      %v3471 = vld [vmem:[%s10 + $0x140] sm:$0xf]
      %v3472 = vld [vmem:[%s10 + $0x144] sm:$0xf]
      %v3473 = vld [vmem:[%s10 + $0x148] sm:$0xf]
      %v3474 = vld [vmem:[%s10 + $0x14c] sm:$0xf]
      %v3475 = vld [vmem:[%s10 + $0x150] sm:$0xf]
      %v3476 = vld [vmem:[%s10 + $0x154] sm:$0xf]
      %v3477 = vld [vmem:[%s10 + $0x158] sm:$0xf]
      %v3478 = vld [vmem:[%s10 + $0x15c] sm:$0xf]
      %v3479 = vld [vmem:[%s10 + $0x160] sm:$0xf]
      %v3480 = vld [vmem:[%s10 + $0x164] sm:$0xf]
      %v3481 = vld [vmem:[%s10 + $0x168] sm:$0xf]
      %v3482 = vld [vmem:[%s10 + $0x16c] sm:$0xf]
      %v3483 = vld [vmem:[%s10 + $0x170] sm:$0xf]
      %v3484 = vld [vmem:[%s10 + $0x174] sm:$0xf]
      %v3485 = vld [vmem:[%s10 + $0x178] sm:$0xf]
      %v3486 = vld [vmem:[%s10 + $0x17c] sm:$0xf]
      %v3503 = vunpack.c.l.b16 %v3471
      %v3504 = vunpack.c.l.b16 %v3472
      %v3505 = vunpack.c.l.b16 %v3473
      %v3506 = vunpack.c.l.b16 %v3474
      %v3507 = vunpack.c.l.b16 %v3475
      %v3508 = vunpack.c.l.b16 %v3476
      %v3509 = vunpack.c.l.b16 %v3477
      %v3510 = vunpack.c.l.b16 %v3478
      %v3511 = vunpack.c.l.b16 %v3479
      %v3512 = vunpack.c.l.b16 %v3480
      %v3513 = vunpack.c.l.b16 %v3481
      %v3514 = vunpack.c.l.b16 %v3482
      %v3515 = vunpack.c.l.b16 %v3483
      %v3516 = vunpack.c.l.b16 %v3484
      %v3517 = vunpack.c.l.b16 %v3485
      %v3518 = vunpack.c.l.b16 %v3486
      %v3519 = vpack.c.b16 %v3504, %v3503
      %v3520 = vpack.c.b16 %v3506, %v3505
      %v3521 = vpack.c.b16 %v3508, %v3507
      %v3522 = vpack.c.b16 %v3510, %v3509
      %v3523 = vpack.c.b16 %v3512, %v3511
      %v3524 = vpack.c.b16 %v3514, %v3513
      %v3525 = vpack.c.b16 %v3516, %v3515
      %v3526 = vpack.c.b16 %v3518, %v3517
      %3535 = vmatpush.bf16.msra.mxu0 %v3526
      %3536 = vmatpush.bf16.msra.mxu0 %v3525
      %3537 = vmatpush.bf16.msra.mxu0 %v3524
      %3538 = vmatpush.bf16.msra.mxu0 %v3523
      %3539 = vmatpush.bf16.msra.mxu0 %v3522
      %3540 = vmatpush.bf16.msra.mxu0 %v3521
      %3541 = vmatpush.bf16.msra.mxu0 %v3520
      %3542 = vmatpush.bf16.msra.mxu0 %v3519
      %3543 = vmatmul.bf16.gmra.mxu0 %v3467
      %v3544 = vpop.f32.mrf.mxu0
      %v3545 = vadd.f32 0.0, %v3544
      %v3546 = vpop.f32.mrf.mxu0
      %v3547 = vadd.f32 0.0, %v3546
      %3548 = vmatmul.bf16.gmra.mxu0 %v3468
      %v3549 = vpop.f32.mrf.mxu0
      %v3550 = vadd.f32 0.0, %v3549
      %v3551 = vpop.f32.mrf.mxu0
      %v3552 = vadd.f32 0.0, %v3551
      %3553 = vmatmul.bf16.gmra.mxu0 %v3469
      %v3554 = vpop.f32.mrf.mxu0
      %v3555 = vadd.f32 0.0, %v3554
      %v3556 = vpop.f32.mrf.mxu0
      %v3557 = vadd.f32 0.0, %v3556
      %3558 = vmatmul.bf16.gmra.mxu0 %v3470
      %v3559 = vpop.f32.mrf.mxu0
      %v3560 = vadd.f32 0.0, %v3559
      %v3561 = vpop.f32.mrf.mxu0
      %v3562 = vadd.f32 0.0, %v3561
      %3563 = vdwg.mxu0
      %v3564 = vadd.f32 %v3451, %v3545
      %v3565 = vadd.f32 %v3452, %v3547
      %v3566 = vadd.f32 %v3453, %v3550
      %v3567 = vadd.f32 %v3454, %v3552
      %v3568 = vadd.f32 %v3455, %v3555
      %v3569 = vadd.f32 %v3456, %v3557
      %v3570 = vadd.f32 %v3457, %v3560
      %v3571 = vadd.f32 %v3458, %v3562
      %v3572 = vld [vmem:[%s560] sm:$0xff]
      %v3573 = vld [vmem:[%s560 + $0x8] sm:$0xff]
      %v3574 = vld [vmem:[%s560 + $0x10] sm:$0xff]
      %v3575 = vld [vmem:[%s560 + $0x18] sm:$0xff]
      %v3576 = vld [vmem:[%s560 + $0x20] sm:$0xff]
      %v3577 = vld [vmem:[%s560 + $0x28] sm:$0xff]
      %v3578 = vld [vmem:[%s560 + $0x30] sm:$0xff]
      %v3579 = vld [vmem:[%s560 + $0x38] sm:$0xff]
      %v3580 = vpack.c.bf16 %v3573, %v3572
      %v3581 = vpack.c.bf16 %v3575, %v3574
      %v3582 = vpack.c.bf16 %v3577, %v3576
      %v3583 = vpack.c.bf16 %v3579, %v3578
      %v3584 = vld [vmem:[%s10 + $0x180] sm:$0xf]
      %v3585 = vld [vmem:[%s10 + $0x184] sm:$0xf]
      %v3586 = vld [vmem:[%s10 + $0x188] sm:$0xf]
      %v3587 = vld [vmem:[%s10 + $0x18c] sm:$0xf]
      %v3588 = vld [vmem:[%s10 + $0x190] sm:$0xf]
      %v3589 = vld [vmem:[%s10 + $0x194] sm:$0xf]
      %v3590 = vld [vmem:[%s10 + $0x198] sm:$0xf]
      %v3591 = vld [vmem:[%s10 + $0x19c] sm:$0xf]
      %v3592 = vld [vmem:[%s10 + $0x1a0] sm:$0xf]
      %v3593 = vld [vmem:[%s10 + $0x1a4] sm:$0xf]
      %v3594 = vld [vmem:[%s10 + $0x1a8] sm:$0xf]
      %v3595 = vld [vmem:[%s10 + $0x1ac] sm:$0xf]
      %v3596 = vld [vmem:[%s10 + $0x1b0] sm:$0xf]
      %v3597 = vld [vmem:[%s10 + $0x1b4] sm:$0xf]
      %v3598 = vld [vmem:[%s10 + $0x1b8] sm:$0xf]
      %v3599 = vld [vmem:[%s10 + $0x1bc] sm:$0xf]
      %v3616 = vunpack.c.l.b16 %v3584
      %v3617 = vunpack.c.l.b16 %v3585
      %v3618 = vunpack.c.l.b16 %v3586
      %v3619 = vunpack.c.l.b16 %v3587
      %v3620 = vunpack.c.l.b16 %v3588
      %v3621 = vunpack.c.l.b16 %v3589
      %v3622 = vunpack.c.l.b16 %v3590
      %v3623 = vunpack.c.l.b16 %v3591
      %v3624 = vunpack.c.l.b16 %v3592
      %v3625 = vunpack.c.l.b16 %v3593
      %v3626 = vunpack.c.l.b16 %v3594
      %v3627 = vunpack.c.l.b16 %v3595
      %v3628 = vunpack.c.l.b16 %v3596
      %v3629 = vunpack.c.l.b16 %v3597
      %v3630 = vunpack.c.l.b16 %v3598
      %v3631 = vunpack.c.l.b16 %v3599
      %v3632 = vpack.c.b16 %v3617, %v3616
      %v3633 = vpack.c.b16 %v3619, %v3618
      %v3634 = vpack.c.b16 %v3621, %v3620
      %v3635 = vpack.c.b16 %v3623, %v3622
      %v3636 = vpack.c.b16 %v3625, %v3624
      %v3637 = vpack.c.b16 %v3627, %v3626
      %v3638 = vpack.c.b16 %v3629, %v3628
      %v3639 = vpack.c.b16 %v3631, %v3630
      %3648 = vmatpush.bf16.msra.mxu0 %v3639
      %3649 = vmatpush.bf16.msra.mxu0 %v3638
      %3650 = vmatpush.bf16.msra.mxu0 %v3637
      %3651 = vmatpush.bf16.msra.mxu0 %v3636
      %3652 = vmatpush.bf16.msra.mxu0 %v3635
      %3653 = vmatpush.bf16.msra.mxu0 %v3634
      %3654 = vmatpush.bf16.msra.mxu0 %v3633
      %3655 = vmatpush.bf16.msra.mxu0 %v3632
      %3656 = vmatmul.bf16.gmra.mxu0 %v3580
      %v3657 = vpop.f32.mrf.mxu0
      %v3658 = vadd.f32 0.0, %v3657
      %v3659 = vpop.f32.mrf.mxu0
      %v3660 = vadd.f32 0.0, %v3659
      %3661 = vmatmul.bf16.gmra.mxu0 %v3581
      %v3662 = vpop.f32.mrf.mxu0
      %v3663 = vadd.f32 0.0, %v3662
      %v3664 = vpop.f32.mrf.mxu0
      %v3665 = vadd.f32 0.0, %v3664
      %3666 = vmatmul.bf16.gmra.mxu0 %v3582
      %v3667 = vpop.f32.mrf.mxu0
      %v3668 = vadd.f32 0.0, %v3667
      %v3669 = vpop.f32.mrf.mxu0
      %v3670 = vadd.f32 0.0, %v3669
      %3671 = vmatmul.bf16.gmra.mxu0 %v3583
      %v3672 = vpop.f32.mrf.mxu0
      %v3673 = vadd.f32 0.0, %v3672
      %v3674 = vpop.f32.mrf.mxu0
      %v3675 = vadd.f32 0.0, %v3674
      %3676 = vdwg.mxu0
      %v3677 = vadd.f32 %v3564, %v3658
      %v3678 = vadd.f32 %v3565, %v3660
      %v3679 = vadd.f32 %v3566, %v3663
      %v3680 = vadd.f32 %v3567, %v3665
      %v3681 = vadd.f32 %v3568, %v3668
      %v3682 = vadd.f32 %v3569, %v3670
      %v3683 = vadd.f32 %v3570, %v3673
      %v3684 = vadd.f32 %v3571, %v3675
      %v3685 = vld [vmem:[%s567] sm:$0xff]
      %v3686 = vld [vmem:[%s567 + $0x8] sm:$0xff]
      %v3687 = vld [vmem:[%s567 + $0x10] sm:$0xff]
      %v3688 = vld [vmem:[%s567 + $0x18] sm:$0xff]
      %v3689 = vld [vmem:[%s567 + $0x20] sm:$0xff]
      %v3690 = vld [vmem:[%s567 + $0x28] sm:$0xff]
      %v3691 = vld [vmem:[%s567 + $0x30] sm:$0xff]
      %v3692 = vld [vmem:[%s567 + $0x38] sm:$0xff]
      %v3693 = vpack.c.bf16 %v3686, %v3685
      %v3694 = vpack.c.bf16 %v3688, %v3687
      %v3695 = vpack.c.bf16 %v3690, %v3689
      %v3696 = vpack.c.bf16 %v3692, %v3691
      %v3697 = vld [vmem:[%s10 + $0x1c0] sm:$0xf]
      %v3698 = vld [vmem:[%s10 + $0x1c4] sm:$0xf]
      %v3699 = vld [vmem:[%s10 + $0x1c8] sm:$0xf]
      %v3700 = vld [vmem:[%s10 + $0x1cc] sm:$0xf]
      %v3701 = vld [vmem:[%s10 + $0x1d0] sm:$0xf]
      %v3702 = vld [vmem:[%s10 + $0x1d4] sm:$0xf]
      %v3703 = vld [vmem:[%s10 + $0x1d8] sm:$0xf]
      %v3704 = vld [vmem:[%s10 + $0x1dc] sm:$0xf]
      %v3705 = vld [vmem:[%s10 + $0x1e0] sm:$0xf]
      %v3706 = vld [vmem:[%s10 + $0x1e4] sm:$0xf]
      %v3707 = vld [vmem:[%s10 + $0x1e8] sm:$0xf]
      %v3708 = vld [vmem:[%s10 + $0x1ec] sm:$0xf]
      %v3709 = vld [vmem:[%s10 + $0x1f0] sm:$0xf]
      %v3710 = vld [vmem:[%s10 + $0x1f4] sm:$0xf]
      %v3711 = vld [vmem:[%s10 + $0x1f8] sm:$0xf]
      %v3712 = vld [vmem:[%s10 + $0x1fc] sm:$0xf]
      %v3729 = vunpack.c.l.b16 %v3697
      %v3730 = vunpack.c.l.b16 %v3698
      %v3731 = vunpack.c.l.b16 %v3699
      %v3732 = vunpack.c.l.b16 %v3700
      %v3733 = vunpack.c.l.b16 %v3701
      %v3734 = vunpack.c.l.b16 %v3702
      %v3735 = vunpack.c.l.b16 %v3703
      %v3736 = vunpack.c.l.b16 %v3704
      %v3737 = vunpack.c.l.b16 %v3705
      %v3738 = vunpack.c.l.b16 %v3706
      %v3739 = vunpack.c.l.b16 %v3707
      %v3740 = vunpack.c.l.b16 %v3708
      %v3741 = vunpack.c.l.b16 %v3709
      %v3742 = vunpack.c.l.b16 %v3710
      %v3743 = vunpack.c.l.b16 %v3711
      %v3744 = vunpack.c.l.b16 %v3712
      %v3745 = vpack.c.b16 %v3730, %v3729
      %v3746 = vpack.c.b16 %v3732, %v3731
      %v3747 = vpack.c.b16 %v3734, %v3733
      %v3748 = vpack.c.b16 %v3736, %v3735
      %v3749 = vpack.c.b16 %v3738, %v3737
      %v3750 = vpack.c.b16 %v3740, %v3739
      %v3751 = vpack.c.b16 %v3742, %v3741
      %v3752 = vpack.c.b16 %v3744, %v3743
      %3761 = vmatpush.bf16.msra.mxu0 %v3752
      %3762 = vmatpush.bf16.msra.mxu0 %v3751
      %3763 = vmatpush.bf16.msra.mxu0 %v3750
      %3764 = vmatpush.bf16.msra.mxu0 %v3749
      %3765 = vmatpush.bf16.msra.mxu0 %v3748
      %3766 = vmatpush.bf16.msra.mxu0 %v3747
      %3767 = vmatpush.bf16.msra.mxu0 %v3746
      %3768 = vmatpush.bf16.msra.mxu0 %v3745
      %3769 = vmatmul.bf16.gmra.mxu0 %v3693
      %v3770 = vpop.f32.mrf.mxu0
      %v3771 = vadd.f32 0.0, %v3770
      %v3772 = vpop.f32.mrf.mxu0
      %v3773 = vadd.f32 0.0, %v3772
      %3774 = vmatmul.bf16.gmra.mxu0 %v3694
      %v3775 = vpop.f32.mrf.mxu0
      %v3776 = vadd.f32 0.0, %v3775
      %v3777 = vpop.f32.mrf.mxu0
      %v3778 = vadd.f32 0.0, %v3777
      %3779 = vmatmul.bf16.gmra.mxu0 %v3695
      %v3780 = vpop.f32.mrf.mxu0
      %v3781 = vadd.f32 0.0, %v3780
      %v3782 = vpop.f32.mrf.mxu0
      %v3783 = vadd.f32 0.0, %v3782
      %3784 = vmatmul.bf16.gmra.mxu0 %v3696
      %v3785 = vpop.f32.mrf.mxu0
      %v3786 = vadd.f32 0.0, %v3785
      %v3787 = vpop.f32.mrf.mxu0
      %v3788 = vadd.f32 0.0, %v3787
      %3789 = vdwg.mxu0
      %v3790 = vadd.f32 %v3677, %v3771
      %v3791 = vadd.f32 %v3678, %v3773
      %v3792 = vadd.f32 %v3679, %v3776
      %v3793 = vadd.f32 %v3680, %v3778
      %v3794 = vadd.f32 %v3681, %v3781
      %v3795 = vadd.f32 %v3682, %v3783
      %v3796 = vadd.f32 %v3683, %v3786
      %v3797 = vadd.f32 %v3684, %v3788
      %v3798 = vld [vmem:[%s575] sm:$0xff]
      %v3799 = vld [vmem:[%s575 + $0x8] sm:$0xff]
      %v3800 = vld [vmem:[%s575 + $0x10] sm:$0xff]
      %v3801 = vld [vmem:[%s575 + $0x18] sm:$0xff]
      %v3802 = vld [vmem:[%s575 + $0x20] sm:$0xff]
      %v3803 = vld [vmem:[%s575 + $0x28] sm:$0xff]
      %v3804 = vld [vmem:[%s575 + $0x30] sm:$0xff]
      %v3805 = vld [vmem:[%s575 + $0x38] sm:$0xff]
      %v3806 = vpack.c.bf16 %v3799, %v3798
      %v3807 = vpack.c.bf16 %v3801, %v3800
      %v3808 = vpack.c.bf16 %v3803, %v3802
      %v3809 = vpack.c.bf16 %v3805, %v3804
      %v3810 = vld [vmem:[%s10 + $0x200] sm:$0xf]
      %v3811 = vld [vmem:[%s10 + $0x204] sm:$0xf]
      %v3812 = vld [vmem:[%s10 + $0x208] sm:$0xf]
      %v3813 = vld [vmem:[%s10 + $0x20c] sm:$0xf]
      %v3814 = vld [vmem:[%s10 + $0x210] sm:$0xf]
      %v3815 = vld [vmem:[%s10 + $0x214] sm:$0xf]
      %v3816 = vld [vmem:[%s10 + $0x218] sm:$0xf]
      %v3817 = vld [vmem:[%s10 + $0x21c] sm:$0xf]
      %v3818 = vld [vmem:[%s10 + $0x220] sm:$0xf]
      %v3819 = vld [vmem:[%s10 + $0x224] sm:$0xf]
      %v3820 = vld [vmem:[%s10 + $0x228] sm:$0xf]
      %v3821 = vld [vmem:[%s10 + $0x22c] sm:$0xf]
      %v3822 = vld [vmem:[%s10 + $0x230] sm:$0xf]
      %v3823 = vld [vmem:[%s10 + $0x234] sm:$0xf]
      %v3824 = vld [vmem:[%s10 + $0x238] sm:$0xf]
      %v3825 = vld [vmem:[%s10 + $0x23c] sm:$0xf]
      %v3842 = vunpack.c.l.b16 %v3810
      %v3843 = vunpack.c.l.b16 %v3811
      %v3844 = vunpack.c.l.b16 %v3812
      %v3845 = vunpack.c.l.b16 %v3813
      %v3846 = vunpack.c.l.b16 %v3814
      %v3847 = vunpack.c.l.b16 %v3815
      %v3848 = vunpack.c.l.b16 %v3816
      %v3849 = vunpack.c.l.b16 %v3817
      %v3850 = vunpack.c.l.b16 %v3818
      %v3851 = vunpack.c.l.b16 %v3819
      %v3852 = vunpack.c.l.b16 %v3820
      %v3853 = vunpack.c.l.b16 %v3821
      %v3854 = vunpack.c.l.b16 %v3822
      %v3855 = vunpack.c.l.b16 %v3823
      %v3856 = vunpack.c.l.b16 %v3824
      %v3857 = vunpack.c.l.b16 %v3825
      %v3858 = vpack.c.b16 %v3843, %v3842
      %v3859 = vpack.c.b16 %v3845, %v3844
      %v3860 = vpack.c.b16 %v3847, %v3846
      %v3861 = vpack.c.b16 %v3849, %v3848
      %v3862 = vpack.c.b16 %v3851, %v3850
      %v3863 = vpack.c.b16 %v3853, %v3852
      %v3864 = vpack.c.b16 %v3855, %v3854
      %v3865 = vpack.c.b16 %v3857, %v3856
      %3874 = vmatpush.bf16.msra.mxu0 %v3865
      %3875 = vmatpush.bf16.msra.mxu0 %v3864
      %3876 = vmatpush.bf16.msra.mxu0 %v3863
      %3877 = vmatpush.bf16.msra.mxu0 %v3862
      %3878 = vmatpush.bf16.msra.mxu0 %v3861
      %3879 = vmatpush.bf16.msra.mxu0 %v3860
      %3880 = vmatpush.bf16.msra.mxu0 %v3859
      %3881 = vmatpush.bf16.msra.mxu0 %v3858
      %3882 = vmatmul.bf16.gmra.mxu0 %v3806
      %v3883 = vpop.f32.mrf.mxu0
      %v3884 = vadd.f32 0.0, %v3883
      %v3885 = vpop.f32.mrf.mxu0
      %v3886 = vadd.f32 0.0, %v3885
      %3887 = vmatmul.bf16.gmra.mxu0 %v3807
      %v3888 = vpop.f32.mrf.mxu0
      %v3889 = vadd.f32 0.0, %v3888
      %v3890 = vpop.f32.mrf.mxu0
      %v3891 = vadd.f32 0.0, %v3890
      %3892 = vmatmul.bf16.gmra.mxu0 %v3808
      %v3893 = vpop.f32.mrf.mxu0
      %v3894 = vadd.f32 0.0, %v3893
      %v3895 = vpop.f32.mrf.mxu0
      %v3896 = vadd.f32 0.0, %v3895
      %3897 = vmatmul.bf16.gmra.mxu0 %v3809
      %v3898 = vpop.f32.mrf.mxu0
      %v3899 = vadd.f32 0.0, %v3898
      %v3900 = vpop.f32.mrf.mxu0
      %v3901 = vadd.f32 0.0, %v3900
      %3902 = vdwg.mxu0
      %v3903 = vadd.f32 %v3790, %v3884
      %v3904 = vadd.f32 %v3791, %v3886
      %v3905 = vadd.f32 %v3792, %v3889
      %v3906 = vadd.f32 %v3793, %v3891
      %v3907 = vadd.f32 %v3794, %v3894
      %v3908 = vadd.f32 %v3795, %v3896
      %v3909 = vadd.f32 %v3796, %v3899
      %v3910 = vadd.f32 %v3797, %v3901
      %v3912 = vperm.slane %v2857, 0
      %v3914 = vadd.f32 %v3903, %v3912
      %v3915 = vadd.f32 %v3904, %v3912
      %v3916 = vadd.f32 %v3905, %v3912
      %v3917 = vadd.f32 %v3906, %v3912
      %v3918 = vadd.f32 %v3907, %v3912
      %v3919 = vadd.f32 %v3908, %v3912
      %v3920 = vadd.f32 %v3909, %v3912
      %v3921 = vadd.f32 %v3910, %v3912
      %v3922 = vsub.f32 0.0, %v3914
      %v3923 = vsub.f32 0.0, %v3915
      %v3924 = vsub.f32 0.0, %v3916
      %v3925 = vsub.f32 0.0, %v3917
      %v3926 = vsub.f32 0.0, %v3918
      %v3927 = vsub.f32 0.0, %v3919
      %v3928 = vsub.f32 0.0, %v3920
      %v3929 = vsub.f32 0.0, %v3921
      %v3930 = vmul.f32 %v3922, 1.442695
      %v3931 = vpow.pop %v3930
      %v3932 = vmul.f32 %v3923, 1.442695
      %v3933 = vpow.pop %v3932
      %v3934 = vmul.f32 %v3924, 1.442695
      %v3935 = vpow.pop %v3934
      %v3936 = vmul.f32 %v3925, 1.442695
      %v3937 = vpow.pop %v3936
      %v3938 = vmul.f32 %v3926, 1.442695
      %v3939 = vpow.pop %v3938
      %v3940 = vmul.f32 %v3927, 1.442695
      %v3941 = vpow.pop %v3940
      %v3942 = vmul.f32 %v3928, 1.442695
      %v3943 = vpow.pop %v3942
      %v3944 = vmul.f32 %v3929, 1.442695
      %v3945 = vpow.pop %v3944
      %v3946 = vadd.f32 %v3931, 1.0
      %v3947 = vadd.f32 %v3933, 1.0
      %v3948 = vadd.f32 %v3935, 1.0
      %v3949 = vadd.f32 %v3937, 1.0
      %v3950 = vadd.f32 %v3939, 1.0
      %v3951 = vadd.f32 %v3941, 1.0
      %v3952 = vadd.f32 %v3943, 1.0
      %v3953 = vadd.f32 %v3945, 1.0
      %v3954 = vrcp.pop %v3946
      %v3955 = vrcp.pop %v3947
      %v3956 = vrcp.pop %v3948
      %v3957 = vrcp.pop %v3949
      %v3958 = vrcp.pop %v3950
      %v3959 = vrcp.pop %v3951
      %v3960 = vrcp.pop %v3952
      %v3961 = vrcp.pop %v3953
      %3962 = vst [vmem:[%s433] sm:$0xff] %v3954
      %3963 = vst [vmem:[%s433 + $0x8] sm:$0xff] %v3955
      %3964 = vst [vmem:[%s433 + $0x10] sm:$0xff] %v3956
      %3965 = vst [vmem:[%s433 + $0x18] sm:$0xff] %v3957
      %3966 = vst [vmem:[%s433 + $0x20] sm:$0xff] %v3958
      %3967 = vst [vmem:[%s433 + $0x28] sm:$0xff] %v3959
      %3968 = vst [vmem:[%s433 + $0x30] sm:$0xff] %v3960
      %3969 = vst [vmem:[%s433 + $0x38] sm:$0xff] %v3961
      %p3970 = scmp.lt.s32.totalorder %s23, 1
      %s3971 = scalar_select %p3970, %s23, 1
      %s3972 = smul.addr %s3971, 8
      %s3973 = smul.addr %s3972, 8
      %s3974 = scalar_lea.vmem %s12, %s3973
      // Predicated region
      $region69: #{forward.3} parent=67 // pred_check
        %p3975 = pneg %p303
      $region70: #{forward.3} parent=67 // pred_check_branch
        %3977 = sbr.rel (%p3975) target = $region72
      $region71: #{forward.3} parent=67 // pred_region
        _
      $region72: #{forward.3} parent=67 // pred_fallthru
        _
    $region68: #{forward.3} parent=5 // pred_fallthru
      _
    %p3978 = scmp.le.s32.totalorder 2, %s18
    // Predicated region
    $region73: #{forward.3} parent=5 // pred_check
      %p3979 = pneg %p3978
    $region74: #{forward.3} parent=5 // pred_check_branch
      %3981 = sbr.rel (%p3979) target = $region76
    $region75: #{forward.3} parent=5 // pred_region
      %s3982 = ssub.s32 %s18, 2
      // Predicated region
      $region77: #{forward.3} parent=75 // pred_check
        %p3983 = pneg %p309
      $region78: #{forward.3} parent=75 // pred_check_branch
        %3985 = sbr.rel (%p3983) target = $region80
      $region79: #{forward.3} parent=75 // pred_region
        %p3986 = scmp.lt.s32.totalorder %s24, 1
        %s3987 = scalar_select %p3986, %s24, 1
        %s3988 = smul.addr %s3987, 8
        %s3989 = smul.addr %s3988, 8
        %s3990 = scalar_lea.vmem %s12, %s3989
      $region80: #{forward.3} parent=75 // pred_fallthru
        _
    $region76: #{forward.3} parent=5 // pred_fallthru
      _
  $region6: #{forward.3} parent=0 // loop_footer
    %s22 = sadd.s32 1, %s18
  $region7: #{forward.3} parent=0 // loop_footer_branch
    %17 = sbr.rel target = $region3
  $region8: #{forward.3} parent=0 // loop_exit
    _

</llo_original>
